<compile_context>
chip_gen: v7x
topology: tpu7x:2x2x1
jax: 0.10.0
libtpu: 0.0.40
codegen_flags: <defaults>
</compile_context>

<pallas_src>
import math
from functools import partial, lru_cache

import jax
import jax.numpy as jnp
from jax.experimental import pallas as pl
from jax.experimental.pallas import tpu as pltpu

F32 = jnp.float32
BF16 = jnp.bfloat16


def _round_up(x, m):
    return (x + m - 1) // m * m


@lru_cache(maxsize=None)
def _vmem_limit():
    # v5e/v6e: 128 MiB VMEM per TensorCore, v7x: 64 MiB.  Stay under 3/4 of it.
    try:
        cap = int(pltpu.get_tpu_info().vmem_capacity_bytes)
    except Exception:
        cap = 64 * 1024 * 1024          # conservative fallback
    return min(96 * 1024 * 1024, (cap * 3) // 4)


def _cparams(*dims):
    return pltpu.CompilerParams(dimension_semantics=dims,
                                vmem_limit_bytes=_vmem_limit())


def _pick_tk(K):
    if K <= 6144:
        return K                         # no K tiling needed
    for t in (512, 256, 128):
        if K % t == 0:
            return t
    return K


def _pick_tn(N):
    for t in (256, 128):
        if N % t == 0:
            return t
    return N                             # full-dim lane block (e.g. 320, 960)


def _pick_tile(n, cands):
    for t in cands:
        if n % t == 0:
            return t
    return n


def _pick_hw_tile(hw, c, budget=4 * 1024 * 1024):
    for t in (2048, 1024, 512, 256, 128, 64, 32, 16, 8):
        if hw % t == 0 and t * c * 2 <= budget:
            return t
    return hw


def _pick_conv_tn(cout):
    for t in (256, 128):
        if cout % t == 0:
            return t
    return cout                          # 320 -> full-dim block


def _pick_conv_tcin(cin, hp, wp, tn):
    x_budget = 6 * 1024 * 1024
    w_budget = 8 * 1024 * 1024

    def ok(t):
        return hp * wp * t * 2 <= x_budget and 9 * t * tn * 2 <= w_budget

    if ok(cin):
        return cin, cin                  # untiled, no channel padding
    cpad = _round_up(cin, 128)
    for t in (512, 384, 256, 128):
        if cpad % t == 0 and ok(t):
            return t, cpad
    return 128, cpad


# ----------------------------------------------------------------------------
# Pallas kernels
# ----------------------------------------------------------------------------
def _matmul_kernel(a_ref, b_ref, bias_ref, o_ref, acc_ref):
    k = pl.program_id(2)

    @pl.when(k == 0)
    def _():
        acc_ref[...] = jnp.broadcast_to(bias_ref[...], acc_ref.shape)

    acc_ref[...] += jnp.dot(a_ref[...], b_ref[...],
                            preferred_element_type=jnp.float32)

    @pl.when(k == pl.num_programs(2) - 1)
    def _():
        o_ref[...] = acc_ref[...].astype(o_ref.dtype)


def _matmul_res_kernel(a_ref, b_ref, bias_ref, r_ref, o_ref, acc_ref):
    k = pl.program_id(2)

    @pl.when(k == 0)
    def _():
        acc_ref[...] = jnp.broadcast_to(bias_ref[...], acc_ref.shape)

    acc_ref[...] += jnp.dot(a_ref[...], b_ref[...],
                            preferred_element_type=jnp.float32)

    @pl.when(k == pl.num_programs(2) - 1)
    def _():
        o_ref[...] = (acc_ref[...] +
                      r_ref[...].astype(jnp.float32)).astype(o_ref.dtype)


def _matmul_geglu_kernel(a_ref, wa_ref, wg_ref, ba_ref, bg_ref, o_ref,
                         acca_ref, accg_ref):
    k = pl.program_id(2)

    @pl.when(k == 0)
    def _():
        acca_ref[...] = jnp.broadcast_to(ba_ref[...], acca_ref.shape)
        accg_ref[...] = jnp.broadcast_to(bg_ref[...], accg_ref.shape)

    a = a_ref[...]
    acca_ref[...] += jnp.dot(a, wa_ref[...], preferred_element_type=jnp.float32)
    accg_ref[...] += jnp.dot(a, wg_ref[...], preferred_element_type=jnp.float32)

    @pl.when(k == pl.num_programs(2) - 1)
    def _():
        g = accg_ref[...]
        gelu = 0.5 * g * (1.0 + jax.lax.erf(g * 0.7071067811865476))
        o_ref[...] = (acca_ref[...] * gelu).astype(o_ref.dtype)


def _conv3x3_body(x_ref, w_ref, bias_ref, o_ref, acc_ref, r_ref=None):
    c = pl.program_id(2)
    _, Ho, Wo, TN = o_ref.shape
    tcin = x_ref.shape[3]

    @pl.when(c == 0)
    def _():
        acc_ref[...] = jnp.broadcast_to(bias_ref[...], acc_ref.shape)

    for ih in range(3):
        for iw in range(3):
            a = x_ref[0, ih:ih + Ho, iw:iw + Wo, :].reshape(Ho * Wo, tcin)
            acc_ref[...] += jnp.dot(a, w_ref[ih, iw],
                                    preferred_element_type=jnp.float32)

    @pl.when(c == pl.num_programs(2) - 1)
    def _():
        acc = acc_ref[...]
        if r_ref is not None:
            acc = acc + r_ref[0].astype(jnp.float32).reshape(Ho * Wo, TN)
        o_ref[0] = acc.reshape(Ho, Wo, TN).astype(o_ref.dtype)


def _conv3x3_kernel(x_ref, w_ref, bias_ref, o_ref, acc_ref):
    _conv3x3_body(x_ref, w_ref, bias_ref, o_ref, acc_ref)


def _conv3x3_res_kernel(x_ref, w_ref, bias_ref, r_ref, o_ref, acc_ref):
    _conv3x3_body(x_ref, w_ref, bias_ref, o_ref, acc_ref, r_ref)


def _gn_stats_kernel(x_ref, s1_ref, s2_ref):
    t = pl.program_id(1)

    @pl.when(t == 0)
    def _():
        s1_ref[...] = jnp.zeros_like(s1_ref)
        s2_ref[...] = jnp.zeros_like(s2_ref)

    x = x_ref[0].astype(jnp.float32)                 # (THW, C)
    s1_ref[...] += jnp.sum(x, axis=0, keepdims=True)[None]
    s2_ref[...] += jnp.sum(x * x, axis=0, keepdims=True)[None]


def _gn_apply_kernel(x_ref, sc_ref, sh_ref, o_ref, *, fuse_silu):
    x = x_ref[0].astype(jnp.float32)                 # (THW, C)
    y = x * sc_ref[0] + sh_ref[0]
    if fuse_silu:
        y = y * jax.nn.sigmoid(y)
    o_ref[0] = y.astype(o_ref.dtype)


def _layer_norm_kernel(x_ref, g_ref, b_ref, o_ref, *, eps):
    x = x_ref[0].astype(jnp.float32)                 # (TS, C)
    mean = jnp.mean(x, axis=-1, keepdims=True)
    d = x - mean
    var = jnp.mean(d * d, axis=-1, keepdims=True)
    y = d * jax.lax.rsqrt(var + eps)
    o_ref[0] = (y * g_ref[...] + b_ref[...]).astype(o_ref.dtype)


def _flash_attn_kernel(q_ref, k_ref, v_ref, o_ref, m_sc, l_sc, acc_sc, *,
                       scale):
    kv = pl.program_id(2)

    @pl.when(kv == 0)
    def _():
        m_sc[...] = jnp.full_like(m_sc, -jnp.inf)
        l_sc[...] = jnp.zeros_like(l_sc)
        acc_sc[...] = jnp.zeros_like(acc_sc)

    q = q_ref[0]                                     # (TQ, dh) bf16
    k = k_ref[0]                                     # (TK, dh) bf16
    v = v_ref[0]
    s = jax.lax.dot_general(q, k, (((1,), (1,)), ((), ())),
                            preferred_element_type=jnp.float32) * scale
    m_prev = m_sc[...]
    m_new = jnp.maximum(m_prev, jnp.max(s, axis=-1, keepdims=True))
    alpha = jnp.exp(m_prev - m_new)
    p = jnp.exp(s - m_new)
    l_sc[...] = alpha * l_sc[...] + jnp.sum(p, axis=-1, keepdims=True)
    acc_sc[...] = alpha * acc_sc[...] + jnp.dot(p.astype(v.dtype), v,
                                                preferred_element_type=jnp.float32)
    m_sc[...] = m_new

    @pl.when(kv == pl.num_programs(2) - 1)
    def _():
        o_ref[0] = (acc_sc[...] *
                    pl.reciprocal(l_sc[...], approx=True)).astype(o_ref.dtype)


# ----------------------------------------------------------------------------
# Kernel wrappers
# ----------------------------------------------------------------------------
@jax.jit
def matmul_bias(a, b, bias, residual=None):
    """(M,K) @ (K,N) + bias [+ residual] -> (M,N) bf16; bf16 MXU, f32 acc."""
    M, K = a.shape
    N = b.shape[1]
    TM = min(512, _round_up(M, 8))
    Mp = _round_up(M, TM)
    TN = _pick_tn(N)
    TK = _pick_tk(K)

    a_p = a.astype(BF16)
    if Mp != M:
        a_p = jnp.pad(a_p, ((0, Mp - M), (0, 0)))
    b_p = b.astype(BF16)
    bias_p = bias.astype(F32).reshape(1, N)

    in_specs = [
        pl.BlockSpec((TM, TK), lambda m, n, k: (m, k)),
        pl.BlockSpec((TK, TN), lambda m, n, k: (k, n)),
        pl.BlockSpec((1, TN), lambda m, n, k: (0, n)),
    ]
    operands = [a_p, b_p, bias_p]
    if residual is not None:
        r_p = residual.astype(BF16)
        if Mp != M:
            r_p = jnp.pad(r_p, ((0, Mp - M), (0, 0)))
        in_specs.append(pl.BlockSpec((TM, TN), lambda m, n, k: (m, n)))
        operands.append(r_p)
        kernel = _matmul_res_kernel
    else:
        kernel = _matmul_kernel

    out = pl.pallas_call(
        kernel,
        grid=(Mp // TM, N // TN, K // TK),
        in_specs=in_specs,
        out_specs=pl.BlockSpec((TM, TN), lambda m, n, k: (m, n)),
        out_shape=jax.ShapeDtypeStruct((Mp, N), BF16),
        scratch_shapes=[pltpu.VMEM((TM, TN), jnp.float32)],
        compiler_params=_cparams("parallel", "parallel", "arbitrary"),
    )(*operands)
    return out if Mp == M else out[:M]


@jax.jit
def geglu_matmul(x, wa, wg, ba, bg):
    """(x@Wa+ba) * gelu(x@Wg+bg), gating fused into the matmul epilogue."""
    M, K = x.shape
    N = wa.shape[1]
    TM = min(512, _round_up(M, 8))
    Mp = _round_up(M, TM)
    TN = _pick_tn(N)
    TK = _pick_tk(K)

    x_p = x.astype(BF16)
    if Mp != M:
        x_p = jnp.pad(x_p, ((0, Mp - M), (0, 0)))
    ba_p = ba.astype(F32).reshape(1, N)
    bg_p = bg.astype(F32).reshape(1, N)

    out = pl.pallas_call(
        _matmul_geglu_kernel,
        grid=(Mp // TM, N // TN, K // TK),
        in_specs=[
            pl.BlockSpec((TM, TK), lambda m, n, k: (m, k)),
            pl.BlockSpec((TK, TN), lambda m, n, k: (k, n)),
            pl.BlockSpec((TK, TN), lambda m, n, k: (k, n)),
            pl.BlockSpec((1, TN), lambda m, n, k: (0, n)),
            pl.BlockSpec((1, TN), lambda m, n, k: (0, n)),
        ],
        out_specs=pl.BlockSpec((TM, TN), lambda m, n, k: (m, n)),
        out_shape=jax.ShapeDtypeStruct((Mp, N), BF16),
        scratch_shapes=[pltpu.VMEM((TM, TN), jnp.float32),
                        pltpu.VMEM((TM, TN), jnp.float32)],
        compiler_params=_cparams("parallel", "parallel", "arbitrary"),
    )(x_p, wa.astype(BF16), wg.astype(BF16), ba_p, bg_p)
    return out if Mp == M else out[:M]


@jax.jit
def conv3x3(x, w, bias, residual=None):
    """Direct 3x3 stride-1 conv, NHWC, pad=1.  w: (3,3,Cin,Cout) bf16.

    Accumulates the 9 shifted-window matmuls into a VMEM scratch ref, with an
    'arbitrary' Cin-reduction grid axis when the input block would blow VMEM.
    """
    B, H, W, Cin = x.shape
    Cout = w.shape[3]
    Hp, Wp = H + 2, W + 2
    TN = _pick_conv_tn(Cout)
    TCIN, Cpad = _pick_conv_tcin(Cin, Hp, Wp, TN)

    xp = jnp.pad(x.astype(BF16), ((0, 0), (1, 1), (1, 1), (0, Cpad - Cin)))
    wb = w.astype(BF16)
    if Cpad != Cin:
        wb = jnp.pad(wb, ((0, 0), (0, 0), (0, Cpad - Cin), (0, 0)))
    bias2 = bias.astype(F32).reshape(1, Cout)

    in_specs = [
        pl.BlockSpec((1, Hp, Wp, TCIN), lambda b, n, c: (b, 0, 0, c)),
        pl.BlockSpec((3, 3, TCIN, TN), lambda b, n, c: (0, 0, c, n)),
        pl.BlockSpec((1, TN), lambda b, n, c: (0, n)),
    ]
    operands = [xp, wb, bias2]
    if residual is not None:
        in_specs.append(pl.BlockSpec((1, H, W, TN), lambda b, n, c: (b, 0, 0, n)))
        operands.append(residual.astype(BF16))
        kernel = _conv3x3_res_kernel
    else:
        kernel = _conv3x3_kernel

    return pl.pallas_call(
        kernel,
        grid=(B, Cout // TN, Cpad // TCIN),
        in_specs=in_specs,
        out_specs=pl.BlockSpec((1, H, W, TN), lambda b, n, c: (b, 0, 0, n)),
        out_shape=jax.ShapeDtypeStruct((B, H, W, Cout), BF16),
        scratch_shapes=[pltpu.VMEM((H * W, TN), jnp.float32)],
        compiler_params=_cparams("parallel", "parallel", "arbitrary"),
    )(*operands)


def conv3x3_stride2(x, w, bias):
    """3x3 stride-2 conv via bf16 im2col + tiled matmul (3 instances in UNET)."""
    # TODO(synk): fold the stride-2 taps into a direct Pallas kernel as well.
    B, H, W, Cin = x.shape
    Cout = w.shape[3]
    xp = jnp.pad(x.astype(BF16), ((0, 0), (1, 1), (1, 1), (0, 0)))
    Ho = (H + 2 - 3) // 2 + 1
    Wo = (W + 2 - 3) // 2 + 1
    patches = []
    for ih in range(3):
        for iw in range(3):
            patches.append(xp[:, ih:ih + 2 * (Ho - 1) + 1:2,
                              iw:iw + 2 * (Wo - 1) + 1:2, :])
    cols = jnp.concatenate(patches, axis=-1).reshape(B * Ho * Wo, 9 * Cin)
    wm = w.reshape(9 * Cin, Cout)
    out = matmul_bias(cols, wm, bias)
    return out.reshape(B, Ho, Wo, Cout)


def conv1x1(x, w, bias, residual=None):
    B, H, W, Cin = x.shape
    Cout = w.shape[1]
    r2 = residual.reshape(B * H * W, Cout) if residual is not None else None
    out = matmul_bias(x.reshape(B * H * W, Cin), w, bias, residual=r2)
    return out.reshape(B, H, W, Cout)


@partial(jax.jit, static_argnames=("groups", "eps", "fuse_silu"))
def group_norm_nhwc(x, gamma, beta, *, groups=32, eps=1e-5, fuse_silu=False):
    """Two-pass, HW-tiled GroupNorm (+optional fused SiLU) on bf16 activations."""
    B, H, W, C = x.shape
    HW = H * W
    G = groups
    Cg = C // G
    xr = x.reshape(B, HW, C).astype(BF16)
    THW = _pick_hw_tile(HW, C)
    grid = (B, HW // THW)

    s1, s2 = pl.pallas_call(
        _gn_stats_kernel,
        grid=grid,
        in_specs=[pl.BlockSpec((1, THW, C), lambda b, t: (b, t, 0))],
        out_specs=[pl.BlockSpec((1, 1, C), lambda b, t: (b, 0, 0)),
                   pl.BlockSpec((1, 1, C), lambda b, t: (b, 0, 0))],
        out_shape=[jax.ShapeDtypeStruct((B, 1, C), F32),
                   jax.ShapeDtypeStruct((B, 1, C), F32)],
        compiler_params=_cparams("parallel", "arbitrary"),
    )(xr)

    inv_n = 1.0 / float(HW * Cg)
    s1g = s1.reshape(B, G, Cg).sum(-1)
    s2g = s2.reshape(B, G, Cg).sum(-1)
    mean = s1g * inv_n
    var = jnp.maximum(s2g * inv_n - mean * mean, 0.0)
    rstd = jax.lax.rsqrt(var + eps)
    mean_c = jnp.repeat(mean, Cg, axis=1)
    rstd_c = jnp.repeat(rstd, Cg, axis=1)
    scale = gamma[None, :] * rstd_c
    shift = beta[None, :] - mean_c * scale

    out = pl.pallas_call(
        partial(_gn_apply_kernel, fuse_silu=fuse_silu),
        grid=grid,
        in_specs=[
            pl.BlockSpec((1, THW, C), lambda b, t: (b, t, 0)),
            pl.BlockSpec((1, 1, C), lambda b, t: (b, 0, 0)),
            pl.BlockSpec((1, 1, C), lambda b, t: (b, 0, 0)),
        ],
        out_specs=pl.BlockSpec((1, THW, C), lambda b, t: (b, t, 0)),
        out_shape=jax.ShapeDtypeStruct((B, HW, C), BF16),
        compiler_params=_cparams("parallel", "parallel"),
    )(xr, scale.reshape(B, 1, C), shift.reshape(B, 1, C))
    return out.reshape(B, H, W, C)


@partial(jax.jit, static_argnames=("eps",))
def layer_norm(x, gamma, beta, *, eps=1e-5):
    B, S, C = x.shape
    TS = _pick_hw_tile(S, C)
    return pl.pallas_call(
        partial(_layer_norm_kernel, eps=eps),
        grid=(B, S // TS),
        in_specs=[
            pl.BlockSpec((1, TS, C), lambda b, t: (b, t, 0)),
            pl.BlockSpec((1, C), lambda b, t: (0, 0)),
            pl.BlockSpec((1, C), lambda b, t: (0, 0)),
        ],
        out_specs=pl.BlockSpec((1, TS, C), lambda b, t: (b, t, 0)),
        out_shape=jax.ShapeDtypeStruct((B, S, C), BF16),
        compiler_params=_cparams("parallel", "parallel"),
    )(x.astype(BF16), gamma.reshape(1, C), beta.reshape(1, C))


@jax.jit
def flash_attention(q, k, v):
    """q: (BH, Sq, dh), k/v: (BH, Skv, dh) bf16 -> (BH, Sq, dh) bf16.

    Flash-style: grid over (batch*head, q-tile, kv-tile) with online softmax;
    scores never materialized, so S=4096 fits on every TPU generation.
    """
    BH, Sq, dh = q.shape
    Skv = k.shape[1]
    scale = 1.0 / math.sqrt(dh)
    TQ = _pick_tile(Sq, (128, 64, 32, 16, 8))
    TK = _pick_tile(Skv, (512, 256, 128))
    return pl.pallas_call(
        partial(_flash_attn_kernel, scale=scale),
        grid=(BH, Sq // TQ, Skv // TK),
        in_specs=[
            pl.BlockSpec((1, TQ, dh), lambda b, i, j: (b, i, 0)),
            pl.BlockSpec((1, TK, dh), lambda b, i, j: (b, j, 0)),
            pl.BlockSpec((1, TK, dh), lambda b, i, j: (b, j, 0)),
        ],
        out_specs=pl.BlockSpec((1, TQ, dh), lambda b, i, j: (b, i, 0)),
        out_shape=jax.ShapeDtypeStruct((BH, Sq, dh), BF16),
        scratch_shapes=[pltpu.VMEM((TQ, 1), jnp.float32),
                        pltpu.VMEM((TQ, 1), jnp.float32),
                        pltpu.VMEM((TQ, dh), jnp.float32)],
        compiler_params=_cparams("parallel", "parallel", "arbitrary"),
    )(q.astype(BF16), k.astype(BF16), v.astype(BF16))


# ----------------------------------------------------------------------------
# Layers (JAX glue around the Pallas hot paths)
# ----------------------------------------------------------------------------
def _split_heads(x2d, B, S, nh, dh):
    # (B*S, nh*dh) -> (B*nh, S, dh)   (bf16 transpose; TODO(synk): index-map heads)
    return x2d.reshape(B, S, nh, dh).transpose(0, 2, 1, 3).reshape(B * nh, S, dh)


def _merge_heads(o, B, S, nh, dh):
    return o.reshape(B, nh, S, dh).transpose(0, 2, 1, 3).reshape(B * S, nh * dh)


def self_attention(x, p, n_heads, residual):
    B, S, C = x.shape
    dh = C // n_heads
    qkv = matmul_bias(x.reshape(B * S, C), p["attn1_in"]["w"],
                      p["attn1_in"]["b"])                      # (B*S, 3C) bf16
    q = _split_heads(qkv[:, :C], B, S, n_heads, dh)
    k = _split_heads(qkv[:, C:2 * C], B, S, n_heads, dh)
    v = _split_heads(qkv[:, 2 * C:], B, S, n_heads, dh)
    o = flash_attention(q, k, v)                               # (B*nh, S, dh)
    o = _merge_heads(o, B, S, n_heads, dh)
    out = matmul_bias(o, p["attn1_out"]["w"], p["attn1_out"]["b"],
                      residual=residual.reshape(B * S, C))
    return out.reshape(B, S, C)


def cross_attention(x, ctx, p, n_heads, residual):
    B, S, C = x.shape
    Bc, Sk, Dc = ctx.shape
    dh = C // n_heads
    q = matmul_bias(x.reshape(B * S, C), p["attn2_q"]["w"], p["attn2_q"]["b"])
    k = matmul_bias(ctx.reshape(Bc * Sk, Dc), p["attn2_k"]["w"], p["attn2_k"]["b"])
    v = matmul_bias(ctx.reshape(Bc * Sk, Dc), p["attn2_v"]["w"], p["attn2_v"]["b"])
    q = _split_heads(q, B, S, n_heads, dh)
    k = _split_heads(k, Bc, Sk, n_heads, dh)
    v = _split_heads(v, Bc, Sk, n_heads, dh)
    o = flash_attention(q, k, v)
    o = _merge_heads(o, B, S, n_heads, dh)
    out = matmul_bias(o, p["attn2_out"]["w"], p["attn2_out"]["b"],
                      residual=residual.reshape(B * S, C))
    return out.reshape(B, S, C)


def residual_block(x, time, p):
    h = group_norm_nhwc(x, p["gn1"]["g"], p["gn1"]["b"], eps=1e-5, fuse_silu=True)
    t = time * jax.nn.sigmoid(time)                    # tiny (1,1280) SiLU glue
    tproj = matmul_bias(t, p["linear_time"]["w"], p["linear_time"]["b"])
    cb = p["conv_feature"]["b"]
    if tproj.shape[0] == 1:
        # time bias is uniform over batch/space -> fold into the conv bias
        h = conv3x3(h, p["conv_feature"]["w"], cb + tproj[0])
    else:
        h = conv3x3(h, p["conv_feature"]["w"], cb)
        h = h + tproj[:, None, None, :]
    m = group_norm_nhwc(h, p["gn2"]["g"], p["gn2"]["b"], eps=1e-5, fuse_silu=True)
    if p["res_conv"] is None:
        res = x
    else:
        res = conv1x1(x, p["res_conv"]["w"], p["res_conv"]["b"])
    return conv3x3(m, p["conv_merged"]["w"], p["conv_merged"]["b"], residual=res)


def attention_block(x, ctx, p):
    nh = p["n_head"]
    B, H, W, C = x.shape
    S = H * W
    res_long = x.reshape(B * S, C)
    h = group_norm_nhwc(x, p["gn"]["g"], p["gn"]["b"], eps=1e-6, fuse_silu=False)
    h = matmul_bias(h.reshape(B * S, C), p["conv_in"]["w"],
                    p["conv_in"]["b"]).reshape(B, S, C)
    res_short = h
    h = layer_norm(h, p["ln1"]["g"], p["ln1"]["b"])
    h = self_attention(h, p, nh, res_short)
    res_short = h
    h = layer_norm(h, p["ln2"]["g"], p["ln2"]["b"])
    h = cross_attention(h, ctx, p, nh, res_short)
    res_short = h
    h = layer_norm(h, p["ln3"]["g"], p["ln3"]["b"])
    g = geglu_matmul(h.reshape(B * S, C), p["geglu_a"]["w"], p["geglu_g"]["w"],
                     p["geglu_a"]["b"], p["geglu_g"]["b"])       # (B*S, 4C)
    h = matmul_bias(g, p["geglu2"]["w"], p["geglu2"]["b"],
                    residual=res_short.reshape(B * S, C))
    out = matmul_bias(h, p["conv_out"]["w"], p["conv_out"]["b"],
                      residual=res_long)
    return out.reshape(B, H, W, C)


def upsample(x, p):
    # TODO(synk): fuse the nearest-2x upsample into conv3x3 via the input
    # index_map instead of materializing the repeated tensor (bf16 for now).
    x = jnp.repeat(jnp.repeat(x.astype(BF16), 2, axis=1), 2, axis=2)
    return conv3x3(x, p["w"], p["b"])


# ----------------------------------------------------------------------------
# Deterministic parameter construction (PyTorch-default-style uniform init)
# ----------------------------------------------------------------------------
class ParamRNG:
    def __init__(self, seed):
        self._key = jax.random.PRNGKey(seed)
        self._i = 0

    def next(self):
        self._i += 1
        return jax.random.fold_in(self._key, self._i)


def init_linear(rng, fin, fout, bias=True):
    bound = 1.0 / math.sqrt(fin)
    w = jax.random.uniform(rng.next(), (fin, fout), F32, -bound, bound).astype(BF16)
    if bias:
        b = jax.random.uniform(rng.next(), (fout,), F32, -bound, bound)
    else:
        b = jnp.zeros((fout,), F32)
    return {"w": w, "b": b}


def init_conv3(rng, cin, cout):
    bound = 1.0 / math.sqrt(cin * 9)
    w = jax.random.uniform(rng.next(), (3, 3, cin, cout), F32, -bound, bound).astype(BF16)
    b = jax.random.uniform(rng.next(), (cout,), F32, -bound, bound)
    return {"w": w, "b": b}


def init_conv1(rng, cin, cout):
    bound = 1.0 / math.sqrt(cin)
    w = jax.random.uniform(rng.next(), (cin, cout), F32, -bound, bound).astype(BF16)
    b = jax.random.uniform(rng.next(), (cout,), F32, -bound, bound)
    return {"w": w, "b": b}


def init_norm(c):
    return {"g": jnp.ones((c,), F32), "b": jnp.zeros((c,), F32)}


def init_residual_block(rng, in_c, out_c, n_time=1280):
    return {
        "gn1": init_norm(in_c),
        "conv_feature": init_conv3(rng, in_c, out_c),
        "linear_time": init_linear(rng, n_time, out_c),
        "gn2": init_norm(out_c),
        "conv_merged": init_conv3(rng, out_c, out_c),
        "res_conv": None if in_c == out_c else init_conv1(rng, in_c, out_c),
    }


def init_attention_block(rng, n_head, n_embd, d_context=768):
    c = n_head * n_embd
    return {
        "n_head": n_head,
        "gn": init_norm(c),
        "conv_in": init_conv1(rng, c, c),
        "ln1": init_norm(c),
        "attn1_in": init_linear(rng, c, 3 * c, bias=False),
        "attn1_out": init_linear(rng, c, c),
        "ln2": init_norm(c),
        "attn2_q": init_linear(rng, c, c, bias=False),
        "attn2_k": init_linear(rng, d_context, c, bias=False),
        "attn2_v": init_linear(rng, d_context, c, bias=False),
        "attn2_out": init_linear(rng, c, c),
        "ln3": init_norm(c),
        "geglu_a": init_linear(rng, c, 4 * c),
        "geglu_g": init_linear(rng, c, 4 * c),
        "geglu2": init_linear(rng, 4 * c, c),
        "conv_out": init_conv1(rng, c, c),
    }


def build_unet_params(rng):
    def res(i, o): return ("res", init_residual_block(rng, i, o))
    def attn(h, e): return ("attn", init_attention_block(rng, h, e))
    def conv3(i, o): return ("conv3", init_conv3(rng, i, o))
    def conv3s2(i, o): return ("conv_s2", init_conv3(rng, i, o))
    def up(c): return ("up", init_conv3(rng, c, c))

    encoders = [
        [conv3(4, 320)],
        [res(320, 320), attn(8, 40)],
        [res(320, 320), attn(8, 40)],
        [conv3s2(320, 320)],
        [res(320, 640), attn(8, 80)],
        [res(640, 640), attn(8, 80)],
        [conv3s2(640, 640)],
        [res(640, 1280), attn(8, 160)],
        [res(1280, 1280), attn(8, 160)],
        [conv3s2(1280, 1280)],
        [res(1280, 1280)],
        [res(1280, 1280)],
    ]
    bottleneck = [res(1280, 1280), attn(8, 160), res(1280, 1280)]
    decoders = [
        [res(2560, 1280)],
        [res(2560, 1280)],
        [res(2560, 1280), up(1280)],
        [res(2560, 1280), attn(8, 160)],
        [res(2560, 1280), attn(8, 160)],
        [res(1920, 1280), attn(8, 160), up(1280)],
        [res(1920, 640), attn(8, 80)],
        [res(1280, 640), attn(8, 80)],
        [res(960, 640), attn(8, 80), up(640)],
        [res(960, 320), attn(8, 40)],
        [res(640, 320), attn(8, 40)],
        [res(640, 320), attn(8, 40)],
    ]
    return {"encoders": encoders, "bottleneck": bottleneck, "decoders": decoders}


def apply_layer(kind, p, x, ctx, time):
    if kind == "res":
        return residual_block(x, time, p)
    if kind == "attn":
        return attention_block(x, ctx, p)
    if kind == "conv3":
        return conv3x3(x, p["w"], p["b"])
    if kind == "conv_s2":
        return conv3x3_stride2(x, p["w"], p["b"])
    if kind == "up":
        return upsample(x, p)
    raise ValueError(kind)


def unet_forward(params, x_nchw, context, time):
    x = jnp.transpose(x_nchw, (0, 2, 3, 1))          # NCHW -> NHWC (once)
    context = context.astype(BF16)
    skips = []
    for block in params["encoders"]:
        for kind, p in block:
            x = apply_layer(kind, p, x, context, time)
        skips.append(x)
    for kind, p in params["bottleneck"]:
        x = apply_layer(kind, p, x, context, time)
    for block in params["decoders"]:
        # TODO(synk): feed the skip as a second channel-split input to the
        # consuming GroupNorm/conv instead of materializing the concat.
        x = jnp.concatenate([x.astype(BF16), skips.pop().astype(BF16)], axis=-1)
        for kind, p in block:
            x = apply_layer(kind, p, x, context, time)
    return jnp.transpose(x, (0, 3, 1, 2)).astype(F32)  # NHWC -> NCHW (once)


# ----------------------------------------------------------------------------
if __name__ == "__main__":
    B, H, W = 2, 16, 16
    SEQ, D_CTX, N_TIME = 8, 768, 1280

    key = jax.random.PRNGKey(0)
    kx, kc, kt = jax.random.split(key, 3)
    x = jax.random.normal(kx, (B, 4, H, W), F32)
    context = jax.random.normal(kc, (B, SEQ, D_CTX), F32)
    time = jax.random.normal(kt, (1, N_TIME), F32)

    params = build_unet_params(ParamRNG(1234))

    out = unet_forward(params, x, context, time)
    out = jax.block_until_ready(out)
    assert out.shape == (B, 320, H, W), out.shape
    assert bool(jnp.all(jnp.isfinite(out)))
    print("KERNEL_OK")
</pallas_src>

<mosaic_0001>
module attributes {stable_mosaic.version = 11 : i64} {
  func.func @_conv3x3_kernel(%arg0: i32, %arg1: i32, %arg2: i32, %arg3: memref<1x18x18x4xbf16, #tpu.memory_space<vmem>>, %arg4: memref<3x3x4x320xbf16, #tpu.memory_space<vmem>>, %arg5: memref<1x320xf32, #tpu.memory_space<vmem>>, %arg6: memref<1x16x16x320xbf16, #tpu.memory_space<vmem>>, %arg7: memref<256x320xf32, #tpu.memory_space<vmem>>) attributes {dimension_semantics = [#tpu.dimension_semantics<parallel>, #tpu.dimension_semantics<parallel>, #tpu.dimension_semantics<arbitrary>], iteration_bounds = array<i64: 2, 1, 1>, scalar_prefetch = 0 : i64, scratch_operands = 1 : i64, tpu.core_type = #tpu.core_type<tc>, window_params = [{transform_indices = @transform_0, window_bounds = array<i64: 1, 18, 18, 4>}, {transform_indices = @transform_1, window_bounds = array<i64: 3, 3, 4, 320>}, {transform_indices = @transform_2, window_bounds = array<i64: 1, 320>}, {transform_indices = @transform_3, window_bounds = array<i64: 1, 16, 16, 320>}]} {
    %c0_i32 = arith.constant 0 : i32
    %0 = arith.cmpi eq, %arg2, %c0_i32 : i32
    %1 = arith.extui %0 : i1 to i32
    %c0_i32_0 = arith.constant 0 : i32
    %2 = arith.cmpi ne, %1, %c0_i32_0 : i32
    scf.if %2 {
      %c0_116 = arith.constant 0 : index
      %c0_117 = arith.constant 0 : index
      %87 = vector.load %arg5[%c0_116, %c0_117] : memref<1x320xf32, #tpu.memory_space<vmem>>, vector<1x320xf32>
      %88 = vector.shape_cast %87 : vector<1x320xf32> to vector<1x320xf32>
      %89 = vector.broadcast %88 : vector<1x320xf32> to vector<256x320xf32>
      %c0_118 = arith.constant 0 : index
      %c0_119 = arith.constant 0 : index
      %90 = vector.load %arg7[%c0_118, %c0_119] : memref<256x320xf32, #tpu.memory_space<vmem>>, vector<256x320xf32>
      tpu.vector_store %arg7[%c0_118, %c0_119], %89 {strides = array<i32>} : memref<256x320xf32, #tpu.memory_space<vmem>>, vector<256x320xf32>,
    } else {
    }
    %c0 = arith.constant 0 : index
    %c0_1 = arith.constant 0 : index
    %c0_2 = arith.constant 0 : index
    %c0_3 = arith.constant 0 : index
    %3 = vector.load %arg3[%c0, %c0_1, %c0_2, %c0_3] : memref<1x18x18x4xbf16, #tpu.memory_space<vmem>>, vector<1x16x16x4xbf16>
    %4 = vector.shape_cast %3 : vector<1x16x16x4xbf16> to vector<16x16x4xbf16>
    %5 = vector.shape_cast %4 : vector<16x16x4xbf16> to vector<256x4xbf16>
    %c0_4 = arith.constant 0 : index
    %c0_5 = arith.constant 0 : index
    %6 = vector.load %arg7[%c0_4, %c0_5] : memref<256x320xf32, #tpu.memory_space<vmem>>, vector<256x320xf32>
    %c0_6 = arith.constant 0 : index
    %c0_7 = arith.constant 0 : index
    %c0_8 = arith.constant 0 : index
    %c0_9 = arith.constant 0 : index
    %7 = vector.load %arg4[%c0_6, %c0_7, %c0_8, %c0_9] : memref<3x3x4x320xbf16, #tpu.memory_space<vmem>>, vector<1x1x4x320xbf16>
    %8 = vector.shape_cast %7 : vector<1x1x4x320xbf16> to vector<4x320xbf16>
    %cst = arith.constant dense<0.000000e+00> : vector<256x320xf32>
    %9 = tpu.matmul %5, %8, %cst {dimension_numbers = #tpu.dot_dimension_numbers<[1], [0], [0], [1], [0, 0, 1, 1], [], []>} : vector<256x4xbf16>, vector<4x320xbf16>, vector<256x320xf32> -> vector<256x320xf32>
    %10 = arith.addf %6, %9 : vector<256x320xf32>
    %c0_10 = arith.constant 0 : index
    %c0_11 = arith.constant 0 : index
    %11 = vector.load %arg7[%c0_10, %c0_11] : memref<256x320xf32, #tpu.memory_space<vmem>>, vector<256x320xf32>
    tpu.vector_store %arg7[%c0_10, %c0_11], %10 {strides = array<i32>} : memref<256x320xf32, #tpu.memory_space<vmem>>, vector<256x320xf32>,
    %c0_12 = arith.constant 0 : index
    %c0_13 = arith.constant 0 : index
    %c1 = arith.constant 1 : index
    %c0_14 = arith.constant 0 : index
    %12 = vector.load %arg3[%c0_12, %c0_13, %c1, %c0_14] : memref<1x18x18x4xbf16, #tpu.memory_space<vmem>>, vector<1x16x16x4xbf16>
    %13 = vector.shape_cast %12 : vector<1x16x16x4xbf16> to vector<16x16x4xbf16>
    %14 = vector.shape_cast %13 : vector<16x16x4xbf16> to vector<256x4xbf16>
    %c0_15 = arith.constant 0 : index
    %c0_16 = arith.constant 0 : index
    %15 = vector.load %arg7[%c0_15, %c0_16] : memref<256x320xf32, #tpu.memory_space<vmem>>, vector<256x320xf32>
    %c0_17 = arith.constant 0 : index
    %c1_18 = arith.constant 1 : index
    %c0_19 = arith.constant 0 : index
    %c0_20 = arith.constant 0 : index
    %16 = vector.load %arg4[%c0_17, %c1_18, %c0_19, %c0_20] : memref<3x3x4x320xbf16, #tpu.memory_space<vmem>>, vector<1x1x4x320xbf16>
    %17 = vector.shape_cast %16 : vector<1x1x4x320xbf16> to vector<4x320xbf16>
    %cst_21 = arith.constant dense<0.000000e+00> : vector<256x320xf32>
    %18 = tpu.matmul %14, %17, %cst_21 {dimension_numbers = #tpu.dot_dimension_numbers<[1], [0], [0], [1], [0, 0, 1, 1], [], []>} : vector<256x4xbf16>, vector<4x320xbf16>, vector<256x320xf32> -> vector<256x320xf32>
    %19 = arith.addf %15, %18 : vector<256x320xf32>
    %c0_22 = arith.constant 0 : index
    %c0_23 = arith.constant 0 : index
    %20 = vector.load %arg7[%c0_22, %c0_23] : memref<256x320xf32, #tpu.memory_space<vmem>>, vector<256x320xf32>
    tpu.vector_store %arg7[%c0_22, %c0_23], %19 {strides = array<i32>} : memref<256x320xf32, #tpu.memory_space<vmem>>, vector<256x320xf32>,
    %c0_24 = arith.constant 0 : index
    %c0_25 = arith.constant 0 : index
    %c2 = arith.constant 2 : index
    %c0_26 = arith.constant 0 : index
    %21 = vector.load %arg3[%c0_24, %c0_25, %c2, %c0_26] : memref<1x18x18x4xbf16, #tpu.memory_space<vmem>>, vector<1x16x16x4xbf16>
    %22 = vector.shape_cast %21 : vector<1x16x16x4xbf16> to vector<16x16x4xbf16>
    %23 = vector.shape_cast %22 : vector<16x16x4xbf16> to vector<256x4xbf16>
    %c0_27 = arith.constant 0 : index
    %c0_28 = arith.constant 0 : index
    %24 = vector.load %arg7[%c0_27, %c0_28] : memref<256x320xf32, #tpu.memory_space<vmem>>, vector<256x320xf32>
    %c0_29 = arith.constant 0 : index
    %c2_30 = arith.constant 2 : index
    %c0_31 = arith.constant 0 : index
    %c0_32 = arith.constant 0 : index
    %25 = vector.load %arg4[%c0_29, %c2_30, %c0_31, %c0_32] : memref<3x3x4x320xbf16, #tpu.memory_space<vmem>>, vector<1x1x4x320xbf16>
    %26 = vector.shape_cast %25 : vector<1x1x4x320xbf16> to vector<4x320xbf16>
    %cst_33 = arith.constant dense<0.000000e+00> : vector<256x320xf32>
    %27 = tpu.matmul %23, %26, %cst_33 {dimension_numbers = #tpu.dot_dimension_numbers<[1], [0], [0], [1], [0, 0, 1, 1], [], []>} : vector<256x4xbf16>, vector<4x320xbf16>, vector<256x320xf32> -> vector<256x320xf32>
    %28 = arith.addf %24, %27 : vector<256x320xf32>
    %c0_34 = arith.constant 0 : index
    %c0_35 = arith.constant 0 : index
    %29 = vector.load %arg7[%c0_34, %c0_35] : memref<256x320xf32, #tpu.memory_space<vmem>>, vector<256x320xf32>
    tpu.vector_store %arg7[%c0_34, %c0_35], %28 {strides = array<i32>} : memref<256x320xf32, #tpu.memory_space<vmem>>, vector<256x320xf32>,
    %c0_36 = arith.constant 0 : index
    %c1_37 = arith.constant 1 : index
    %c0_38 = arith.constant 0 : index
    %c0_39 = arith.constant 0 : index
    %30 = vector.load %arg3[%c0_36, %c1_37, %c0_38, %c0_39] : memref<1x18x18x4xbf16, #tpu.memory_space<vmem>>, vector<1x16x16x4xbf16>
    %31 = vector.shape_cast %30 : vector<1x16x16x4xbf16> to vector<16x16x4xbf16>
    %32 = vector.shape_cast %31 : vector<16x16x4xbf16> to vector<256x4xbf16>
    %c0_40 = arith.constant 0 : index
    %c0_41 = arith.constant 0 : index
    %33 = vector.load %arg7[%c0_40, %c0_41] : memref<256x320xf32, #tpu.memory_space<vmem>>, vector<256x320xf32>
    %c1_42 = arith.constant 1 : index
    %c0_43 = arith.constant 0 : index
    %c0_44 = arith.constant 0 : index
    %c0_45 = arith.constant 0 : index
    %34 = vector.load %arg4[%c1_42, %c0_43, %c0_44, %c0_45] : memref<3x3x4x320xbf16, #tpu.memory_space<vmem>>, vector<1x1x4x320xbf16>
    %35 = vector.shape_cast %34 : vector<1x1x4x320xbf16> to vector<4x320xbf16>
    %cst_46 = arith.constant dense<0.000000e+00> : vector<256x320xf32>
    %36 = tpu.matmul %32, %35, %cst_46 {dimension_numbers = #tpu.dot_dimension_numbers<[1], [0], [0], [1], [0, 0, 1, 1], [], []>} : vector<256x4xbf16>, vector<4x320xbf16>, vector<256x320xf32> -> vector<256x320xf32>
    %37 = arith.addf %33, %36 : vector<256x320xf32>
    %c0_47 = arith.constant 0 : index
    %c0_48 = arith.constant 0 : index
    %38 = vector.load %arg7[%c0_47, %c0_48] : memref<256x320xf32, #tpu.memory_space<vmem>>, vector<256x320xf32>
    tpu.vector_store %arg7[%c0_47, %c0_48], %37 {strides = array<i32>} : memref<256x320xf32, #tpu.memory_space<vmem>>, vector<256x320xf32>,
    %c0_49 = arith.constant 0 : index
    %c1_50 = arith.constant 1 : index
    %c1_51 = arith.constant 1 : index
    %c0_52 = arith.constant 0 : index
    %39 = vector.load %arg3[%c0_49, %c1_50, %c1_51, %c0_52] : memref<1x18x18x4xbf16, #tpu.memory_space<vmem>>, vector<1x16x16x4xbf16>
    %40 = vector.shape_cast %39 : vector<1x16x16x4xbf16> to vector<16x16x4xbf16>
    %41 = vector.shape_cast %40 : vector<16x16x4xbf16> to vector<256x4xbf16>
    %c0_53 = arith.constant 0 : index
    %c0_54 = arith.constant 0 : index
    %42 = vector.load %arg7[%c0_53, %c0_54] : memref<256x320xf32, #tpu.memory_space<vmem>>, vector<256x320xf32>
    %c1_55 = arith.constant 1 : index
    %c1_56 = arith.constant 1 : index
    %c0_57 = arith.constant 0 : index
    %c0_58 = arith.constant 0 : index
    %43 = vector.load %arg4[%c1_55, %c1_56, %c0_57, %c0_58] : memref<3x3x4x320xbf16, #tpu.memory_space<vmem>>, vector<1x1x4x320xbf16>
    %44 = vector.shape_cast %43 : vector<1x1x4x320xbf16> to vector<4x320xbf16>
    %cst_59 = arith.constant dense<0.000000e+00> : vector<256x320xf32>
    %45 = tpu.matmul %41, %44, %cst_59 {dimension_numbers = #tpu.dot_dimension_numbers<[1], [0], [0], [1], [0, 0, 1, 1], [], []>} : vector<256x4xbf16>, vector<4x320xbf16>, vector<256x320xf32> -> vector<256x320xf32>
    %46 = arith.addf %42, %45 : vector<256x320xf32>
    %c0_60 = arith.constant 0 : index
    %c0_61 = arith.constant 0 : index
    %47 = vector.load %arg7[%c0_60, %c0_61] : memref<256x320xf32, #tpu.memory_space<vmem>>, vector<256x320xf32>
    tpu.vector_store %arg7[%c0_60, %c0_61], %46 {strides = array<i32>} : memref<256x320xf32, #tpu.memory_space<vmem>>, vector<256x320xf32>,
    %c0_62 = arith.constant 0 : index
    %c1_63 = arith.constant 1 : index
    %c2_64 = arith.constant 2 : index
    %c0_65 = arith.constant 0 : index
    %48 = vector.load %arg3[%c0_62, %c1_63, %c2_64, %c0_65] : memref<1x18x18x4xbf16, #tpu.memory_space<vmem>>, vector<1x16x16x4xbf16>
    %49 = vector.shape_cast %48 : vector<1x16x16x4xbf16> to vector<16x16x4xbf16>
    %50 = vector.shape_cast %49 : vector<16x16x4xbf16> to vector<256x4xbf16>
    %c0_66 = arith.constant 0 : index
    %c0_67 = arith.constant 0 : index
    %51 = vector.load %arg7[%c0_66, %c0_67] : memref<256x320xf32, #tpu.memory_space<vmem>>, vector<256x320xf32>
    %c1_68 = arith.constant 1 : index
    %c2_69 = arith.constant 2 : index
    %c0_70 = arith.constant 0 : index
    %c0_71 = arith.constant 0 : index
    %52 = vector.load %arg4[%c1_68, %c2_69, %c0_70, %c0_71] : memref<3x3x4x320xbf16, #tpu.memory_space<vmem>>, vector<1x1x4x320xbf16>
    %53 = vector.shape_cast %52 : vector<1x1x4x320xbf16> to vector<4x320xbf16>
    %cst_72 = arith.constant dense<0.000000e+00> : vector<256x320xf32>
    %54 = tpu.matmul %50, %53, %cst_72 {dimension_numbers = #tpu.dot_dimension_numbers<[1], [0], [0], [1], [0, 0, 1, 1], [], []>} : vector<256x4xbf16>, vector<4x320xbf16>, vector<256x320xf32> -> vector<256x320xf32>
    %55 = arith.addf %51, %54 : vector<256x320xf32>
    %c0_73 = arith.constant 0 : index
    %c0_74 = arith.constant 0 : index
    %56 = vector.load %arg7[%c0_73, %c0_74] : memref<256x320xf32, #tpu.memory_space<vmem>>, vector<256x320xf32>
    tpu.vector_store %arg7[%c0_73, %c0_74], %55 {strides = array<i32>} : memref<256x320xf32, #tpu.memory_space<vmem>>, vector<256x320xf32>,
    %c0_75 = arith.constant 0 : index
    %c2_76 = arith.constant 2 : index
    %c0_77 = arith.constant 0 : index
    %c0_78 = arith.constant 0 : index
    %57 = vector.load %arg3[%c0_75, %c2_76, %c0_77, %c0_78] : memref<1x18x18x4xbf16, #tpu.memory_space<vmem>>, vector<1x16x16x4xbf16>
    %58 = vector.shape_cast %57 : vector<1x16x16x4xbf16> to vector<16x16x4xbf16>
    %59 = vector.shape_cast %58 : vector<16x16x4xbf16> to vector<256x4xbf16>
    %c0_79 = arith.constant 0 : index
    %c0_80 = arith.constant 0 : index
    %60 = vector.load %arg7[%c0_79, %c0_80] : memref<256x320xf32, #tpu.memory_space<vmem>>, vector<256x320xf32>
    %c2_81 = arith.constant 2 : index
    %c0_82 = arith.constant 0 : index
    %c0_83 = arith.constant 0 : index
    %c0_84 = arith.constant 0 : index
    %61 = vector.load %arg4[%c2_81, %c0_82, %c0_83, %c0_84] : memref<3x3x4x320xbf16, #tpu.memory_space<vmem>>, vector<1x1x4x320xbf16>
    %62 = vector.shape_cast %61 : vector<1x1x4x320xbf16> to vector<4x320xbf16>
    %cst_85 = arith.constant dense<0.000000e+00> : vector<256x320xf32>
    %63 = tpu.matmul %59, %62, %cst_85 {dimension_numbers = #tpu.dot_dimension_numbers<[1], [0], [0], [1], [0, 0, 1, 1], [], []>} : vector<256x4xbf16>, vector<4x320xbf16>, vector<256x320xf32> -> vector<256x320xf32>
    %64 = arith.addf %60, %63 : vector<256x320xf32>
    %c0_86 = arith.constant 0 : index
    %c0_87 = arith.constant 0 : index
    %65 = vector.load %arg7[%c0_86, %c0_87] : memref<256x320xf32, #tpu.memory_space<vmem>>, vector<256x320xf32>
    tpu.vector_store %arg7[%c0_86, %c0_87], %64 {strides = array<i32>} : memref<256x320xf32, #tpu.memory_space<vmem>>, vector<256x320xf32>,
    %c0_88 = arith.constant 0 : index
    %c2_89 = arith.constant 2 : index
    %c1_90 = arith.constant 1 : index
    %c0_91 = arith.constant 0 : index
    %66 = vector.load %arg3[%c0_88, %c2_89, %c1_90, %c0_91] : memref<1x18x18x4xbf16, #tpu.memory_space<vmem>>, vector<1x16x16x4xbf16>
    %67 = vector.shape_cast %66 : vector<1x16x16x4xbf16> to vector<16x16x4xbf16>
    %68 = vector.shape_cast %67 : vector<16x16x4xbf16> to vector<256x4xbf16>
    %c0_92 = arith.constant 0 : index
    %c0_93 = arith.constant 0 : index
    %69 = vector.load %arg7[%c0_92, %c0_93] : memref<256x320xf32, #tpu.memory_space<vmem>>, vector<256x320xf32>
    %c2_94 = arith.constant 2 : index
    %c1_95 = arith.constant 1 : index
    %c0_96 = arith.constant 0 : index
    %c0_97 = arith.constant 0 : index
    %70 = vector.load %arg4[%c2_94, %c1_95, %c0_96, %c0_97] : memref<3x3x4x320xbf16, #tpu.memory_space<vmem>>, vector<1x1x4x320xbf16>
    %71 = vector.shape_cast %70 : vector<1x1x4x320xbf16> to vector<4x320xbf16>
    %cst_98 = arith.constant dense<0.000000e+00> : vector<256x320xf32>
    %72 = tpu.matmul %68, %71, %cst_98 {dimension_numbers = #tpu.dot_dimension_numbers<[1], [0], [0], [1], [0, 0, 1, 1], [], []>} : vector<256x4xbf16>, vector<4x320xbf16>, vector<256x320xf32> -> vector<256x320xf32>
    %73 = arith.addf %69, %72 : vector<256x320xf32>
    %c0_99 = arith.constant 0 : index
    %c0_100 = arith.constant 0 : index
    %74 = vector.load %arg7[%c0_99, %c0_100] : memref<256x320xf32, #tpu.memory_space<vmem>>, vector<256x320xf32>
    tpu.vector_store %arg7[%c0_99, %c0_100], %73 {strides = array<i32>} : memref<256x320xf32, #tpu.memory_space<vmem>>, vector<256x320xf32>,
    %c0_101 = arith.constant 0 : index
    %c2_102 = arith.constant 2 : index
    %c2_103 = arith.constant 2 : index
    %c0_104 = arith.constant 0 : index
    %75 = vector.load %arg3[%c0_101, %c2_102, %c2_103, %c0_104] : memref<1x18x18x4xbf16, #tpu.memory_space<vmem>>, vector<1x16x16x4xbf16>
    %76 = vector.shape_cast %75 : vector<1x16x16x4xbf16> to vector<16x16x4xbf16>
    %77 = vector.shape_cast %76 : vector<16x16x4xbf16> to vector<256x4xbf16>
    %c0_105 = arith.constant 0 : index
    %c0_106 = arith.constant 0 : index
    %78 = vector.load %arg7[%c0_105, %c0_106] : memref<256x320xf32, #tpu.memory_space<vmem>>, vector<256x320xf32>
    %c2_107 = arith.constant 2 : index
    %c2_108 = arith.constant 2 : index
    %c0_109 = arith.constant 0 : index
    %c0_110 = arith.constant 0 : index
    %79 = vector.load %arg4[%c2_107, %c2_108, %c0_109, %c0_110] : memref<3x3x4x320xbf16, #tpu.memory_space<vmem>>, vector<1x1x4x320xbf16>
    %80 = vector.shape_cast %79 : vector<1x1x4x320xbf16> to vector<4x320xbf16>
    %cst_111 = arith.constant dense<0.000000e+00> : vector<256x320xf32>
    %81 = tpu.matmul %77, %80, %cst_111 {dimension_numbers = #tpu.dot_dimension_numbers<[1], [0], [0], [1], [0, 0, 1, 1], [], []>} : vector<256x4xbf16>, vector<4x320xbf16>, vector<256x320xf32> -> vector<256x320xf32>
    %82 = arith.addf %78, %81 : vector<256x320xf32>
    %c0_112 = arith.constant 0 : index
    %c0_113 = arith.constant 0 : index
    %83 = vector.load %arg7[%c0_112, %c0_113] : memref<256x320xf32, #tpu.memory_space<vmem>>, vector<256x320xf32>
    tpu.vector_store %arg7[%c0_112, %c0_113], %82 {strides = array<i32>} : memref<256x320xf32, #tpu.memory_space<vmem>>, vector<256x320xf32>,
    %c0_i32_114 = arith.constant 0 : i32
    %84 = arith.cmpi eq, %arg2, %c0_i32_114 : i32
    %85 = arith.extui %84 : i1 to i32
    %c0_i32_115 = arith.constant 0 : i32
    %86 = arith.cmpi ne, %85, %c0_i32_115 : i32
    scf.if %86 {
      %c0_116 = arith.constant 0 : index
      %c0_117 = arith.constant 0 : index
      %87 = vector.load %arg7[%c0_116, %c0_117] : memref<256x320xf32, #tpu.memory_space<vmem>>, vector<256x320xf32>
      %88 = vector.shape_cast %87 : vector<256x320xf32> to vector<16x16x320xf32>
      %89 = arith.truncf %88 : vector<16x16x320xf32> to vector<16x16x320xbf16>
      %c0_118 = arith.constant 0 : index
      %c0_119 = arith.constant 0 : index
      %c0_120 = arith.constant 0 : index
      %c0_121 = arith.constant 0 : index
      %90 = vector.load %arg6[%c0_118, %c0_119, %c0_120, %c0_121] : memref<1x16x16x320xbf16, #tpu.memory_space<vmem>>, vector<1x16x16x320xbf16>
      %91 = vector.shape_cast %90 : vector<1x16x16x320xbf16> to vector<16x16x320xbf16>
      %92 = vector.shape_cast %89 : vector<16x16x320xbf16> to vector<1x16x16x320xbf16>
      tpu.vector_store %arg6[%c0_118, %c0_119, %c0_120, %c0_121], %92 {strides = array<i32>} : memref<1x16x16x320xbf16, #tpu.memory_space<vmem>>, vector<1x16x16x320xbf16>,
    } else {
    }
    return
  }
  func.func @transform_0(%arg0: i32, %arg1: i32, %arg2: i32) -> (i32, i32, i32, i32) {
    %c0_i32 = arith.constant 0 : i32
    %c0_i32_0 = arith.constant 0 : i32
    %c0_i32_1 = arith.constant 0 : i32
    return %arg0, %c0_i32, %c0_i32_0, %arg2 : i32, i32, i32, i32
  }
  func.func @transform_1(%arg0: i32, %arg1: i32, %arg2: i32) -> (i32, i32, i32, i32) {
    %c0_i32 = arith.constant 0 : i32
    %c0_i32_0 = arith.constant 0 : i32
    %c0_i32_1 = arith.constant 0 : i32
    return %c0_i32, %c0_i32_0, %arg2, %arg1 : i32, i32, i32, i32
  }
  func.func @transform_2(%arg0: i32, %arg1: i32, %arg2: i32) -> (i32, i32) {
    %c0_i32 = arith.constant 0 : i32
    %c0_i32_0 = arith.constant 0 : i32
    return %c0_i32, %arg1 : i32, i32
  }
  func.func @transform_3(%arg0: i32, %arg1: i32, %arg2: i32) -> (i32, i32, i32, i32) {
    %c0_i32 = arith.constant 0 : i32
    %c0_i32_0 = arith.constant 0 : i32
    %c0_i32_1 = arith.constant 0 : i32
    return %arg0, %c0_i32, %c0_i32_0, %arg1 : i32, i32, i32, i32
  }
}

</mosaic_0001>

<llo_original>
// kernel: conv3x3.1
$region0: #{conv3x3.1}
  #allocation0 [shape = 'u32[]', space=smem, size = 0x4, offset = 0x4, fixed_abs, tag = 'smem constant byte address 0x4 - core index']
  #allocation1 [shape = 'u32[144,128]{1,0:T(1,128)}', space=vmem, size = 0x12000, scoped, tag = 'internal scratch']
  #allocation2 [shape = 'f32[256,320]{1,0:T(8,128)}', space=vmem, size = 0x60000, scoped, tag = 'scratch operand']
  %s0 = inlined_call_operand.vmem [shape: bf16[2,18,18,4], index: 0, kind: input, shape index: {}]
  %s1 = inlined_call_operand.vmem [shape: bf16[3,3,4,320], index: 1, kind: input, shape index: {}]
  %s2 = inlined_call_operand.vmem [shape: f32[1,320], index: 2, kind: input, shape index: {}]
  %s3 = inlined_call_operand.hbm [shape: bf16[2,16,16,320], index: 3, kind: output, shape index: {}]
  %s4 = sld [smem:[#allocation0]]
  $region53: #{conv3x3.1} parent=0
    _
  %s6 = ssub.s32 1, %s4
  %s7 = scalar_select 0, %s6, %s4
  $region1: #{conv3x3.1} parent=0
    #allocation3 [shape = 'u8[393216]{0}', space=vmem, size = 0x60000, scoped, tag = 'output window, operand 0']
    #allocation4 [shape = 's32[2]{0}', space=sflag, size = 0x8, scoped, tag = 'scoped memory for conv3x3.1']
    %8 = vsyncpa [#allocation4], 0
    %s9 = scalar_lea.sflag [#allocation4], 1
    %10 = vsyncpa %s9, 0
    loop: start=0, step=1, limit=4
    $region2: #{conv3x3.1} parent=1 // loop_pre_header
      _
    $region3: #{conv3x3.1} parent=1 // loop_header
      %s12 = sphi 0, %s16
      %p13 = scmp.ge.s32.totalorder %s12, 4
      %s19 = sphi 0, %s38
      %s20 = sphi 0, %s34
      %s21 = sphi 0, %s30
      %s22 = sphi 0, %s19
      %s23 = sphi 0, %s20
      %s24 = sphi 0, %s21
      %s25 = sphi 0, %s22
      %s26 = sphi 0, %s23
      %s27 = sphi 0, %s24
      %s43 = sphi 0, %s45
      %s46 = sphi 0, %s43
      %s47 = sphi 0, %s46
      %s63 = sphi 0, %s47
      %s71 = sphi 0, %s73
      %s74 = sphi 0, %s71
      %s75 = sphi 0, %s74
      %s91 = sphi 0, %s75
      %s97 = sphi 0, %s99
      %s100 = sphi 0, %s97
      %s101 = sphi 0, %s100
      %s117 = sphi 0, %s101
      %s125 = sphi 0, %s127
      %s128 = sphi 0, %s125
      %s129 = sphi 0, %s128
      %s145 = sphi 0, %s129
    $region4: #{conv3x3.1} parent=1 // loop_header_branch
      %15 = sbr.rel (%p13) target = $region8
    $region5: #{conv3x3.1} parent=1 // loop_body
      %s17 = ssub.s32 %s12, 1
      %s18 = ssub.s32 %s12, 2
      %s28 = sadd.s32 1, %s21
      %p29 = scmp.ge.s32.totalorder %s28, 1
      %s30 = scalar_select %p29, 0, %s28
      %s31 = sadd.s32 1, %s20
      %s32 = scalar_select %p29, %s31, %s20
      %p33 = scmp.ge.s32.totalorder %s32, 1
      %s34 = scalar_select %p33, 0, %s32
      %s35 = sadd.s32 1, %s19
      %s36 = scalar_select %p33, %s35, %s19
      %p37 = scmp.ge.s32.totalorder %s36, 2
      %s38 = scalar_select %p37, 0, %s36
      %s39 = ssub.s32 %s19, %s38
      %s40 = ssub.s32 %s21, %s30
      %s41 = sor.u32 %s39, %s40
      %p42 = scmp.eq.s32.totalorder %s41, 0
      %s44 = sadd.s32 %s43, 1
      %s45 = scalar_select %p42, %s43, %s44
      %p48 = pneg %p42
      %p49 = scmp.eq.s32.totalorder %s12, 1
      %p50 = por %p48, %p49
      %p51 = scmp.ne.s32.totalorder %s43, %s46
      %p52 = scmp.eq.s32.totalorder %s12, 0
      %p53 = por %p51, %p52
      %p54 = scmp.ne.s32.totalorder %s43, %s46
      %p55 = scmp.eq.s32.totalorder %s17, 1
      %p56 = por %p54, %p55
      %p57 = scmp.ne.s32.totalorder %s46, %s47
      %p58 = scmp.eq.s32.totalorder %s17, 0
      %p59 = por %p57, %p58
      %p60 = scmp.ne.s32.totalorder %s46, %s47
      %p61 = scmp.eq.s32.totalorder %s18, 1
      %p62 = por %p60, %p61
      %p64 = scmp.ne.s32.totalorder %s47, %s63
      %p65 = scmp.eq.s32.totalorder %s18, 0
      %p66 = por %p64, %p65
      %s67 = ssub.s32 %s21, %s30
      %s68 = ssub.s32 %s20, %s34
      %s69 = sor.u32 %s67, %s68
      %p70 = scmp.eq.s32.totalorder %s69, 0
      %s72 = sadd.s32 %s71, 1
      %s73 = scalar_select %p70, %s71, %s72
      %p76 = pneg %p70
      %p77 = scmp.eq.s32.totalorder %s12, 1
      %p78 = por %p76, %p77
      %p79 = scmp.ne.s32.totalorder %s71, %s74
      %p80 = scmp.eq.s32.totalorder %s12, 0
      %p81 = por %p79, %p80
      %p82 = scmp.ne.s32.totalorder %s71, %s74
      %p83 = scmp.eq.s32.totalorder %s17, 1
      %p84 = por %p82, %p83
      %p85 = scmp.ne.s32.totalorder %s74, %s75
      %p86 = scmp.eq.s32.totalorder %s17, 0
      %p87 = por %p85, %p86
      %p88 = scmp.ne.s32.totalorder %s74, %s75
      %p89 = scmp.eq.s32.totalorder %s18, 1
      %p90 = por %p88, %p89
      %p92 = scmp.ne.s32.totalorder %s75, %s91
      %p93 = scmp.eq.s32.totalorder %s18, 0
      %p94 = por %p92, %p93
      %s95 = ssub.s32 %s20, %s34
      %p96 = scmp.eq.s32.totalorder %s95, 0
      %s98 = sadd.s32 %s97, 1
      %s99 = scalar_select %p96, %s97, %s98
      %p102 = pneg %p96
      %p103 = scmp.eq.s32.totalorder %s12, 1
      %p104 = por %p102, %p103
      %p105 = scmp.ne.s32.totalorder %s97, %s100
      %p106 = scmp.eq.s32.totalorder %s12, 0
      %p107 = por %p105, %p106
      %p108 = scmp.ne.s32.totalorder %s97, %s100
      %p109 = scmp.eq.s32.totalorder %s17, 1
      %p110 = por %p108, %p109
      %p111 = scmp.ne.s32.totalorder %s100, %s101
      %p112 = scmp.eq.s32.totalorder %s17, 0
      %p113 = por %p111, %p112
      %p114 = scmp.ne.s32.totalorder %s100, %s101
      %p115 = scmp.eq.s32.totalorder %s18, 1
      %p116 = por %p114, %p115
      %p118 = scmp.ne.s32.totalorder %s101, %s117
      %p119 = scmp.eq.s32.totalorder %s18, 0
      %p120 = por %p118, %p119
      %s121 = ssub.s32 %s19, %s38
      %s122 = ssub.s32 %s20, %s34
      %s123 = sor.u32 %s121, %s122
      %p124 = scmp.eq.s32.totalorder %s123, 0
      %s126 = sadd.s32 %s125, 1
      %s127 = scalar_select %p124, %s125, %s126
      %p130 = pneg %p124
      %p131 = scmp.eq.s32.totalorder %s12, 1
      %p132 = por %p130, %p131
      %p133 = scmp.ne.s32.totalorder %s125, %s128
      %p134 = scmp.eq.s32.totalorder %s12, 0
      %p135 = por %p133, %p134
      %p136 = scmp.ne.s32.totalorder %s125, %s128
      %p137 = scmp.eq.s32.totalorder %s17, 1
      %p138 = por %p136, %p137
      %p139 = scmp.ne.s32.totalorder %s128, %s129
      %p140 = scmp.eq.s32.totalorder %s17, 0
      %p141 = por %p139, %p140
      %p142 = scmp.ne.s32.totalorder %s128, %s129
      %p143 = scmp.eq.s32.totalorder %s18, 1
      %p144 = por %p142, %p143
      %p146 = scmp.ne.s32.totalorder %s129, %s145
      %p147 = scmp.eq.s32.totalorder %s18, 0
      %p148 = por %p146, %p147
      %p149 = scmp.le.s32.totalorder 1, %s12
      %p150 = scmp.lt.s32.totalorder %s12, 3
      %p151 = pnand %p149, %p150
      %p152 = pneg %p151
      // Predicated region
      $region9: #{conv3x3.1} parent=5 // pred_check
        _
      $region10: #{conv3x3.1} parent=5 // pred_check_branch
        %154 = sbr.rel (%p151) target = $region12
      $region11: #{conv3x3.1} parent=5 // pred_region
        %s155 = ssub.s32 %s12, 1
        // Predicated region
        $region13: #{conv3x3.1} parent=11 // pred_check
          %p156 = pneg %p87
        $region14: #{conv3x3.1} parent=11 // pred_check_branch
          %158 = sbr.rel (%p156) target = $region16
        $region15: #{conv3x3.1} parent=11 // pred_region
          %s159 = smul.u32 3, %s23
          %p160 = scmp.lt.s32.totalorder %s24, 0
          %s161 = scalar_select %p160, %s24, 0
          %p162 = scmp.lt.s32.totalorder %s159, 2
          %s163 = scalar_select %p162, %s159, 2
          %s164 = smul.addr %s161, 3
          %s165 = sadd.s32 %s163, %s164
          %s166 = smul.addr %s165, 2
          %s167 = scalar_lea.vmem %s1, %s166
          %s168 = smul.u32 3, %s23
        $region16: #{conv3x3.1} parent=11 // pred_fallthru
          _
        // Predicated region
        $region17: #{conv3x3.1} parent=11 // pred_check
          %p169 = pneg %p113
        $region18: #{conv3x3.1} parent=11 // pred_check_branch
          %171 = sbr.rel (%p169) target = $region20
        $region19: #{conv3x3.1} parent=11 // pred_region
          %s172 = smul.u32 3, %s23
          %p173 = scmp.lt.s32.totalorder %s172, 2
          %s174 = scalar_select %p173, %s172, 2
          %s175 = scalar_lea.vmem %s2, %s174
          %s176 = smul.u32 3, %s23
        $region20: #{conv3x3.1} parent=11 // pred_fallthru
          _
      $region12: #{conv3x3.1} parent=5 // pred_fallthru
        _
      %p177 = scmp.lt.s32.totalorder %s12, 2
      // Predicated region
      $region21: #{conv3x3.1} parent=5 // pred_check
        %p178 = pneg %p177
      $region22: #{conv3x3.1} parent=5 // pred_check_branch
        %180 = sbr.rel (%p178) target = $region24
      $region23: #{conv3x3.1} parent=5 // pred_region
        // Predicated region
        $region25: #{conv3x3.1} parent=23 // pred_check
          %p181 = pneg %p53
        $region26: #{conv3x3.1} parent=23 // pred_check_branch
          %183 = sbr.rel (%p181) target = $region28
        $region27: #{conv3x3.1} parent=23 // pred_region
          %p184 = scmp.lt.s32.totalorder %s19, 1
          %s185 = scalar_select %p184, %s19, 1
          %p186 = scmp.lt.s32.totalorder %s21, 0
          %s187 = scalar_select %p186, %s21, 0
          %s188 = smul.addr %s185, 54
          %s189 = sadd.s32 %s187, %s188
          %s190 = smul.addr %s189, 4
          %s191 = scalar_lea.vmem %s0, %s190
        $region28: #{conv3x3.1} parent=23 // pred_fallthru
          _
      $region24: #{conv3x3.1} parent=5 // pred_fallthru
        _
      %p192 = scmp.le.s32.totalorder 1, %s12
      %p193 = scmp.lt.s32.totalorder %s12, 3
      %p194 = pnand %p192, %p193
      %p195 = pneg %p194
      // Predicated region
      $region29: #{conv3x3.1} parent=5 // pred_check
        _
      $region30: #{conv3x3.1} parent=5 // pred_check_branch
        %197 = sbr.rel (%p194) target = $region32
      $region31: #{conv3x3.1} parent=5 // pred_region
        %s198 = ssub.s32 %s12, 1
        %p199 = scmp.lt.s32.totalorder %s22, 1
        %s200 = scalar_select %p199, %s22, 1
        %p201 = scmp.lt.s32.totalorder %s24, 0
        %s202 = scalar_select %p201, %s24, 0
        %s203 = smul.addr %s200, 54
        %s204 = sadd.s32 %s202, %s203
        %s205 = smul.addr %s204, 4
        %s206 = scalar_lea.vmem %s0, %s205
        %p207 = pneg %p59
        %p208 = pneg %p56
        %s209 = smul.u32 3, %s23
        %p210 = scmp.lt.s32.totalorder %s24, 0
        %s211 = scalar_select %p210, %s24, 0
        %p212 = scmp.lt.s32.totalorder %s209, 2
        %s213 = scalar_select %p212, %s209, 2
        %s214 = smul.addr %s211, 3
        %s215 = sadd.s32 %s213, %s214
        %s216 = smul.addr %s215, 2
        %s217 = scalar_lea.vmem %s1, %s216
        %p218 = pneg %p87
        %p219 = pneg %p84
        %s220 = smul.u32 3, %s23
        %p221 = scmp.lt.s32.totalorder %s220, 2
        %s222 = scalar_select %p221, %s220, 2
        %s223 = scalar_lea.vmem %s2, %s222
        %p224 = pneg %p113
        %p225 = pneg %p110
        %p226 = pneg %p141
        %p227 = pneg %p138
        %s228 = sand.u32 %s128, 1
        %s229 = scalar_lea.sflag [#allocation4], %s228
        %s230 = sand.u32 %s128, 1
        %s231 = smul.addr %s230, 384
        %s232 = scalar_lea.vmem [#allocation3], %s231
        %p233 = scmp.lt.s32.totalorder %s22, 1
        %s234 = scalar_select %p233, %s22, 1
        %p235 = scmp.lt.s32.totalorder %s24, 0
        %s236 = scalar_select %p235, %s24, 0
        %s237 = smul.addr %s234, 54
        %s238 = sadd.s32 %s236, %s237
        %s239 = smul.addr %s238, 4
        %s240 = scalar_lea.vmem %s0, %s239
        %s241 = smul.u32 3, %s23
        %p242 = scmp.lt.s32.totalorder %s24, 0
        %s243 = scalar_select %p242, %s24, 0
        %p244 = scmp.lt.s32.totalorder %s241, 2
        %s245 = scalar_select %p244, %s241, 2
        %s246 = smul.addr %s243, 3
        %s247 = sadd.s32 %s245, %s246
        %s248 = smul.addr %s247, 2
        %s249 = scalar_lea.vmem %s1, %s248
        %s250 = smul.u32 3, %s23
        %s251 = smul.u32 3, %s23
        %p252 = scmp.lt.s32.totalorder %s251, 2
        %s253 = scalar_select %p252, %s251, 2
        %s254 = scalar_lea.vmem %s2, %s253
        %s255 = smul.u32 3, %s23
        %s256 = smul.u32 3, %s23
        %p258 = scmp.eq.s32.totalorder %s24, 0
        // Predicated region
        $region33: #{conv3x3.1} parent=31 // pred_check
          %p259 = pneg %p258
        $region34: #{conv3x3.1} parent=31 // pred_check_branch
          %261 = sbr.rel (%p259) target = $region36
        $region35: #{conv3x3.1} parent=31 // pred_region
          %v262 = vld [vmem:[%s254] sm:$0x7]
          %v264 = vlaneseq
          %v265 = vshrl.u32 %v264, 7
          %v266 = vsub.s32 0, %v265
          %v267 = vrot.slane %v262, %v266
          %v268 = vlaneseq
          %v269 = vshrl.u32 %v268, 7
          %v270 = vsub.s32 1, %v269
          %v271 = vrot.slane %v262, %v270
          %v272 = vlaneseq
          %v273 = vshrl.u32 %v272, 7
          %v274 = vsub.s32 2, %v273
          %v275 = vrot.slane %v262, %v274
          %279 = vst [vmem:[#allocation2] sm:$0xff] %v267
          %280 = vst [vmem:[#allocation2 + $0x8] sm:$0xff] %v271
          %vm281 = vcmask 523264
          %282 = vst.msk [vmem:[#allocation2 + $0x10] sm:$0xff] %vm281, %v275
          %283 = vst [vmem:[#allocation2 + $0x18] sm:$0xff] %v267
          %284 = vst [vmem:[#allocation2 + $0x20] sm:$0xff] %v271
          %285 = vst.msk [vmem:[#allocation2 + $0x28] sm:$0xff] %vm281, %v275
          %286 = vst [vmem:[#allocation2 + $0x30] sm:$0xff] %v267
          %287 = vst [vmem:[#allocation2 + $0x38] sm:$0xff] %v271
          %288 = vst.msk [vmem:[#allocation2 + $0x40] sm:$0xff] %vm281, %v275
          %289 = vst [vmem:[#allocation2 + $0x48] sm:$0xff] %v267
          %290 = vst [vmem:[#allocation2 + $0x50] sm:$0xff] %v271
          %291 = vst.msk [vmem:[#allocation2 + $0x58] sm:$0xff] %vm281, %v275
          %292 = vst [vmem:[#allocation2 + $0x60] sm:$0xff] %v267
          %293 = vst [vmem:[#allocation2 + $0x68] sm:$0xff] %v271
          %294 = vst.msk [vmem:[#allocation2 + $0x70] sm:$0xff] %vm281, %v275
          %295 = vst [vmem:[#allocation2 + $0x78] sm:$0xff] %v267
          %296 = vst [vmem:[#allocation2 + $0x80] sm:$0xff] %v271
          %297 = vst.msk [vmem:[#allocation2 + $0x88] sm:$0xff] %vm281, %v275
          %298 = vst [vmem:[#allocation2 + $0x90] sm:$0xff] %v267
          %299 = vst [vmem:[#allocation2 + $0x98] sm:$0xff] %v271
          %300 = vst.msk [vmem:[#allocation2 + $0xa0] sm:$0xff] %vm281, %v275
          %301 = vst [vmem:[#allocation2 + $0xa8] sm:$0xff] %v267
          %302 = vst [vmem:[#allocation2 + $0xb0] sm:$0xff] %v271
          %303 = vst.msk [vmem:[#allocation2 + $0xb8] sm:$0xff] %vm281, %v275
          %304 = vst [vmem:[#allocation2 + $0xc0] sm:$0xff] %v267
          %305 = vst [vmem:[#allocation2 + $0xc8] sm:$0xff] %v271
          %306 = vst.msk [vmem:[#allocation2 + $0xd0] sm:$0xff] %vm281, %v275
          %307 = vst [vmem:[#allocation2 + $0xd8] sm:$0xff] %v267
          %308 = vst [vmem:[#allocation2 + $0xe0] sm:$0xff] %v271
          %309 = vst.msk [vmem:[#allocation2 + $0xe8] sm:$0xff] %vm281, %v275
          %310 = vst [vmem:[#allocation2 + $0xf0] sm:$0xff] %v267
          %311 = vst [vmem:[#allocation2 + $0xf8] sm:$0xff] %v271
          %312 = vst.msk [vmem:[#allocation2 + $0x100] sm:$0xff] %vm281, %v275
          %313 = vst [vmem:[#allocation2 + $0x108] sm:$0xff] %v267
          %314 = vst [vmem:[#allocation2 + $0x110] sm:$0xff] %v271
          %315 = vst.msk [vmem:[#allocation2 + $0x118] sm:$0xff] %vm281, %v275
          %316 = vst [vmem:[#allocation2 + $0x120] sm:$0xff] %v267
          %317 = vst [vmem:[#allocation2 + $0x128] sm:$0xff] %v271
          %318 = vst.msk [vmem:[#allocation2 + $0x130] sm:$0xff] %vm281, %v275
          %319 = vst [vmem:[#allocation2 + $0x138] sm:$0xff] %v267
          %320 = vst [vmem:[#allocation2 + $0x140] sm:$0xff] %v271
          %321 = vst.msk [vmem:[#allocation2 + $0x148] sm:$0xff] %vm281, %v275
          %322 = vst [vmem:[#allocation2 + $0x150] sm:$0xff] %v267
          %323 = vst [vmem:[#allocation2 + $0x158] sm:$0xff] %v271
          %324 = vst.msk [vmem:[#allocation2 + $0x160] sm:$0xff] %vm281, %v275
          %325 = vst [vmem:[#allocation2 + $0x168] sm:$0xff] %v267
          %326 = vst [vmem:[#allocation2 + $0x170] sm:$0xff] %v271
          %327 = vst.msk [vmem:[#allocation2 + $0x178] sm:$0xff] %vm281, %v275
          %328 = vst [vmem:[#allocation2 + $0x180] sm:$0xff] %v267
          %329 = vst [vmem:[#allocation2 + $0x188] sm:$0xff] %v271
          %330 = vst.msk [vmem:[#allocation2 + $0x190] sm:$0xff] %vm281, %v275
          %331 = vst [vmem:[#allocation2 + $0x198] sm:$0xff] %v267
          %332 = vst [vmem:[#allocation2 + $0x1a0] sm:$0xff] %v271
          %333 = vst.msk [vmem:[#allocation2 + $0x1a8] sm:$0xff] %vm281, %v275
          %334 = vst [vmem:[#allocation2 + $0x1b0] sm:$0xff] %v267
          %335 = vst [vmem:[#allocation2 + $0x1b8] sm:$0xff] %v271
          %336 = vst.msk [vmem:[#allocation2 + $0x1c0] sm:$0xff] %vm281, %v275
          %337 = vst [vmem:[#allocation2 + $0x1c8] sm:$0xff] %v267
          %338 = vst [vmem:[#allocation2 + $0x1d0] sm:$0xff] %v271
          %339 = vst.msk [vmem:[#allocation2 + $0x1d8] sm:$0xff] %vm281, %v275
          %340 = vst [vmem:[#allocation2 + $0x1e0] sm:$0xff] %v267
          %341 = vst [vmem:[#allocation2 + $0x1e8] sm:$0xff] %v271
          %342 = vst.msk [vmem:[#allocation2 + $0x1f0] sm:$0xff] %vm281, %v275
          %343 = vst [vmem:[#allocation2 + $0x1f8] sm:$0xff] %v267
          %344 = vst [vmem:[#allocation2 + $0x200] sm:$0xff] %v271
          %345 = vst.msk [vmem:[#allocation2 + $0x208] sm:$0xff] %vm281, %v275
          %346 = vst [vmem:[#allocation2 + $0x210] sm:$0xff] %v267
          %347 = vst [vmem:[#allocation2 + $0x218] sm:$0xff] %v271
          %348 = vst.msk [vmem:[#allocation2 + $0x220] sm:$0xff] %vm281, %v275
          %349 = vst [vmem:[#allocation2 + $0x228] sm:$0xff] %v267
          %350 = vst [vmem:[#allocation2 + $0x230] sm:$0xff] %v271
          %351 = vst.msk [vmem:[#allocation2 + $0x238] sm:$0xff] %vm281, %v275
          %352 = vst [vmem:[#allocation2 + $0x240] sm:$0xff] %v267
          %353 = vst [vmem:[#allocation2 + $0x248] sm:$0xff] %v271
          %354 = vst.msk [vmem:[#allocation2 + $0x250] sm:$0xff] %vm281, %v275
          %355 = vst [vmem:[#allocation2 + $0x258] sm:$0xff] %v267
          %356 = vst [vmem:[#allocation2 + $0x260] sm:$0xff] %v271
          %357 = vst.msk [vmem:[#allocation2 + $0x268] sm:$0xff] %vm281, %v275
          %358 = vst [vmem:[#allocation2 + $0x270] sm:$0xff] %v267
          %359 = vst [vmem:[#allocation2 + $0x278] sm:$0xff] %v271
          %360 = vst.msk [vmem:[#allocation2 + $0x280] sm:$0xff] %vm281, %v275
          %361 = vst [vmem:[#allocation2 + $0x288] sm:$0xff] %v267
          %362 = vst [vmem:[#allocation2 + $0x290] sm:$0xff] %v271
          %363 = vst.msk [vmem:[#allocation2 + $0x298] sm:$0xff] %vm281, %v275
          %364 = vst [vmem:[#allocation2 + $0x2a0] sm:$0xff] %v267
          %365 = vst [vmem:[#allocation2 + $0x2a8] sm:$0xff] %v271
          %366 = vst.msk [vmem:[#allocation2 + $0x2b0] sm:$0xff] %vm281, %v275
          %367 = vst [vmem:[#allocation2 + $0x2b8] sm:$0xff] %v267
          %368 = vst [vmem:[#allocation2 + $0x2c0] sm:$0xff] %v271
          %369 = vst.msk [vmem:[#allocation2 + $0x2c8] sm:$0xff] %vm281, %v275
          %370 = vst [vmem:[#allocation2 + $0x2d0] sm:$0xff] %v267
          %371 = vst [vmem:[#allocation2 + $0x2d8] sm:$0xff] %v271
          %372 = vst.msk [vmem:[#allocation2 + $0x2e0] sm:$0xff] %vm281, %v275
          %373 = vst [vmem:[#allocation2 + $0x2e8] sm:$0xff] %v267
          %374 = vst [vmem:[#allocation2 + $0x2f0] sm:$0xff] %v271
          %375 = vst.msk [vmem:[#allocation2 + $0x2f8] sm:$0xff] %vm281, %v275
        $region36: #{conv3x3.1} parent=31 // pred_fallthru
          _
        %v376 = vld [vmem:[%s240] sm:$0xf]
        %v377 = vld [vmem:[%s240 + $0x4] sm:$0xf]
        %v378 = vld [vmem:[%s240 + $0xc] sm:$0xf]
        %v379 = vld [vmem:[%s240 + $0x10] sm:$0xf]
        %v380 = vld [vmem:[%s240 + $0x18] sm:$0xf]
        %v381 = vld [vmem:[%s240 + $0x1c] sm:$0xf]
        %v382 = vld [vmem:[%s240 + $0x24] sm:$0xf]
        %v383 = vld [vmem:[%s240 + $0x28] sm:$0xf]
        %v384 = vld [vmem:[%s240 + $0x30] sm:$0xf]
        %v385 = vld [vmem:[%s240 + $0x34] sm:$0xf]
        %v386 = vld [vmem:[%s240 + $0x3c] sm:$0xf]
        %v387 = vld [vmem:[%s240 + $0x40] sm:$0xf]
        %v388 = vld [vmem:[%s240 + $0x48] sm:$0xf]
        %v389 = vld [vmem:[%s240 + $0x4c] sm:$0xf]
        %v390 = vld [vmem:[%s240 + $0x54] sm:$0xf]
        %v391 = vld [vmem:[%s240 + $0x58] sm:$0xf]
        %v392 = vld [vmem:[%s240 + $0x60] sm:$0xf]
        %v393 = vld [vmem:[%s240 + $0x64] sm:$0xf]
        %v394 = vld [vmem:[%s240 + $0x6c] sm:$0xf]
        %v395 = vld [vmem:[%s240 + $0x70] sm:$0xf]
        %v396 = vld [vmem:[%s240 + $0x78] sm:$0xf]
        %v397 = vld [vmem:[%s240 + $0x7c] sm:$0xf]
        %v398 = vld [vmem:[%s240 + $0x84] sm:$0xf]
        %v399 = vld [vmem:[%s240 + $0x88] sm:$0xf]
        %v400 = vld [vmem:[%s240 + $0x90] sm:$0xf]
        %v401 = vld [vmem:[%s240 + $0x94] sm:$0xf]
        %v402 = vld [vmem:[%s240 + $0x9c] sm:$0xf]
        %v403 = vld [vmem:[%s240 + $0xa0] sm:$0xf]
        %v404 = vld [vmem:[%s240 + $0xa8] sm:$0xf]
        %v405 = vld [vmem:[%s240 + $0xac] sm:$0xf]
        %v406 = vld [vmem:[%s240 + $0xb4] sm:$0xf]
        %v407 = vld [vmem:[%s240 + $0xb8] sm:$0xf]
        %v408 = vld [vmem:[#allocation2] sm:$0xff]
        %v409 = vld [vmem:[#allocation2 + $0x8] sm:$0xff]
        %v410 = vld [vmem:[#allocation2 + $0x10] sm:$0xff]
        %v411 = vld [vmem:[#allocation2 + $0x18] sm:$0xff]
        %v412 = vld [vmem:[#allocation2 + $0x20] sm:$0xff]
        %v413 = vld [vmem:[#allocation2 + $0x28] sm:$0xff]
        %v414 = vld [vmem:[#allocation2 + $0x30] sm:$0xff]
        %v415 = vld [vmem:[#allocation2 + $0x38] sm:$0xff]
        %v416 = vld [vmem:[#allocation2 + $0x40] sm:$0xff]
        %v417 = vld [vmem:[#allocation2 + $0x48] sm:$0xff]
        %v418 = vld [vmem:[#allocation2 + $0x50] sm:$0xff]
        %v419 = vld [vmem:[#allocation2 + $0x58] sm:$0xff]
        %v420 = vld [vmem:[#allocation2 + $0x60] sm:$0xff]
        %v421 = vld [vmem:[#allocation2 + $0x68] sm:$0xff]
        %v422 = vld [vmem:[#allocation2 + $0x70] sm:$0xff]
        %v423 = vld [vmem:[#allocation2 + $0x78] sm:$0xff]
        %v424 = vld [vmem:[#allocation2 + $0x80] sm:$0xff]
        %v425 = vld [vmem:[#allocation2 + $0x88] sm:$0xff]
        %v426 = vld [vmem:[#allocation2 + $0x90] sm:$0xff]
        %v427 = vld [vmem:[#allocation2 + $0x98] sm:$0xff]
        %v428 = vld [vmem:[#allocation2 + $0xa0] sm:$0xff]
        %v429 = vld [vmem:[#allocation2 + $0xa8] sm:$0xff]
        %v430 = vld [vmem:[#allocation2 + $0xb0] sm:$0xff]
        %v431 = vld [vmem:[#allocation2 + $0xb8] sm:$0xff]
        %v432 = vld [vmem:[#allocation2 + $0xc0] sm:$0xff]
        %v433 = vld [vmem:[#allocation2 + $0xc8] sm:$0xff]
        %v434 = vld [vmem:[#allocation2 + $0xd0] sm:$0xff]
        %v435 = vld [vmem:[#allocation2 + $0xd8] sm:$0xff]
        %v436 = vld [vmem:[#allocation2 + $0xe0] sm:$0xff]
        %v437 = vld [vmem:[#allocation2 + $0xe8] sm:$0xff]
        %v438 = vld [vmem:[#allocation2 + $0xf0] sm:$0xff]
        %v439 = vld [vmem:[#allocation2 + $0xf8] sm:$0xff]
        %v440 = vld [vmem:[#allocation2 + $0x100] sm:$0xff]
        %v441 = vld [vmem:[#allocation2 + $0x108] sm:$0xff]
        %v442 = vld [vmem:[#allocation2 + $0x110] sm:$0xff]
        %v443 = vld [vmem:[#allocation2 + $0x118] sm:$0xff]
        %v444 = vld [vmem:[#allocation2 + $0x120] sm:$0xff]
        %v445 = vld [vmem:[#allocation2 + $0x128] sm:$0xff]
        %v446 = vld [vmem:[#allocation2 + $0x130] sm:$0xff]
        %v447 = vld [vmem:[#allocation2 + $0x138] sm:$0xff]
        %v448 = vld [vmem:[#allocation2 + $0x140] sm:$0xff]
        %v449 = vld [vmem:[#allocation2 + $0x148] sm:$0xff]
        %v450 = vld [vmem:[#allocation2 + $0x150] sm:$0xff]
        %v451 = vld [vmem:[#allocation2 + $0x158] sm:$0xff]
        %v452 = vld [vmem:[#allocation2 + $0x160] sm:$0xff]
        %v453 = vld [vmem:[#allocation2 + $0x168] sm:$0xff]
        %v454 = vld [vmem:[#allocation2 + $0x170] sm:$0xff]
        %v455 = vld [vmem:[#allocation2 + $0x178] sm:$0xff]
        %v456 = vld [vmem:[#allocation2 + $0x180] sm:$0xff]
        %v457 = vld [vmem:[#allocation2 + $0x188] sm:$0xff]
        %v458 = vld [vmem:[#allocation2 + $0x190] sm:$0xff]
        %v459 = vld [vmem:[#allocation2 + $0x198] sm:$0xff]
        %v460 = vld [vmem:[#allocation2 + $0x1a0] sm:$0xff]
        %v461 = vld [vmem:[#allocation2 + $0x1a8] sm:$0xff]
        %v462 = vld [vmem:[#allocation2 + $0x1b0] sm:$0xff]
        %v463 = vld [vmem:[#allocation2 + $0x1b8] sm:$0xff]
        %v464 = vld [vmem:[#allocation2 + $0x1c0] sm:$0xff]
        %v465 = vld [vmem:[#allocation2 + $0x1c8] sm:$0xff]
        %v466 = vld [vmem:[#allocation2 + $0x1d0] sm:$0xff]
        %v467 = vld [vmem:[#allocation2 + $0x1d8] sm:$0xff]
        %v468 = vld [vmem:[#allocation2 + $0x1e0] sm:$0xff]
        %v469 = vld [vmem:[#allocation2 + $0x1e8] sm:$0xff]
        %v470 = vld [vmem:[#allocation2 + $0x1f0] sm:$0xff]
        %v471 = vld [vmem:[#allocation2 + $0x1f8] sm:$0xff]
        %v472 = vld [vmem:[#allocation2 + $0x200] sm:$0xff]
        %v473 = vld [vmem:[#allocation2 + $0x208] sm:$0xff]
        %v474 = vld [vmem:[#allocation2 + $0x210] sm:$0xff]
        %v475 = vld [vmem:[#allocation2 + $0x218] sm:$0xff]
        %v476 = vld [vmem:[#allocation2 + $0x220] sm:$0xff]
        %v477 = vld [vmem:[#allocation2 + $0x228] sm:$0xff]
        %v478 = vld [vmem:[#allocation2 + $0x230] sm:$0xff]
        %v479 = vld [vmem:[#allocation2 + $0x238] sm:$0xff]
        %v480 = vld [vmem:[#allocation2 + $0x240] sm:$0xff]
        %v481 = vld [vmem:[#allocation2 + $0x248] sm:$0xff]
        %v482 = vld [vmem:[#allocation2 + $0x250] sm:$0xff]
        %v483 = vld [vmem:[#allocation2 + $0x258] sm:$0xff]
        %v484 = vld [vmem:[#allocation2 + $0x260] sm:$0xff]
        %v485 = vld [vmem:[#allocation2 + $0x268] sm:$0xff]
        %v486 = vld [vmem:[#allocation2 + $0x270] sm:$0xff]
        %v487 = vld [vmem:[#allocation2 + $0x278] sm:$0xff]
        %v488 = vld [vmem:[#allocation2 + $0x280] sm:$0xff]
        %v489 = vld [vmem:[#allocation2 + $0x288] sm:$0xff]
        %v490 = vld [vmem:[#allocation2 + $0x290] sm:$0xff]
        %v491 = vld [vmem:[#allocation2 + $0x298] sm:$0xff]
        %v492 = vld [vmem:[#allocation2 + $0x2a0] sm:$0xff]
        %v493 = vld [vmem:[#allocation2 + $0x2a8] sm:$0xff]
        %v494 = vld [vmem:[#allocation2 + $0x2b0] sm:$0xff]
        %v495 = vld [vmem:[#allocation2 + $0x2b8] sm:$0xff]
        %v496 = vld [vmem:[#allocation2 + $0x2c0] sm:$0xff]
        %v497 = vld [vmem:[#allocation2 + $0x2c8] sm:$0xff]
        %v498 = vld [vmem:[#allocation2 + $0x2d0] sm:$0xff]
        %v499 = vld [vmem:[#allocation2 + $0x2d8] sm:$0xff]
        %v500 = vld [vmem:[#allocation2 + $0x2e0] sm:$0xff]
        %v501 = vld [vmem:[#allocation2 + $0x2e8] sm:$0xff]
        %v502 = vld [vmem:[#allocation2 + $0x2f0] sm:$0xff]
        %v503 = vld [vmem:[#allocation2 + $0x2f8] sm:$0xff]
        %v504 = vld [vmem:[%s249] sm:$0x3f]
        %v537 = vunpack.c.l.b16 %v376
        %v538 = vunpack.c.l.b16 %v377
        %v539 = vunpack.c.l.b16 %v378
        %v540 = vunpack.c.l.b16 %v379
        %v541 = vunpack.c.l.b16 %v380
        %v542 = vunpack.c.l.b16 %v381
        %v543 = vunpack.c.l.b16 %v382
        %v544 = vunpack.c.l.b16 %v383
        %v545 = vunpack.c.l.b16 %v384
        %v546 = vunpack.c.l.b16 %v385
        %v547 = vunpack.c.l.b16 %v386
        %v548 = vunpack.c.l.b16 %v387
        %v549 = vunpack.c.l.b16 %v388
        %v550 = vunpack.c.l.b16 %v389
        %v551 = vunpack.c.l.b16 %v390
        %v552 = vunpack.c.l.b16 %v391
        %v553 = vunpack.c.l.b16 %v392
        %v554 = vunpack.c.l.b16 %v393
        %v555 = vunpack.c.l.b16 %v394
        %v556 = vunpack.c.l.b16 %v395
        %v557 = vunpack.c.l.b16 %v396
        %v558 = vunpack.c.l.b16 %v397
        %v559 = vunpack.c.l.b16 %v398
        %v560 = vunpack.c.l.b16 %v399
        %v561 = vunpack.c.l.b16 %v400
        %v562 = vunpack.c.l.b16 %v401
        %v563 = vunpack.c.l.b16 %v402
        %v564 = vunpack.c.l.b16 %v403
        %v565 = vunpack.c.l.b16 %v404
        %v566 = vunpack.c.l.b16 %v405
        %v567 = vunpack.c.l.b16 %v406
        %v568 = vunpack.c.l.b16 %v407
        %v569 = vpack.c.b16 %v538, %v537
        %v570 = vpack.c.b16 %v540, %v539
        %v571 = vpack.c.b16 %v542, %v541
        %v572 = vpack.c.b16 %v544, %v543
        %v573 = vpack.c.b16 %v546, %v545
        %v574 = vpack.c.b16 %v548, %v547
        %v575 = vpack.c.b16 %v550, %v549
        %v576 = vpack.c.b16 %v552, %v551
        %v577 = vpack.c.b16 %v554, %v553
        %v578 = vpack.c.b16 %v556, %v555
        %v579 = vpack.c.b16 %v558, %v557
        %v580 = vpack.c.b16 %v560, %v559
        %v581 = vpack.c.b16 %v562, %v561
        %v582 = vpack.c.b16 %v564, %v563
        %v583 = vpack.c.b16 %v566, %v565
        %v584 = vpack.c.b16 %v568, %v567
        %v586 = vcombine.high %v504, %v504
        %v588 = vunpack.c.l.s4 1983009808
        %v589 = vunpack.c.0.s8 %v588
        %v590 = vlaneseq
        %v591 = vshrl.u32 %v590, 7
        %v592 = vsub.s32 %v589, %v591
        %v593 = vrot.slane %v504, %v592
        %v595 = vunpack.c.l.s4 1983009808
        %v596 = vunpack.c.0.s8 %v595
        %v597 = vlaneseq
        %v598 = vshrl.u32 %v597, 7
        %v599 = vsub.s32 %v596, %v598
        %v600 = vrot.slane %v586, %v599
        %v601 = vcombine.high %v593, %v593
        %vm602 = vcmask 31744
        %v604 = vsel %vm602, %v569, 0
        %v607 = vsel %vm602, %v570, 0
        %v610 = vsel %vm602, %v571, 0
        %v613 = vsel %vm602, %v572, 0
        %v616 = vsel %vm602, %v573, 0
        %v619 = vsel %vm602, %v574, 0
        %v622 = vsel %vm602, %v575, 0
        %v625 = vsel %vm602, %v576, 0
        %v628 = vsel %vm602, %v577, 0
        %v631 = vsel %vm602, %v578, 0
        %v634 = vsel %vm602, %v579, 0
        %v637 = vsel %vm602, %v580, 0
        %v640 = vsel %vm602, %v581, 0
        %v643 = vsel %vm602, %v582, 0
        %v646 = vsel %vm602, %v583, 0
        %v649 = vsel %vm602, %v584, 0
        %vm651 = vcmask 1041408
        %v653 = vsel %vm651, %v593, 0
        %v656 = vsel %vm651, %v601, 0
        %v659 = vsel %vm651, %v600, 0
        %661 = vmatprep.subr.bf16.mxu0 %v656
        %662 = vmatpush1.bf16.msra.mxu0 %v653
        %663 = vmatprep.subr.bf16.mxu0 0
        %664 = vmatpush1.bf16.msra.mxu0 0
        %665 = vmatprep.subr.bf16.mxu0 0
        %666 = vmatpush1.bf16.msra.mxu0 0
        %667 = vmatprep.subr.bf16.mxu0 0
        %668 = vmatpush1.bf16.msra.mxu0 0
        %669 = vmatprep.subr.bf16.mxu0 0
        %670 = vmatpush1.bf16.msra.mxu0 0
        %671 = vmatprep.subr.bf16.mxu0 0
        %672 = vmatpush1.bf16.msra.mxu0 0
        %673 = vmatprep.subr.bf16.mxu0 0
        %674 = vmatpush1.bf16.msra.mxu0 0
        %675 = vmatprep.subr.bf16.mxu0 0
        %676 = vmatpush1.bf16.msra.mxu0 0
        %677 = vmatprep.subr.bf16.mxu0 0
        %678 = vmatpush1.bf16.msra.mxu0 0
        %679 = vmatprep.subr.bf16.mxu0 0
        %680 = vmatpush1.bf16.msra.mxu0 0
        %681 = vmatprep.subr.bf16.mxu0 0
        %682 = vmatpush1.bf16.msra.mxu0 0
        %683 = vmatprep.subr.bf16.mxu0 0
        %684 = vmatpush1.bf16.msra.mxu0 0
        %685 = vmatprep.subr.bf16.mxu0 0
        %686 = vmatpush1.bf16.msra.mxu0 0
        %687 = vmatprep.subr.bf16.mxu0 0
        %688 = vmatpush1.bf16.msra.mxu0 0
        %689 = vmatprep.subr.bf16.mxu0 0
        %690 = vmatpush1.bf16.msra.mxu0 0
        %691 = vmatprep.subr.bf16.mxu0 0
        %692 = vmatpush1.bf16.msra.mxu0 0
        %693 = vmatprep.mubr.bf16.mxu0 0
        %694 = vmatmul.mubr.bf16.gmra.mrb[0].mxu0 %v604
        %v695 = vpop.f32.mrb[0].mxu0
        %v696 = vadd.f32 0.0, %v695
        %v697 = vpop.f32.mrb[0].mxu0
        %v698 = vadd.f32 0.0, %v697
        %v699 = vpop.f32.mrb[0].mxu0
        %v700 = vadd.f32 0.0, %v699
        %v701 = vpop.f32.mrb[0].mxu0
        %v702 = vadd.f32 0.0, %v701
        %703 = vmatprep.mubr.bf16.mxu0 0
        %704 = vmatmul.mubr.bf16.gmra.mrb[0].mxu0 %v607
        %v705 = vpop.f32.mrb[0].mxu0
        %v706 = vadd.f32 0.0, %v705
        %v707 = vpop.f32.mrb[0].mxu0
        %v708 = vadd.f32 0.0, %v707
        %v709 = vpop.f32.mrb[0].mxu0
        %v710 = vadd.f32 0.0, %v709
        %v711 = vpop.f32.mrb[0].mxu0
        %v712 = vadd.f32 0.0, %v711
        %713 = vmatprep.mubr.bf16.mxu0 0
        %714 = vmatmul.mubr.bf16.gmra.mrb[0].mxu0 %v610
        %v715 = vpop.f32.mrb[0].mxu0
        %v716 = vadd.f32 0.0, %v715
        %v717 = vpop.f32.mrb[0].mxu0
        %v718 = vadd.f32 0.0, %v717
        %v719 = vpop.f32.mrb[0].mxu0
        %v720 = vadd.f32 0.0, %v719
        %v721 = vpop.f32.mrb[0].mxu0
        %v722 = vadd.f32 0.0, %v721
        %723 = vmatprep.mubr.bf16.mxu0 0
        %724 = vmatmul.mubr.bf16.gmra.mrb[0].mxu0 %v613
        %v725 = vpop.f32.mrb[0].mxu0
        %v726 = vadd.f32 0.0, %v725
        %v727 = vpop.f32.mrb[0].mxu0
        %v728 = vadd.f32 0.0, %v727
        %v729 = vpop.f32.mrb[0].mxu0
        %v730 = vadd.f32 0.0, %v729
        %v731 = vpop.f32.mrb[0].mxu0
        %v732 = vadd.f32 0.0, %v731
        %733 = vmatprep.mubr.bf16.mxu0 0
        %734 = vmatmul.mubr.bf16.gmra.mrb[0].mxu0 %v616
        %v735 = vpop.f32.mrb[0].mxu0
        %v736 = vadd.f32 0.0, %v735
        %v737 = vpop.f32.mrb[0].mxu0
        %v738 = vadd.f32 0.0, %v737
        %v739 = vpop.f32.mrb[0].mxu0
        %v740 = vadd.f32 0.0, %v739
        %v741 = vpop.f32.mrb[0].mxu0
        %v742 = vadd.f32 0.0, %v741
        %743 = vmatprep.mubr.bf16.mxu0 0
        %744 = vmatmul.mubr.bf16.gmra.mrb[0].mxu0 %v619
        %v745 = vpop.f32.mrb[0].mxu0
        %v746 = vadd.f32 0.0, %v745
        %v747 = vpop.f32.mrb[0].mxu0
        %v748 = vadd.f32 0.0, %v747
        %v749 = vpop.f32.mrb[0].mxu0
        %v750 = vadd.f32 0.0, %v749
        %v751 = vpop.f32.mrb[0].mxu0
        %v752 = vadd.f32 0.0, %v751
        %753 = vmatprep.mubr.bf16.mxu0 0
        %754 = vmatmul.mubr.bf16.gmra.mrb[0].mxu0 %v622
        %v755 = vpop.f32.mrb[0].mxu0
        %v756 = vadd.f32 0.0, %v755
        %v757 = vpop.f32.mrb[0].mxu0
        %v758 = vadd.f32 0.0, %v757
        %v759 = vpop.f32.mrb[0].mxu0
        %v760 = vadd.f32 0.0, %v759
        %v761 = vpop.f32.mrb[0].mxu0
        %v762 = vadd.f32 0.0, %v761
        %763 = vmatprep.mubr.bf16.mxu0 0
        %764 = vmatmul.mubr.bf16.gmra.mrb[0].mxu0 %v625
        %v765 = vpop.f32.mrb[0].mxu0
        %v766 = vadd.f32 0.0, %v765
        %v767 = vpop.f32.mrb[0].mxu0
        %v768 = vadd.f32 0.0, %v767
        %v769 = vpop.f32.mrb[0].mxu0
        %v770 = vadd.f32 0.0, %v769
        %v771 = vpop.f32.mrb[0].mxu0
        %v772 = vadd.f32 0.0, %v771
        %773 = vmatprep.mubr.bf16.mxu0 0
        %774 = vmatmul.mubr.bf16.gmra.mrb[0].mxu0 %v628
        %v775 = vpop.f32.mrb[0].mxu0
        %v776 = vadd.f32 0.0, %v775
        %v777 = vpop.f32.mrb[0].mxu0
        %v778 = vadd.f32 0.0, %v777
        %v779 = vpop.f32.mrb[0].mxu0
        %v780 = vadd.f32 0.0, %v779
        %v781 = vpop.f32.mrb[0].mxu0
        %v782 = vadd.f32 0.0, %v781
        %783 = vmatprep.mubr.bf16.mxu0 0
        %784 = vmatmul.mubr.bf16.gmra.mrb[0].mxu0 %v631
        %v785 = vpop.f32.mrb[0].mxu0
        %v786 = vadd.f32 0.0, %v785
        %v787 = vpop.f32.mrb[0].mxu0
        %v788 = vadd.f32 0.0, %v787
        %v789 = vpop.f32.mrb[0].mxu0
        %v790 = vadd.f32 0.0, %v789
        %v791 = vpop.f32.mrb[0].mxu0
        %v792 = vadd.f32 0.0, %v791
        %793 = vmatprep.mubr.bf16.mxu0 0
        %794 = vmatmul.mubr.bf16.gmra.mrb[0].mxu0 %v634
        %v795 = vpop.f32.mrb[0].mxu0
        %v796 = vadd.f32 0.0, %v795
        %v797 = vpop.f32.mrb[0].mxu0
        %v798 = vadd.f32 0.0, %v797
        %v799 = vpop.f32.mrb[0].mxu0
        %v800 = vadd.f32 0.0, %v799
        %v801 = vpop.f32.mrb[0].mxu0
        %v802 = vadd.f32 0.0, %v801
        %803 = vmatprep.mubr.bf16.mxu0 0
        %804 = vmatmul.mubr.bf16.gmra.mrb[0].mxu0 %v637
        %v805 = vpop.f32.mrb[0].mxu0
        %v806 = vadd.f32 0.0, %v805
        %v807 = vpop.f32.mrb[0].mxu0
        %v808 = vadd.f32 0.0, %v807
        %v809 = vpop.f32.mrb[0].mxu0
        %v810 = vadd.f32 0.0, %v809
        %v811 = vpop.f32.mrb[0].mxu0
        %v812 = vadd.f32 0.0, %v811
        %813 = vmatprep.mubr.bf16.mxu0 0
        %814 = vmatmul.mubr.bf16.gmra.mrb[0].mxu0 %v640
        %v815 = vpop.f32.mrb[0].mxu0
        %v816 = vadd.f32 0.0, %v815
        %v817 = vpop.f32.mrb[0].mxu0
        %v818 = vadd.f32 0.0, %v817
        %v819 = vpop.f32.mrb[0].mxu0
        %v820 = vadd.f32 0.0, %v819
        %v821 = vpop.f32.mrb[0].mxu0
        %v822 = vadd.f32 0.0, %v821
        %823 = vmatprep.mubr.bf16.mxu0 0
        %824 = vmatmul.mubr.bf16.gmra.mrb[0].mxu0 %v643
        %v825 = vpop.f32.mrb[0].mxu0
        %v826 = vadd.f32 0.0, %v825
        %v827 = vpop.f32.mrb[0].mxu0
        %v828 = vadd.f32 0.0, %v827
        %v829 = vpop.f32.mrb[0].mxu0
        %v830 = vadd.f32 0.0, %v829
        %v831 = vpop.f32.mrb[0].mxu0
        %v832 = vadd.f32 0.0, %v831
        %833 = vmatprep.mubr.bf16.mxu0 0
        %834 = vmatmul.mubr.bf16.gmra.mrb[0].mxu0 %v646
        %v835 = vpop.f32.mrb[0].mxu0
        %v836 = vadd.f32 0.0, %v835
        %v837 = vpop.f32.mrb[0].mxu0
        %v838 = vadd.f32 0.0, %v837
        %v839 = vpop.f32.mrb[0].mxu0
        %v840 = vadd.f32 0.0, %v839
        %v841 = vpop.f32.mrb[0].mxu0
        %v842 = vadd.f32 0.0, %v841
        %843 = vmatprep.mubr.bf16.mxu0 0
        %844 = vmatmul.mubr.bf16.gmra.mrb[0].mxu0 %v649
        %v845 = vpop.f32.mrb[0].mxu0
        %v846 = vadd.f32 0.0, %v845
        %v847 = vpop.f32.mrb[0].mxu0
        %v848 = vadd.f32 0.0, %v847
        %v849 = vpop.f32.mrb[0].mxu0
        %v850 = vadd.f32 0.0, %v849
        %v851 = vpop.f32.mrb[0].mxu0
        %v852 = vadd.f32 0.0, %v851
        %853 = vdwg.mxu0
        %854 = vmatprep.subr.bf16.mxu0 0
        %855 = vmatpush1.bf16.msra.mxu0 %v659
        %856 = vmatprep.subr.bf16.mxu0 0
        %857 = vmatpush1.bf16.msra.mxu0 0
        %858 = vmatprep.subr.bf16.mxu0 0
        %859 = vmatpush1.bf16.msra.mxu0 0
        %860 = vmatprep.subr.bf16.mxu0 0
        %861 = vmatpush1.bf16.msra.mxu0 0
        %862 = vmatprep.subr.bf16.mxu0 0
        %863 = vmatpush1.bf16.msra.mxu0 0
        %864 = vmatprep.subr.bf16.mxu0 0
        %865 = vmatpush1.bf16.msra.mxu0 0
        %866 = vmatprep.subr.bf16.mxu0 0
        %867 = vmatpush1.bf16.msra.mxu0 0
        %868 = vmatprep.subr.bf16.mxu0 0
        %869 = vmatpush1.bf16.msra.mxu0 0
        %870 = vmatprep.subr.bf16.mxu0 0
        %871 = vmatpush1.bf16.msra.mxu0 0
        %872 = vmatprep.subr.bf16.mxu0 0
        %873 = vmatpush1.bf16.msra.mxu0 0
        %874 = vmatprep.subr.bf16.mxu0 0
        %875 = vmatpush1.bf16.msra.mxu0 0
        %876 = vmatprep.subr.bf16.mxu0 0
        %877 = vmatpush1.bf16.msra.mxu0 0
        %878 = vmatprep.subr.bf16.mxu0 0
        %879 = vmatpush1.bf16.msra.mxu0 0
        %880 = vmatprep.subr.bf16.mxu0 0
        %881 = vmatpush1.bf16.msra.mxu0 0
        %882 = vmatprep.subr.bf16.mxu0 0
        %883 = vmatpush1.bf16.msra.mxu0 0
        %884 = vmatprep.subr.bf16.mxu0 0
        %885 = vmatpush1.bf16.msra.mxu0 0
        %886 = vmatprep.mubr.bf16.mxu0 0
        %887 = vmatmul.mubr.bf16.gmra.mrb[0].mxu0 %v604
        %v888 = vpop.f32.mrb[0].mxu0
        %v889 = vadd.f32 0.0, %v888
        %v890 = vpop.f32.mrb[0].mxu0
        %v891 = vpop.f32.mrb[0].mxu0
        %v892 = vadd.f32 0.0, %v891
        %v893 = vpop.f32.mrb[0].mxu0
        %894 = vmatprep.mubr.bf16.mxu0 0
        %895 = vmatmul.mubr.bf16.gmra.mrb[0].mxu0 %v607
        %v896 = vpop.f32.mrb[0].mxu0
        %v897 = vadd.f32 0.0, %v896
        %v898 = vpop.f32.mrb[0].mxu0
        %v899 = vpop.f32.mrb[0].mxu0
        %v900 = vadd.f32 0.0, %v899
        %v901 = vpop.f32.mrb[0].mxu0
        %902 = vmatprep.mubr.bf16.mxu0 0
        %903 = vmatmul.mubr.bf16.gmra.mrb[0].mxu0 %v610
        %v904 = vpop.f32.mrb[0].mxu0
        %v905 = vadd.f32 0.0, %v904
        %v906 = vpop.f32.mrb[0].mxu0
        %v907 = vpop.f32.mrb[0].mxu0
        %v908 = vadd.f32 0.0, %v907
        %v909 = vpop.f32.mrb[0].mxu0
        %910 = vmatprep.mubr.bf16.mxu0 0
        %911 = vmatmul.mubr.bf16.gmra.mrb[0].mxu0 %v613
        %v912 = vpop.f32.mrb[0].mxu0
        %v913 = vadd.f32 0.0, %v912
        %v914 = vpop.f32.mrb[0].mxu0
        %v915 = vpop.f32.mrb[0].mxu0
        %v916 = vadd.f32 0.0, %v915
        %v917 = vpop.f32.mrb[0].mxu0
        %918 = vmatprep.mubr.bf16.mxu0 0
        %919 = vmatmul.mubr.bf16.gmra.mrb[0].mxu0 %v616
        %v920 = vpop.f32.mrb[0].mxu0
        %v921 = vadd.f32 0.0, %v920
        %v922 = vpop.f32.mrb[0].mxu0
        %v923 = vpop.f32.mrb[0].mxu0
        %v924 = vadd.f32 0.0, %v923
        %v925 = vpop.f32.mrb[0].mxu0
        %926 = vmatprep.mubr.bf16.mxu0 0
        %927 = vmatmul.mubr.bf16.gmra.mrb[0].mxu0 %v619
        %v928 = vpop.f32.mrb[0].mxu0
        %v929 = vadd.f32 0.0, %v928
        %v930 = vpop.f32.mrb[0].mxu0
        %v931 = vpop.f32.mrb[0].mxu0
        %v932 = vadd.f32 0.0, %v931
        %v933 = vpop.f32.mrb[0].mxu0
        %934 = vmatprep.mubr.bf16.mxu0 0
        %935 = vmatmul.mubr.bf16.gmra.mrb[0].mxu0 %v622
        %v936 = vpop.f32.mrb[0].mxu0
        %v937 = vadd.f32 0.0, %v936
        %v938 = vpop.f32.mrb[0].mxu0
        %v939 = vpop.f32.mrb[0].mxu0
        %v940 = vadd.f32 0.0, %v939
        %v941 = vpop.f32.mrb[0].mxu0
        %942 = vmatprep.mubr.bf16.mxu0 0
        %943 = vmatmul.mubr.bf16.gmra.mrb[0].mxu0 %v625
        %v944 = vpop.f32.mrb[0].mxu0
        %v945 = vadd.f32 0.0, %v944
        %v946 = vpop.f32.mrb[0].mxu0
        %v947 = vpop.f32.mrb[0].mxu0
        %v948 = vadd.f32 0.0, %v947
        %v949 = vpop.f32.mrb[0].mxu0
        %950 = vmatprep.mubr.bf16.mxu0 0
        %951 = vmatmul.mubr.bf16.gmra.mrb[0].mxu0 %v628
        %v952 = vpop.f32.mrb[0].mxu0
        %v953 = vadd.f32 0.0, %v952
        %v954 = vpop.f32.mrb[0].mxu0
        %v955 = vpop.f32.mrb[0].mxu0
        %v956 = vadd.f32 0.0, %v955
        %v957 = vpop.f32.mrb[0].mxu0
        %958 = vmatprep.mubr.bf16.mxu0 0
        %959 = vmatmul.mubr.bf16.gmra.mrb[0].mxu0 %v631
        %v960 = vpop.f32.mrb[0].mxu0
        %v961 = vadd.f32 0.0, %v960
        %v962 = vpop.f32.mrb[0].mxu0
        %v963 = vpop.f32.mrb[0].mxu0
        %v964 = vadd.f32 0.0, %v963
        %v965 = vpop.f32.mrb[0].mxu0
        %966 = vmatprep.mubr.bf16.mxu0 0
        %967 = vmatmul.mubr.bf16.gmra.mrb[0].mxu0 %v634
        %v968 = vpop.f32.mrb[0].mxu0
        %v969 = vadd.f32 0.0, %v968
        %v970 = vpop.f32.mrb[0].mxu0
        %v971 = vpop.f32.mrb[0].mxu0
        %v972 = vadd.f32 0.0, %v971
        %v973 = vpop.f32.mrb[0].mxu0
        %974 = vmatprep.mubr.bf16.mxu0 0
        %975 = vmatmul.mubr.bf16.gmra.mrb[0].mxu0 %v637
        %v976 = vpop.f32.mrb[0].mxu0
        %v977 = vadd.f32 0.0, %v976
        %v978 = vpop.f32.mrb[0].mxu0
        %v979 = vpop.f32.mrb[0].mxu0
        %v980 = vadd.f32 0.0, %v979
        %v981 = vpop.f32.mrb[0].mxu0
        %982 = vmatprep.mubr.bf16.mxu0 0
        %983 = vmatmul.mubr.bf16.gmra.mrb[0].mxu0 %v640
        %v984 = vpop.f32.mrb[0].mxu0
        %v985 = vadd.f32 0.0, %v984
        %v986 = vpop.f32.mrb[0].mxu0
        %v987 = vpop.f32.mrb[0].mxu0
        %v988 = vadd.f32 0.0, %v987
        %v989 = vpop.f32.mrb[0].mxu0
        %990 = vmatprep.mubr.bf16.mxu0 0
        %991 = vmatmul.mubr.bf16.gmra.mrb[0].mxu0 %v643
        %v992 = vpop.f32.mrb[0].mxu0
        %v993 = vadd.f32 0.0, %v992
        %v994 = vpop.f32.mrb[0].mxu0
        %v995 = vpop.f32.mrb[0].mxu0
        %v996 = vadd.f32 0.0, %v995
        %v997 = vpop.f32.mrb[0].mxu0
        %998 = vmatprep.mubr.bf16.mxu0 0
        %999 = vmatmul.mubr.bf16.gmra.mrb[0].mxu0 %v646
        %v1000 = vpop.f32.mrb[0].mxu0
        %v1001 = vadd.f32 0.0, %v1000
        %v1002 = vpop.f32.mrb[0].mxu0
        %v1003 = vpop.f32.mrb[0].mxu0
        %v1004 = vadd.f32 0.0, %v1003
        %v1005 = vpop.f32.mrb[0].mxu0
        %1006 = vmatprep.mubr.bf16.mxu0 0
        %1007 = vmatmul.mubr.bf16.gmra.mrb[0].mxu0 %v649
        %v1008 = vpop.f32.mrb[0].mxu0
        %v1009 = vadd.f32 0.0, %v1008
        %v1010 = vpop.f32.mrb[0].mxu0
        %v1011 = vpop.f32.mrb[0].mxu0
        %v1012 = vadd.f32 0.0, %v1011
        %v1013 = vpop.f32.mrb[0].mxu0
        %1014 = vdwg.mxu0
        %v1015 = vadd.f32 %v408, %v696
        %v1016 = vadd.f32 %v409, %v698
        %v1017 = vadd.f32 %v410, %v889
        %v1018 = vadd.f32 %v411, %v700
        %v1019 = vadd.f32 %v412, %v702
        %v1020 = vadd.f32 %v413, %v892
        %v1021 = vadd.f32 %v414, %v706
        %v1022 = vadd.f32 %v415, %v708
        %v1023 = vadd.f32 %v416, %v897
        %v1024 = vadd.f32 %v417, %v710
        %v1025 = vadd.f32 %v418, %v712
        %v1026 = vadd.f32 %v419, %v900
        %v1027 = vadd.f32 %v420, %v716
        %v1028 = vadd.f32 %v421, %v718
        %v1029 = vadd.f32 %v422, %v905
        %v1030 = vadd.f32 %v423, %v720
        %v1031 = vadd.f32 %v424, %v722
        %v1032 = vadd.f32 %v425, %v908
        %v1033 = vadd.f32 %v426, %v726
        %v1034 = vadd.f32 %v427, %v728
        %v1035 = vadd.f32 %v428, %v913
        %v1036 = vadd.f32 %v429, %v730
        %v1037 = vadd.f32 %v430, %v732
        %v1038 = vadd.f32 %v431, %v916
        %v1039 = vadd.f32 %v432, %v736
        %v1040 = vadd.f32 %v433, %v738
        %v1041 = vadd.f32 %v434, %v921
        %v1042 = vadd.f32 %v435, %v740
        %v1043 = vadd.f32 %v436, %v742
        %v1044 = vadd.f32 %v437, %v924
        %v1045 = vadd.f32 %v438, %v746
        %v1046 = vadd.f32 %v439, %v748
        %v1047 = vadd.f32 %v440, %v929
        %v1048 = vadd.f32 %v441, %v750
        %v1049 = vadd.f32 %v442, %v752
        %v1050 = vadd.f32 %v443, %v932
        %v1051 = vadd.f32 %v444, %v756
        %v1052 = vadd.f32 %v445, %v758
        %v1053 = vadd.f32 %v446, %v937
        %v1054 = vadd.f32 %v447, %v760
        %v1055 = vadd.f32 %v448, %v762
        %v1056 = vadd.f32 %v449, %v940
        %v1057 = vadd.f32 %v450, %v766
        %v1058 = vadd.f32 %v451, %v768
        %v1059 = vadd.f32 %v452, %v945
        %v1060 = vadd.f32 %v453, %v770
        %v1061 = vadd.f32 %v454, %v772
        %v1062 = vadd.f32 %v455, %v948
        %v1063 = vadd.f32 %v456, %v776
        %v1064 = vadd.f32 %v457, %v778
        %v1065 = vadd.f32 %v458, %v953
        %v1066 = vadd.f32 %v459, %v780
        %v1067 = vadd.f32 %v460, %v782
        %v1068 = vadd.f32 %v461, %v956
        %v1069 = vadd.f32 %v462, %v786
        %v1070 = vadd.f32 %v463, %v788
        %v1071 = vadd.f32 %v464, %v961
        %v1072 = vadd.f32 %v465, %v790
        %v1073 = vadd.f32 %v466, %v792
        %v1074 = vadd.f32 %v467, %v964
        %v1075 = vadd.f32 %v468, %v796
        %v1076 = vadd.f32 %v469, %v798
        %v1077 = vadd.f32 %v470, %v969
        %v1078 = vadd.f32 %v471, %v800
        %v1079 = vadd.f32 %v472, %v802
        %v1080 = vadd.f32 %v473, %v972
        %v1081 = vadd.f32 %v474, %v806
        %v1082 = vadd.f32 %v475, %v808
        %v1083 = vadd.f32 %v476, %v977
        %v1084 = vadd.f32 %v477, %v810
        %v1085 = vadd.f32 %v478, %v812
        %v1086 = vadd.f32 %v479, %v980
        %v1087 = vadd.f32 %v480, %v816
        %v1088 = vadd.f32 %v481, %v818
        %v1089 = vadd.f32 %v482, %v985
        %v1090 = vadd.f32 %v483, %v820
        %v1091 = vadd.f32 %v484, %v822
        %v1092 = vadd.f32 %v485, %v988
        %v1093 = vadd.f32 %v486, %v826
        %v1094 = vadd.f32 %v487, %v828
        %v1095 = vadd.f32 %v488, %v993
        %v1096 = vadd.f32 %v489, %v830
        %v1097 = vadd.f32 %v490, %v832
        %v1098 = vadd.f32 %v491, %v996
        %v1099 = vadd.f32 %v492, %v836
        %v1100 = vadd.f32 %v493, %v838
        %v1101 = vadd.f32 %v494, %v1001
        %v1102 = vadd.f32 %v495, %v840
        %v1103 = vadd.f32 %v496, %v842
        %v1104 = vadd.f32 %v497, %v1004
        %v1105 = vadd.f32 %v498, %v846
        %v1106 = vadd.f32 %v499, %v848
        %v1107 = vadd.f32 %v500, %v1009
        %v1108 = vadd.f32 %v501, %v850
        %v1109 = vadd.f32 %v502, %v852
        %v1110 = vadd.f32 %v503, %v1012
        %1111 = vst [vmem:[#allocation2] sm:$0xff] %v1015
        %1112 = vst [vmem:[#allocation2 + $0x8] sm:$0xff] %v1016
        %vm1113 = vcmask 523264
        %1114 = vst.msk [vmem:[#allocation2 + $0x10] sm:$0xff] %vm1113, %v1017
        %1115 = vst [vmem:[#allocation2 + $0x18] sm:$0xff] %v1018
        %1116 = vst [vmem:[#allocation2 + $0x20] sm:$0xff] %v1019
        %1117 = vst.msk [vmem:[#allocation2 + $0x28] sm:$0xff] %vm1113, %v1020
        %1118 = vst [vmem:[#allocation2 + $0x30] sm:$0xff] %v1021
        %1119 = vst [vmem:[#allocation2 + $0x38] sm:$0xff] %v1022
        %1120 = vst.msk [vmem:[#allocation2 + $0x40] sm:$0xff] %vm1113, %v1023
        %1121 = vst [vmem:[#allocation2 + $0x48] sm:$0xff] %v1024
        %1122 = vst [vmem:[#allocation2 + $0x50] sm:$0xff] %v1025
        %1123 = vst.msk [vmem:[#allocation2 + $0x58] sm:$0xff] %vm1113, %v1026
        %1124 = vst [vmem:[#allocation2 + $0x60] sm:$0xff] %v1027
        %1125 = vst [vmem:[#allocation2 + $0x68] sm:$0xff] %v1028
        %1126 = vst.msk [vmem:[#allocation2 + $0x70] sm:$0xff] %vm1113, %v1029
        %1127 = vst [vmem:[#allocation2 + $0x78] sm:$0xff] %v1030
        %1128 = vst [vmem:[#allocation2 + $0x80] sm:$0xff] %v1031
        %1129 = vst.msk [vmem:[#allocation2 + $0x88] sm:$0xff] %vm1113, %v1032
        %1130 = vst [vmem:[#allocation2 + $0x90] sm:$0xff] %v1033
        %1131 = vst [vmem:[#allocation2 + $0x98] sm:$0xff] %v1034
        %1132 = vst.msk [vmem:[#allocation2 + $0xa0] sm:$0xff] %vm1113, %v1035
        %1133 = vst [vmem:[#allocation2 + $0xa8] sm:$0xff] %v1036
        %1134 = vst [vmem:[#allocation2 + $0xb0] sm:$0xff] %v1037
        %1135 = vst.msk [vmem:[#allocation2 + $0xb8] sm:$0xff] %vm1113, %v1038
        %1136 = vst [vmem:[#allocation2 + $0xc0] sm:$0xff] %v1039
        %1137 = vst [vmem:[#allocation2 + $0xc8] sm:$0xff] %v1040
        %1138 = vst.msk [vmem:[#allocation2 + $0xd0] sm:$0xff] %vm1113, %v1041
        %1139 = vst [vmem:[#allocation2 + $0xd8] sm:$0xff] %v1042
        %1140 = vst [vmem:[#allocation2 + $0xe0] sm:$0xff] %v1043
        %1141 = vst.msk [vmem:[#allocation2 + $0xe8] sm:$0xff] %vm1113, %v1044
        %1142 = vst [vmem:[#allocation2 + $0xf0] sm:$0xff] %v1045
        %1143 = vst [vmem:[#allocation2 + $0xf8] sm:$0xff] %v1046
        %1144 = vst.msk [vmem:[#allocation2 + $0x100] sm:$0xff] %vm1113, %v1047
        %1145 = vst [vmem:[#allocation2 + $0x108] sm:$0xff] %v1048
        %1146 = vst [vmem:[#allocation2 + $0x110] sm:$0xff] %v1049
        %1147 = vst.msk [vmem:[#allocation2 + $0x118] sm:$0xff] %vm1113, %v1050
        %1148 = vst [vmem:[#allocation2 + $0x120] sm:$0xff] %v1051
        %1149 = vst [vmem:[#allocation2 + $0x128] sm:$0xff] %v1052
        %1150 = vst.msk [vmem:[#allocation2 + $0x130] sm:$0xff] %vm1113, %v1053
        %1151 = vst [vmem:[#allocation2 + $0x138] sm:$0xff] %v1054
        %1152 = vst [vmem:[#allocation2 + $0x140] sm:$0xff] %v1055
        %1153 = vst.msk [vmem:[#allocation2 + $0x148] sm:$0xff] %vm1113, %v1056
        %1154 = vst [vmem:[#allocation2 + $0x150] sm:$0xff] %v1057
        %1155 = vst [vmem:[#allocation2 + $0x158] sm:$0xff] %v1058
        %1156 = vst.msk [vmem:[#allocation2 + $0x160] sm:$0xff] %vm1113, %v1059
        %1157 = vst [vmem:[#allocation2 + $0x168] sm:$0xff] %v1060
        %1158 = vst [vmem:[#allocation2 + $0x170] sm:$0xff] %v1061
        %1159 = vst.msk [vmem:[#allocation2 + $0x178] sm:$0xff] %vm1113, %v1062
        %1160 = vst [vmem:[#allocation2 + $0x180] sm:$0xff] %v1063
        %1161 = vst [vmem:[#allocation2 + $0x188] sm:$0xff] %v1064
        %1162 = vst.msk [vmem:[#allocation2 + $0x190] sm:$0xff] %vm1113, %v1065
        %1163 = vst [vmem:[#allocation2 + $0x198] sm:$0xff] %v1066
        %1164 = vst [vmem:[#allocation2 + $0x1a0] sm:$0xff] %v1067
        %1165 = vst.msk [vmem:[#allocation2 + $0x1a8] sm:$0xff] %vm1113, %v1068
        %1166 = vst [vmem:[#allocation2 + $0x1b0] sm:$0xff] %v1069
        %1167 = vst [vmem:[#allocation2 + $0x1b8] sm:$0xff] %v1070
        %1168 = vst.msk [vmem:[#allocation2 + $0x1c0] sm:$0xff] %vm1113, %v1071
        %1169 = vst [vmem:[#allocation2 + $0x1c8] sm:$0xff] %v1072
        %1170 = vst [vmem:[#allocation2 + $0x1d0] sm:$0xff] %v1073
        %1171 = vst.msk [vmem:[#allocation2 + $0x1d8] sm:$0xff] %vm1113, %v1074
        %1172 = vst [vmem:[#allocation2 + $0x1e0] sm:$0xff] %v1075
        %1173 = vst [vmem:[#allocation2 + $0x1e8] sm:$0xff] %v1076
        %1174 = vst.msk [vmem:[#allocation2 + $0x1f0] sm:$0xff] %vm1113, %v1077
        %1175 = vst [vmem:[#allocation2 + $0x1f8] sm:$0xff] %v1078
        %1176 = vst [vmem:[#allocation2 + $0x200] sm:$0xff] %v1079
        %1177 = vst.msk [vmem:[#allocation2 + $0x208] sm:$0xff] %vm1113, %v1080
        %1178 = vst [vmem:[#allocation2 + $0x210] sm:$0xff] %v1081
        %1179 = vst [vmem:[#allocation2 + $0x218] sm:$0xff] %v1082
        %1180 = vst.msk [vmem:[#allocation2 + $0x220] sm:$0xff] %vm1113, %v1083
        %1181 = vst [vmem:[#allocation2 + $0x228] sm:$0xff] %v1084
        %1182 = vst [vmem:[#allocation2 + $0x230] sm:$0xff] %v1085
        %1183 = vst.msk [vmem:[#allocation2 + $0x238] sm:$0xff] %vm1113, %v1086
        %1184 = vst [vmem:[#allocation2 + $0x240] sm:$0xff] %v1087
        %1185 = vst [vmem:[#allocation2 + $0x248] sm:$0xff] %v1088
        %1186 = vst.msk [vmem:[#allocation2 + $0x250] sm:$0xff] %vm1113, %v1089
        %1187 = vst [vmem:[#allocation2 + $0x258] sm:$0xff] %v1090
        %1188 = vst [vmem:[#allocation2 + $0x260] sm:$0xff] %v1091
        %1189 = vst.msk [vmem:[#allocation2 + $0x268] sm:$0xff] %vm1113, %v1092
        %1190 = vst [vmem:[#allocation2 + $0x270] sm:$0xff] %v1093
        %1191 = vst [vmem:[#allocation2 + $0x278] sm:$0xff] %v1094
        %1192 = vst.msk [vmem:[#allocation2 + $0x280] sm:$0xff] %vm1113, %v1095
        %1193 = vst [vmem:[#allocation2 + $0x288] sm:$0xff] %v1096
        %1194 = vst [vmem:[#allocation2 + $0x290] sm:$0xff] %v1097
        %1195 = vst.msk [vmem:[#allocation2 + $0x298] sm:$0xff] %vm1113, %v1098
        %1196 = vst [vmem:[#allocation2 + $0x2a0] sm:$0xff] %v1099
        %1197 = vst [vmem:[#allocation2 + $0x2a8] sm:$0xff] %v1100
        %1198 = vst.msk [vmem:[#allocation2 + $0x2b0] sm:$0xff] %vm1113, %v1101
        %1199 = vst [vmem:[#allocation2 + $0x2b8] sm:$0xff] %v1102
        %1200 = vst [vmem:[#allocation2 + $0x2c0] sm:$0xff] %v1103
        %1201 = vst.msk [vmem:[#allocation2 + $0x2c8] sm:$0xff] %vm1113, %v1104
        %1202 = vst [vmem:[#allocation2 + $0x2d0] sm:$0xff] %v1105
        %1203 = vst [vmem:[#allocation2 + $0x2d8] sm:$0xff] %v1106
        %1204 = vst.msk [vmem:[#allocation2 + $0x2e0] sm:$0xff] %vm1113, %v1107
        %1205 = vst [vmem:[#allocation2 + $0x2e8] sm:$0xff] %v1108
        %1206 = vst [vmem:[#allocation2 + $0x2f0] sm:$0xff] %v1109
        %1207 = vst.msk [vmem:[#allocation2 + $0x2f8] sm:$0xff] %vm1113, %v1110
        %v1208 = vld [vmem:[%s240] sm:$0xf]
        %v1209 = vld [vmem:[%s240 + $0x4] sm:$0xf]
        %v1210 = vld [vmem:[%s240 + $0x8] sm:$0x1]
        %v1211 = vld [vmem:[%s240 + $0xc] sm:$0xf]
        %v1212 = vld [vmem:[%s240 + $0x10] sm:$0xf]
        %v1213 = vld [vmem:[%s240 + $0x14] sm:$0x1]
        %v1214 = vld [vmem:[%s240 + $0x18] sm:$0xf]
        %v1215 = vld [vmem:[%s240 + $0x1c] sm:$0xf]
        %v1216 = vld [vmem:[%s240 + $0x20] sm:$0x1]
        %v1217 = vld [vmem:[%s240 + $0x24] sm:$0xf]
        %v1218 = vld [vmem:[%s240 + $0x28] sm:$0xf]
        %v1219 = vld [vmem:[%s240 + $0x2c] sm:$0x1]
        %v1220 = vld [vmem:[%s240 + $0x30] sm:$0xf]
        %v1221 = vld [vmem:[%s240 + $0x34] sm:$0xf]
        %v1222 = vld [vmem:[%s240 + $0x38] sm:$0x1]
        %v1223 = vld [vmem:[%s240 + $0x3c] sm:$0xf]
        %v1224 = vld [vmem:[%s240 + $0x40] sm:$0xf]
        %v1225 = vld [vmem:[%s240 + $0x44] sm:$0x1]
        %v1226 = vld [vmem:[%s240 + $0x48] sm:$0xf]
        %v1227 = vld [vmem:[%s240 + $0x4c] sm:$0xf]
        %v1228 = vld [vmem:[%s240 + $0x50] sm:$0x1]
        %v1229 = vld [vmem:[%s240 + $0x54] sm:$0xf]
        %v1230 = vld [vmem:[%s240 + $0x58] sm:$0xf]
        %v1231 = vld [vmem:[%s240 + $0x5c] sm:$0x1]
        %v1232 = vld [vmem:[%s240 + $0x60] sm:$0xf]
        %v1233 = vld [vmem:[%s240 + $0x64] sm:$0xf]
        %v1234 = vld [vmem:[%s240 + $0x68] sm:$0x1]
        %v1235 = vld [vmem:[%s240 + $0x6c] sm:$0xf]
        %v1236 = vld [vmem:[%s240 + $0x70] sm:$0xf]
        %v1237 = vld [vmem:[%s240 + $0x74] sm:$0x1]
        %v1238 = vld [vmem:[%s240 + $0x78] sm:$0xf]
        %v1239 = vld [vmem:[%s240 + $0x7c] sm:$0xf]
        %v1240 = vld [vmem:[%s240 + $0x80] sm:$0x1]
        %v1241 = vld [vmem:[%s240 + $0x84] sm:$0xf]
        %v1242 = vld [vmem:[%s240 + $0x88] sm:$0xf]
        %v1243 = vld [vmem:[%s240 + $0x8c] sm:$0x1]
        %v1244 = vld [vmem:[%s240 + $0x90] sm:$0xf]
        %v1245 = vld [vmem:[%s240 + $0x94] sm:$0xf]
        %v1246 = vld [vmem:[%s240 + $0x98] sm:$0x1]
        %v1247 = vld [vmem:[%s240 + $0x9c] sm:$0xf]
        %v1248 = vld [vmem:[%s240 + $0xa0] sm:$0xf]
        %v1249 = vld [vmem:[%s240 + $0xa4] sm:$0x1]
        %v1250 = vld [vmem:[%s240 + $0xa8] sm:$0xf]
        %v1251 = vld [vmem:[%s240 + $0xac] sm:$0xf]
        %v1252 = vld [vmem:[%s240 + $0xb0] sm:$0x1]
        %v1253 = vld [vmem:[%s240 + $0xb4] sm:$0xf]
        %v1254 = vld [vmem:[%s240 + $0xb8] sm:$0xf]
        %v1255 = vld [vmem:[%s240 + $0xbc] sm:$0x1]
        %vm1256 = vsmask.f32 3328
        %vm1257 = vsmask.f32 7440
        %vm1258 = vmor %vm1256, %vm1257
        %v1260 = vshrl.u32 %v1208, 16
        %v1262 = vrot.slane %v1260, 4
        %v1263 = vshll.u32 %v1208, 16
        %v1265 = vrot.slane %v1263, 5
        %v1266 = vor.u32 %v1262, %v1265
        %v1267 = vrot.slane %v1266, 4
        %v1269 = vshll.u32 %v1209, 16
        %v1271 = vrot.slane %v1269, 5
        %v1272 = vsel %vm1258, %v1267, %v1271
        %v1273 = vshrl.u32 %v1209, 16
        %v1275 = vrot.slane %v1273, 4
        %v1276 = vor.u32 %v1275, %v1271
        %v1277 = vrot.slane %v1276, 4
        %v1279 = vshll.u32 %v1210, 16
        %v1281 = vrot.slane %v1279, 5
        %v1282 = vsel %vm1258, %v1277, %v1281
        %v1284 = vshrl.u32 %v1211, 16
        %v1286 = vrot.slane %v1284, 4
        %v1287 = vshll.u32 %v1211, 16
        %v1289 = vrot.slane %v1287, 5
        %v1290 = vor.u32 %v1286, %v1289
        %v1291 = vrot.slane %v1290, 4
        %v1293 = vshll.u32 %v1212, 16
        %v1295 = vrot.slane %v1293, 5
        %v1296 = vsel %vm1258, %v1291, %v1295
        %v1297 = vshrl.u32 %v1212, 16
        %v1299 = vrot.slane %v1297, 4
        %v1300 = vor.u32 %v1299, %v1295
        %v1301 = vrot.slane %v1300, 4
        %v1303 = vshll.u32 %v1213, 16
        %v1305 = vrot.slane %v1303, 5
        %v1306 = vsel %vm1258, %v1301, %v1305
        %v1308 = vshrl.u32 %v1214, 16
        %v1310 = vrot.slane %v1308, 4
        %v1311 = vshll.u32 %v1214, 16
        %v1313 = vrot.slane %v1311, 5
        %v1314 = vor.u32 %v1310, %v1313
        %v1315 = vrot.slane %v1314, 4
        %v1317 = vshll.u32 %v1215, 16
        %v1319 = vrot.slane %v1317, 5
        %v1320 = vsel %vm1258, %v1315, %v1319
        %v1321 = vshrl.u32 %v1215, 16
        %v1323 = vrot.slane %v1321, 4
        %v1324 = vor.u32 %v1323, %v1319
        %v1325 = vrot.slane %v1324, 4
        %v1327 = vshll.u32 %v1216, 16
        %v1329 = vrot.slane %v1327, 5
        %v1330 = vsel %vm1258, %v1325, %v1329
        %v1332 = vshrl.u32 %v1217, 16
        %v1334 = vrot.slane %v1332, 4
        %v1335 = vshll.u32 %v1217, 16
        %v1337 = vrot.slane %v1335, 5
        %v1338 = vor.u32 %v1334, %v1337
        %v1339 = vrot.slane %v1338, 4
        %v1341 = vshll.u32 %v1218, 16
        %v1343 = vrot.slane %v1341, 5
        %v1344 = vsel %vm1258, %v1339, %v1343
        %v1345 = vshrl.u32 %v1218, 16
        %v1347 = vrot.slane %v1345, 4
        %v1348 = vor.u32 %v1347, %v1343
        %v1349 = vrot.slane %v1348, 4
        %v1351 = vshll.u32 %v1219, 16
        %v1353 = vrot.slane %v1351, 5
        %v1354 = vsel %vm1258, %v1349, %v1353
        %v1356 = vshrl.u32 %v1220, 16
        %v1358 = vrot.slane %v1356, 4
        %v1359 = vshll.u32 %v1220, 16
        %v1361 = vrot.slane %v1359, 5
        %v1362 = vor.u32 %v1358, %v1361
        %v1363 = vrot.slane %v1362, 4
        %v1365 = vshll.u32 %v1221, 16
        %v1367 = vrot.slane %v1365, 5
        %v1368 = vsel %vm1258, %v1363, %v1367
        %v1369 = vshrl.u32 %v1221, 16
        %v1371 = vrot.slane %v1369, 4
        %v1372 = vor.u32 %v1371, %v1367
        %v1373 = vrot.slane %v1372, 4
        %v1375 = vshll.u32 %v1222, 16
        %v1377 = vrot.slane %v1375, 5
        %v1378 = vsel %vm1258, %v1373, %v1377
        %v1380 = vshrl.u32 %v1223, 16
        %v1382 = vrot.slane %v1380, 4
        %v1383 = vshll.u32 %v1223, 16
        %v1385 = vrot.slane %v1383, 5
        %v1386 = vor.u32 %v1382, %v1385
        %v1387 = vrot.slane %v1386, 4
        %v1389 = vshll.u32 %v1224, 16
        %v1391 = vrot.slane %v1389, 5
        %v1392 = vsel %vm1258, %v1387, %v1391
        %v1393 = vshrl.u32 %v1224, 16
        %v1395 = vrot.slane %v1393, 4
        %v1396 = vor.u32 %v1395, %v1391
        %v1397 = vrot.slane %v1396, 4
        %v1399 = vshll.u32 %v1225, 16
        %v1401 = vrot.slane %v1399, 5
        %v1402 = vsel %vm1258, %v1397, %v1401
        %v1404 = vshrl.u32 %v1226, 16
        %v1406 = vrot.slane %v1404, 4
        %v1407 = vshll.u32 %v1226, 16
        %v1409 = vrot.slane %v1407, 5
        %v1410 = vor.u32 %v1406, %v1409
        %v1411 = vrot.slane %v1410, 4
        %v1413 = vshll.u32 %v1227, 16
        %v1415 = vrot.slane %v1413, 5
        %v1416 = vsel %vm1258, %v1411, %v1415
        %v1417 = vshrl.u32 %v1227, 16
        %v1419 = vrot.slane %v1417, 4
        %v1420 = vor.u32 %v1419, %v1415
        %v1421 = vrot.slane %v1420, 4
        %v1423 = vshll.u32 %v1228, 16
        %v1425 = vrot.slane %v1423, 5
        %v1426 = vsel %vm1258, %v1421, %v1425
        %v1428 = vshrl.u32 %v1229, 16
        %v1430 = vrot.slane %v1428, 4
        %v1431 = vshll.u32 %v1229, 16
        %v1433 = vrot.slane %v1431, 5
        %v1434 = vor.u32 %v1430, %v1433
        %v1435 = vrot.slane %v1434, 4
        %v1437 = vshll.u32 %v1230, 16
        %v1439 = vrot.slane %v1437, 5
        %v1440 = vsel %vm1258, %v1435, %v1439
        %v1441 = vshrl.u32 %v1230, 16
        %v1443 = vrot.slane %v1441, 4
        %v1444 = vor.u32 %v1443, %v1439
        %v1445 = vrot.slane %v1444, 4
        %v1447 = vshll.u32 %v1231, 16
        %v1449 = vrot.slane %v1447, 5
        %v1450 = vsel %vm1258, %v1445, %v1449
        %v1452 = vshrl.u32 %v1232, 16
        %v1454 = vrot.slane %v1452, 4
        %v1455 = vshll.u32 %v1232, 16
        %v1457 = vrot.slane %v1455, 5
        %v1458 = vor.u32 %v1454, %v1457
        %v1459 = vrot.slane %v1458, 4
        %v1461 = vshll.u32 %v1233, 16
        %v1463 = vrot.slane %v1461, 5
        %v1464 = vsel %vm1258, %v1459, %v1463
        %v1465 = vshrl.u32 %v1233, 16
        %v1467 = vrot.slane %v1465, 4
        %v1468 = vor.u32 %v1467, %v1463
        %v1469 = vrot.slane %v1468, 4
        %v1471 = vshll.u32 %v1234, 16
        %v1473 = vrot.slane %v1471, 5
        %v1474 = vsel %vm1258, %v1469, %v1473
        %v1476 = vshrl.u32 %v1235, 16
        %v1478 = vrot.slane %v1476, 4
        %v1479 = vshll.u32 %v1235, 16
        %v1481 = vrot.slane %v1479, 5
        %v1482 = vor.u32 %v1478, %v1481
        %v1483 = vrot.slane %v1482, 4
        %v1485 = vshll.u32 %v1236, 16
        %v1487 = vrot.slane %v1485, 5
        %v1488 = vsel %vm1258, %v1483, %v1487
        %v1489 = vshrl.u32 %v1236, 16
        %v1491 = vrot.slane %v1489, 4
        %v1492 = vor.u32 %v1491, %v1487
        %v1493 = vrot.slane %v1492, 4
        %v1495 = vshll.u32 %v1237, 16
        %v1497 = vrot.slane %v1495, 5
        %v1498 = vsel %vm1258, %v1493, %v1497
        %v1500 = vshrl.u32 %v1238, 16
        %v1502 = vrot.slane %v1500, 4
        %v1503 = vshll.u32 %v1238, 16
        %v1505 = vrot.slane %v1503, 5
        %v1506 = vor.u32 %v1502, %v1505
        %v1507 = vrot.slane %v1506, 4
        %v1509 = vshll.u32 %v1239, 16
        %v1511 = vrot.slane %v1509, 5
        %v1512 = vsel %vm1258, %v1507, %v1511
        %v1513 = vshrl.u32 %v1239, 16
        %v1515 = vrot.slane %v1513, 4
        %v1516 = vor.u32 %v1515, %v1511
        %v1517 = vrot.slane %v1516, 4
        %v1519 = vshll.u32 %v1240, 16
        %v1521 = vrot.slane %v1519, 5
        %v1522 = vsel %vm1258, %v1517, %v1521
        %v1524 = vshrl.u32 %v1241, 16
        %v1526 = vrot.slane %v1524, 4
        %v1527 = vshll.u32 %v1241, 16
        %v1529 = vrot.slane %v1527, 5
        %v1530 = vor.u32 %v1526, %v1529
        %v1531 = vrot.slane %v1530, 4
        %v1533 = vshll.u32 %v1242, 16
        %v1535 = vrot.slane %v1533, 5
        %v1536 = vsel %vm1258, %v1531, %v1535
        %v1537 = vshrl.u32 %v1242, 16
        %v1539 = vrot.slane %v1537, 4
        %v1540 = vor.u32 %v1539, %v1535
        %v1541 = vrot.slane %v1540, 4
        %v1543 = vshll.u32 %v1243, 16
        %v1545 = vrot.slane %v1543, 5
        %v1546 = vsel %vm1258, %v1541, %v1545
        %v1548 = vshrl.u32 %v1244, 16
        %v1550 = vrot.slane %v1548, 4
        %v1551 = vshll.u32 %v1244, 16
        %v1553 = vrot.slane %v1551, 5
        %v1554 = vor.u32 %v1550, %v1553
        %v1555 = vrot.slane %v1554, 4
        %v1557 = vshll.u32 %v1245, 16
        %v1559 = vrot.slane %v1557, 5
        %v1560 = vsel %vm1258, %v1555, %v1559
        %v1561 = vshrl.u32 %v1245, 16
        %v1563 = vrot.slane %v1561, 4
        %v1564 = vor.u32 %v1563, %v1559
        %v1565 = vrot.slane %v1564, 4
        %v1567 = vshll.u32 %v1246, 16
        %v1569 = vrot.slane %v1567, 5
        %v1570 = vsel %vm1258, %v1565, %v1569
        %v1572 = vshrl.u32 %v1247, 16
        %v1574 = vrot.slane %v1572, 4
        %v1575 = vshll.u32 %v1247, 16
        %v1577 = vrot.slane %v1575, 5
        %v1578 = vor.u32 %v1574, %v1577
        %v1579 = vrot.slane %v1578, 4
        %v1581 = vshll.u32 %v1248, 16
        %v1583 = vrot.slane %v1581, 5
        %v1584 = vsel %vm1258, %v1579, %v1583
        %v1585 = vshrl.u32 %v1248, 16
        %v1587 = vrot.slane %v1585, 4
        %v1588 = vor.u32 %v1587, %v1583
        %v1589 = vrot.slane %v1588, 4
        %v1591 = vshll.u32 %v1249, 16
        %v1593 = vrot.slane %v1591, 5
        %v1594 = vsel %vm1258, %v1589, %v1593
        %v1596 = vshrl.u32 %v1250, 16
        %v1598 = vrot.slane %v1596, 4
        %v1599 = vshll.u32 %v1250, 16
        %v1601 = vrot.slane %v1599, 5
        %v1602 = vor.u32 %v1598, %v1601
        %v1603 = vrot.slane %v1602, 4
        %v1605 = vshll.u32 %v1251, 16
        %v1607 = vrot.slane %v1605, 5
        %v1608 = vsel %vm1258, %v1603, %v1607
        %v1609 = vshrl.u32 %v1251, 16
        %v1611 = vrot.slane %v1609, 4
        %v1612 = vor.u32 %v1611, %v1607
        %v1613 = vrot.slane %v1612, 4
        %v1615 = vshll.u32 %v1252, 16
        %v1617 = vrot.slane %v1615, 5
        %v1618 = vsel %vm1258, %v1613, %v1617
        %v1620 = vshrl.u32 %v1253, 16
        %v1622 = vrot.slane %v1620, 4
        %v1623 = vshll.u32 %v1253, 16
        %v1625 = vrot.slane %v1623, 5
        %v1626 = vor.u32 %v1622, %v1625
        %v1627 = vrot.slane %v1626, 4
        %v1629 = vshll.u32 %v1254, 16
        %v1631 = vrot.slane %v1629, 5
        %v1632 = vsel %vm1258, %v1627, %v1631
        %v1633 = vshrl.u32 %v1254, 16
        %v1635 = vrot.slane %v1633, 4
        %v1636 = vor.u32 %v1635, %v1631
        %v1637 = vrot.slane %v1636, 4
        %v1639 = vshll.u32 %v1255, 16
        %v1641 = vrot.slane %v1639, 5
        %v1642 = vsel %vm1258, %v1637, %v1641
        %v1643 = vld [vmem:[#allocation2] sm:$0xff]
        %v1644 = vld [vmem:[#allocation2 + $0x8] sm:$0xff]
        %v1645 = vld [vmem:[#allocation2 + $0x10] sm:$0xff]
        %v1646 = vld [vmem:[#allocation2 + $0x18] sm:$0xff]
        %v1647 = vld [vmem:[#allocation2 + $0x20] sm:$0xff]
        %v1648 = vld [vmem:[#allocation2 + $0x28] sm:$0xff]
        %v1649 = vld [vmem:[#allocation2 + $0x30] sm:$0xff]
        %v1650 = vld [vmem:[#allocation2 + $0x38] sm:$0xff]
        %v1651 = vld [vmem:[#allocation2 + $0x40] sm:$0xff]
        %v1652 = vld [vmem:[#allocation2 + $0x48] sm:$0xff]
        %v1653 = vld [vmem:[#allocation2 + $0x50] sm:$0xff]
        %v1654 = vld [vmem:[#allocation2 + $0x58] sm:$0xff]
        %v1655 = vld [vmem:[#allocation2 + $0x60] sm:$0xff]
        %v1656 = vld [vmem:[#allocation2 + $0x68] sm:$0xff]
        %v1657 = vld [vmem:[#allocation2 + $0x70] sm:$0xff]
        %v1658 = vld [vmem:[#allocation2 + $0x78] sm:$0xff]
        %v1659 = vld [vmem:[#allocation2 + $0x80] sm:$0xff]
        %v1660 = vld [vmem:[#allocation2 + $0x88] sm:$0xff]
        %v1661 = vld [vmem:[#allocation2 + $0x90] sm:$0xff]
        %v1662 = vld [vmem:[#allocation2 + $0x98] sm:$0xff]
        %v1663 = vld [vmem:[#allocation2 + $0xa0] sm:$0xff]
        %v1664 = vld [vmem:[#allocation2 + $0xa8] sm:$0xff]
        %v1665 = vld [vmem:[#allocation2 + $0xb0] sm:$0xff]
        %v1666 = vld [vmem:[#allocation2 + $0xb8] sm:$0xff]
        %v1667 = vld [vmem:[#allocation2 + $0xc0] sm:$0xff]
        %v1668 = vld [vmem:[#allocation2 + $0xc8] sm:$0xff]
        %v1669 = vld [vmem:[#allocation2 + $0xd0] sm:$0xff]
        %v1670 = vld [vmem:[#allocation2 + $0xd8] sm:$0xff]
        %v1671 = vld [vmem:[#allocation2 + $0xe0] sm:$0xff]
        %v1672 = vld [vmem:[#allocation2 + $0xe8] sm:$0xff]
        %v1673 = vld [vmem:[#allocation2 + $0xf0] sm:$0xff]
        %v1674 = vld [vmem:[#allocation2 + $0xf8] sm:$0xff]
        %v1675 = vld [vmem:[#allocation2 + $0x100] sm:$0xff]
        %v1676 = vld [vmem:[#allocation2 + $0x108] sm:$0xff]
        %v1677 = vld [vmem:[#allocation2 + $0x110] sm:$0xff]
        %v1678 = vld [vmem:[#allocation2 + $0x118] sm:$0xff]
        %v1679 = vld [vmem:[#allocation2 + $0x120] sm:$0xff]
        %v1680 = vld [vmem:[#allocation2 + $0x128] sm:$0xff]
        %v1681 = vld [vmem:[#allocation2 + $0x130] sm:$0xff]
        %v1682 = vld [vmem:[#allocation2 + $0x138] sm:$0xff]
        %v1683 = vld [vmem:[#allocation2 + $0x140] sm:$0xff]
        %v1684 = vld [vmem:[#allocation2 + $0x148] sm:$0xff]
        %v1685 = vld [vmem:[#allocation2 + $0x150] sm:$0xff]
        %v1686 = vld [vmem:[#allocation2 + $0x158] sm:$0xff]
        %v1687 = vld [vmem:[#allocation2 + $0x160] sm:$0xff]
        %v1688 = vld [vmem:[#allocation2 + $0x168] sm:$0xff]
        %v1689 = vld [vmem:[#allocation2 + $0x170] sm:$0xff]
        %v1690 = vld [vmem:[#allocation2 + $0x178] sm:$0xff]
        %v1691 = vld [vmem:[#allocation2 + $0x180] sm:$0xff]
        %v1692 = vld [vmem:[#allocation2 + $0x188] sm:$0xff]
        %v1693 = vld [vmem:[#allocation2 + $0x190] sm:$0xff]
        %v1694 = vld [vmem:[#allocation2 + $0x198] sm:$0xff]
        %v1695 = vld [vmem:[#allocation2 + $0x1a0] sm:$0xff]
        %v1696 = vld [vmem:[#allocation2 + $0x1a8] sm:$0xff]
        %v1697 = vld [vmem:[#allocation2 + $0x1b0] sm:$0xff]
        %v1698 = vld [vmem:[#allocation2 + $0x1b8] sm:$0xff]
        %v1699 = vld [vmem:[#allocation2 + $0x1c0] sm:$0xff]
        %v1700 = vld [vmem:[#allocation2 + $0x1c8] sm:$0xff]
        %v1701 = vld [vmem:[#allocation2 + $0x1d0] sm:$0xff]
        %v1702 = vld [vmem:[#allocation2 + $0x1d8] sm:$0xff]
        %v1703 = vld [vmem:[#allocation2 + $0x1e0] sm:$0xff]
        %v1704 = vld [vmem:[#allocation2 + $0x1e8] sm:$0xff]
        %v1705 = vld [vmem:[#allocation2 + $0x1f0] sm:$0xff]
        %v1706 = vld [vmem:[#allocation2 + $0x1f8] sm:$0xff]
        %v1707 = vld [vmem:[#allocation2 + $0x200] sm:$0xff]
        %v1708 = vld [vmem:[#allocation2 + $0x208] sm:$0xff]
        %v1709 = vld [vmem:[#allocation2 + $0x210] sm:$0xff]
        %v1710 = vld [vmem:[#allocation2 + $0x218] sm:$0xff]
        %v1711 = vld [vmem:[#allocation2 + $0x220] sm:$0xff]
        %v1712 = vld [vmem:[#allocation2 + $0x228] sm:$0xff]
        %v1713 = vld [vmem:[#allocation2 + $0x230] sm:$0xff]
        %v1714 = vld [vmem:[#allocation2 + $0x238] sm:$0xff]
        %v1715 = vld [vmem:[#allocation2 + $0x240] sm:$0xff]
        %v1716 = vld [vmem:[#allocation2 + $0x248] sm:$0xff]
        %v1717 = vld [vmem:[#allocation2 + $0x250] sm:$0xff]
        %v1718 = vld [vmem:[#allocation2 + $0x258] sm:$0xff]
        %v1719 = vld [vmem:[#allocation2 + $0x260] sm:$0xff]
        %v1720 = vld [vmem:[#allocation2 + $0x268] sm:$0xff]
        %v1721 = vld [vmem:[#allocation2 + $0x270] sm:$0xff]
        %v1722 = vld [vmem:[#allocation2 + $0x278] sm:$0xff]
        %v1723 = vld [vmem:[#allocation2 + $0x280] sm:$0xff]
        %v1724 = vld [vmem:[#allocation2 + $0x288] sm:$0xff]
        %v1725 = vld [vmem:[#allocation2 + $0x290] sm:$0xff]
        %v1726 = vld [vmem:[#allocation2 + $0x298] sm:$0xff]
        %v1727 = vld [vmem:[#allocation2 + $0x2a0] sm:$0xff]
        %v1728 = vld [vmem:[#allocation2 + $0x2a8] sm:$0xff]
        %v1729 = vld [vmem:[#allocation2 + $0x2b0] sm:$0xff]
        %v1730 = vld [vmem:[#allocation2 + $0x2b8] sm:$0xff]
        %v1731 = vld [vmem:[#allocation2 + $0x2c0] sm:$0xff]
        %v1732 = vld [vmem:[#allocation2 + $0x2c8] sm:$0xff]
        %v1733 = vld [vmem:[#allocation2 + $0x2d0] sm:$0xff]
        %v1734 = vld [vmem:[#allocation2 + $0x2d8] sm:$0xff]
        %v1735 = vld [vmem:[#allocation2 + $0x2e0] sm:$0xff]
        %v1736 = vld [vmem:[#allocation2 + $0x2e8] sm:$0xff]
        %v1737 = vld [vmem:[#allocation2 + $0x2f0] sm:$0xff]
        %v1738 = vld [vmem:[#allocation2 + $0x2f8] sm:$0xff]
        %s1739 = scalar_lea.vmem %s249, 6
        %v1740 = vld [vmem:[%s1739] sm:$0x3f]
        %v1741 = vunpack.c.l.b16 %v1272
        %v1742 = vunpack.c.l.b16 %v1282
        %v1743 = vunpack.c.l.b16 %v1296
        %v1744 = vunpack.c.l.b16 %v1306
        %v1745 = vunpack.c.l.b16 %v1320
        %v1746 = vunpack.c.l.b16 %v1330
        %v1747 = vunpack.c.l.b16 %v1344
        %v1748 = vunpack.c.l.b16 %v1354
        %v1749 = vunpack.c.l.b16 %v1368
        %v1750 = vunpack.c.l.b16 %v1378
        %v1751 = vunpack.c.l.b16 %v1392
        %v1752 = vunpack.c.l.b16 %v1402
        %v1753 = vunpack.c.l.b16 %v1416
        %v1754 = vunpack.c.l.b16 %v1426
        %v1755 = vunpack.c.l.b16 %v1440
        %v1756 = vunpack.c.l.b16 %v1450
        %v1757 = vunpack.c.l.b16 %v1464
        %v1758 = vunpack.c.l.b16 %v1474
        %v1759 = vunpack.c.l.b16 %v1488
        %v1760 = vunpack.c.l.b16 %v1498
        %v1761 = vunpack.c.l.b16 %v1512
        %v1762 = vunpack.c.l.b16 %v1522
        %v1763 = vunpack.c.l.b16 %v1536
        %v1764 = vunpack.c.l.b16 %v1546
        %v1765 = vunpack.c.l.b16 %v1560
        %v1766 = vunpack.c.l.b16 %v1570
        %v1767 = vunpack.c.l.b16 %v1584
        %v1768 = vunpack.c.l.b16 %v1594
        %v1769 = vunpack.c.l.b16 %v1608
        %v1770 = vunpack.c.l.b16 %v1618
        %v1771 = vunpack.c.l.b16 %v1632
        %v1772 = vunpack.c.l.b16 %v1642
        %v1773 = vpack.c.b16 %v1742, %v1741
        %v1774 = vpack.c.b16 %v1744, %v1743
        %v1775 = vpack.c.b16 %v1746, %v1745
        %v1776 = vpack.c.b16 %v1748, %v1747
        %v1777 = vpack.c.b16 %v1750, %v1749
        %v1778 = vpack.c.b16 %v1752, %v1751
        %v1779 = vpack.c.b16 %v1754, %v1753
        %v1780 = vpack.c.b16 %v1756, %v1755
        %v1781 = vpack.c.b16 %v1758, %v1757
        %v1782 = vpack.c.b16 %v1760, %v1759
        %v1783 = vpack.c.b16 %v1762, %v1761
        %v1784 = vpack.c.b16 %v1764, %v1763
        %v1785 = vpack.c.b16 %v1766, %v1765
        %v1786 = vpack.c.b16 %v1768, %v1767
        %v1787 = vpack.c.b16 %v1770, %v1769
        %v1788 = vpack.c.b16 %v1772, %v1771
        %v1790 = vcombine.high %v1740, %v1740
        %v1792 = vunpack.c.l.s4 1983009808
        %v1793 = vunpack.c.0.s8 %v1792
        %v1794 = vlaneseq
        %v1795 = vshrl.u32 %v1794, 7
        %v1796 = vsub.s32 %v1793, %v1795
        %v1797 = vrot.slane %v1740, %v1796
        %v1799 = vunpack.c.l.s4 1983009808
        %v1800 = vunpack.c.0.s8 %v1799
        %v1801 = vlaneseq
        %v1802 = vshrl.u32 %v1801, 7
        %v1803 = vsub.s32 %v1800, %v1802
        %v1804 = vrot.slane %v1790, %v1803
        %v1805 = vcombine.high %v1797, %v1797
        %v1807 = vsel %vm602, %v1773, 0
        %v1810 = vsel %vm602, %v1774, 0
        %v1813 = vsel %vm602, %v1775, 0
        %v1816 = vsel %vm602, %v1776, 0
        %v1819 = vsel %vm602, %v1777, 0
        %v1822 = vsel %vm602, %v1778, 0
        %v1825 = vsel %vm602, %v1779, 0
        %v1828 = vsel %vm602, %v1780, 0
        %v1831 = vsel %vm602, %v1781, 0
        %v1834 = vsel %vm602, %v1782, 0
        %v1837 = vsel %vm602, %v1783, 0
        %v1840 = vsel %vm602, %v1784, 0
        %v1843 = vsel %vm602, %v1785, 0
        %v1846 = vsel %vm602, %v1786, 0
        %v1849 = vsel %vm602, %v1787, 0
        %v1852 = vsel %vm602, %v1788, 0
        %v1855 = vsel %vm651, %v1797, 0
        %v1858 = vsel %vm651, %v1805, 0
        %v1861 = vsel %vm651, %v1804, 0
        %1863 = vmatprep.subr.bf16.mxu0 %v1858
        %1864 = vmatpush1.bf16.msra.mxu0 %v1855
        %1865 = vmatprep.subr.bf16.mxu0 0
        %1866 = vmatpush1.bf16.msra.mxu0 0
        %1867 = vmatprep.subr.bf16.mxu0 0
        %1868 = vmatpush1.bf16.msra.mxu0 0
        %1869 = vmatprep.subr.bf16.mxu0 0
        %1870 = vmatpush1.bf16.msra.mxu0 0
        %1871 = vmatprep.subr.bf16.mxu0 0
        %1872 = vmatpush1.bf16.msra.mxu0 0
        %1873 = vmatprep.subr.bf16.mxu0 0
        %1874 = vmatpush1.bf16.msra.mxu0 0
        %1875 = vmatprep.subr.bf16.mxu0 0
        %1876 = vmatpush1.bf16.msra.mxu0 0
        %1877 = vmatprep.subr.bf16.mxu0 0
        %1878 = vmatpush1.bf16.msra.mxu0 0
        %1879 = vmatprep.subr.bf16.mxu0 0
        %1880 = vmatpush1.bf16.msra.mxu0 0
        %1881 = vmatprep.subr.bf16.mxu0 0
        %1882 = vmatpush1.bf16.msra.mxu0 0
        %1883 = vmatprep.subr.bf16.mxu0 0
        %1884 = vmatpush1.bf16.msra.mxu0 0
        %1885 = vmatprep.subr.bf16.mxu0 0
        %1886 = vmatpush1.bf16.msra.mxu0 0
        %1887 = vmatprep.subr.bf16.mxu0 0
        %1888 = vmatpush1.bf16.msra.mxu0 0
        %1889 = vmatprep.subr.bf16.mxu0 0
        %1890 = vmatpush1.bf16.msra.mxu0 0
        %1891 = vmatprep.subr.bf16.mxu0 0
        %1892 = vmatpush1.bf16.msra.mxu0 0
        %1893 = vmatprep.subr.bf16.mxu0 0
        %1894 = vmatpush1.bf16.msra.mxu0 0
        %1895 = vmatprep.mubr.bf16.mxu0 0
        %1896 = vmatmul.mubr.bf16.gmra.mrb[0].mxu0 %v1807
        %v1897 = vpop.f32.mrb[0].mxu0
        %v1898 = vadd.f32 0.0, %v1897
        %v1899 = vpop.f32.mrb[0].mxu0
        %v1900 = vadd.f32 0.0, %v1899
        %v1901 = vpop.f32.mrb[0].mxu0
        %v1902 = vadd.f32 0.0, %v1901
        %v1903 = vpop.f32.mrb[0].mxu0
        %v1904 = vadd.f32 0.0, %v1903
        %1905 = vmatprep.mubr.bf16.mxu0 0
        %1906 = vmatmul.mubr.bf16.gmra.mrb[0].mxu0 %v1810
        %v1907 = vpop.f32.mrb[0].mxu0
        %v1908 = vadd.f32 0.0, %v1907
        %v1909 = vpop.f32.mrb[0].mxu0
        %v1910 = vadd.f32 0.0, %v1909
        %v1911 = vpop.f32.mrb[0].mxu0
        %v1912 = vadd.f32 0.0, %v1911
        %v1913 = vpop.f32.mrb[0].mxu0
        %v1914 = vadd.f32 0.0, %v1913
        %1915 = vmatprep.mubr.bf16.mxu0 0
        %1916 = vmatmul.mubr.bf16.gmra.mrb[0].mxu0 %v1813
        %v1917 = vpop.f32.mrb[0].mxu0
        %v1918 = vadd.f32 0.0, %v1917
        %v1919 = vpop.f32.mrb[0].mxu0
        %v1920 = vadd.f32 0.0, %v1919
        %v1921 = vpop.f32.mrb[0].mxu0
        %v1922 = vadd.f32 0.0, %v1921
        %v1923 = vpop.f32.mrb[0].mxu0
        %v1924 = vadd.f32 0.0, %v1923
        %1925 = vmatprep.mubr.bf16.mxu0 0
        %1926 = vmatmul.mubr.bf16.gmra.mrb[0].mxu0 %v1816
        %v1927 = vpop.f32.mrb[0].mxu0
        %v1928 = vadd.f32 0.0, %v1927
        %v1929 = vpop.f32.mrb[0].mxu0
        %v1930 = vadd.f32 0.0, %v1929
        %v1931 = vpop.f32.mrb[0].mxu0
        %v1932 = vadd.f32 0.0, %v1931
        %v1933 = vpop.f32.mrb[0].mxu0
        %v1934 = vadd.f32 0.0, %v1933
        %1935 = vmatprep.mubr.bf16.mxu0 0
        %1936 = vmatmul.mubr.bf16.gmra.mrb[0].mxu0 %v1819
        %v1937 = vpop.f32.mrb[0].mxu0
        %v1938 = vadd.f32 0.0, %v1937
        %v1939 = vpop.f32.mrb[0].mxu0
        %v1940 = vadd.f32 0.0, %v1939
        %v1941 = vpop.f32.mrb[0].mxu0
        %v1942 = vadd.f32 0.0, %v1941
        %v1943 = vpop.f32.mrb[0].mxu0
        %v1944 = vadd.f32 0.0, %v1943
        %1945 = vmatprep.mubr.bf16.mxu0 0
        %1946 = vmatmul.mubr.bf16.gmra.mrb[0].mxu0 %v1822
        %v1947 = vpop.f32.mrb[0].mxu0
        %v1948 = vadd.f32 0.0, %v1947
        %v1949 = vpop.f32.mrb[0].mxu0
        %v1950 = vadd.f32 0.0, %v1949
        %v1951 = vpop.f32.mrb[0].mxu0
        %v1952 = vadd.f32 0.0, %v1951
        %v1953 = vpop.f32.mrb[0].mxu0
        %v1954 = vadd.f32 0.0, %v1953
        %1955 = vmatprep.mubr.bf16.mxu0 0
        %1956 = vmatmul.mubr.bf16.gmra.mrb[0].mxu0 %v1825
        %v1957 = vpop.f32.mrb[0].mxu0
        %v1958 = vadd.f32 0.0, %v1957
        %v1959 = vpop.f32.mrb[0].mxu0
        %v1960 = vadd.f32 0.0, %v1959
        %v1961 = vpop.f32.mrb[0].mxu0
        %v1962 = vadd.f32 0.0, %v1961
        %v1963 = vpop.f32.mrb[0].mxu0
        %v1964 = vadd.f32 0.0, %v1963
        %1965 = vmatprep.mubr.bf16.mxu0 0
        %1966 = vmatmul.mubr.bf16.gmra.mrb[0].mxu0 %v1828
        %v1967 = vpop.f32.mrb[0].mxu0
        %v1968 = vadd.f32 0.0, %v1967
        %v1969 = vpop.f32.mrb[0].mxu0
        %v1970 = vadd.f32 0.0, %v1969
        %v1971 = vpop.f32.mrb[0].mxu0
        %v1972 = vadd.f32 0.0, %v1971
        %v1973 = vpop.f32.mrb[0].mxu0
        %v1974 = vadd.f32 0.0, %v1973
        %1975 = vmatprep.mubr.bf16.mxu0 0
        %1976 = vmatmul.mubr.bf16.gmra.mrb[0].mxu0 %v1831
        %v1977 = vpop.f32.mrb[0].mxu0
        %v1978 = vadd.f32 0.0, %v1977
        %v1979 = vpop.f32.mrb[0].mxu0
        %v1980 = vadd.f32 0.0, %v1979
        %v1981 = vpop.f32.mrb[0].mxu0
        %v1982 = vadd.f32 0.0, %v1981
        %v1983 = vpop.f32.mrb[0].mxu0
        %v1984 = vadd.f32 0.0, %v1983
        %1985 = vmatprep.mubr.bf16.mxu0 0
        %1986 = vmatmul.mubr.bf16.gmra.mrb[0].mxu0 %v1834
        %v1987 = vpop.f32.mrb[0].mxu0
        %v1988 = vadd.f32 0.0, %v1987
        %v1989 = vpop.f32.mrb[0].mxu0
        %v1990 = vadd.f32 0.0, %v1989
        %v1991 = vpop.f32.mrb[0].mxu0
        %v1992 = vadd.f32 0.0, %v1991
        %v1993 = vpop.f32.mrb[0].mxu0
        %v1994 = vadd.f32 0.0, %v1993
        %1995 = vmatprep.mubr.bf16.mxu0 0
        %1996 = vmatmul.mubr.bf16.gmra.mrb[0].mxu0 %v1837
        %v1997 = vpop.f32.mrb[0].mxu0
        %v1998 = vadd.f32 0.0, %v1997
        %v1999 = vpop.f32.mrb[0].mxu0
        %v2000 = vadd.f32 0.0, %v1999
        %v2001 = vpop.f32.mrb[0].mxu0
        %v2002 = vadd.f32 0.0, %v2001
        %v2003 = vpop.f32.mrb[0].mxu0
        %v2004 = vadd.f32 0.0, %v2003
        %2005 = vmatprep.mubr.bf16.mxu0 0
        %2006 = vmatmul.mubr.bf16.gmra.mrb[0].mxu0 %v1840
        %v2007 = vpop.f32.mrb[0].mxu0
        %v2008 = vadd.f32 0.0, %v2007
        %v2009 = vpop.f32.mrb[0].mxu0
        %v2010 = vadd.f32 0.0, %v2009
        %v2011 = vpop.f32.mrb[0].mxu0
        %v2012 = vadd.f32 0.0, %v2011
        %v2013 = vpop.f32.mrb[0].mxu0
        %v2014 = vadd.f32 0.0, %v2013
        %2015 = vmatprep.mubr.bf16.mxu0 0
        %2016 = vmatmul.mubr.bf16.gmra.mrb[0].mxu0 %v1843
        %v2017 = vpop.f32.mrb[0].mxu0
        %v2018 = vadd.f32 0.0, %v2017
        %v2019 = vpop.f32.mrb[0].mxu0
        %v2020 = vadd.f32 0.0, %v2019
        %v2021 = vpop.f32.mrb[0].mxu0
        %v2022 = vadd.f32 0.0, %v2021
        %v2023 = vpop.f32.mrb[0].mxu0
        %v2024 = vadd.f32 0.0, %v2023
        %2025 = vmatprep.mubr.bf16.mxu0 0
        %2026 = vmatmul.mubr.bf16.gmra.mrb[0].mxu0 %v1846
        %v2027 = vpop.f32.mrb[0].mxu0
        %v2028 = vadd.f32 0.0, %v2027
        %v2029 = vpop.f32.mrb[0].mxu0
        %v2030 = vadd.f32 0.0, %v2029
        %v2031 = vpop.f32.mrb[0].mxu0
        %v2032 = vadd.f32 0.0, %v2031
        %v2033 = vpop.f32.mrb[0].mxu0
        %v2034 = vadd.f32 0.0, %v2033
        %2035 = vmatprep.mubr.bf16.mxu0 0
        %2036 = vmatmul.mubr.bf16.gmra.mrb[0].mxu0 %v1849
        %v2037 = vpop.f32.mrb[0].mxu0
        %v2038 = vadd.f32 0.0, %v2037
        %v2039 = vpop.f32.mrb[0].mxu0
        %v2040 = vadd.f32 0.0, %v2039
        %v2041 = vpop.f32.mrb[0].mxu0
        %v2042 = vadd.f32 0.0, %v2041
        %v2043 = vpop.f32.mrb[0].mxu0
        %v2044 = vadd.f32 0.0, %v2043
        %2045 = vmatprep.mubr.bf16.mxu0 0
        %2046 = vmatmul.mubr.bf16.gmra.mrb[0].mxu0 %v1852
        %v2047 = vpop.f32.mrb[0].mxu0
        %v2048 = vadd.f32 0.0, %v2047
        %v2049 = vpop.f32.mrb[0].mxu0
        %v2050 = vadd.f32 0.0, %v2049
        %v2051 = vpop.f32.mrb[0].mxu0
        %v2052 = vadd.f32 0.0, %v2051
        %v2053 = vpop.f32.mrb[0].mxu0
        %v2054 = vadd.f32 0.0, %v2053
        %2055 = vdwg.mxu0
        %2056 = vmatprep.subr.bf16.mxu0 0
        %2057 = vmatpush1.bf16.msra.mxu0 %v1861
        %2058 = vmatprep.subr.bf16.mxu0 0
        %2059 = vmatpush1.bf16.msra.mxu0 0
        %2060 = vmatprep.subr.bf16.mxu0 0
        %2061 = vmatpush1.bf16.msra.mxu0 0
        %2062 = vmatprep.subr.bf16.mxu0 0
        %2063 = vmatpush1.bf16.msra.mxu0 0
        %2064 = vmatprep.subr.bf16.mxu0 0
        %2065 = vmatpush1.bf16.msra.mxu0 0
        %2066 = vmatprep.subr.bf16.mxu0 0
        %2067 = vmatpush1.bf16.msra.mxu0 0
        %2068 = vmatprep.subr.bf16.mxu0 0
        %2069 = vmatpush1.bf16.msra.mxu0 0
        %2070 = vmatprep.subr.bf16.mxu0 0
        %2071 = vmatpush1.bf16.msra.mxu0 0
        %2072 = vmatprep.subr.bf16.mxu0 0
        %2073 = vmatpush1.bf16.msra.mxu0 0
        %2074 = vmatprep.subr.bf16.mxu0 0
        %2075 = vmatpush1.bf16.msra.mxu0 0
        %2076 = vmatprep.subr.bf16.mxu0 0
        %2077 = vmatpush1.bf16.msra.mxu0 0
        %2078 = vmatprep.subr.bf16.mxu0 0
        %2079 = vmatpush1.bf16.msra.mxu0 0
        %2080 = vmatprep.subr.bf16.mxu0 0
        %2081 = vmatpush1.bf16.msra.mxu0 0
        %2082 = vmatprep.subr.bf16.mxu0 0
        %2083 = vmatpush1.bf16.msra.mxu0 0
        %2084 = vmatprep.subr.bf16.mxu0 0
        %2085 = vmatpush1.bf16.msra.mxu0 0
        %2086 = vmatprep.subr.bf16.mxu0 0
        %2087 = vmatpush1.bf16.msra.mxu0 0
        %2088 = vmatprep.mubr.bf16.mxu0 0
        %2089 = vmatmul.mubr.bf16.gmra.mrb[0].mxu0 %v1807
        %v2090 = vpop.f32.mrb[0].mxu0
        %v2091 = vadd.f32 0.0, %v2090
        %v2092 = vpop.f32.mrb[0].mxu0
        %v2093 = vpop.f32.mrb[0].mxu0
        %v2094 = vadd.f32 0.0, %v2093
        %v2095 = vpop.f32.mrb[0].mxu0
        %2096 = vmatprep.mubr.bf16.mxu0 0
        %2097 = vmatmul.mubr.bf16.gmra.mrb[0].mxu0 %v1810
        %v2098 = vpop.f32.mrb[0].mxu0
        %v2099 = vadd.f32 0.0, %v2098
        %v2100 = vpop.f32.mrb[0].mxu0
        %v2101 = vpop.f32.mrb[0].mxu0
        %v2102 = vadd.f32 0.0, %v2101
        %v2103 = vpop.f32.mrb[0].mxu0
        %2104 = vmatprep.mubr.bf16.mxu0 0
        %2105 = vmatmul.mubr.bf16.gmra.mrb[0].mxu0 %v1813
        %v2106 = vpop.f32.mrb[0].mxu0
        %v2107 = vadd.f32 0.0, %v2106
        %v2108 = vpop.f32.mrb[0].mxu0
        %v2109 = vpop.f32.mrb[0].mxu0
        %v2110 = vadd.f32 0.0, %v2109
        %v2111 = vpop.f32.mrb[0].mxu0
        %2112 = vmatprep.mubr.bf16.mxu0 0
        %2113 = vmatmul.mubr.bf16.gmra.mrb[0].mxu0 %v1816
        %v2114 = vpop.f32.mrb[0].mxu0
        %v2115 = vadd.f32 0.0, %v2114
        %v2116 = vpop.f32.mrb[0].mxu0
        %v2117 = vpop.f32.mrb[0].mxu0
        %v2118 = vadd.f32 0.0, %v2117
        %v2119 = vpop.f32.mrb[0].mxu0
        %2120 = vmatprep.mubr.bf16.mxu0 0
        %2121 = vmatmul.mubr.bf16.gmra.mrb[0].mxu0 %v1819
        %v2122 = vpop.f32.mrb[0].mxu0
        %v2123 = vadd.f32 0.0, %v2122
        %v2124 = vpop.f32.mrb[0].mxu0
        %v2125 = vpop.f32.mrb[0].mxu0
        %v2126 = vadd.f32 0.0, %v2125
        %v2127 = vpop.f32.mrb[0].mxu0
        %2128 = vmatprep.mubr.bf16.mxu0 0
        %2129 = vmatmul.mubr.bf16.gmra.mrb[0].mxu0 %v1822
        %v2130 = vpop.f32.mrb[0].mxu0
        %v2131 = vadd.f32 0.0, %v2130
        %v2132 = vpop.f32.mrb[0].mxu0
        %v2133 = vpop.f32.mrb[0].mxu0
        %v2134 = vadd.f32 0.0, %v2133
        %v2135 = vpop.f32.mrb[0].mxu0
        %2136 = vmatprep.mubr.bf16.mxu0 0
        %2137 = vmatmul.mubr.bf16.gmra.mrb[0].mxu0 %v1825
        %v2138 = vpop.f32.mrb[0].mxu0
        %v2139 = vadd.f32 0.0, %v2138
        %v2140 = vpop.f32.mrb[0].mxu0
        %v2141 = vpop.f32.mrb[0].mxu0
        %v2142 = vadd.f32 0.0, %v2141
        %v2143 = vpop.f32.mrb[0].mxu0
        %2144 = vmatprep.mubr.bf16.mxu0 0
        %2145 = vmatmul.mubr.bf16.gmra.mrb[0].mxu0 %v1828
        %v2146 = vpop.f32.mrb[0].mxu0
        %v2147 = vadd.f32 0.0, %v2146
        %v2148 = vpop.f32.mrb[0].mxu0
        %v2149 = vpop.f32.mrb[0].mxu0
        %v2150 = vadd.f32 0.0, %v2149
        %v2151 = vpop.f32.mrb[0].mxu0
        %2152 = vmatprep.mubr.bf16.mxu0 0
        %2153 = vmatmul.mubr.bf16.gmra.mrb[0].mxu0 %v1831
        %v2154 = vpop.f32.mrb[0].mxu0
        %v2155 = vadd.f32 0.0, %v2154
        %v2156 = vpop.f32.mrb[0].mxu0
        %v2157 = vpop.f32.mrb[0].mxu0
        %v2158 = vadd.f32 0.0, %v2157
        %v2159 = vpop.f32.mrb[0].mxu0
        %2160 = vmatprep.mubr.bf16.mxu0 0
        %2161 = vmatmul.mubr.bf16.gmra.mrb[0].mxu0 %v1834
        %v2162 = vpop.f32.mrb[0].mxu0
        %v2163 = vadd.f32 0.0, %v2162
        %v2164 = vpop.f32.mrb[0].mxu0
        %v2165 = vpop.f32.mrb[0].mxu0
        %v2166 = vadd.f32 0.0, %v2165
        %v2167 = vpop.f32.mrb[0].mxu0
        %2168 = vmatprep.mubr.bf16.mxu0 0
        %2169 = vmatmul.mubr.bf16.gmra.mrb[0].mxu0 %v1837
        %v2170 = vpop.f32.mrb[0].mxu0
        %v2171 = vadd.f32 0.0, %v2170
        %v2172 = vpop.f32.mrb[0].mxu0
        %v2173 = vpop.f32.mrb[0].mxu0
        %v2174 = vadd.f32 0.0, %v2173
        %v2175 = vpop.f32.mrb[0].mxu0
        %2176 = vmatprep.mubr.bf16.mxu0 0
        %2177 = vmatmul.mubr.bf16.gmra.mrb[0].mxu0 %v1840
        %v2178 = vpop.f32.mrb[0].mxu0
        %v2179 = vadd.f32 0.0, %v2178
        %v2180 = vpop.f32.mrb[0].mxu0
        %v2181 = vpop.f32.mrb[0].mxu0
        %v2182 = vadd.f32 0.0, %v2181
        %v2183 = vpop.f32.mrb[0].mxu0
        %2184 = vmatprep.mubr.bf16.mxu0 0
        %2185 = vmatmul.mubr.bf16.gmra.mrb[0].mxu0 %v1843
        %v2186 = vpop.f32.mrb[0].mxu0
        %v2187 = vadd.f32 0.0, %v2186
        %v2188 = vpop.f32.mrb[0].mxu0
        %v2189 = vpop.f32.mrb[0].mxu0
        %v2190 = vadd.f32 0.0, %v2189
        %v2191 = vpop.f32.mrb[0].mxu0
        %2192 = vmatprep.mubr.bf16.mxu0 0
        %2193 = vmatmul.mubr.bf16.gmra.mrb[0].mxu0 %v1846
        %v2194 = vpop.f32.mrb[0].mxu0
        %v2195 = vadd.f32 0.0, %v2194
        %v2196 = vpop.f32.mrb[0].mxu0
        %v2197 = vpop.f32.mrb[0].mxu0
        %v2198 = vadd.f32 0.0, %v2197
        %v2199 = vpop.f32.mrb[0].mxu0
        %2200 = vmatprep.mubr.bf16.mxu0 0
        %2201 = vmatmul.mubr.bf16.gmra.mrb[0].mxu0 %v1849
        %v2202 = vpop.f32.mrb[0].mxu0
        %v2203 = vadd.f32 0.0, %v2202
        %v2204 = vpop.f32.mrb[0].mxu0
        %v2205 = vpop.f32.mrb[0].mxu0
        %v2206 = vadd.f32 0.0, %v2205
        %v2207 = vpop.f32.mrb[0].mxu0
        %2208 = vmatprep.mubr.bf16.mxu0 0
        %2209 = vmatmul.mubr.bf16.gmra.mrb[0].mxu0 %v1852
        %v2210 = vpop.f32.mrb[0].mxu0
        %v2211 = vadd.f32 0.0, %v2210
        %v2212 = vpop.f32.mrb[0].mxu0
        %v2213 = vpop.f32.mrb[0].mxu0
        %v2214 = vadd.f32 0.0, %v2213
        %v2215 = vpop.f32.mrb[0].mxu0
        %2216 = vdwg.mxu0
        %v2217 = vadd.f32 %v1643, %v1898
        %v2218 = vadd.f32 %v1644, %v1900
        %v2219 = vadd.f32 %v1645, %v2091
        %v2220 = vadd.f32 %v1646, %v1902
        %v2221 = vadd.f32 %v1647, %v1904
        %v2222 = vadd.f32 %v1648, %v2094
        %v2223 = vadd.f32 %v1649, %v1908
        %v2224 = vadd.f32 %v1650, %v1910
        %v2225 = vadd.f32 %v1651, %v2099
        %v2226 = vadd.f32 %v1652, %v1912
        %v2227 = vadd.f32 %v1653, %v1914
        %v2228 = vadd.f32 %v1654, %v2102
        %v2229 = vadd.f32 %v1655, %v1918
        %v2230 = vadd.f32 %v1656, %v1920
        %v2231 = vadd.f32 %v1657, %v2107
        %v2232 = vadd.f32 %v1658, %v1922
        %v2233 = vadd.f32 %v1659, %v1924
        %v2234 = vadd.f32 %v1660, %v2110
        %v2235 = vadd.f32 %v1661, %v1928
        %v2236 = vadd.f32 %v1662, %v1930
        %v2237 = vadd.f32 %v1663, %v2115
        %v2238 = vadd.f32 %v1664, %v1932
        %v2239 = vadd.f32 %v1665, %v1934
        %v2240 = vadd.f32 %v1666, %v2118
        %v2241 = vadd.f32 %v1667, %v1938
        %v2242 = vadd.f32 %v1668, %v1940
        %v2243 = vadd.f32 %v1669, %v2123
        %v2244 = vadd.f32 %v1670, %v1942
        %v2245 = vadd.f32 %v1671, %v1944
        %v2246 = vadd.f32 %v1672, %v2126
        %v2247 = vadd.f32 %v1673, %v1948
        %v2248 = vadd.f32 %v1674, %v1950
        %v2249 = vadd.f32 %v1675, %v2131
        %v2250 = vadd.f32 %v1676, %v1952
        %v2251 = vadd.f32 %v1677, %v1954
        %v2252 = vadd.f32 %v1678, %v2134
        %v2253 = vadd.f32 %v1679, %v1958
        %v2254 = vadd.f32 %v1680, %v1960
        %v2255 = vadd.f32 %v1681, %v2139
        %v2256 = vadd.f32 %v1682, %v1962
        %v2257 = vadd.f32 %v1683, %v1964
        %v2258 = vadd.f32 %v1684, %v2142
        %v2259 = vadd.f32 %v1685, %v1968
        %v2260 = vadd.f32 %v1686, %v1970
        %v2261 = vadd.f32 %v1687, %v2147
        %v2262 = vadd.f32 %v1688, %v1972
        %v2263 = vadd.f32 %v1689, %v1974
        %v2264 = vadd.f32 %v1690, %v2150
        %v2265 = vadd.f32 %v1691, %v1978
        %v2266 = vadd.f32 %v1692, %v1980
        %v2267 = vadd.f32 %v1693, %v2155
        %v2268 = vadd.f32 %v1694, %v1982
        %v2269 = vadd.f32 %v1695, %v1984
        %v2270 = vadd.f32 %v1696, %v2158
        %v2271 = vadd.f32 %v1697, %v1988
        %v2272 = vadd.f32 %v1698, %v1990
        %v2273 = vadd.f32 %v1699, %v2163
        %v2274 = vadd.f32 %v1700, %v1992
        %v2275 = vadd.f32 %v1701, %v1994
        %v2276 = vadd.f32 %v1702, %v2166
        %v2277 = vadd.f32 %v1703, %v1998
        %v2278 = vadd.f32 %v1704, %v2000
        %v2279 = vadd.f32 %v1705, %v2171
        %v2280 = vadd.f32 %v1706, %v2002
        %v2281 = vadd.f32 %v1707, %v2004
        %v2282 = vadd.f32 %v1708, %v2174
        %v2283 = vadd.f32 %v1709, %v2008
        %v2284 = vadd.f32 %v1710, %v2010
        %v2285 = vadd.f32 %v1711, %v2179
        %v2286 = vadd.f32 %v1712, %v2012
        %v2287 = vadd.f32 %v1713, %v2014
        %v2288 = vadd.f32 %v1714, %v2182
        %v2289 = vadd.f32 %v1715, %v2018
        %v2290 = vadd.f32 %v1716, %v2020
        %v2291 = vadd.f32 %v1717, %v2187
        %v2292 = vadd.f32 %v1718, %v2022
        %v2293 = vadd.f32 %v1719, %v2024
        %v2294 = vadd.f32 %v1720, %v2190
        %v2295 = vadd.f32 %v1721, %v2028
        %v2296 = vadd.f32 %v1722, %v2030
        %v2297 = vadd.f32 %v1723, %v2195
        %v2298 = vadd.f32 %v1724, %v2032
        %v2299 = vadd.f32 %v1725, %v2034
        %v2300 = vadd.f32 %v1726, %v2198
        %v2301 = vadd.f32 %v1727, %v2038
        %v2302 = vadd.f32 %v1728, %v2040
        %v2303 = vadd.f32 %v1729, %v2203
        %v2304 = vadd.f32 %v1730, %v2042
        %v2305 = vadd.f32 %v1731, %v2044
        %v2306 = vadd.f32 %v1732, %v2206
        %v2307 = vadd.f32 %v1733, %v2048
        %v2308 = vadd.f32 %v1734, %v2050
        %v2309 = vadd.f32 %v1735, %v2211
        %v2310 = vadd.f32 %v1736, %v2052
        %v2311 = vadd.f32 %v1737, %v2054
        %v2312 = vadd.f32 %v1738, %v2214
        %2313 = vst [vmem:[#allocation2] sm:$0xff] %v2217
        %2314 = vst [vmem:[#allocation2 + $0x8] sm:$0xff] %v2218
        %2315 = vst.msk [vmem:[#allocation2 + $0x10] sm:$0xff] %vm1113, %v2219
        %2316 = vst [vmem:[#allocation2 + $0x18] sm:$0xff] %v2220
        %2317 = vst [vmem:[#allocation2 + $0x20] sm:$0xff] %v2221
        %2318 = vst.msk [vmem:[#allocation2 + $0x28] sm:$0xff] %vm1113, %v2222
        %2319 = vst [vmem:[#allocation2 + $0x30] sm:$0xff] %v2223
        %2320 = vst [vmem:[#allocation2 + $0x38] sm:$0xff] %v2224
        %2321 = vst.msk [vmem:[#allocation2 + $0x40] sm:$0xff] %vm1113, %v2225
        %2322 = vst [vmem:[#allocation2 + $0x48] sm:$0xff] %v2226
        %2323 = vst [vmem:[#allocation2 + $0x50] sm:$0xff] %v2227
        %2324 = vst.msk [vmem:[#allocation2 + $0x58] sm:$0xff] %vm1113, %v2228
        %2325 = vst [vmem:[#allocation2 + $0x60] sm:$0xff] %v2229
        %2326 = vst [vmem:[#allocation2 + $0x68] sm:$0xff] %v2230
        %2327 = vst.msk [vmem:[#allocation2 + $0x70] sm:$0xff] %vm1113, %v2231
        %2328 = vst [vmem:[#allocation2 + $0x78] sm:$0xff] %v2232
        %2329 = vst [vmem:[#allocation2 + $0x80] sm:$0xff] %v2233
        %2330 = vst.msk [vmem:[#allocation2 + $0x88] sm:$0xff] %vm1113, %v2234
        %2331 = vst [vmem:[#allocation2 + $0x90] sm:$0xff] %v2235
        %2332 = vst [vmem:[#allocation2 + $0x98] sm:$0xff] %v2236
        %2333 = vst.msk [vmem:[#allocation2 + $0xa0] sm:$0xff] %vm1113, %v2237
        %2334 = vst [vmem:[#allocation2 + $0xa8] sm:$0xff] %v2238
        %2335 = vst [vmem:[#allocation2 + $0xb0] sm:$0xff] %v2239
        %2336 = vst.msk [vmem:[#allocation2 + $0xb8] sm:$0xff] %vm1113, %v2240
        %2337 = vst [vmem:[#allocation2 + $0xc0] sm:$0xff] %v2241
        %2338 = vst [vmem:[#allocation2 + $0xc8] sm:$0xff] %v2242
        %2339 = vst.msk [vmem:[#allocation2 + $0xd0] sm:$0xff] %vm1113, %v2243
        %2340 = vst [vmem:[#allocation2 + $0xd8] sm:$0xff] %v2244
        %2341 = vst [vmem:[#allocation2 + $0xe0] sm:$0xff] %v2245
        %2342 = vst.msk [vmem:[#allocation2 + $0xe8] sm:$0xff] %vm1113, %v2246
        %2343 = vst [vmem:[#allocation2 + $0xf0] sm:$0xff] %v2247
        %2344 = vst [vmem:[#allocation2 + $0xf8] sm:$0xff] %v2248
        %2345 = vst.msk [vmem:[#allocation2 + $0x100] sm:$0xff] %vm1113, %v2249
        %2346 = vst [vmem:[#allocation2 + $0x108] sm:$0xff] %v2250
        %2347 = vst [vmem:[#allocation2 + $0x110] sm:$0xff] %v2251
        %2348 = vst.msk [vmem:[#allocation2 + $0x118] sm:$0xff] %vm1113, %v2252
        %2349 = vst [vmem:[#allocation2 + $0x120] sm:$0xff] %v2253
        %2350 = vst [vmem:[#allocation2 + $0x128] sm:$0xff] %v2254
        %2351 = vst.msk [vmem:[#allocation2 + $0x130] sm:$0xff] %vm1113, %v2255
        %2352 = vst [vmem:[#allocation2 + $0x138] sm:$0xff] %v2256
        %2353 = vst [vmem:[#allocation2 + $0x140] sm:$0xff] %v2257
        %2354 = vst.msk [vmem:[#allocation2 + $0x148] sm:$0xff] %vm1113, %v2258
        %2355 = vst [vmem:[#allocation2 + $0x150] sm:$0xff] %v2259
        %2356 = vst [vmem:[#allocation2 + $0x158] sm:$0xff] %v2260
        %2357 = vst.msk [vmem:[#allocation2 + $0x160] sm:$0xff] %vm1113, %v2261
        %2358 = vst [vmem:[#allocation2 + $0x168] sm:$0xff] %v2262
        %2359 = vst [vmem:[#allocation2 + $0x170] sm:$0xff] %v2263
        %2360 = vst.msk [vmem:[#allocation2 + $0x178] sm:$0xff] %vm1113, %v2264
        %2361 = vst [vmem:[#allocation2 + $0x180] sm:$0xff] %v2265
        %2362 = vst [vmem:[#allocation2 + $0x188] sm:$0xff] %v2266
        %2363 = vst.msk [vmem:[#allocation2 + $0x190] sm:$0xff] %vm1113, %v2267
        %2364 = vst [vmem:[#allocation2 + $0x198] sm:$0xff] %v2268
        %2365 = vst [vmem:[#allocation2 + $0x1a0] sm:$0xff] %v2269
        %2366 = vst.msk [vmem:[#allocation2 + $0x1a8] sm:$0xff] %vm1113, %v2270
        %2367 = vst [vmem:[#allocation2 + $0x1b0] sm:$0xff] %v2271
        %2368 = vst [vmem:[#allocation2 + $0x1b8] sm:$0xff] %v2272
        %2369 = vst.msk [vmem:[#allocation2 + $0x1c0] sm:$0xff] %vm1113, %v2273
        %2370 = vst [vmem:[#allocation2 + $0x1c8] sm:$0xff] %v2274
        %2371 = vst [vmem:[#allocation2 + $0x1d0] sm:$0xff] %v2275
        %2372 = vst.msk [vmem:[#allocation2 + $0x1d8] sm:$0xff] %vm1113, %v2276
        %2373 = vst [vmem:[#allocation2 + $0x1e0] sm:$0xff] %v2277
        %2374 = vst [vmem:[#allocation2 + $0x1e8] sm:$0xff] %v2278
        %2375 = vst.msk [vmem:[#allocation2 + $0x1f0] sm:$0xff] %vm1113, %v2279
        %2376 = vst [vmem:[#allocation2 + $0x1f8] sm:$0xff] %v2280
        %2377 = vst [vmem:[#allocation2 + $0x200] sm:$0xff] %v2281
        %2378 = vst.msk [vmem:[#allocation2 + $0x208] sm:$0xff] %vm1113, %v2282
        %2379 = vst [vmem:[#allocation2 + $0x210] sm:$0xff] %v2283
        %2380 = vst [vmem:[#allocation2 + $0x218] sm:$0xff] %v2284
        %2381 = vst.msk [vmem:[#allocation2 + $0x220] sm:$0xff] %vm1113, %v2285
        %2382 = vst [vmem:[#allocation2 + $0x228] sm:$0xff] %v2286
        %2383 = vst [vmem:[#allocation2 + $0x230] sm:$0xff] %v2287
        %2384 = vst.msk [vmem:[#allocation2 + $0x238] sm:$0xff] %vm1113, %v2288
        %2385 = vst [vmem:[#allocation2 + $0x240] sm:$0xff] %v2289
        %2386 = vst [vmem:[#allocation2 + $0x248] sm:$0xff] %v2290
        %2387 = vst.msk [vmem:[#allocation2 + $0x250] sm:$0xff] %vm1113, %v2291
        %2388 = vst [vmem:[#allocation2 + $0x258] sm:$0xff] %v2292
        %2389 = vst [vmem:[#allocation2 + $0x260] sm:$0xff] %v2293
        %2390 = vst.msk [vmem:[#allocation2 + $0x268] sm:$0xff] %vm1113, %v2294
        %2391 = vst [vmem:[#allocation2 + $0x270] sm:$0xff] %v2295
        %2392 = vst [vmem:[#allocation2 + $0x278] sm:$0xff] %v2296
        %2393 = vst.msk [vmem:[#allocation2 + $0x280] sm:$0xff] %vm1113, %v2297
        %2394 = vst [vmem:[#allocation2 + $0x288] sm:$0xff] %v2298
        %2395 = vst [vmem:[#allocation2 + $0x290] sm:$0xff] %v2299
        %2396 = vst.msk [vmem:[#allocation2 + $0x298] sm:$0xff] %vm1113, %v2300
        %2397 = vst [vmem:[#allocation2 + $0x2a0] sm:$0xff] %v2301
        %2398 = vst [vmem:[#allocation2 + $0x2a8] sm:$0xff] %v2302
        %2399 = vst.msk [vmem:[#allocation2 + $0x2b0] sm:$0xff] %vm1113, %v2303
        %2400 = vst [vmem:[#allocation2 + $0x2b8] sm:$0xff] %v2304
        %2401 = vst [vmem:[#allocation2 + $0x2c0] sm:$0xff] %v2305
        %2402 = vst.msk [vmem:[#allocation2 + $0x2c8] sm:$0xff] %vm1113, %v2306
        %2403 = vst [vmem:[#allocation2 + $0x2d0] sm:$0xff] %v2307
        %2404 = vst [vmem:[#allocation2 + $0x2d8] sm:$0xff] %v2308
        %2405 = vst.msk [vmem:[#allocation2 + $0x2e0] sm:$0xff] %vm1113, %v2309
        %2406 = vst [vmem:[#allocation2 + $0x2e8] sm:$0xff] %v2310
        %2407 = vst [vmem:[#allocation2 + $0x2f0] sm:$0xff] %v2311
        %2408 = vst.msk [vmem:[#allocation2 + $0x2f8] sm:$0xff] %vm1113, %v2312
        %v2409 = vld [vmem:[%s240] sm:$0xe]
        %v2410 = vld [vmem:[%s240 + $0x4] sm:$0xf]
        %v2411 = vld [vmem:[%s240 + $0x8] sm:$0x1]
        %v2412 = vld [vmem:[%s240 + $0xc] sm:$0xe]
        %v2413 = vld [vmem:[%s240 + $0x10] sm:$0xf]
        %v2414 = vld [vmem:[%s240 + $0x14] sm:$0x1]
        %v2415 = vld [vmem:[%s240 + $0x18] sm:$0xe]
        %v2416 = vld [vmem:[%s240 + $0x1c] sm:$0xf]
        %v2417 = vld [vmem:[%s240 + $0x20] sm:$0x1]
        %v2418 = vld [vmem:[%s240 + $0x24] sm:$0xe]
        %v2419 = vld [vmem:[%s240 + $0x28] sm:$0xf]
        %v2420 = vld [vmem:[%s240 + $0x2c] sm:$0x1]
        %v2421 = vld [vmem:[%s240 + $0x30] sm:$0xe]
        %v2422 = vld [vmem:[%s240 + $0x34] sm:$0xf]
        %v2423 = vld [vmem:[%s240 + $0x38] sm:$0x1]
        %v2424 = vld [vmem:[%s240 + $0x3c] sm:$0xe]
        %v2425 = vld [vmem:[%s240 + $0x40] sm:$0xf]
        %v2426 = vld [vmem:[%s240 + $0x44] sm:$0x1]
        %v2427 = vld [vmem:[%s240 + $0x48] sm:$0xe]
        %v2428 = vld [vmem:[%s240 + $0x4c] sm:$0xf]
        %v2429 = vld [vmem:[%s240 + $0x50] sm:$0x1]
        %v2430 = vld [vmem:[%s240 + $0x54] sm:$0xe]
        %v2431 = vld [vmem:[%s240 + $0x58] sm:$0xf]
        %v2432 = vld [vmem:[%s240 + $0x5c] sm:$0x1]
        %v2433 = vld [vmem:[%s240 + $0x60] sm:$0xe]
        %v2434 = vld [vmem:[%s240 + $0x64] sm:$0xf]
        %v2435 = vld [vmem:[%s240 + $0x68] sm:$0x1]
        %v2436 = vld [vmem:[%s240 + $0x6c] sm:$0xe]
        %v2437 = vld [vmem:[%s240 + $0x70] sm:$0xf]
        %v2438 = vld [vmem:[%s240 + $0x74] sm:$0x1]
        %v2439 = vld [vmem:[%s240 + $0x78] sm:$0xe]
        %v2440 = vld [vmem:[%s240 + $0x7c] sm:$0xf]
        %v2441 = vld [vmem:[%s240 + $0x80] sm:$0x1]
        %v2442 = vld [vmem:[%s240 + $0x84] sm:$0xe]
        %v2443 = vld [vmem:[%s240 + $0x88] sm:$0xf]
        %v2444 = vld [vmem:[%s240 + $0x8c] sm:$0x1]
        %v2445 = vld [vmem:[%s240 + $0x90] sm:$0xe]
        %v2446 = vld [vmem:[%s240 + $0x94] sm:$0xf]
        %v2447 = vld [vmem:[%s240 + $0x98] sm:$0x1]
        %v2448 = vld [vmem:[%s240 + $0x9c] sm:$0xe]
        %v2449 = vld [vmem:[%s240 + $0xa0] sm:$0xf]
        %v2450 = vld [vmem:[%s240 + $0xa4] sm:$0x1]
        %v2451 = vld [vmem:[%s240 + $0xa8] sm:$0xe]
        %v2452 = vld [vmem:[%s240 + $0xac] sm:$0xf]
        %v2453 = vld [vmem:[%s240 + $0xb0] sm:$0x1]
        %v2454 = vld [vmem:[%s240 + $0xb4] sm:$0xe]
        %v2455 = vld [vmem:[%s240 + $0xb8] sm:$0xf]
        %v2456 = vld [vmem:[%s240 + $0xbc] sm:$0x1]
        %vm2505 = vcmask 1042432
        %vm2506 = vcmask 1046532
        %vm2507 = vmor %vm2505, %vm2506
        %v2508 = vrot.slane %v2409, 5
        %v2509 = vrot.slane %v2508, 4
        %v2510 = vrot.slane %v2410, 5
        %v2511 = vsel %vm2507, %v2509, %v2510
        %v2512 = vrot.slane %v2510, 4
        %v2513 = vrot.slane %v2411, 5
        %v2514 = vsel %vm2507, %v2512, %v2513
        %v2515 = vrot.slane %v2412, 5
        %v2516 = vrot.slane %v2515, 4
        %v2517 = vrot.slane %v2413, 5
        %v2518 = vsel %vm2507, %v2516, %v2517
        %v2519 = vrot.slane %v2517, 4
        %v2520 = vrot.slane %v2414, 5
        %v2521 = vsel %vm2507, %v2519, %v2520
        %v2522 = vrot.slane %v2415, 5
        %v2523 = vrot.slane %v2522, 4
        %v2524 = vrot.slane %v2416, 5
        %v2525 = vsel %vm2507, %v2523, %v2524
        %v2526 = vrot.slane %v2524, 4
        %v2527 = vrot.slane %v2417, 5
        %v2528 = vsel %vm2507, %v2526, %v2527
        %v2529 = vrot.slane %v2418, 5
        %v2530 = vrot.slane %v2529, 4
        %v2531 = vrot.slane %v2419, 5
        %v2532 = vsel %vm2507, %v2530, %v2531
        %v2533 = vrot.slane %v2531, 4
        %v2534 = vrot.slane %v2420, 5
        %v2535 = vsel %vm2507, %v2533, %v2534
        %v2536 = vrot.slane %v2421, 5
        %v2537 = vrot.slane %v2536, 4
        %v2538 = vrot.slane %v2422, 5
        %v2539 = vsel %vm2507, %v2537, %v2538
        %v2540 = vrot.slane %v2538, 4
        %v2541 = vrot.slane %v2423, 5
        %v2542 = vsel %vm2507, %v2540, %v2541
        %v2543 = vrot.slane %v2424, 5
        %v2544 = vrot.slane %v2543, 4
        %v2545 = vrot.slane %v2425, 5
        %v2546 = vsel %vm2507, %v2544, %v2545
        %v2547 = vrot.slane %v2545, 4
        %v2548 = vrot.slane %v2426, 5
        %v2549 = vsel %vm2507, %v2547, %v2548
        %v2550 = vrot.slane %v2427, 5
        %v2551 = vrot.slane %v2550, 4
        %v2552 = vrot.slane %v2428, 5
        %v2553 = vsel %vm2507, %v2551, %v2552
        %v2554 = vrot.slane %v2552, 4
        %v2555 = vrot.slane %v2429, 5
        %v2556 = vsel %vm2507, %v2554, %v2555
        %v2557 = vrot.slane %v2430, 5
        %v2558 = vrot.slane %v2557, 4
        %v2559 = vrot.slane %v2431, 5
        %v2560 = vsel %vm2507, %v2558, %v2559
        %v2561 = vrot.slane %v2559, 4
        %v2562 = vrot.slane %v2432, 5
        %v2563 = vsel %vm2507, %v2561, %v2562
        %v2564 = vrot.slane %v2433, 5
        %v2565 = vrot.slane %v2564, 4
        %v2566 = vrot.slane %v2434, 5
        %v2567 = vsel %vm2507, %v2565, %v2566
        %v2568 = vrot.slane %v2566, 4
        %v2569 = vrot.slane %v2435, 5
        %v2570 = vsel %vm2507, %v2568, %v2569
        %v2571 = vrot.slane %v2436, 5
        %v2572 = vrot.slane %v2571, 4
        %v2573 = vrot.slane %v2437, 5
        %v2574 = vsel %vm2507, %v2572, %v2573
        %v2575 = vrot.slane %v2573, 4
        %v2576 = vrot.slane %v2438, 5
        %v2577 = vsel %vm2507, %v2575, %v2576
        %v2578 = vrot.slane %v2439, 5
        %v2579 = vrot.slane %v2578, 4
        %v2580 = vrot.slane %v2440, 5
        %v2581 = vsel %vm2507, %v2579, %v2580
        %v2582 = vrot.slane %v2580, 4
        %v2583 = vrot.slane %v2441, 5
        %v2584 = vsel %vm2507, %v2582, %v2583
        %v2585 = vrot.slane %v2442, 5
        %v2586 = vrot.slane %v2585, 4
        %v2587 = vrot.slane %v2443, 5
        %v2588 = vsel %vm2507, %v2586, %v2587
        %v2589 = vrot.slane %v2587, 4
        %v2590 = vrot.slane %v2444, 5
        %v2591 = vsel %vm2507, %v2589, %v2590
        %v2592 = vrot.slane %v2445, 5
        %v2593 = vrot.slane %v2592, 4
        %v2594 = vrot.slane %v2446, 5
        %v2595 = vsel %vm2507, %v2593, %v2594
        %v2596 = vrot.slane %v2594, 4
        %v2597 = vrot.slane %v2447, 5
        %v2598 = vsel %vm2507, %v2596, %v2597
        %v2599 = vrot.slane %v2448, 5
        %v2600 = vrot.slane %v2599, 4
        %v2601 = vrot.slane %v2449, 5
        %v2602 = vsel %vm2507, %v2600, %v2601
        %v2603 = vrot.slane %v2601, 4
        %v2604 = vrot.slane %v2450, 5
        %v2605 = vsel %vm2507, %v2603, %v2604
        %v2606 = vrot.slane %v2451, 5
        %v2607 = vrot.slane %v2606, 4
        %v2608 = vrot.slane %v2452, 5
        %v2609 = vsel %vm2507, %v2607, %v2608
        %v2610 = vrot.slane %v2608, 4
        %v2611 = vrot.slane %v2453, 5
        %v2612 = vsel %vm2507, %v2610, %v2611
        %v2613 = vrot.slane %v2454, 5
        %v2614 = vrot.slane %v2613, 4
        %v2615 = vrot.slane %v2455, 5
        %v2616 = vsel %vm2507, %v2614, %v2615
        %v2617 = vrot.slane %v2615, 4
        %v2618 = vrot.slane %v2456, 5
        %v2619 = vsel %vm2507, %v2617, %v2618
        %v2620 = vld [vmem:[#allocation2] sm:$0xff]
        %v2621 = vld [vmem:[#allocation2 + $0x8] sm:$0xff]
        %v2622 = vld [vmem:[#allocation2 + $0x10] sm:$0xff]
        %v2623 = vld [vmem:[#allocation2 + $0x18] sm:$0xff]
        %v2624 = vld [vmem:[#allocation2 + $0x20] sm:$0xff]
        %v2625 = vld [vmem:[#allocation2 + $0x28] sm:$0xff]
        %v2626 = vld [vmem:[#allocation2 + $0x30] sm:$0xff]
        %v2627 = vld [vmem:[#allocation2 + $0x38] sm:$0xff]
        %v2628 = vld [vmem:[#allocation2 + $0x40] sm:$0xff]
        %v2629 = vld [vmem:[#allocation2 + $0x48] sm:$0xff]
        %v2630 = vld [vmem:[#allocation2 + $0x50] sm:$0xff]
        %v2631 = vld [vmem:[#allocation2 + $0x58] sm:$0xff]
        %v2632 = vld [vmem:[#allocation2 + $0x60] sm:$0xff]
        %v2633 = vld [vmem:[#allocation2 + $0x68] sm:$0xff]
        %v2634 = vld [vmem:[#allocation2 + $0x70] sm:$0xff]
        %v2635 = vld [vmem:[#allocation2 + $0x78] sm:$0xff]
        %v2636 = vld [vmem:[#allocation2 + $0x80] sm:$0xff]
        %v2637 = vld [vmem:[#allocation2 + $0x88] sm:$0xff]
        %v2638 = vld [vmem:[#allocation2 + $0x90] sm:$0xff]
        %v2639 = vld [vmem:[#allocation2 + $0x98] sm:$0xff]
        %v2640 = vld [vmem:[#allocation2 + $0xa0] sm:$0xff]
        %v2641 = vld [vmem:[#allocation2 + $0xa8] sm:$0xff]
        %v2642 = vld [vmem:[#allocation2 + $0xb0] sm:$0xff]
        %v2643 = vld [vmem:[#allocation2 + $0xb8] sm:$0xff]
        %v2644 = vld [vmem:[#allocation2 + $0xc0] sm:$0xff]
        %v2645 = vld [vmem:[#allocation2 + $0xc8] sm:$0xff]
        %v2646 = vld [vmem:[#allocation2 + $0xd0] sm:$0xff]
        %v2647 = vld [vmem:[#allocation2 + $0xd8] sm:$0xff]
        %v2648 = vld [vmem:[#allocation2 + $0xe0] sm:$0xff]
        %v2649 = vld [vmem:[#allocation2 + $0xe8] sm:$0xff]
        %v2650 = vld [vmem:[#allocation2 + $0xf0] sm:$0xff]
        %v2651 = vld [vmem:[#allocation2 + $0xf8] sm:$0xff]
        %v2652 = vld [vmem:[#allocation2 + $0x100] sm:$0xff]
        %v2653 = vld [vmem:[#allocation2 + $0x108] sm:$0xff]
        %v2654 = vld [vmem:[#allocation2 + $0x110] sm:$0xff]
        %v2655 = vld [vmem:[#allocation2 + $0x118] sm:$0xff]
        %v2656 = vld [vmem:[#allocation2 + $0x120] sm:$0xff]
        %v2657 = vld [vmem:[#allocation2 + $0x128] sm:$0xff]
        %v2658 = vld [vmem:[#allocation2 + $0x130] sm:$0xff]
        %v2659 = vld [vmem:[#allocation2 + $0x138] sm:$0xff]
        %v2660 = vld [vmem:[#allocation2 + $0x140] sm:$0xff]
        %v2661 = vld [vmem:[#allocation2 + $0x148] sm:$0xff]
        %v2662 = vld [vmem:[#allocation2 + $0x150] sm:$0xff]
        %v2663 = vld [vmem:[#allocation2 + $0x158] sm:$0xff]
        %v2664 = vld [vmem:[#allocation2 + $0x160] sm:$0xff]
        %v2665 = vld [vmem:[#allocation2 + $0x168] sm:$0xff]
        %v2666 = vld [vmem:[#allocation2 + $0x170] sm:$0xff]
        %v2667 = vld [vmem:[#allocation2 + $0x178] sm:$0xff]
        %v2668 = vld [vmem:[#allocation2 + $0x180] sm:$0xff]
        %v2669 = vld [vmem:[#allocation2 + $0x188] sm:$0xff]
        %v2670 = vld [vmem:[#allocation2 + $0x190] sm:$0xff]
        %v2671 = vld [vmem:[#allocation2 + $0x198] sm:$0xff]
        %v2672 = vld [vmem:[#allocation2 + $0x1a0] sm:$0xff]
        %v2673 = vld [vmem:[#allocation2 + $0x1a8] sm:$0xff]
        %v2674 = vld [vmem:[#allocation2 + $0x1b0] sm:$0xff]
        %v2675 = vld [vmem:[#allocation2 + $0x1b8] sm:$0xff]
        %v2676 = vld [vmem:[#allocation2 + $0x1c0] sm:$0xff]
        %v2677 = vld [vmem:[#allocation2 + $0x1c8] sm:$0xff]
        %v2678 = vld [vmem:[#allocation2 + $0x1d0] sm:$0xff]
        %v2679 = vld [vmem:[#allocation2 + $0x1d8] sm:$0xff]
        %v2680 = vld [vmem:[#allocation2 + $0x1e0] sm:$0xff]
        %v2681 = vld [vmem:[#allocation2 + $0x1e8] sm:$0xff]
        %v2682 = vld [vmem:[#allocation2 + $0x1f0] sm:$0xff]
        %v2683 = vld [vmem:[#allocation2 + $0x1f8] sm:$0xff]
        %v2684 = vld [vmem:[#allocation2 + $0x200] sm:$0xff]
        %v2685 = vld [vmem:[#allocation2 + $0x208] sm:$0xff]
        %v2686 = vld [vmem:[#allocation2 + $0x210] sm:$0xff]
        %v2687 = vld [vmem:[#allocation2 + $0x218] sm:$0xff]
        %v2688 = vld [vmem:[#allocation2 + $0x220] sm:$0xff]
        %v2689 = vld [vmem:[#allocation2 + $0x228] sm:$0xff]
        %v2690 = vld [vmem:[#allocation2 + $0x230] sm:$0xff]
        %v2691 = vld [vmem:[#allocation2 + $0x238] sm:$0xff]
        %v2692 = vld [vmem:[#allocation2 + $0x240] sm:$0xff]
        %v2693 = vld [vmem:[#allocation2 + $0x248] sm:$0xff]
        %v2694 = vld [vmem:[#allocation2 + $0x250] sm:$0xff]
        %v2695 = vld [vmem:[#allocation2 + $0x258] sm:$0xff]
        %v2696 = vld [vmem:[#allocation2 + $0x260] sm:$0xff]
        %v2697 = vld [vmem:[#allocation2 + $0x268] sm:$0xff]
        %v2698 = vld [vmem:[#allocation2 + $0x270] sm:$0xff]
        %v2699 = vld [vmem:[#allocation2 + $0x278] sm:$0xff]
        %v2700 = vld [vmem:[#allocation2 + $0x280] sm:$0xff]
        %v2701 = vld [vmem:[#allocation2 + $0x288] sm:$0xff]
        %v2702 = vld [vmem:[#allocation2 + $0x290] sm:$0xff]
        %v2703 = vld [vmem:[#allocation2 + $0x298] sm:$0xff]
        %v2704 = vld [vmem:[#allocation2 + $0x2a0] sm:$0xff]
        %v2705 = vld [vmem:[#allocation2 + $0x2a8] sm:$0xff]
        %v2706 = vld [vmem:[#allocation2 + $0x2b0] sm:$0xff]
        %v2707 = vld [vmem:[#allocation2 + $0x2b8] sm:$0xff]
        %v2708 = vld [vmem:[#allocation2 + $0x2c0] sm:$0xff]
        %v2709 = vld [vmem:[#allocation2 + $0x2c8] sm:$0xff]
        %v2710 = vld [vmem:[#allocation2 + $0x2d0] sm:$0xff]
        %v2711 = vld [vmem:[#allocation2 + $0x2d8] sm:$0xff]
        %v2712 = vld [vmem:[#allocation2 + $0x2e0] sm:$0xff]
        %v2713 = vld [vmem:[#allocation2 + $0x2e8] sm:$0xff]
        %v2714 = vld [vmem:[#allocation2 + $0x2f0] sm:$0xff]
        %v2715 = vld [vmem:[#allocation2 + $0x2f8] sm:$0xff]
        %s2716 = scalar_lea.vmem %s249, 12
        %v2717 = vld [vmem:[%s2716] sm:$0x3f]
        %v2718 = vunpack.c.l.b16 %v2511
        %v2719 = vunpack.c.l.b16 %v2514
        %v2720 = vunpack.c.l.b16 %v2518
        %v2721 = vunpack.c.l.b16 %v2521
        %v2722 = vunpack.c.l.b16 %v2525
        %v2723 = vunpack.c.l.b16 %v2528
        %v2724 = vunpack.c.l.b16 %v2532
        %v2725 = vunpack.c.l.b16 %v2535
        %v2726 = vunpack.c.l.b16 %v2539
        %v2727 = vunpack.c.l.b16 %v2542
        %v2728 = vunpack.c.l.b16 %v2546
        %v2729 = vunpack.c.l.b16 %v2549
        %v2730 = vunpack.c.l.b16 %v2553
        %v2731 = vunpack.c.l.b16 %v2556
        %v2732 = vunpack.c.l.b16 %v2560
        %v2733 = vunpack.c.l.b16 %v2563
        %v2734 = vunpack.c.l.b16 %v2567
        %v2735 = vunpack.c.l.b16 %v2570
        %v2736 = vunpack.c.l.b16 %v2574
        %v2737 = vunpack.c.l.b16 %v2577
        %v2738 = vunpack.c.l.b16 %v2581
        %v2739 = vunpack.c.l.b16 %v2584
        %v2740 = vunpack.c.l.b16 %v2588
        %v2741 = vunpack.c.l.b16 %v2591
        %v2742 = vunpack.c.l.b16 %v2595
        %v2743 = vunpack.c.l.b16 %v2598
        %v2744 = vunpack.c.l.b16 %v2602
        %v2745 = vunpack.c.l.b16 %v2605
        %v2746 = vunpack.c.l.b16 %v2609
        %v2747 = vunpack.c.l.b16 %v2612
        %v2748 = vunpack.c.l.b16 %v2616
        %v2749 = vunpack.c.l.b16 %v2619
        %v2750 = vpack.c.b16 %v2719, %v2718
        %v2751 = vpack.c.b16 %v2721, %v2720
        %v2752 = vpack.c.b16 %v2723, %v2722
        %v2753 = vpack.c.b16 %v2725, %v2724
        %v2754 = vpack.c.b16 %v2727, %v2726
        %v2755 = vpack.c.b16 %v2729, %v2728
        %v2756 = vpack.c.b16 %v2731, %v2730
        %v2757 = vpack.c.b16 %v2733, %v2732
        %v2758 = vpack.c.b16 %v2735, %v2734
        %v2759 = vpack.c.b16 %v2737, %v2736
        %v2760 = vpack.c.b16 %v2739, %v2738
        %v2761 = vpack.c.b16 %v2741, %v2740
        %v2762 = vpack.c.b16 %v2743, %v2742
        %v2763 = vpack.c.b16 %v2745, %v2744
        %v2764 = vpack.c.b16 %v2747, %v2746
        %v2765 = vpack.c.b16 %v2749, %v2748
        %v2767 = vcombine.high %v2717, %v2717
        %v2769 = vunpack.c.l.s4 1983009808
        %v2770 = vunpack.c.0.s8 %v2769
        %v2771 = vlaneseq
        %v2772 = vshrl.u32 %v2771, 7
        %v2773 = vsub.s32 %v2770, %v2772
        %v2774 = vrot.slane %v2717, %v2773
        %v2776 = vunpack.c.l.s4 1983009808
        %v2777 = vunpack.c.0.s8 %v2776
        %v2778 = vlaneseq
        %v2779 = vshrl.u32 %v2778, 7
        %v2780 = vsub.s32 %v2777, %v2779
        %v2781 = vrot.slane %v2767, %v2780
        %v2782 = vcombine.high %v2774, %v2774
        %v2784 = vsel %vm602, %v2750, 0
        %v2787 = vsel %vm602, %v2751, 0
        %v2790 = vsel %vm602, %v2752, 0
        %v2793 = vsel %vm602, %v2753, 0
        %v2796 = vsel %vm602, %v2754, 0
        %v2799 = vsel %vm602, %v2755, 0
        %v2802 = vsel %vm602, %v2756, 0
        %v2805 = vsel %vm602, %v2757, 0
        %v2808 = vsel %vm602, %v2758, 0
        %v2811 = vsel %vm602, %v2759, 0
        %v2814 = vsel %vm602, %v2760, 0
        %v2817 = vsel %vm602, %v2761, 0
        %v2820 = vsel %vm602, %v2762, 0
        %v2823 = vsel %vm602, %v2763, 0
        %v2826 = vsel %vm602, %v2764, 0
        %v2829 = vsel %vm602, %v2765, 0
        %v2832 = vsel %vm651, %v2774, 0
        %v2835 = vsel %vm651, %v2782, 0
        %v2838 = vsel %vm651, %v2781, 0
        %2840 = vmatprep.subr.bf16.mxu0 %v2835
        %2841 = vmatpush1.bf16.msra.mxu0 %v2832
        %2842 = vmatprep.subr.bf16.mxu0 0
        %2843 = vmatpush1.bf16.msra.mxu0 0
        %2844 = vmatprep.subr.bf16.mxu0 0
        %2845 = vmatpush1.bf16.msra.mxu0 0
        %2846 = vmatprep.subr.bf16.mxu0 0
        %2847 = vmatpush1.bf16.msra.mxu0 0
        %2848 = vmatprep.subr.bf16.mxu0 0
        %2849 = vmatpush1.bf16.msra.mxu0 0
        %2850 = vmatprep.subr.bf16.mxu0 0
        %2851 = vmatpush1.bf16.msra.mxu0 0
        %2852 = vmatprep.subr.bf16.mxu0 0
        %2853 = vmatpush1.bf16.msra.mxu0 0
        %2854 = vmatprep.subr.bf16.mxu0 0
        %2855 = vmatpush1.bf16.msra.mxu0 0
        %2856 = vmatprep.subr.bf16.mxu0 0
        %2857 = vmatpush1.bf16.msra.mxu0 0
        %2858 = vmatprep.subr.bf16.mxu0 0
        %2859 = vmatpush1.bf16.msra.mxu0 0
        %2860 = vmatprep.subr.bf16.mxu0 0
        %2861 = vmatpush1.bf16.msra.mxu0 0
        %2862 = vmatprep.subr.bf16.mxu0 0
        %2863 = vmatpush1.bf16.msra.mxu0 0
        %2864 = vmatprep.subr.bf16.mxu0 0
        %2865 = vmatpush1.bf16.msra.mxu0 0
        %2866 = vmatprep.subr.bf16.mxu0 0
        %2867 = vmatpush1.bf16.msra.mxu0 0
        %2868 = vmatprep.subr.bf16.mxu0 0
        %2869 = vmatpush1.bf16.msra.mxu0 0
        %2870 = vmatprep.subr.bf16.mxu0 0
        %2871 = vmatpush1.bf16.msra.mxu0 0
        %2872 = vmatprep.mubr.bf16.mxu0 0
        %2873 = vmatmul.mubr.bf16.gmra.mrb[0].mxu0 %v2784
        %v2874 = vpop.f32.mrb[0].mxu0
        %v2875 = vadd.f32 0.0, %v2874
        %v2876 = vpop.f32.mrb[0].mxu0
        %v2877 = vadd.f32 0.0, %v2876
        %v2878 = vpop.f32.mrb[0].mxu0
        %v2879 = vadd.f32 0.0, %v2878
        %v2880 = vpop.f32.mrb[0].mxu0
        %v2881 = vadd.f32 0.0, %v2880
        %2882 = vmatprep.mubr.bf16.mxu0 0
        %2883 = vmatmul.mubr.bf16.gmra.mrb[0].mxu0 %v2787
        %v2884 = vpop.f32.mrb[0].mxu0
        %v2885 = vadd.f32 0.0, %v2884
        %v2886 = vpop.f32.mrb[0].mxu0
        %v2887 = vadd.f32 0.0, %v2886
        %v2888 = vpop.f32.mrb[0].mxu0
        %v2889 = vadd.f32 0.0, %v2888
        %v2890 = vpop.f32.mrb[0].mxu0
        %v2891 = vadd.f32 0.0, %v2890
        %2892 = vmatprep.mubr.bf16.mxu0 0
        %2893 = vmatmul.mubr.bf16.gmra.mrb[0].mxu0 %v2790
        %v2894 = vpop.f32.mrb[0].mxu0
        %v2895 = vadd.f32 0.0, %v2894
        %v2896 = vpop.f32.mrb[0].mxu0
        %v2897 = vadd.f32 0.0, %v2896
        %v2898 = vpop.f32.mrb[0].mxu0
        %v2899 = vadd.f32 0.0, %v2898
        %v2900 = vpop.f32.mrb[0].mxu0
        %v2901 = vadd.f32 0.0, %v2900
        %2902 = vmatprep.mubr.bf16.mxu0 0
        %2903 = vmatmul.mubr.bf16.gmra.mrb[0].mxu0 %v2793
        %v2904 = vpop.f32.mrb[0].mxu0
        %v2905 = vadd.f32 0.0, %v2904
        %v2906 = vpop.f32.mrb[0].mxu0
        %v2907 = vadd.f32 0.0, %v2906
        %v2908 = vpop.f32.mrb[0].mxu0
        %v2909 = vadd.f32 0.0, %v2908
        %v2910 = vpop.f32.mrb[0].mxu0
        %v2911 = vadd.f32 0.0, %v2910
        %2912 = vmatprep.mubr.bf16.mxu0 0
        %2913 = vmatmul.mubr.bf16.gmra.mrb[0].mxu0 %v2796
        %v2914 = vpop.f32.mrb[0].mxu0
        %v2915 = vadd.f32 0.0, %v2914
        %v2916 = vpop.f32.mrb[0].mxu0
        %v2917 = vadd.f32 0.0, %v2916
        %v2918 = vpop.f32.mrb[0].mxu0
        %v2919 = vadd.f32 0.0, %v2918
        %v2920 = vpop.f32.mrb[0].mxu0
        %v2921 = vadd.f32 0.0, %v2920
        %2922 = vmatprep.mubr.bf16.mxu0 0
        %2923 = vmatmul.mubr.bf16.gmra.mrb[0].mxu0 %v2799
        %v2924 = vpop.f32.mrb[0].mxu0
        %v2925 = vadd.f32 0.0, %v2924
        %v2926 = vpop.f32.mrb[0].mxu0
        %v2927 = vadd.f32 0.0, %v2926
        %v2928 = vpop.f32.mrb[0].mxu0
        %v2929 = vadd.f32 0.0, %v2928
        %v2930 = vpop.f32.mrb[0].mxu0
        %v2931 = vadd.f32 0.0, %v2930
        %2932 = vmatprep.mubr.bf16.mxu0 0
        %2933 = vmatmul.mubr.bf16.gmra.mrb[0].mxu0 %v2802
        %v2934 = vpop.f32.mrb[0].mxu0
        %v2935 = vadd.f32 0.0, %v2934
        %v2936 = vpop.f32.mrb[0].mxu0
        %v2937 = vadd.f32 0.0, %v2936
        %v2938 = vpop.f32.mrb[0].mxu0
        %v2939 = vadd.f32 0.0, %v2938
        %v2940 = vpop.f32.mrb[0].mxu0
        %v2941 = vadd.f32 0.0, %v2940
        %2942 = vmatprep.mubr.bf16.mxu0 0
        %2943 = vmatmul.mubr.bf16.gmra.mrb[0].mxu0 %v2805
        %v2944 = vpop.f32.mrb[0].mxu0
        %v2945 = vadd.f32 0.0, %v2944
        %v2946 = vpop.f32.mrb[0].mxu0
        %v2947 = vadd.f32 0.0, %v2946
        %v2948 = vpop.f32.mrb[0].mxu0
        %v2949 = vadd.f32 0.0, %v2948
        %v2950 = vpop.f32.mrb[0].mxu0
        %v2951 = vadd.f32 0.0, %v2950
        %2952 = vmatprep.mubr.bf16.mxu0 0
        %2953 = vmatmul.mubr.bf16.gmra.mrb[0].mxu0 %v2808
        %v2954 = vpop.f32.mrb[0].mxu0
        %v2955 = vadd.f32 0.0, %v2954
        %v2956 = vpop.f32.mrb[0].mxu0
        %v2957 = vadd.f32 0.0, %v2956
        %v2958 = vpop.f32.mrb[0].mxu0
        %v2959 = vadd.f32 0.0, %v2958
        %v2960 = vpop.f32.mrb[0].mxu0
        %v2961 = vadd.f32 0.0, %v2960
        %2962 = vmatprep.mubr.bf16.mxu0 0
        %2963 = vmatmul.mubr.bf16.gmra.mrb[0].mxu0 %v2811
        %v2964 = vpop.f32.mrb[0].mxu0
        %v2965 = vadd.f32 0.0, %v2964
        %v2966 = vpop.f32.mrb[0].mxu0
        %v2967 = vadd.f32 0.0, %v2966
        %v2968 = vpop.f32.mrb[0].mxu0
        %v2969 = vadd.f32 0.0, %v2968
        %v2970 = vpop.f32.mrb[0].mxu0
        %v2971 = vadd.f32 0.0, %v2970
        %2972 = vmatprep.mubr.bf16.mxu0 0
        %2973 = vmatmul.mubr.bf16.gmra.mrb[0].mxu0 %v2814
        %v2974 = vpop.f32.mrb[0].mxu0
        %v2975 = vadd.f32 0.0, %v2974
        %v2976 = vpop.f32.mrb[0].mxu0
        %v2977 = vadd.f32 0.0, %v2976
        %v2978 = vpop.f32.mrb[0].mxu0
        %v2979 = vadd.f32 0.0, %v2978
        %v2980 = vpop.f32.mrb[0].mxu0
        %v2981 = vadd.f32 0.0, %v2980
        %2982 = vmatprep.mubr.bf16.mxu0 0
        %2983 = vmatmul.mubr.bf16.gmra.mrb[0].mxu0 %v2817
        %v2984 = vpop.f32.mrb[0].mxu0
        %v2985 = vadd.f32 0.0, %v2984
        %v2986 = vpop.f32.mrb[0].mxu0
        %v2987 = vadd.f32 0.0, %v2986
        %v2988 = vpop.f32.mrb[0].mxu0
        %v2989 = vadd.f32 0.0, %v2988
        %v2990 = vpop.f32.mrb[0].mxu0
        %v2991 = vadd.f32 0.0, %v2990
        %2992 = vmatprep.mubr.bf16.mxu0 0
        %2993 = vmatmul.mubr.bf16.gmra.mrb[0].mxu0 %v2820
        %v2994 = vpop.f32.mrb[0].mxu0
        %v2995 = vadd.f32 0.0, %v2994
        %v2996 = vpop.f32.mrb[0].mxu0
        %v2997 = vadd.f32 0.0, %v2996
        %v2998 = vpop.f32.mrb[0].mxu0
        %v2999 = vadd.f32 0.0, %v2998
        %v3000 = vpop.f32.mrb[0].mxu0
        %v3001 = vadd.f32 0.0, %v3000
        %3002 = vmatprep.mubr.bf16.mxu0 0
        %3003 = vmatmul.mubr.bf16.gmra.mrb[0].mxu0 %v2823
        %v3004 = vpop.f32.mrb[0].mxu0
        %v3005 = vadd.f32 0.0, %v3004
        %v3006 = vpop.f32.mrb[0].mxu0
        %v3007 = vadd.f32 0.0, %v3006
        %v3008 = vpop.f32.mrb[0].mxu0
        %v3009 = vadd.f32 0.0, %v3008
        %v3010 = vpop.f32.mrb[0].mxu0
        %v3011 = vadd.f32 0.0, %v3010
        %3012 = vmatprep.mubr.bf16.mxu0 0
        %3013 = vmatmul.mubr.bf16.gmra.mrb[0].mxu0 %v2826
        %v3014 = vpop.f32.mrb[0].mxu0
        %v3015 = vadd.f32 0.0, %v3014
        %v3016 = vpop.f32.mrb[0].mxu0
        %v3017 = vadd.f32 0.0, %v3016
        %v3018 = vpop.f32.mrb[0].mxu0
        %v3019 = vadd.f32 0.0, %v3018
        %v3020 = vpop.f32.mrb[0].mxu0
        %v3021 = vadd.f32 0.0, %v3020
        %3022 = vmatprep.mubr.bf16.mxu0 0
        %3023 = vmatmul.mubr.bf16.gmra.mrb[0].mxu0 %v2829
        %v3024 = vpop.f32.mrb[0].mxu0
        %v3025 = vadd.f32 0.0, %v3024
        %v3026 = vpop.f32.mrb[0].mxu0
        %v3027 = vadd.f32 0.0, %v3026
        %v3028 = vpop.f32.mrb[0].mxu0
        %v3029 = vadd.f32 0.0, %v3028
        %v3030 = vpop.f32.mrb[0].mxu0
        %v3031 = vadd.f32 0.0, %v3030
        %3032 = vdwg.mxu0
        %3033 = vmatprep.subr.bf16.mxu0 0
        %3034 = vmatpush1.bf16.msra.mxu0 %v2838
        %3035 = vmatprep.subr.bf16.mxu0 0
        %3036 = vmatpush1.bf16.msra.mxu0 0
        %3037 = vmatprep.subr.bf16.mxu0 0
        %3038 = vmatpush1.bf16.msra.mxu0 0
        %3039 = vmatprep.subr.bf16.mxu0 0
        %3040 = vmatpush1.bf16.msra.mxu0 0
        %3041 = vmatprep.subr.bf16.mxu0 0
        %3042 = vmatpush1.bf16.msra.mxu0 0
        %3043 = vmatprep.subr.bf16.mxu0 0
        %3044 = vmatpush1.bf16.msra.mxu0 0
        %3045 = vmatprep.subr.bf16.mxu0 0
        %3046 = vmatpush1.bf16.msra.mxu0 0
        %3047 = vmatprep.subr.bf16.mxu0 0
        %3048 = vmatpush1.bf16.msra.mxu0 0
        %3049 = vmatprep.subr.bf16.mxu0 0
        %3050 = vmatpush1.bf16.msra.mxu0 0
        %3051 = vmatprep.subr.bf16.mxu0 0
        %3052 = vmatpush1.bf16.msra.mxu0 0
        %3053 = vmatprep.subr.bf16.mxu0 0
        %3054 = vmatpush1.bf16.msra.mxu0 0
        %3055 = vmatprep.subr.bf16.mxu0 0
        %3056 = vmatpush1.bf16.msra.mxu0 0
        %3057 = vmatprep.subr.bf16.mxu0 0
        %3058 = vmatpush1.bf16.msra.mxu0 0
        %3059 = vmatprep.subr.bf16.mxu0 0
        %3060 = vmatpush1.bf16.msra.mxu0 0
        %3061 = vmatprep.subr.bf16.mxu0 0
        %3062 = vmatpush1.bf16.msra.mxu0 0
        %3063 = vmatprep.subr.bf16.mxu0 0
        %3064 = vmatpush1.bf16.msra.mxu0 0
        %3065 = vmatprep.mubr.bf16.mxu0 0
        %3066 = vmatmul.mubr.bf16.gmra.mrb[0].mxu0 %v2784
        %v3067 = vpop.f32.mrb[0].mxu0
        %v3068 = vadd.f32 0.0, %v3067
        %v3069 = vpop.f32.mrb[0].mxu0
        %v3070 = vpop.f32.mrb[0].mxu0
        %v3071 = vadd.f32 0.0, %v3070
        %v3072 = vpop.f32.mrb[0].mxu0
        %3073 = vmatprep.mubr.bf16.mxu0 0
        %3074 = vmatmul.mubr.bf16.gmra.mrb[0].mxu0 %v2787
        %v3075 = vpop.f32.mrb[0].mxu0
        %v3076 = vadd.f32 0.0, %v3075
        %v3077 = vpop.f32.mrb[0].mxu0
        %v3078 = vpop.f32.mrb[0].mxu0
        %v3079 = vadd.f32 0.0, %v3078
        %v3080 = vpop.f32.mrb[0].mxu0
        %3081 = vmatprep.mubr.bf16.mxu0 0
        %3082 = vmatmul.mubr.bf16.gmra.mrb[0].mxu0 %v2790
        %v3083 = vpop.f32.mrb[0].mxu0
        %v3084 = vadd.f32 0.0, %v3083
        %v3085 = vpop.f32.mrb[0].mxu0
        %v3086 = vpop.f32.mrb[0].mxu0
        %v3087 = vadd.f32 0.0, %v3086
        %v3088 = vpop.f32.mrb[0].mxu0
        %3089 = vmatprep.mubr.bf16.mxu0 0
        %3090 = vmatmul.mubr.bf16.gmra.mrb[0].mxu0 %v2793
        %v3091 = vpop.f32.mrb[0].mxu0
        %v3092 = vadd.f32 0.0, %v3091
        %v3093 = vpop.f32.mrb[0].mxu0
        %v3094 = vpop.f32.mrb[0].mxu0
        %v3095 = vadd.f32 0.0, %v3094
        %v3096 = vpop.f32.mrb[0].mxu0
        %3097 = vmatprep.mubr.bf16.mxu0 0
        %3098 = vmatmul.mubr.bf16.gmra.mrb[0].mxu0 %v2796
        %v3099 = vpop.f32.mrb[0].mxu0
        %v3100 = vadd.f32 0.0, %v3099
        %v3101 = vpop.f32.mrb[0].mxu0
        %v3102 = vpop.f32.mrb[0].mxu0
        %v3103 = vadd.f32 0.0, %v3102
        %v3104 = vpop.f32.mrb[0].mxu0
        %3105 = vmatprep.mubr.bf16.mxu0 0
        %3106 = vmatmul.mubr.bf16.gmra.mrb[0].mxu0 %v2799
        %v3107 = vpop.f32.mrb[0].mxu0
        %v3108 = vadd.f32 0.0, %v3107
        %v3109 = vpop.f32.mrb[0].mxu0
        %v3110 = vpop.f32.mrb[0].mxu0
        %v3111 = vadd.f32 0.0, %v3110
        %v3112 = vpop.f32.mrb[0].mxu0
        %3113 = vmatprep.mubr.bf16.mxu0 0
        %3114 = vmatmul.mubr.bf16.gmra.mrb[0].mxu0 %v2802
        %v3115 = vpop.f32.mrb[0].mxu0
        %v3116 = vadd.f32 0.0, %v3115
        %v3117 = vpop.f32.mrb[0].mxu0
        %v3118 = vpop.f32.mrb[0].mxu0
        %v3119 = vadd.f32 0.0, %v3118
        %v3120 = vpop.f32.mrb[0].mxu0
        %3121 = vmatprep.mubr.bf16.mxu0 0
        %3122 = vmatmul.mubr.bf16.gmra.mrb[0].mxu0 %v2805
        %v3123 = vpop.f32.mrb[0].mxu0
        %v3124 = vadd.f32 0.0, %v3123
        %v3125 = vpop.f32.mrb[0].mxu0
        %v3126 = vpop.f32.mrb[0].mxu0
        %v3127 = vadd.f32 0.0, %v3126
        %v3128 = vpop.f32.mrb[0].mxu0
        %3129 = vmatprep.mubr.bf16.mxu0 0
        %3130 = vmatmul.mubr.bf16.gmra.mrb[0].mxu0 %v2808
        %v3131 = vpop.f32.mrb[0].mxu0
        %v3132 = vadd.f32 0.0, %v3131
        %v3133 = vpop.f32.mrb[0].mxu0
        %v3134 = vpop.f32.mrb[0].mxu0
        %v3135 = vadd.f32 0.0, %v3134
        %v3136 = vpop.f32.mrb[0].mxu0
        %3137 = vmatprep.mubr.bf16.mxu0 0
        %3138 = vmatmul.mubr.bf16.gmra.mrb[0].mxu0 %v2811
        %v3139 = vpop.f32.mrb[0].mxu0
        %v3140 = vadd.f32 0.0, %v3139
        %v3141 = vpop.f32.mrb[0].mxu0
        %v3142 = vpop.f32.mrb[0].mxu0
        %v3143 = vadd.f32 0.0, %v3142
        %v3144 = vpop.f32.mrb[0].mxu0
        %3145 = vmatprep.mubr.bf16.mxu0 0
        %3146 = vmatmul.mubr.bf16.gmra.mrb[0].mxu0 %v2814
        %v3147 = vpop.f32.mrb[0].mxu0
        %v3148 = vadd.f32 0.0, %v3147
        %v3149 = vpop.f32.mrb[0].mxu0
        %v3150 = vpop.f32.mrb[0].mxu0
        %v3151 = vadd.f32 0.0, %v3150
        %v3152 = vpop.f32.mrb[0].mxu0
        %3153 = vmatprep.mubr.bf16.mxu0 0
        %3154 = vmatmul.mubr.bf16.gmra.mrb[0].mxu0 %v2817
        %v3155 = vpop.f32.mrb[0].mxu0
        %v3156 = vadd.f32 0.0, %v3155
        %v3157 = vpop.f32.mrb[0].mxu0
        %v3158 = vpop.f32.mrb[0].mxu0
        %v3159 = vadd.f32 0.0, %v3158
        %v3160 = vpop.f32.mrb[0].mxu0
        %3161 = vmatprep.mubr.bf16.mxu0 0
        %3162 = vmatmul.mubr.bf16.gmra.mrb[0].mxu0 %v2820
        %v3163 = vpop.f32.mrb[0].mxu0
        %v3164 = vadd.f32 0.0, %v3163
        %v3165 = vpop.f32.mrb[0].mxu0
        %v3166 = vpop.f32.mrb[0].mxu0
        %v3167 = vadd.f32 0.0, %v3166
        %v3168 = vpop.f32.mrb[0].mxu0
        %3169 = vmatprep.mubr.bf16.mxu0 0
        %3170 = vmatmul.mubr.bf16.gmra.mrb[0].mxu0 %v2823
        %v3171 = vpop.f32.mrb[0].mxu0
        %v3172 = vadd.f32 0.0, %v3171
        %v3173 = vpop.f32.mrb[0].mxu0
        %v3174 = vpop.f32.mrb[0].mxu0
        %v3175 = vadd.f32 0.0, %v3174
        %v3176 = vpop.f32.mrb[0].mxu0
        %3177 = vmatprep.mubr.bf16.mxu0 0
        %3178 = vmatmul.mubr.bf16.gmra.mrb[0].mxu0 %v2826
        %v3179 = vpop.f32.mrb[0].mxu0
        %v3180 = vadd.f32 0.0, %v3179
        %v3181 = vpop.f32.mrb[0].mxu0
        %v3182 = vpop.f32.mrb[0].mxu0
        %v3183 = vadd.f32 0.0, %v3182
        %v3184 = vpop.f32.mrb[0].mxu0
        %3185 = vmatprep.mubr.bf16.mxu0 0
        %3186 = vmatmul.mubr.bf16.gmra.mrb[0].mxu0 %v2829
        %v3187 = vpop.f32.mrb[0].mxu0
        %v3188 = vadd.f32 0.0, %v3187
        %v3189 = vpop.f32.mrb[0].mxu0
        %v3190 = vpop.f32.mrb[0].mxu0
        %v3191 = vadd.f32 0.0, %v3190
        %v3192 = vpop.f32.mrb[0].mxu0
        %3193 = vdwg.mxu0
        %v3194 = vadd.f32 %v2620, %v2875
        %v3195 = vadd.f32 %v2621, %v2877
        %v3196 = vadd.f32 %v2622, %v3068
        %v3197 = vadd.f32 %v2623, %v2879
        %v3198 = vadd.f32 %v2624, %v2881
        %v3199 = vadd.f32 %v2625, %v3071
        %v3200 = vadd.f32 %v2626, %v2885
        %v3201 = vadd.f32 %v2627, %v2887
        %v3202 = vadd.f32 %v2628, %v3076
        %v3203 = vadd.f32 %v2629, %v2889
        %v3204 = vadd.f32 %v2630, %v2891
        %v3205 = vadd.f32 %v2631, %v3079
        %v3206 = vadd.f32 %v2632, %v2895
        %v3207 = vadd.f32 %v2633, %v2897
        %v3208 = vadd.f32 %v2634, %v3084
        %v3209 = vadd.f32 %v2635, %v2899
        %v3210 = vadd.f32 %v2636, %v2901
        %v3211 = vadd.f32 %v2637, %v3087
        %v3212 = vadd.f32 %v2638, %v2905
        %v3213 = vadd.f32 %v2639, %v2907
        %v3214 = vadd.f32 %v2640, %v3092
        %v3215 = vadd.f32 %v2641, %v2909
        %v3216 = vadd.f32 %v2642, %v2911
        %v3217 = vadd.f32 %v2643, %v3095
        %v3218 = vadd.f32 %v2644, %v2915
        %v3219 = vadd.f32 %v2645, %v2917
        %v3220 = vadd.f32 %v2646, %v3100
        %v3221 = vadd.f32 %v2647, %v2919
        %v3222 = vadd.f32 %v2648, %v2921
        %v3223 = vadd.f32 %v2649, %v3103
        %v3224 = vadd.f32 %v2650, %v2925
        %v3225 = vadd.f32 %v2651, %v2927
        %v3226 = vadd.f32 %v2652, %v3108
        %v3227 = vadd.f32 %v2653, %v2929
        %v3228 = vadd.f32 %v2654, %v2931
        %v3229 = vadd.f32 %v2655, %v3111
        %v3230 = vadd.f32 %v2656, %v2935
        %v3231 = vadd.f32 %v2657, %v2937
        %v3232 = vadd.f32 %v2658, %v3116
        %v3233 = vadd.f32 %v2659, %v2939
        %v3234 = vadd.f32 %v2660, %v2941
        %v3235 = vadd.f32 %v2661, %v3119
        %v3236 = vadd.f32 %v2662, %v2945
        %v3237 = vadd.f32 %v2663, %v2947
        %v3238 = vadd.f32 %v2664, %v3124
        %v3239 = vadd.f32 %v2665, %v2949
        %v3240 = vadd.f32 %v2666, %v2951
        %v3241 = vadd.f32 %v2667, %v3127
        %v3242 = vadd.f32 %v2668, %v2955
        %v3243 = vadd.f32 %v2669, %v2957
        %v3244 = vadd.f32 %v2670, %v3132
        %v3245 = vadd.f32 %v2671, %v2959
        %v3246 = vadd.f32 %v2672, %v2961
        %v3247 = vadd.f32 %v2673, %v3135
        %v3248 = vadd.f32 %v2674, %v2965
        %v3249 = vadd.f32 %v2675, %v2967
        %v3250 = vadd.f32 %v2676, %v3140
        %v3251 = vadd.f32 %v2677, %v2969
        %v3252 = vadd.f32 %v2678, %v2971
        %v3253 = vadd.f32 %v2679, %v3143
        %v3254 = vadd.f32 %v2680, %v2975
        %v3255 = vadd.f32 %v2681, %v2977
        %v3256 = vadd.f32 %v2682, %v3148
        %v3257 = vadd.f32 %v2683, %v2979
        %v3258 = vadd.f32 %v2684, %v2981
        %v3259 = vadd.f32 %v2685, %v3151
        %v3260 = vadd.f32 %v2686, %v2985
        %v3261 = vadd.f32 %v2687, %v2987
        %v3262 = vadd.f32 %v2688, %v3156
        %v3263 = vadd.f32 %v2689, %v2989
        %v3264 = vadd.f32 %v2690, %v2991
        %v3265 = vadd.f32 %v2691, %v3159
        %v3266 = vadd.f32 %v2692, %v2995
        %v3267 = vadd.f32 %v2693, %v2997
        %v3268 = vadd.f32 %v2694, %v3164
        %v3269 = vadd.f32 %v2695, %v2999
        %v3270 = vadd.f32 %v2696, %v3001
        %v3271 = vadd.f32 %v2697, %v3167
        %v3272 = vadd.f32 %v2698, %v3005
        %v3273 = vadd.f32 %v2699, %v3007
        %v3274 = vadd.f32 %v2700, %v3172
        %v3275 = vadd.f32 %v2701, %v3009
        %v3276 = vadd.f32 %v2702, %v3011
        %v3277 = vadd.f32 %v2703, %v3175
        %v3278 = vadd.f32 %v2704, %v3015
        %v3279 = vadd.f32 %v2705, %v3017
        %v3280 = vadd.f32 %v2706, %v3180
        %v3281 = vadd.f32 %v2707, %v3019
        %v3282 = vadd.f32 %v2708, %v3021
        %v3283 = vadd.f32 %v2709, %v3183
        %v3284 = vadd.f32 %v2710, %v3025
        %v3285 = vadd.f32 %v2711, %v3027
        %v3286 = vadd.f32 %v2712, %v3188
        %v3287 = vadd.f32 %v2713, %v3029
        %v3288 = vadd.f32 %v2714, %v3031
        %v3289 = vadd.f32 %v2715, %v3191
        %3290 = vst [vmem:[#allocation2] sm:$0xff] %v3194
        %3291 = vst [vmem:[#allocation2 + $0x8] sm:$0xff] %v3195
        %3292 = vst.msk [vmem:[#allocation2 + $0x10] sm:$0xff] %vm1113, %v3196
        %3293 = vst [vmem:[#allocation2 + $0x18] sm:$0xff] %v3197
        %3294 = vst [vmem:[#allocation2 + $0x20] sm:$0xff] %v3198
        %3295 = vst.msk [vmem:[#allocation2 + $0x28] sm:$0xff] %vm1113, %v3199
        %3296 = vst [vmem:[#allocation2 + $0x30] sm:$0xff] %v3200
        %3297 = vst [vmem:[#allocation2 + $0x38] sm:$0xff] %v3201
        %3298 = vst.msk [vmem:[#allocation2 + $0x40] sm:$0xff] %vm1113, %v3202
        %3299 = vst [vmem:[#allocation2 + $0x48] sm:$0xff] %v3203
        %3300 = vst [vmem:[#allocation2 + $0x50] sm:$0xff] %v3204
        %3301 = vst.msk [vmem:[#allocation2 + $0x58] sm:$0xff] %vm1113, %v3205
        %3302 = vst [vmem:[#allocation2 + $0x60] sm:$0xff] %v3206
        %3303 = vst [vmem:[#allocation2 + $0x68] sm:$0xff] %v3207
        %3304 = vst.msk [vmem:[#allocation2 + $0x70] sm:$0xff] %vm1113, %v3208
        %3305 = vst [vmem:[#allocation2 + $0x78] sm:$0xff] %v3209
        %3306 = vst [vmem:[#allocation2 + $0x80] sm:$0xff] %v3210
        %3307 = vst.msk [vmem:[#allocation2 + $0x88] sm:$0xff] %vm1113, %v3211
        %3308 = vst [vmem:[#allocation2 + $0x90] sm:$0xff] %v3212
        %3309 = vst [vmem:[#allocation2 + $0x98] sm:$0xff] %v3213
        %3310 = vst.msk [vmem:[#allocation2 + $0xa0] sm:$0xff] %vm1113, %v3214
        %3311 = vst [vmem:[#allocation2 + $0xa8] sm:$0xff] %v3215
        %3312 = vst [vmem:[#allocation2 + $0xb0] sm:$0xff] %v3216
        %3313 = vst.msk [vmem:[#allocation2 + $0xb8] sm:$0xff] %vm1113, %v3217
        %3314 = vst [vmem:[#allocation2 + $0xc0] sm:$0xff] %v3218
        %3315 = vst [vmem:[#allocation2 + $0xc8] sm:$0xff] %v3219
        %3316 = vst.msk [vmem:[#allocation2 + $0xd0] sm:$0xff] %vm1113, %v3220
        %3317 = vst [vmem:[#allocation2 + $0xd8] sm:$0xff] %v3221
        %3318 = vst [vmem:[#allocation2 + $0xe0] sm:$0xff] %v3222
        %3319 = vst.msk [vmem:[#allocation2 + $0xe8] sm:$0xff] %vm1113, %v3223
        %3320 = vst [vmem:[#allocation2 + $0xf0] sm:$0xff] %v3224
        %3321 = vst [vmem:[#allocation2 + $0xf8] sm:$0xff] %v3225
        %3322 = vst.msk [vmem:[#allocation2 + $0x100] sm:$0xff] %vm1113, %v3226
        %3323 = vst [vmem:[#allocation2 + $0x108] sm:$0xff] %v3227
        %3324 = vst [vmem:[#allocation2 + $0x110] sm:$0xff] %v3228
        %3325 = vst.msk [vmem:[#allocation2 + $0x118] sm:$0xff] %vm1113, %v3229
        %3326 = vst [vmem:[#allocation2 + $0x120] sm:$0xff] %v3230
        %3327 = vst [vmem:[#allocation2 + $0x128] sm:$0xff] %v3231
        %3328 = vst.msk [vmem:[#allocation2 + $0x130] sm:$0xff] %vm1113, %v3232
        %3329 = vst [vmem:[#allocation2 + $0x138] sm:$0xff] %v3233
        %3330 = vst [vmem:[#allocation2 + $0x140] sm:$0xff] %v3234
        %3331 = vst.msk [vmem:[#allocation2 + $0x148] sm:$0xff] %vm1113, %v3235
        %3332 = vst [vmem:[#allocation2 + $0x150] sm:$0xff] %v3236
        %3333 = vst [vmem:[#allocation2 + $0x158] sm:$0xff] %v3237
        %3334 = vst.msk [vmem:[#allocation2 + $0x160] sm:$0xff] %vm1113, %v3238
        %3335 = vst [vmem:[#allocation2 + $0x168] sm:$0xff] %v3239
        %3336 = vst [vmem:[#allocation2 + $0x170] sm:$0xff] %v3240
        %3337 = vst.msk [vmem:[#allocation2 + $0x178] sm:$0xff] %vm1113, %v3241
        %3338 = vst [vmem:[#allocation2 + $0x180] sm:$0xff] %v3242
        %3339 = vst [vmem:[#allocation2 + $0x188] sm:$0xff] %v3243
        %3340 = vst.msk [vmem:[#allocation2 + $0x190] sm:$0xff] %vm1113, %v3244
        %3341 = vst [vmem:[#allocation2 + $0x198] sm:$0xff] %v3245
        %3342 = vst [vmem:[#allocation2 + $0x1a0] sm:$0xff] %v3246
        %3343 = vst.msk [vmem:[#allocation2 + $0x1a8] sm:$0xff] %vm1113, %v3247
        %3344 = vst [vmem:[#allocation2 + $0x1b0] sm:$0xff] %v3248
        %3345 = vst [vmem:[#allocation2 + $0x1b8] sm:$0xff] %v3249
        %3346 = vst.msk [vmem:[#allocation2 + $0x1c0] sm:$0xff] %vm1113, %v3250
        %3347 = vst [vmem:[#allocation2 + $0x1c8] sm:$0xff] %v3251
        %3348 = vst [vmem:[#allocation2 + $0x1d0] sm:$0xff] %v3252
        %3349 = vst.msk [vmem:[#allocation2 + $0x1d8] sm:$0xff] %vm1113, %v3253
        %3350 = vst [vmem:[#allocation2 + $0x1e0] sm:$0xff] %v3254
        %3351 = vst [vmem:[#allocation2 + $0x1e8] sm:$0xff] %v3255
        %3352 = vst.msk [vmem:[#allocation2 + $0x1f0] sm:$0xff] %vm1113, %v3256
        %3353 = vst [vmem:[#allocation2 + $0x1f8] sm:$0xff] %v3257
        %3354 = vst [vmem:[#allocation2 + $0x200] sm:$0xff] %v3258
        %3355 = vst.msk [vmem:[#allocation2 + $0x208] sm:$0xff] %vm1113, %v3259
        %3356 = vst [vmem:[#allocation2 + $0x210] sm:$0xff] %v3260
        %3357 = vst [vmem:[#allocation2 + $0x218] sm:$0xff] %v3261
        %3358 = vst.msk [vmem:[#allocation2 + $0x220] sm:$0xff] %vm1113, %v3262
        %3359 = vst [vmem:[#allocation2 + $0x228] sm:$0xff] %v3263
        %3360 = vst [vmem:[#allocation2 + $0x230] sm:$0xff] %v3264
        %3361 = vst.msk [vmem:[#allocation2 + $0x238] sm:$0xff] %vm1113, %v3265
        %3362 = vst [vmem:[#allocation2 + $0x240] sm:$0xff] %v3266
        %3363 = vst [vmem:[#allocation2 + $0x248] sm:$0xff] %v3267
        %3364 = vst.msk [vmem:[#allocation2 + $0x250] sm:$0xff] %vm1113, %v3268
        %3365 = vst [vmem:[#allocation2 + $0x258] sm:$0xff] %v3269
        %3366 = vst [vmem:[#allocation2 + $0x260] sm:$0xff] %v3270
        %3367 = vst.msk [vmem:[#allocation2 + $0x268] sm:$0xff] %vm1113, %v3271
        %3368 = vst [vmem:[#allocation2 + $0x270] sm:$0xff] %v3272
        %3369 = vst [vmem:[#allocation2 + $0x278] sm:$0xff] %v3273
        %3370 = vst.msk [vmem:[#allocation2 + $0x280] sm:$0xff] %vm1113, %v3274
        %3371 = vst [vmem:[#allocation2 + $0x288] sm:$0xff] %v3275
        %3372 = vst [vmem:[#allocation2 + $0x290] sm:$0xff] %v3276
        %3373 = vst.msk [vmem:[#allocation2 + $0x298] sm:$0xff] %vm1113, %v3277
        %3374 = vst [vmem:[#allocation2 + $0x2a0] sm:$0xff] %v3278
        %3375 = vst [vmem:[#allocation2 + $0x2a8] sm:$0xff] %v3279
        %3376 = vst.msk [vmem:[#allocation2 + $0x2b0] sm:$0xff] %vm1113, %v3280
        %3377 = vst [vmem:[#allocation2 + $0x2b8] sm:$0xff] %v3281
        %3378 = vst [vmem:[#allocation2 + $0x2c0] sm:$0xff] %v3282
        %3379 = vst.msk [vmem:[#allocation2 + $0x2c8] sm:$0xff] %vm1113, %v3283
        %3380 = vst [vmem:[#allocation2 + $0x2d0] sm:$0xff] %v3284
        %3381 = vst [vmem:[#allocation2 + $0x2d8] sm:$0xff] %v3285
        %3382 = vst.msk [vmem:[#allocation2 + $0x2e0] sm:$0xff] %vm1113, %v3286
        %3383 = vst [vmem:[#allocation2 + $0x2e8] sm:$0xff] %v3287
        %3384 = vst [vmem:[#allocation2 + $0x2f0] sm:$0xff] %v3288
        %3385 = vst.msk [vmem:[#allocation2 + $0x2f8] sm:$0xff] %vm1113, %v3289
        %s3386 = scalar_lea.vmem %s240, 12
        %v3387 = vld [vmem:[%s3386] sm:$0xf]
        %v3388 = vld [vmem:[%s3386 + $0x4] sm:$0xf]
        %v3389 = vld [vmem:[%s3386 + $0xc] sm:$0xf]
        %v3390 = vld [vmem:[%s3386 + $0x10] sm:$0xf]
        %v3391 = vld [vmem:[%s3386 + $0x18] sm:$0xf]
        %v3392 = vld [vmem:[%s3386 + $0x1c] sm:$0xf]
        %v3393 = vld [vmem:[%s3386 + $0x24] sm:$0xf]
        %v3394 = vld [vmem:[%s3386 + $0x28] sm:$0xf]
        %v3395 = vld [vmem:[%s3386 + $0x30] sm:$0xf]
        %v3396 = vld [vmem:[%s3386 + $0x34] sm:$0xf]
        %v3397 = vld [vmem:[%s3386 + $0x3c] sm:$0xf]
        %v3398 = vld [vmem:[%s3386 + $0x40] sm:$0xf]
        %v3399 = vld [vmem:[%s3386 + $0x48] sm:$0xf]
        %v3400 = vld [vmem:[%s3386 + $0x4c] sm:$0xf]
        %v3401 = vld [vmem:[%s3386 + $0x54] sm:$0xf]
        %v3402 = vld [vmem:[%s3386 + $0x58] sm:$0xf]
        %v3403 = vld [vmem:[%s3386 + $0x60] sm:$0xf]
        %v3404 = vld [vmem:[%s3386 + $0x64] sm:$0xf]
        %v3405 = vld [vmem:[%s3386 + $0x6c] sm:$0xf]
        %v3406 = vld [vmem:[%s3386 + $0x70] sm:$0xf]
        %v3407 = vld [vmem:[%s3386 + $0x78] sm:$0xf]
        %v3408 = vld [vmem:[%s3386 + $0x7c] sm:$0xf]
        %v3409 = vld [vmem:[%s3386 + $0x84] sm:$0xf]
        %v3410 = vld [vmem:[%s3386 + $0x88] sm:$0xf]
        %v3411 = vld [vmem:[%s3386 + $0x90] sm:$0xf]
        %v3412 = vld [vmem:[%s3386 + $0x94] sm:$0xf]
        %v3413 = vld [vmem:[%s3386 + $0x9c] sm:$0xf]
        %v3414 = vld [vmem:[%s3386 + $0xa0] sm:$0xf]
        %v3415 = vld [vmem:[%s3386 + $0xa8] sm:$0xf]
        %v3416 = vld [vmem:[%s3386 + $0xac] sm:$0xf]
        %v3417 = vld [vmem:[%s3386 + $0xb4] sm:$0xf]
        %v3418 = vld [vmem:[%s3386 + $0xb8] sm:$0xf]
        %v3419 = vld [vmem:[#allocation2] sm:$0xff]
        %v3420 = vld [vmem:[#allocation2 + $0x8] sm:$0xff]
        %v3421 = vld [vmem:[#allocation2 + $0x10] sm:$0xff]
        %v3422 = vld [vmem:[#allocation2 + $0x18] sm:$0xff]
        %v3423 = vld [vmem:[#allocation2 + $0x20] sm:$0xff]
        %v3424 = vld [vmem:[#allocation2 + $0x28] sm:$0xff]
        %v3425 = vld [vmem:[#allocation2 + $0x30] sm:$0xff]
        %v3426 = vld [vmem:[#allocation2 + $0x38] sm:$0xff]
        %v3427 = vld [vmem:[#allocation2 + $0x40] sm:$0xff]
        %v3428 = vld [vmem:[#allocation2 + $0x48] sm:$0xff]
        %v3429 = vld [vmem:[#allocation2 + $0x50] sm:$0xff]
        %v3430 = vld [vmem:[#allocation2 + $0x58] sm:$0xff]
        %v3431 = vld [vmem:[#allocation2 + $0x60] sm:$0xff]
        %v3432 = vld [vmem:[#allocation2 + $0x68] sm:$0xff]
        %v3433 = vld [vmem:[#allocation2 + $0x70] sm:$0xff]
        %v3434 = vld [vmem:[#allocation2 + $0x78] sm:$0xff]
        %v3435 = vld [vmem:[#allocation2 + $0x80] sm:$0xff]
        %v3436 = vld [vmem:[#allocation2 + $0x88] sm:$0xff]
        %v3437 = vld [vmem:[#allocation2 + $0x90] sm:$0xff]
        %v3438 = vld [vmem:[#allocation2 + $0x98] sm:$0xff]
        %v3439 = vld [vmem:[#allocation2 + $0xa0] sm:$0xff]
        %v3440 = vld [vmem:[#allocation2 + $0xa8] sm:$0xff]
        %v3441 = vld [vmem:[#allocation2 + $0xb0] sm:$0xff]
        %v3442 = vld [vmem:[#allocation2 + $0xb8] sm:$0xff]
        %v3443 = vld [vmem:[#allocation2 + $0xc0] sm:$0xff]
        %v3444 = vld [vmem:[#allocation2 + $0xc8] sm:$0xff]
        %v3445 = vld [vmem:[#allocation2 + $0xd0] sm:$0xff]
        %v3446 = vld [vmem:[#allocation2 + $0xd8] sm:$0xff]
        %v3447 = vld [vmem:[#allocation2 + $0xe0] sm:$0xff]
        %v3448 = vld [vmem:[#allocation2 + $0xe8] sm:$0xff]
        %v3449 = vld [vmem:[#allocation2 + $0xf0] sm:$0xff]
        %v3450 = vld [vmem:[#allocation2 + $0xf8] sm:$0xff]
        %v3451 = vld [vmem:[#allocation2 + $0x100] sm:$0xff]
        %v3452 = vld [vmem:[#allocation2 + $0x108] sm:$0xff]
        %v3453 = vld [vmem:[#allocation2 + $0x110] sm:$0xff]
        %v3454 = vld [vmem:[#allocation2 + $0x118] sm:$0xff]
        %v3455 = vld [vmem:[#allocation2 + $0x120] sm:$0xff]
        %v3456 = vld [vmem:[#allocation2 + $0x128] sm:$0xff]
        %v3457 = vld [vmem:[#allocation2 + $0x130] sm:$0xff]
        %v3458 = vld [vmem:[#allocation2 + $0x138] sm:$0xff]
        %v3459 = vld [vmem:[#allocation2 + $0x140] sm:$0xff]
        %v3460 = vld [vmem:[#allocation2 + $0x148] sm:$0xff]
        %v3461 = vld [vmem:[#allocation2 + $0x150] sm:$0xff]
        %v3462 = vld [vmem:[#allocation2 + $0x158] sm:$0xff]
        %v3463 = vld [vmem:[#allocation2 + $0x160] sm:$0xff]
        %v3464 = vld [vmem:[#allocation2 + $0x168] sm:$0xff]
        %v3465 = vld [vmem:[#allocation2 + $0x170] sm:$0xff]
        %v3466 = vld [vmem:[#allocation2 + $0x178] sm:$0xff]
        %v3467 = vld [vmem:[#allocation2 + $0x180] sm:$0xff]
        %v3468 = vld [vmem:[#allocation2 + $0x188] sm:$0xff]
        %v3469 = vld [vmem:[#allocation2 + $0x190] sm:$0xff]
        %v3470 = vld [vmem:[#allocation2 + $0x198] sm:$0xff]
        %v3471 = vld [vmem:[#allocation2 + $0x1a0] sm:$0xff]
        %v3472 = vld [vmem:[#allocation2 + $0x1a8] sm:$0xff]
        %v3473 = vld [vmem:[#allocation2 + $0x1b0] sm:$0xff]
        %v3474 = vld [vmem:[#allocation2 + $0x1b8] sm:$0xff]
        %v3475 = vld [vmem:[#allocation2 + $0x1c0] sm:$0xff]
        %v3476 = vld [vmem:[#allocation2 + $0x1c8] sm:$0xff]
        %v3477 = vld [vmem:[#allocation2 + $0x1d0] sm:$0xff]
        %v3478 = vld [vmem:[#allocation2 + $0x1d8] sm:$0xff]
        %v3479 = vld [vmem:[#allocation2 + $0x1e0] sm:$0xff]
        %v3480 = vld [vmem:[#allocation2 + $0x1e8] sm:$0xff]
        %v3481 = vld [vmem:[#allocation2 + $0x1f0] sm:$0xff]
        %v3482 = vld [vmem:[#allocation2 + $0x1f8] sm:$0xff]
        %v3483 = vld [vmem:[#allocation2 + $0x200] sm:$0xff]
        %v3484 = vld [vmem:[#allocation2 + $0x208] sm:$0xff]
        %v3485 = vld [vmem:[#allocation2 + $0x210] sm:$0xff]
        %v3486 = vld [vmem:[#allocation2 + $0x218] sm:$0xff]
        %v3487 = vld [vmem:[#allocation2 + $0x220] sm:$0xff]
        %v3488 = vld [vmem:[#allocation2 + $0x228] sm:$0xff]
        %v3489 = vld [vmem:[#allocation2 + $0x230] sm:$0xff]
        %v3490 = vld [vmem:[#allocation2 + $0x238] sm:$0xff]
        %v3491 = vld [vmem:[#allocation2 + $0x240] sm:$0xff]
        %v3492 = vld [vmem:[#allocation2 + $0x248] sm:$0xff]
        %v3493 = vld [vmem:[#allocation2 + $0x250] sm:$0xff]
        %v3494 = vld [vmem:[#allocation2 + $0x258] sm:$0xff]
        %v3495 = vld [vmem:[#allocation2 + $0x260] sm:$0xff]
        %v3496 = vld [vmem:[#allocation2 + $0x268] sm:$0xff]
        %v3497 = vld [vmem:[#allocation2 + $0x270] sm:$0xff]
        %v3498 = vld [vmem:[#allocation2 + $0x278] sm:$0xff]
        %v3499 = vld [vmem:[#allocation2 + $0x280] sm:$0xff]
        %v3500 = vld [vmem:[#allocation2 + $0x288] sm:$0xff]
        %v3501 = vld [vmem:[#allocation2 + $0x290] sm:$0xff]
        %v3502 = vld [vmem:[#allocation2 + $0x298] sm:$0xff]
        %v3503 = vld [vmem:[#allocation2 + $0x2a0] sm:$0xff]
        %v3504 = vld [vmem:[#allocation2 + $0x2a8] sm:$0xff]
        %v3505 = vld [vmem:[#allocation2 + $0x2b0] sm:$0xff]
        %v3506 = vld [vmem:[#allocation2 + $0x2b8] sm:$0xff]
        %v3507 = vld [vmem:[#allocation2 + $0x2c0] sm:$0xff]
        %v3508 = vld [vmem:[#allocation2 + $0x2c8] sm:$0xff]
        %v3509 = vld [vmem:[#allocation2 + $0x2d0] sm:$0xff]
        %v3510 = vld [vmem:[#allocation2 + $0x2d8] sm:$0xff]
        %v3511 = vld [vmem:[#allocation2 + $0x2e0] sm:$0xff]
        %v3512 = vld [vmem:[#allocation2 + $0x2e8] sm:$0xff]
        %v3513 = vld [vmem:[#allocation2 + $0x2f0] sm:$0xff]
        %v3514 = vld [vmem:[#allocation2 + $0x2f8] sm:$0xff]
        %s3515 = scalar_lea.vmem %s249, 18
        %v3516 = vld [vmem:[%s3515] sm:$0x3f]
        %v3549 = vunpack.c.l.b16 %v3387
        %v3550 = vunpack.c.l.b16 %v3388
        %v3551 = vunpack.c.l.b16 %v3389
        %v3552 = vunpack.c.l.b16 %v3390
        %v3553 = vunpack.c.l.b16 %v3391
        %v3554 = vunpack.c.l.b16 %v3392
        %v3555 = vunpack.c.l.b16 %v3393
        %v3556 = vunpack.c.l.b16 %v3394
        %v3557 = vunpack.c.l.b16 %v3395
        %v3558 = vunpack.c.l.b16 %v3396
        %v3559 = vunpack.c.l.b16 %v3397
        %v3560 = vunpack.c.l.b16 %v3398
        %v3561 = vunpack.c.l.b16 %v3399
        %v3562 = vunpack.c.l.b16 %v3400
        %v3563 = vunpack.c.l.b16 %v3401
        %v3564 = vunpack.c.l.b16 %v3402
        %v3565 = vunpack.c.l.b16 %v3403
        %v3566 = vunpack.c.l.b16 %v3404
        %v3567 = vunpack.c.l.b16 %v3405
        %v3568 = vunpack.c.l.b16 %v3406
        %v3569 = vunpack.c.l.b16 %v3407
        %v3570 = vunpack.c.l.b16 %v3408
        %v3571 = vunpack.c.l.b16 %v3409
        %v3572 = vunpack.c.l.b16 %v3410
        %v3573 = vunpack.c.l.b16 %v3411
        %v3574 = vunpack.c.l.b16 %v3412
        %v3575 = vunpack.c.l.b16 %v3413
        %v3576 = vunpack.c.l.b16 %v3414
        %v3577 = vunpack.c.l.b16 %v3415
        %v3578 = vunpack.c.l.b16 %v3416
        %v3579 = vunpack.c.l.b16 %v3417
        %v3580 = vunpack.c.l.b16 %v3418
        %v3581 = vpack.c.b16 %v3550, %v3549
        %v3582 = vpack.c.b16 %v3552, %v3551
        %v3583 = vpack.c.b16 %v3554, %v3553
        %v3584 = vpack.c.b16 %v3556, %v3555
        %v3585 = vpack.c.b16 %v3558, %v3557
        %v3586 = vpack.c.b16 %v3560, %v3559
        %v3587 = vpack.c.b16 %v3562, %v3561
        %v3588 = vpack.c.b16 %v3564, %v3563
        %v3589 = vpack.c.b16 %v3566, %v3565
        %v3590 = vpack.c.b16 %v3568, %v3567
        %v3591 = vpack.c.b16 %v3570, %v3569
        %v3592 = vpack.c.b16 %v3572, %v3571
        %v3593 = vpack.c.b16 %v3574, %v3573
        %v3594 = vpack.c.b16 %v3576, %v3575
        %v3595 = vpack.c.b16 %v3578, %v3577
        %v3596 = vpack.c.b16 %v3580, %v3579
        %v3598 = vcombine.high %v3516, %v3516
        %v3600 = vunpack.c.l.s4 1983009808
        %v3601 = vunpack.c.0.s8 %v3600
        %v3602 = vlaneseq
        %v3603 = vshrl.u32 %v3602, 7
        %v3604 = vsub.s32 %v3601, %v3603
        %v3605 = vrot.slane %v3516, %v3604
        %v3607 = vunpack.c.l.s4 1983009808
        %v3608 = vunpack.c.0.s8 %v3607
        %v3609 = vlaneseq
        %v3610 = vshrl.u32 %v3609, 7
        %v3611 = vsub.s32 %v3608, %v3610
        %v3612 = vrot.slane %v3598, %v3611
        %v3613 = vcombine.high %v3605, %v3605
        %v3615 = vsel %vm602, %v3581, 0
        %v3618 = vsel %vm602, %v3582, 0
        %v3621 = vsel %vm602, %v3583, 0
        %v3624 = vsel %vm602, %v3584, 0
        %v3627 = vsel %vm602, %v3585, 0
        %v3630 = vsel %vm602, %v3586, 0
        %v3633 = vsel %vm602, %v3587, 0
        %v3636 = vsel %vm602, %v3588, 0
        %v3639 = vsel %vm602, %v3589, 0
        %v3642 = vsel %vm602, %v3590, 0
        %v3645 = vsel %vm602, %v3591, 0
        %v3648 = vsel %vm602, %v3592, 0
        %v3651 = vsel %vm602, %v3593, 0
        %v3654 = vsel %vm602, %v3594, 0
        %v3657 = vsel %vm602, %v3595, 0
        %v3660 = vsel %vm602, %v3596, 0
        %v3663 = vsel %vm651, %v3605, 0
        %v3666 = vsel %vm651, %v3613, 0
        %v3669 = vsel %vm651, %v3612, 0
        %3671 = vmatprep.subr.bf16.mxu0 %v3666
        %3672 = vmatpush1.bf16.msra.mxu0 %v3663
        %3673 = vmatprep.subr.bf16.mxu0 0
        %3674 = vmatpush1.bf16.msra.mxu0 0
        %3675 = vmatprep.subr.bf16.mxu0 0
        %3676 = vmatpush1.bf16.msra.mxu0 0
        %3677 = vmatprep.subr.bf16.mxu0 0
        %3678 = vmatpush1.bf16.msra.mxu0 0
        %3679 = vmatprep.subr.bf16.mxu0 0
        %3680 = vmatpush1.bf16.msra.mxu0 0
        %3681 = vmatprep.subr.bf16.mxu0 0
        %3682 = vmatpush1.bf16.msra.mxu0 0
        %3683 = vmatprep.subr.bf16.mxu0 0
        %3684 = vmatpush1.bf16.msra.mxu0 0
        %3685 = vmatprep.subr.bf16.mxu0 0
        %3686 = vmatpush1.bf16.msra.mxu0 0
        %3687 = vmatprep.subr.bf16.mxu0 0
        %3688 = vmatpush1.bf16.msra.mxu0 0
        %3689 = vmatprep.subr.bf16.mxu0 0
        %3690 = vmatpush1.bf16.msra.mxu0 0
        %3691 = vmatprep.subr.bf16.mxu0 0
        %3692 = vmatpush1.bf16.msra.mxu0 0
        %3693 = vmatprep.subr.bf16.mxu0 0
        %3694 = vmatpush1.bf16.msra.mxu0 0
        %3695 = vmatprep.subr.bf16.mxu0 0
        %3696 = vmatpush1.bf16.msra.mxu0 0
        %3697 = vmatprep.subr.bf16.mxu0 0
        %3698 = vmatpush1.bf16.msra.mxu0 0
        %3699 = vmatprep.subr.bf16.mxu0 0
        %3700 = vmatpush1.bf16.msra.mxu0 0
        %3701 = vmatprep.subr.bf16.mxu0 0
        %3702 = vmatpush1.bf16.msra.mxu0 0
        %3703 = vmatprep.mubr.bf16.mxu0 0
        %3704 = vmatmul.mubr.bf16.gmra.mrb[0].mxu0 %v3615
        %v3705 = vpop.f32.mrb[0].mxu0
        %v3706 = vadd.f32 0.0, %v3705
        %v3707 = vpop.f32.mrb[0].mxu0
        %v3708 = vadd.f32 0.0, %v3707
        %v3709 = vpop.f32.mrb[0].mxu0
        %v3710 = vadd.f32 0.0, %v3709
        %v3711 = vpop.f32.mrb[0].mxu0
        %v3712 = vadd.f32 0.0, %v3711
        %3713 = vmatprep.mubr.bf16.mxu0 0
        %3714 = vmatmul.mubr.bf16.gmra.mrb[0].mxu0 %v3618
        %v3715 = vpop.f32.mrb[0].mxu0
        %v3716 = vadd.f32 0.0, %v3715
        %v3717 = vpop.f32.mrb[0].mxu0
        %v3718 = vadd.f32 0.0, %v3717
        %v3719 = vpop.f32.mrb[0].mxu0
        %v3720 = vadd.f32 0.0, %v3719
        %v3721 = vpop.f32.mrb[0].mxu0
        %v3722 = vadd.f32 0.0, %v3721
        %3723 = vmatprep.mubr.bf16.mxu0 0
        %3724 = vmatmul.mubr.bf16.gmra.mrb[0].mxu0 %v3621
        %v3725 = vpop.f32.mrb[0].mxu0
        %v3726 = vadd.f32 0.0, %v3725
        %v3727 = vpop.f32.mrb[0].mxu0
        %v3728 = vadd.f32 0.0, %v3727
        %v3729 = vpop.f32.mrb[0].mxu0
        %v3730 = vadd.f32 0.0, %v3729
        %v3731 = vpop.f32.mrb[0].mxu0
        %v3732 = vadd.f32 0.0, %v3731
        %3733 = vmatprep.mubr.bf16.mxu0 0
        %3734 = vmatmul.mubr.bf16.gmra.mrb[0].mxu0 %v3624
        %v3735 = vpop.f32.mrb[0].mxu0
        %v3736 = vadd.f32 0.0, %v3735
        %v3737 = vpop.f32.mrb[0].mxu0
        %v3738 = vadd.f32 0.0, %v3737
        %v3739 = vpop.f32.mrb[0].mxu0
        %v3740 = vadd.f32 0.0, %v3739
        %v3741 = vpop.f32.mrb[0].mxu0
        %v3742 = vadd.f32 0.0, %v3741
        %3743 = vmatprep.mubr.bf16.mxu0 0
        %3744 = vmatmul.mubr.bf16.gmra.mrb[0].mxu0 %v3627
        %v3745 = vpop.f32.mrb[0].mxu0
        %v3746 = vadd.f32 0.0, %v3745
        %v3747 = vpop.f32.mrb[0].mxu0
        %v3748 = vadd.f32 0.0, %v3747
        %v3749 = vpop.f32.mrb[0].mxu0
        %v3750 = vadd.f32 0.0, %v3749
        %v3751 = vpop.f32.mrb[0].mxu0
        %v3752 = vadd.f32 0.0, %v3751
        %3753 = vmatprep.mubr.bf16.mxu0 0
        %3754 = vmatmul.mubr.bf16.gmra.mrb[0].mxu0 %v3630
        %v3755 = vpop.f32.mrb[0].mxu0
        %v3756 = vadd.f32 0.0, %v3755
        %v3757 = vpop.f32.mrb[0].mxu0
        %v3758 = vadd.f32 0.0, %v3757
        %v3759 = vpop.f32.mrb[0].mxu0
        %v3760 = vadd.f32 0.0, %v3759
        %v3761 = vpop.f32.mrb[0].mxu0
        %v3762 = vadd.f32 0.0, %v3761
        %3763 = vmatprep.mubr.bf16.mxu0 0
        %3764 = vmatmul.mubr.bf16.gmra.mrb[0].mxu0 %v3633
        %v3765 = vpop.f32.mrb[0].mxu0
        %v3766 = vadd.f32 0.0, %v3765
        %v3767 = vpop.f32.mrb[0].mxu0
        %v3768 = vadd.f32 0.0, %v3767
        %v3769 = vpop.f32.mrb[0].mxu0
        %v3770 = vadd.f32 0.0, %v3769
        %v3771 = vpop.f32.mrb[0].mxu0
        %v3772 = vadd.f32 0.0, %v3771
        %3773 = vmatprep.mubr.bf16.mxu0 0
        %3774 = vmatmul.mubr.bf16.gmra.mrb[0].mxu0 %v3636
        %v3775 = vpop.f32.mrb[0].mxu0
        %v3776 = vadd.f32 0.0, %v3775
        %v3777 = vpop.f32.mrb[0].mxu0
        %v3778 = vadd.f32 0.0, %v3777
        %v3779 = vpop.f32.mrb[0].mxu0
        %v3780 = vadd.f32 0.0, %v3779
        %v3781 = vpop.f32.mrb[0].mxu0
        %v3782 = vadd.f32 0.0, %v3781
        %3783 = vmatprep.mubr.bf16.mxu0 0
        %3784 = vmatmul.mubr.bf16.gmra.mrb[0].mxu0 %v3639
        %v3785 = vpop.f32.mrb[0].mxu0
        %v3786 = vadd.f32 0.0, %v3785
        %v3787 = vpop.f32.mrb[0].mxu0
        %v3788 = vadd.f32 0.0, %v3787
        %v3789 = vpop.f32.mrb[0].mxu0
        %v3790 = vadd.f32 0.0, %v3789
        %v3791 = vpop.f32.mrb[0].mxu0
        %v3792 = vadd.f32 0.0, %v3791
        %3793 = vmatprep.mubr.bf16.mxu0 0
        %3794 = vmatmul.mubr.bf16.gmra.mrb[0].mxu0 %v3642
        %v3795 = vpop.f32.mrb[0].mxu0
        %v3796 = vadd.f32 0.0, %v3795
        %v3797 = vpop.f32.mrb[0].mxu0
        %v3798 = vadd.f32 0.0, %v3797
        %v3799 = vpop.f32.mrb[0].mxu0
        %v3800 = vadd.f32 0.0, %v3799
        %v3801 = vpop.f32.mrb[0].mxu0
        %v3802 = vadd.f32 0.0, %v3801
        %3803 = vmatprep.mubr.bf16.mxu0 0
        %3804 = vmatmul.mubr.bf16.gmra.mrb[0].mxu0 %v3645
        %v3805 = vpop.f32.mrb[0].mxu0
        %v3806 = vadd.f32 0.0, %v3805
        %v3807 = vpop.f32.mrb[0].mxu0
        %v3808 = vadd.f32 0.0, %v3807
        %v3809 = vpop.f32.mrb[0].mxu0
        %v3810 = vadd.f32 0.0, %v3809
        %v3811 = vpop.f32.mrb[0].mxu0
        %v3812 = vadd.f32 0.0, %v3811
        %3813 = vmatprep.mubr.bf16.mxu0 0
        %3814 = vmatmul.mubr.bf16.gmra.mrb[0].mxu0 %v3648
        %v3815 = vpop.f32.mrb[0].mxu0
        %v3816 = vadd.f32 0.0, %v3815
        %v3817 = vpop.f32.mrb[0].mxu0
        %v3818 = vadd.f32 0.0, %v3817
        %v3819 = vpop.f32.mrb[0].mxu0
        %v3820 = vadd.f32 0.0, %v3819
        %v3821 = vpop.f32.mrb[0].mxu0
        %v3822 = vadd.f32 0.0, %v3821
        %3823 = vmatprep.mubr.bf16.mxu0 0
        %3824 = vmatmul.mubr.bf16.gmra.mrb[0].mxu0 %v3651
        %v3825 = vpop.f32.mrb[0].mxu0
        %v3826 = vadd.f32 0.0, %v3825
        %v3827 = vpop.f32.mrb[0].mxu0
        %v3828 = vadd.f32 0.0, %v3827
        %v3829 = vpop.f32.mrb[0].mxu0
        %v3830 = vadd.f32 0.0, %v3829
        %v3831 = vpop.f32.mrb[0].mxu0
        %v3832 = vadd.f32 0.0, %v3831
        %3833 = vmatprep.mubr.bf16.mxu0 0
        %3834 = vmatmul.mubr.bf16.gmra.mrb[0].mxu0 %v3654
        %v3835 = vpop.f32.mrb[0].mxu0
        %v3836 = vadd.f32 0.0, %v3835
        %v3837 = vpop.f32.mrb[0].mxu0
        %v3838 = vadd.f32 0.0, %v3837
        %v3839 = vpop.f32.mrb[0].mxu0
        %v3840 = vadd.f32 0.0, %v3839
        %v3841 = vpop.f32.mrb[0].mxu0
        %v3842 = vadd.f32 0.0, %v3841
        %3843 = vmatprep.mubr.bf16.mxu0 0
        %3844 = vmatmul.mubr.bf16.gmra.mrb[0].mxu0 %v3657
        %v3845 = vpop.f32.mrb[0].mxu0
        %v3846 = vadd.f32 0.0, %v3845
        %v3847 = vpop.f32.mrb[0].mxu0
        %v3848 = vadd.f32 0.0, %v3847
        %v3849 = vpop.f32.mrb[0].mxu0
        %v3850 = vadd.f32 0.0, %v3849
        %v3851 = vpop.f32.mrb[0].mxu0
        %v3852 = vadd.f32 0.0, %v3851
        %3853 = vmatprep.mubr.bf16.mxu0 0
        %3854 = vmatmul.mubr.bf16.gmra.mrb[0].mxu0 %v3660
        %v3855 = vpop.f32.mrb[0].mxu0
        %v3856 = vadd.f32 0.0, %v3855
        %v3857 = vpop.f32.mrb[0].mxu0
        %v3858 = vadd.f32 0.0, %v3857
        %v3859 = vpop.f32.mrb[0].mxu0
        %v3860 = vadd.f32 0.0, %v3859
        %v3861 = vpop.f32.mrb[0].mxu0
        %v3862 = vadd.f32 0.0, %v3861
        %3863 = vdwg.mxu0
        %3864 = vmatprep.subr.bf16.mxu0 0
        %3865 = vmatpush1.bf16.msra.mxu0 %v3669
        %3866 = vmatprep.subr.bf16.mxu0 0
        %3867 = vmatpush1.bf16.msra.mxu0 0
        %3868 = vmatprep.subr.bf16.mxu0 0
        %3869 = vmatpush1.bf16.msra.mxu0 0
        %3870 = vmatprep.subr.bf16.mxu0 0
        %3871 = vmatpush1.bf16.msra.mxu0 0
        %3872 = vmatprep.subr.bf16.mxu0 0
        %3873 = vmatpush1.bf16.msra.mxu0 0
        %3874 = vmatprep.subr.bf16.mxu0 0
        %3875 = vmatpush1.bf16.msra.mxu0 0
        %3876 = vmatprep.subr.bf16.mxu0 0
        %3877 = vmatpush1.bf16.msra.mxu0 0
        %3878 = vmatprep.subr.bf16.mxu0 0
        %3879 = vmatpush1.bf16.msra.mxu0 0
        %3880 = vmatprep.subr.bf16.mxu0 0
        %3881 = vmatpush1.bf16.msra.mxu0 0
        %3882 = vmatprep.subr.bf16.mxu0 0
        %3883 = vmatpush1.bf16.msra.mxu0 0
        %3884 = vmatprep.subr.bf16.mxu0 0
        %3885 = vmatpush1.bf16.msra.mxu0 0
        %3886 = vmatprep.subr.bf16.mxu0 0
        %3887 = vmatpush1.bf16.msra.mxu0 0
        %3888 = vmatprep.subr.bf16.mxu0 0
        %3889 = vmatpush1.bf16.msra.mxu0 0
        %3890 = vmatprep.subr.bf16.mxu0 0
        %3891 = vmatpush1.bf16.msra.mxu0 0
        %3892 = vmatprep.subr.bf16.mxu0 0
        %3893 = vmatpush1.bf16.msra.mxu0 0
        %3894 = vmatprep.subr.bf16.mxu0 0
        %3895 = vmatpush1.bf16.msra.mxu0 0
        %3896 = vmatprep.mubr.bf16.mxu0 0
        %3897 = vmatmul.mubr.bf16.gmra.mrb[0].mxu0 %v3615
        %v3898 = vpop.f32.mrb[0].mxu0
        %v3899 = vadd.f32 0.0, %v3898
        %v3900 = vpop.f32.mrb[0].mxu0
        %v3901 = vpop.f32.mrb[0].mxu0
        %v3902 = vadd.f32 0.0, %v3901
        %v3903 = vpop.f32.mrb[0].mxu0
        %3904 = vmatprep.mubr.bf16.mxu0 0
        %3905 = vmatmul.mubr.bf16.gmra.mrb[0].mxu0 %v3618
        %v3906 = vpop.f32.mrb[0].mxu0
        %v3907 = vadd.f32 0.0, %v3906
        %v3908 = vpop.f32.mrb[0].mxu0
        %v3909 = vpop.f32.mrb[0].mxu0
        %v3910 = vadd.f32 0.0, %v3909
        %v3911 = vpop.f32.mrb[0].mxu0
        %3912 = vmatprep.mubr.bf16.mxu0 0
        %3913 = vmatmul.mubr.bf16.gmra.mrb[0].mxu0 %v3621
        %v3914 = vpop.f32.mrb[0].mxu0
        %v3915 = vadd.f32 0.0, %v3914
        %v3916 = vpop.f32.mrb[0].mxu0
        %v3917 = vpop.f32.mrb[0].mxu0
        %v3918 = vadd.f32 0.0, %v3917
        %v3919 = vpop.f32.mrb[0].mxu0
        %3920 = vmatprep.mubr.bf16.mxu0 0
        %3921 = vmatmul.mubr.bf16.gmra.mrb[0].mxu0 %v3624
        %v3922 = vpop.f32.mrb[0].mxu0
        %v3923 = vadd.f32 0.0, %v3922
        %v3924 = vpop.f32.mrb[0].mxu0
        %v3925 = vpop.f32.mrb[0].mxu0
        %v3926 = vadd.f32 0.0, %v3925
        %v3927 = vpop.f32.mrb[0].mxu0
        %3928 = vmatprep.mubr.bf16.mxu0 0
        %3929 = vmatmul.mubr.bf16.gmra.mrb[0].mxu0 %v3627
        %v3930 = vpop.f32.mrb[0].mxu0
        %v3931 = vadd.f32 0.0, %v3930
        %v3932 = vpop.f32.mrb[0].mxu0
        %v3933 = vpop.f32.mrb[0].mxu0
        %v3934 = vadd.f32 0.0, %v3933
        %v3935 = vpop.f32.mrb[0].mxu0
        %3936 = vmatprep.mubr.bf16.mxu0 0
        %3937 = vmatmul.mubr.bf16.gmra.mrb[0].mxu0 %v3630
        %v3938 = vpop.f32.mrb[0].mxu0
        %v3939 = vadd.f32 0.0, %v3938
        %v3940 = vpop.f32.mrb[0].mxu0
        %v3941 = vpop.f32.mrb[0].mxu0
        %v3942 = vadd.f32 0.0, %v3941
        %v3943 = vpop.f32.mrb[0].mxu0
        %3944 = vmatprep.mubr.bf16.mxu0 0
        %3945 = vmatmul.mubr.bf16.gmra.mrb[0].mxu0 %v3633
        %v3946 = vpop.f32.mrb[0].mxu0
        %v3947 = vadd.f32 0.0, %v3946
        %v3948 = vpop.f32.mrb[0].mxu0
        %v3949 = vpop.f32.mrb[0].mxu0
        %v3950 = vadd.f32 0.0, %v3949
        %v3951 = vpop.f32.mrb[0].mxu0
        %3952 = vmatprep.mubr.bf16.mxu0 0
        %3953 = vmatmul.mubr.bf16.gmra.mrb[0].mxu0 %v3636
        %v3954 = vpop.f32.mrb[0].mxu0
        %v3955 = vadd.f32 0.0, %v3954
        %v3956 = vpop.f32.mrb[0].mxu0
        %v3957 = vpop.f32.mrb[0].mxu0
        %v3958 = vadd.f32 0.0, %v3957
        %v3959 = vpop.f32.mrb[0].mxu0
        %3960 = vmatprep.mubr.bf16.mxu0 0
        %3961 = vmatmul.mubr.bf16.gmra.mrb[0].mxu0 %v3639
        %v3962 = vpop.f32.mrb[0].mxu0
        %v3963 = vadd.f32 0.0, %v3962
        %v3964 = vpop.f32.mrb[0].mxu0
        %v3965 = vpop.f32.mrb[0].mxu0
        %v3966 = vadd.f32 0.0, %v3965
        %v3967 = vpop.f32.mrb[0].mxu0
        %3968 = vmatprep.mubr.bf16.mxu0 0
        %3969 = vmatmul.mubr.bf16.gmra.mrb[0].mxu0 %v3642
        %v3970 = vpop.f32.mrb[0].mxu0
        %v3971 = vadd.f32 0.0, %v3970
        %v3972 = vpop.f32.mrb[0].mxu0
        %v3973 = vpop.f32.mrb[0].mxu0
        %v3974 = vadd.f32 0.0, %v3973
        %v3975 = vpop.f32.mrb[0].mxu0
        %3976 = vmatprep.mubr.bf16.mxu0 0
        %3977 = vmatmul.mubr.bf16.gmra.mrb[0].mxu0 %v3645
        %v3978 = vpop.f32.mrb[0].mxu0
        %v3979 = vadd.f32 0.0, %v3978
        %v3980 = vpop.f32.mrb[0].mxu0
        %v3981 = vpop.f32.mrb[0].mxu0
        %v3982 = vadd.f32 0.0, %v3981
        %v3983 = vpop.f32.mrb[0].mxu0
        %3984 = vmatprep.mubr.bf16.mxu0 0
        %3985 = vmatmul.mubr.bf16.gmra.mrb[0].mxu0 %v3648
        %v3986 = vpop.f32.mrb[0].mxu0
        %v3987 = vadd.f32 0.0, %v3986
        %v3988 = vpop.f32.mrb[0].mxu0
        %v3989 = vpop.f32.mrb[0].mxu0
        %v3990 = vadd.f32 0.0, %v3989
        %v3991 = vpop.f32.mrb[0].mxu0
        %3992 = vmatprep.mubr.bf16.mxu0 0
        %3993 = vmatmul.mubr.bf16.gmra.mrb[0].mxu0 %v3651
        %v3994 = vpop.f32.mrb[0].mxu0
        %v3995 = vadd.f32 0.0, %v3994
        %v3996 = vpop.f32.mrb[0].mxu0
        %v3997 = vpop.f32.mrb[0].mxu0
        %v3998 = vadd.f32 0.0, %v3997
        %v3999 = vpop.f32.mrb[0].mxu0
        %4000 = vmatprep.mubr.bf16.mxu0 0
        %4001 = vmatmul.mubr.bf16.gmra.mrb[0].mxu0 %v3654
        %v4002 = vpop.f32.mrb[0].mxu0
        %v4003 = vadd.f32 0.0, %v4002
        %v4004 = vpop.f32.mrb[0].mxu0
        %v4005 = vpop.f32.mrb[0].mxu0
        %v4006 = vadd.f32 0.0, %v4005
        %v4007 = vpop.f32.mrb[0].mxu0
        %4008 = vmatprep.mubr.bf16.mxu0 0
        %4009 = vmatmul.mubr.bf16.gmra.mrb[0].mxu0 %v3657
        %v4010 = vpop.f32.mrb[0].mxu0
        %v4011 = vadd.f32 0.0, %v4010
        %v4012 = vpop.f32.mrb[0].mxu0
        %v4013 = vpop.f32.mrb[0].mxu0
        %v4014 = vadd.f32 0.0, %v4013
        %v4015 = vpop.f32.mrb[0].mxu0
        %4016 = vmatprep.mubr.bf16.mxu0 0
        %4017 = vmatmul.mubr.bf16.gmra.mrb[0].mxu0 %v3660
        %v4018 = vpop.f32.mrb[0].mxu0
        %v4019 = vadd.f32 0.0, %v4018
        %v4020 = vpop.f32.mrb[0].mxu0
        %v4021 = vpop.f32.mrb[0].mxu0
        %v4022 = vadd.f32 0.0, %v4021
        %v4023 = vpop.f32.mrb[0].mxu0
        %4024 = vdwg.mxu0
        %v4025 = vadd.f32 %v3419, %v3706
        %v4026 = vadd.f32 %v3420, %v3708
        %v4027 = vadd.f32 %v3421, %v3899
        %v4028 = vadd.f32 %v3422, %v3710
        %v4029 = vadd.f32 %v3423, %v3712
        %v4030 = vadd.f32 %v3424, %v3902
        %v4031 = vadd.f32 %v3425, %v3716
        %v4032 = vadd.f32 %v3426, %v3718
        %v4033 = vadd.f32 %v3427, %v3907
        %v4034 = vadd.f32 %v3428, %v3720
        %v4035 = vadd.f32 %v3429, %v3722
        %v4036 = vadd.f32 %v3430, %v3910
        %v4037 = vadd.f32 %v3431, %v3726
        %v4038 = vadd.f32 %v3432, %v3728
        %v4039 = vadd.f32 %v3433, %v3915
        %v4040 = vadd.f32 %v3434, %v3730
        %v4041 = vadd.f32 %v3435, %v3732
        %v4042 = vadd.f32 %v3436, %v3918
        %v4043 = vadd.f32 %v3437, %v3736
        %v4044 = vadd.f32 %v3438, %v3738
        %v4045 = vadd.f32 %v3439, %v3923
        %v4046 = vadd.f32 %v3440, %v3740
        %v4047 = vadd.f32 %v3441, %v3742
        %v4048 = vadd.f32 %v3442, %v3926
        %v4049 = vadd.f32 %v3443, %v3746
        %v4050 = vadd.f32 %v3444, %v3748
        %v4051 = vadd.f32 %v3445, %v3931
        %v4052 = vadd.f32 %v3446, %v3750
        %v4053 = vadd.f32 %v3447, %v3752
        %v4054 = vadd.f32 %v3448, %v3934
        %v4055 = vadd.f32 %v3449, %v3756
        %v4056 = vadd.f32 %v3450, %v3758
        %v4057 = vadd.f32 %v3451, %v3939
        %v4058 = vadd.f32 %v3452, %v3760
        %v4059 = vadd.f32 %v3453, %v3762
        %v4060 = vadd.f32 %v3454, %v3942
        %v4061 = vadd.f32 %v3455, %v3766
        %v4062 = vadd.f32 %v3456, %v3768
        %v4063 = vadd.f32 %v3457, %v3947
        %v4064 = vadd.f32 %v3458, %v3770
        %v4065 = vadd.f32 %v3459, %v3772
        %v4066 = vadd.f32 %v3460, %v3950
        %v4067 = vadd.f32 %v3461, %v3776
        %v4068 = vadd.f32 %v3462, %v3778
        %v4069 = vadd.f32 %v3463, %v3955
        %v4070 = vadd.f32 %v3464, %v3780
        %v4071 = vadd.f32 %v3465, %v3782
        %v4072 = vadd.f32 %v3466, %v3958
        %v4073 = vadd.f32 %v3467, %v3786
        %v4074 = vadd.f32 %v3468, %v3788
        %v4075 = vadd.f32 %v3469, %v3963
        %v4076 = vadd.f32 %v3470, %v3790
        %v4077 = vadd.f32 %v3471, %v3792
        %v4078 = vadd.f32 %v3472, %v3966
        %v4079 = vadd.f32 %v3473, %v3796
        %v4080 = vadd.f32 %v3474, %v3798
        %v4081 = vadd.f32 %v3475, %v3971
        %v4082 = vadd.f32 %v3476, %v3800
        %v4083 = vadd.f32 %v3477, %v3802
        %v4084 = vadd.f32 %v3478, %v3974
        %v4085 = vadd.f32 %v3479, %v3806
        %v4086 = vadd.f32 %v3480, %v3808
        %v4087 = vadd.f32 %v3481, %v3979
        %v4088 = vadd.f32 %v3482, %v3810
        %v4089 = vadd.f32 %v3483, %v3812
        %v4090 = vadd.f32 %v3484, %v3982
        %v4091 = vadd.f32 %v3485, %v3816
        %v4092 = vadd.f32 %v3486, %v3818
        %v4093 = vadd.f32 %v3487, %v3987
        %v4094 = vadd.f32 %v3488, %v3820
        %v4095 = vadd.f32 %v3489, %v3822
        %v4096 = vadd.f32 %v3490, %v3990
        %v4097 = vadd.f32 %v3491, %v3826
        %v4098 = vadd.f32 %v3492, %v3828
        %v4099 = vadd.f32 %v3493, %v3995
        %v4100 = vadd.f32 %v3494, %v3830
        %v4101 = vadd.f32 %v3495, %v3832
        %v4102 = vadd.f32 %v3496, %v3998
        %v4103 = vadd.f32 %v3497, %v3836
        %v4104 = vadd.f32 %v3498, %v3838
        %v4105 = vadd.f32 %v3499, %v4003
        %v4106 = vadd.f32 %v3500, %v3840
        %v4107 = vadd.f32 %v3501, %v3842
        %v4108 = vadd.f32 %v3502, %v4006
        %v4109 = vadd.f32 %v3503, %v3846
        %v4110 = vadd.f32 %v3504, %v3848
        %v4111 = vadd.f32 %v3505, %v4011
        %v4112 = vadd.f32 %v3506, %v3850
        %v4113 = vadd.f32 %v3507, %v3852
        %v4114 = vadd.f32 %v3508, %v4014
        %v4115 = vadd.f32 %v3509, %v3856
        %v4116 = vadd.f32 %v3510, %v3858
        %v4117 = vadd.f32 %v3511, %v4019
        %v4118 = vadd.f32 %v3512, %v3860
        %v4119 = vadd.f32 %v3513, %v3862
        %v4120 = vadd.f32 %v3514, %v4022
        %4121 = vst [vmem:[#allocation2] sm:$0xff] %v4025
        %4122 = vst [vmem:[#allocation2 + $0x8] sm:$0xff] %v4026
        %4123 = vst.msk [vmem:[#allocation2 + $0x10] sm:$0xff] %vm1113, %v4027
        %4124 = vst [vmem:[#allocation2 + $0x18] sm:$0xff] %v4028
        %4125 = vst [vmem:[#allocation2 + $0x20] sm:$0xff] %v4029
        %4126 = vst.msk [vmem:[#allocation2 + $0x28] sm:$0xff] %vm1113, %v4030
        %4127 = vst [vmem:[#allocation2 + $0x30] sm:$0xff] %v4031
        %4128 = vst [vmem:[#allocation2 + $0x38] sm:$0xff] %v4032
        %4129 = vst.msk [vmem:[#allocation2 + $0x40] sm:$0xff] %vm1113, %v4033
        %4130 = vst [vmem:[#allocation2 + $0x48] sm:$0xff] %v4034
        %4131 = vst [vmem:[#allocation2 + $0x50] sm:$0xff] %v4035
        %4132 = vst.msk [vmem:[#allocation2 + $0x58] sm:$0xff] %vm1113, %v4036
        %4133 = vst [vmem:[#allocation2 + $0x60] sm:$0xff] %v4037
        %4134 = vst [vmem:[#allocation2 + $0x68] sm:$0xff] %v4038
        %4135 = vst.msk [vmem:[#allocation2 + $0x70] sm:$0xff] %vm1113, %v4039
        %4136 = vst [vmem:[#allocation2 + $0x78] sm:$0xff] %v4040
        %4137 = vst [vmem:[#allocation2 + $0x80] sm:$0xff] %v4041
        %4138 = vst.msk [vmem:[#allocation2 + $0x88] sm:$0xff] %vm1113, %v4042
        %4139 = vst [vmem:[#allocation2 + $0x90] sm:$0xff] %v4043
        %4140 = vst [vmem:[#allocation2 + $0x98] sm:$0xff] %v4044
        %4141 = vst.msk [vmem:[#allocation2 + $0xa0] sm:$0xff] %vm1113, %v4045
        %4142 = vst [vmem:[#allocation2 + $0xa8] sm:$0xff] %v4046
        %4143 = vst [vmem:[#allocation2 + $0xb0] sm:$0xff] %v4047
        %4144 = vst.msk [vmem:[#allocation2 + $0xb8] sm:$0xff] %vm1113, %v4048
        %4145 = vst [vmem:[#allocation2 + $0xc0] sm:$0xff] %v4049
        %4146 = vst [vmem:[#allocation2 + $0xc8] sm:$0xff] %v4050
        %4147 = vst.msk [vmem:[#allocation2 + $0xd0] sm:$0xff] %vm1113, %v4051
        %4148 = vst [vmem:[#allocation2 + $0xd8] sm:$0xff] %v4052
        %4149 = vst [vmem:[#allocation2 + $0xe0] sm:$0xff] %v4053
        %4150 = vst.msk [vmem:[#allocation2 + $0xe8] sm:$0xff] %vm1113, %v4054
        %4151 = vst [vmem:[#allocation2 + $0xf0] sm:$0xff] %v4055
        %4152 = vst [vmem:[#allocation2 + $0xf8] sm:$0xff] %v4056
        %4153 = vst.msk [vmem:[#allocation2 + $0x100] sm:$0xff] %vm1113, %v4057
        %4154 = vst [vmem:[#allocation2 + $0x108] sm:$0xff] %v4058
        %4155 = vst [vmem:[#allocation2 + $0x110] sm:$0xff] %v4059
        %4156 = vst.msk [vmem:[#allocation2 + $0x118] sm:$0xff] %vm1113, %v4060
        %4157 = vst [vmem:[#allocation2 + $0x120] sm:$0xff] %v4061
        %4158 = vst [vmem:[#allocation2 + $0x128] sm:$0xff] %v4062
        %4159 = vst.msk [vmem:[#allocation2 + $0x130] sm:$0xff] %vm1113, %v4063
        %4160 = vst [vmem:[#allocation2 + $0x138] sm:$0xff] %v4064
        %4161 = vst [vmem:[#allocation2 + $0x140] sm:$0xff] %v4065
        %4162 = vst.msk [vmem:[#allocation2 + $0x148] sm:$0xff] %vm1113, %v4066
        %4163 = vst [vmem:[#allocation2 + $0x150] sm:$0xff] %v4067
        %4164 = vst [vmem:[#allocation2 + $0x158] sm:$0xff] %v4068
        %4165 = vst.msk [vmem:[#allocation2 + $0x160] sm:$0xff] %vm1113, %v4069
        %4166 = vst [vmem:[#allocation2 + $0x168] sm:$0xff] %v4070
        %4167 = vst [vmem:[#allocation2 + $0x170] sm:$0xff] %v4071
        %4168 = vst.msk [vmem:[#allocation2 + $0x178] sm:$0xff] %vm1113, %v4072
        %4169 = vst [vmem:[#allocation2 + $0x180] sm:$0xff] %v4073
        %4170 = vst [vmem:[#allocation2 + $0x188] sm:$0xff] %v4074
        %4171 = vst.msk [vmem:[#allocation2 + $0x190] sm:$0xff] %vm1113, %v4075
        %4172 = vst [vmem:[#allocation2 + $0x198] sm:$0xff] %v4076
        %4173 = vst [vmem:[#allocation2 + $0x1a0] sm:$0xff] %v4077
        %4174 = vst.msk [vmem:[#allocation2 + $0x1a8] sm:$0xff] %vm1113, %v4078
        %4175 = vst [vmem:[#allocation2 + $0x1b0] sm:$0xff] %v4079
        %4176 = vst [vmem:[#allocation2 + $0x1b8] sm:$0xff] %v4080
        %4177 = vst.msk [vmem:[#allocation2 + $0x1c0] sm:$0xff] %vm1113, %v4081
        %4178 = vst [vmem:[#allocation2 + $0x1c8] sm:$0xff] %v4082
        %4179 = vst [vmem:[#allocation2 + $0x1d0] sm:$0xff] %v4083
        %4180 = vst.msk [vmem:[#allocation2 + $0x1d8] sm:$0xff] %vm1113, %v4084
        %4181 = vst [vmem:[#allocation2 + $0x1e0] sm:$0xff] %v4085
        %4182 = vst [vmem:[#allocation2 + $0x1e8] sm:$0xff] %v4086
        %4183 = vst.msk [vmem:[#allocation2 + $0x1f0] sm:$0xff] %vm1113, %v4087
        %4184 = vst [vmem:[#allocation2 + $0x1f8] sm:$0xff] %v4088
        %4185 = vst [vmem:[#allocation2 + $0x200] sm:$0xff] %v4089
        %4186 = vst.msk [vmem:[#allocation2 + $0x208] sm:$0xff] %vm1113, %v4090
        %4187 = vst [vmem:[#allocation2 + $0x210] sm:$0xff] %v4091
        %4188 = vst [vmem:[#allocation2 + $0x218] sm:$0xff] %v4092
        %4189 = vst.msk [vmem:[#allocation2 + $0x220] sm:$0xff] %vm1113, %v4093
        %4190 = vst [vmem:[#allocation2 + $0x228] sm:$0xff] %v4094
        %4191 = vst [vmem:[#allocation2 + $0x230] sm:$0xff] %v4095
        %4192 = vst.msk [vmem:[#allocation2 + $0x238] sm:$0xff] %vm1113, %v4096
        %4193 = vst [vmem:[#allocation2 + $0x240] sm:$0xff] %v4097
        %4194 = vst [vmem:[#allocation2 + $0x248] sm:$0xff] %v4098
        %4195 = vst.msk [vmem:[#allocation2 + $0x250] sm:$0xff] %vm1113, %v4099
        %4196 = vst [vmem:[#allocation2 + $0x258] sm:$0xff] %v4100
        %4197 = vst [vmem:[#allocation2 + $0x260] sm:$0xff] %v4101
        %4198 = vst.msk [vmem:[#allocation2 + $0x268] sm:$0xff] %vm1113, %v4102
        %4199 = vst [vmem:[#allocation2 + $0x270] sm:$0xff] %v4103
        %4200 = vst [vmem:[#allocation2 + $0x278] sm:$0xff] %v4104
        %4201 = vst.msk [vmem:[#allocation2 + $0x280] sm:$0xff] %vm1113, %v4105
        %4202 = vst [vmem:[#allocation2 + $0x288] sm:$0xff] %v4106
        %4203 = vst [vmem:[#allocation2 + $0x290] sm:$0xff] %v4107
        %4204 = vst.msk [vmem:[#allocation2 + $0x298] sm:$0xff] %vm1113, %v4108
        %4205 = vst [vmem:[#allocation2 + $0x2a0] sm:$0xff] %v4109
        %4206 = vst [vmem:[#allocation2 + $0x2a8] sm:$0xff] %v4110
        %4207 = vst.msk [vmem:[#allocation2 + $0x2b0] sm:$0xff] %vm1113, %v4111
        %4208 = vst [vmem:[#allocation2 + $0x2b8] sm:$0xff] %v4112
        %4209 = vst [vmem:[#allocation2 + $0x2c0] sm:$0xff] %v4113
        %4210 = vst.msk [vmem:[#allocation2 + $0x2c8] sm:$0xff] %vm1113, %v4114
        %4211 = vst [vmem:[#allocation2 + $0x2d0] sm:$0xff] %v4115
        %4212 = vst [vmem:[#allocation2 + $0x2d8] sm:$0xff] %v4116
        %4213 = vst.msk [vmem:[#allocation2 + $0x2e0] sm:$0xff] %vm1113, %v4117
        %4214 = vst [vmem:[#allocation2 + $0x2e8] sm:$0xff] %v4118
        %4215 = vst [vmem:[#allocation2 + $0x2f0] sm:$0xff] %v4119
        %4216 = vst.msk [vmem:[#allocation2 + $0x2f8] sm:$0xff] %vm1113, %v4120
        %v4217 = vld [vmem:[%s3386] sm:$0xf]
        %v4218 = vld [vmem:[%s3386 + $0x4] sm:$0xf]
        %v4219 = vld [vmem:[%s3386 + $0x8] sm:$0x1]
        %v4220 = vld [vmem:[%s3386 + $0xc] sm:$0xf]
        %v4221 = vld [vmem:[%s3386 + $0x10] sm:$0xf]
        %v4222 = vld [vmem:[%s3386 + $0x14] sm:$0x1]
        %v4223 = vld [vmem:[%s3386 + $0x18] sm:$0xf]
        %v4224 = vld [vmem:[%s3386 + $0x1c] sm:$0xf]
        %v4225 = vld [vmem:[%s3386 + $0x20] sm:$0x1]
        %v4226 = vld [vmem:[%s3386 + $0x24] sm:$0xf]
        %v4227 = vld [vmem:[%s3386 + $0x28] sm:$0xf]
        %v4228 = vld [vmem:[%s3386 + $0x2c] sm:$0x1]
        %v4229 = vld [vmem:[%s3386 + $0x30] sm:$0xf]
        %v4230 = vld [vmem:[%s3386 + $0x34] sm:$0xf]
        %v4231 = vld [vmem:[%s3386 + $0x38] sm:$0x1]
        %v4232 = vld [vmem:[%s3386 + $0x3c] sm:$0xf]
        %v4233 = vld [vmem:[%s3386 + $0x40] sm:$0xf]
        %v4234 = vld [vmem:[%s3386 + $0x44] sm:$0x1]
        %v4235 = vld [vmem:[%s3386 + $0x48] sm:$0xf]
        %v4236 = vld [vmem:[%s3386 + $0x4c] sm:$0xf]
        %v4237 = vld [vmem:[%s3386 + $0x50] sm:$0x1]
        %v4238 = vld [vmem:[%s3386 + $0x54] sm:$0xf]
        %v4239 = vld [vmem:[%s3386 + $0x58] sm:$0xf]
        %v4240 = vld [vmem:[%s3386 + $0x5c] sm:$0x1]
        %v4241 = vld [vmem:[%s3386 + $0x60] sm:$0xf]
        %v4242 = vld [vmem:[%s3386 + $0x64] sm:$0xf]
        %v4243 = vld [vmem:[%s3386 + $0x68] sm:$0x1]
        %v4244 = vld [vmem:[%s3386 + $0x6c] sm:$0xf]
        %v4245 = vld [vmem:[%s3386 + $0x70] sm:$0xf]
        %v4246 = vld [vmem:[%s3386 + $0x74] sm:$0x1]
        %v4247 = vld [vmem:[%s3386 + $0x78] sm:$0xf]
        %v4248 = vld [vmem:[%s3386 + $0x7c] sm:$0xf]
        %v4249 = vld [vmem:[%s3386 + $0x80] sm:$0x1]
        %v4250 = vld [vmem:[%s3386 + $0x84] sm:$0xf]
        %v4251 = vld [vmem:[%s3386 + $0x88] sm:$0xf]
        %v4252 = vld [vmem:[%s3386 + $0x8c] sm:$0x1]
        %v4253 = vld [vmem:[%s3386 + $0x90] sm:$0xf]
        %v4254 = vld [vmem:[%s3386 + $0x94] sm:$0xf]
        %v4255 = vld [vmem:[%s3386 + $0x98] sm:$0x1]
        %v4256 = vld [vmem:[%s3386 + $0x9c] sm:$0xf]
        %v4257 = vld [vmem:[%s3386 + $0xa0] sm:$0xf]
        %v4258 = vld [vmem:[%s3386 + $0xa4] sm:$0x1]
        %v4259 = vld [vmem:[%s3386 + $0xa8] sm:$0xf]
        %v4260 = vld [vmem:[%s3386 + $0xac] sm:$0xf]
        %v4261 = vld [vmem:[%s3386 + $0xb0] sm:$0x1]
        %v4262 = vld [vmem:[%s3386 + $0xb4] sm:$0xf]
        %v4263 = vld [vmem:[%s3386 + $0xb8] sm:$0xf]
        %v4264 = vld [vmem:[%s3386 + $0xbc] sm:$0x1]
        %v4266 = vshrl.u32 %v4217, 16
        %v4268 = vrot.slane %v4266, 4
        %v4269 = vshll.u32 %v4217, 16
        %v4271 = vrot.slane %v4269, 5
        %v4272 = vor.u32 %v4268, %v4271
        %v4273 = vrot.slane %v4272, 4
        %v4275 = vshll.u32 %v4218, 16
        %v4277 = vrot.slane %v4275, 5
        %v4278 = vsel %vm1258, %v4273, %v4277
        %v4279 = vshrl.u32 %v4218, 16
        %v4281 = vrot.slane %v4279, 4
        %v4282 = vor.u32 %v4281, %v4277
        %v4283 = vrot.slane %v4282, 4
        %v4285 = vshll.u32 %v4219, 16
        %v4287 = vrot.slane %v4285, 5
        %v4288 = vsel %vm1258, %v4283, %v4287
        %v4290 = vshrl.u32 %v4220, 16
        %v4292 = vrot.slane %v4290, 4
        %v4293 = vshll.u32 %v4220, 16
        %v4295 = vrot.slane %v4293, 5
        %v4296 = vor.u32 %v4292, %v4295
        %v4297 = vrot.slane %v4296, 4
        %v4299 = vshll.u32 %v4221, 16
        %v4301 = vrot.slane %v4299, 5
        %v4302 = vsel %vm1258, %v4297, %v4301
        %v4303 = vshrl.u32 %v4221, 16
        %v4305 = vrot.slane %v4303, 4
        %v4306 = vor.u32 %v4305, %v4301
        %v4307 = vrot.slane %v4306, 4
        %v4309 = vshll.u32 %v4222, 16
        %v4311 = vrot.slane %v4309, 5
        %v4312 = vsel %vm1258, %v4307, %v4311
        %v4314 = vshrl.u32 %v4223, 16
        %v4316 = vrot.slane %v4314, 4
        %v4317 = vshll.u32 %v4223, 16
        %v4319 = vrot.slane %v4317, 5
        %v4320 = vor.u32 %v4316, %v4319
        %v4321 = vrot.slane %v4320, 4
        %v4323 = vshll.u32 %v4224, 16
        %v4325 = vrot.slane %v4323, 5
        %v4326 = vsel %vm1258, %v4321, %v4325
        %v4327 = vshrl.u32 %v4224, 16
        %v4329 = vrot.slane %v4327, 4
        %v4330 = vor.u32 %v4329, %v4325
        %v4331 = vrot.slane %v4330, 4
        %v4333 = vshll.u32 %v4225, 16
        %v4335 = vrot.slane %v4333, 5
        %v4336 = vsel %vm1258, %v4331, %v4335
        %v4338 = vshrl.u32 %v4226, 16
        %v4340 = vrot.slane %v4338, 4
        %v4341 = vshll.u32 %v4226, 16
        %v4343 = vrot.slane %v4341, 5
        %v4344 = vor.u32 %v4340, %v4343
        %v4345 = vrot.slane %v4344, 4
        %v4347 = vshll.u32 %v4227, 16
        %v4349 = vrot.slane %v4347, 5
        %v4350 = vsel %vm1258, %v4345, %v4349
        %v4351 = vshrl.u32 %v4227, 16
        %v4353 = vrot.slane %v4351, 4
        %v4354 = vor.u32 %v4353, %v4349
        %v4355 = vrot.slane %v4354, 4
        %v4357 = vshll.u32 %v4228, 16
        %v4359 = vrot.slane %v4357, 5
        %v4360 = vsel %vm1258, %v4355, %v4359
        %v4362 = vshrl.u32 %v4229, 16
        %v4364 = vrot.slane %v4362, 4
        %v4365 = vshll.u32 %v4229, 16
        %v4367 = vrot.slane %v4365, 5
        %v4368 = vor.u32 %v4364, %v4367
        %v4369 = vrot.slane %v4368, 4
        %v4371 = vshll.u32 %v4230, 16
        %v4373 = vrot.slane %v4371, 5
        %v4374 = vsel %vm1258, %v4369, %v4373
        %v4375 = vshrl.u32 %v4230, 16
        %v4377 = vrot.slane %v4375, 4
        %v4378 = vor.u32 %v4377, %v4373
        %v4379 = vrot.slane %v4378, 4
        %v4381 = vshll.u32 %v4231, 16
        %v4383 = vrot.slane %v4381, 5
        %v4384 = vsel %vm1258, %v4379, %v4383
        %v4386 = vshrl.u32 %v4232, 16
        %v4388 = vrot.slane %v4386, 4
        %v4389 = vshll.u32 %v4232, 16
        %v4391 = vrot.slane %v4389, 5
        %v4392 = vor.u32 %v4388, %v4391
        %v4393 = vrot.slane %v4392, 4
        %v4395 = vshll.u32 %v4233, 16
        %v4397 = vrot.slane %v4395, 5
        %v4398 = vsel %vm1258, %v4393, %v4397
        %v4399 = vshrl.u32 %v4233, 16
        %v4401 = vrot.slane %v4399, 4
        %v4402 = vor.u32 %v4401, %v4397
        %v4403 = vrot.slane %v4402, 4
        %v4405 = vshll.u32 %v4234, 16
        %v4407 = vrot.slane %v4405, 5
        %v4408 = vsel %vm1258, %v4403, %v4407
        %v4410 = vshrl.u32 %v4235, 16
        %v4412 = vrot.slane %v4410, 4
        %v4413 = vshll.u32 %v4235, 16
        %v4415 = vrot.slane %v4413, 5
        %v4416 = vor.u32 %v4412, %v4415
        %v4417 = vrot.slane %v4416, 4
        %v4419 = vshll.u32 %v4236, 16
        %v4421 = vrot.slane %v4419, 5
        %v4422 = vsel %vm1258, %v4417, %v4421
        %v4423 = vshrl.u32 %v4236, 16
        %v4425 = vrot.slane %v4423, 4
        %v4426 = vor.u32 %v4425, %v4421
        %v4427 = vrot.slane %v4426, 4
        %v4429 = vshll.u32 %v4237, 16
        %v4431 = vrot.slane %v4429, 5
        %v4432 = vsel %vm1258, %v4427, %v4431
        %v4434 = vshrl.u32 %v4238, 16
        %v4436 = vrot.slane %v4434, 4
        %v4437 = vshll.u32 %v4238, 16
        %v4439 = vrot.slane %v4437, 5
        %v4440 = vor.u32 %v4436, %v4439
        %v4441 = vrot.slane %v4440, 4
        %v4443 = vshll.u32 %v4239, 16
        %v4445 = vrot.slane %v4443, 5
        %v4446 = vsel %vm1258, %v4441, %v4445
        %v4447 = vshrl.u32 %v4239, 16
        %v4449 = vrot.slane %v4447, 4
        %v4450 = vor.u32 %v4449, %v4445
        %v4451 = vrot.slane %v4450, 4
        %v4453 = vshll.u32 %v4240, 16
        %v4455 = vrot.slane %v4453, 5
        %v4456 = vsel %vm1258, %v4451, %v4455
        %v4458 = vshrl.u32 %v4241, 16
        %v4460 = vrot.slane %v4458, 4
        %v4461 = vshll.u32 %v4241, 16
        %v4463 = vrot.slane %v4461, 5
        %v4464 = vor.u32 %v4460, %v4463
        %v4465 = vrot.slane %v4464, 4
        %v4467 = vshll.u32 %v4242, 16
        %v4469 = vrot.slane %v4467, 5
        %v4470 = vsel %vm1258, %v4465, %v4469
        %v4471 = vshrl.u32 %v4242, 16
        %v4473 = vrot.slane %v4471, 4
        %v4474 = vor.u32 %v4473, %v4469
        %v4475 = vrot.slane %v4474, 4
        %v4477 = vshll.u32 %v4243, 16
        %v4479 = vrot.slane %v4477, 5
        %v4480 = vsel %vm1258, %v4475, %v4479
        %v4482 = vshrl.u32 %v4244, 16
        %v4484 = vrot.slane %v4482, 4
        %v4485 = vshll.u32 %v4244, 16
        %v4487 = vrot.slane %v4485, 5
        %v4488 = vor.u32 %v4484, %v4487
        %v4489 = vrot.slane %v4488, 4
        %v4491 = vshll.u32 %v4245, 16
        %v4493 = vrot.slane %v4491, 5
        %v4494 = vsel %vm1258, %v4489, %v4493
        %v4495 = vshrl.u32 %v4245, 16
        %v4497 = vrot.slane %v4495, 4
        %v4498 = vor.u32 %v4497, %v4493
        %v4499 = vrot.slane %v4498, 4
        %v4501 = vshll.u32 %v4246, 16
        %v4503 = vrot.slane %v4501, 5
        %v4504 = vsel %vm1258, %v4499, %v4503
        %v4506 = vshrl.u32 %v4247, 16
        %v4508 = vrot.slane %v4506, 4
        %v4509 = vshll.u32 %v4247, 16
        %v4511 = vrot.slane %v4509, 5
        %v4512 = vor.u32 %v4508, %v4511
        %v4513 = vrot.slane %v4512, 4
        %v4515 = vshll.u32 %v4248, 16
        %v4517 = vrot.slane %v4515, 5
        %v4518 = vsel %vm1258, %v4513, %v4517
        %v4519 = vshrl.u32 %v4248, 16
        %v4521 = vrot.slane %v4519, 4
        %v4522 = vor.u32 %v4521, %v4517
        %v4523 = vrot.slane %v4522, 4
        %v4525 = vshll.u32 %v4249, 16
        %v4527 = vrot.slane %v4525, 5
        %v4528 = vsel %vm1258, %v4523, %v4527
        %v4530 = vshrl.u32 %v4250, 16
        %v4532 = vrot.slane %v4530, 4
        %v4533 = vshll.u32 %v4250, 16
        %v4535 = vrot.slane %v4533, 5
        %v4536 = vor.u32 %v4532, %v4535
        %v4537 = vrot.slane %v4536, 4
        %v4539 = vshll.u32 %v4251, 16
        %v4541 = vrot.slane %v4539, 5
        %v4542 = vsel %vm1258, %v4537, %v4541
        %v4543 = vshrl.u32 %v4251, 16
        %v4545 = vrot.slane %v4543, 4
        %v4546 = vor.u32 %v4545, %v4541
        %v4547 = vrot.slane %v4546, 4
        %v4549 = vshll.u32 %v4252, 16
        %v4551 = vrot.slane %v4549, 5
        %v4552 = vsel %vm1258, %v4547, %v4551
        %v4554 = vshrl.u32 %v4253, 16
        %v4556 = vrot.slane %v4554, 4
        %v4557 = vshll.u32 %v4253, 16
        %v4559 = vrot.slane %v4557, 5
        %v4560 = vor.u32 %v4556, %v4559
        %v4561 = vrot.slane %v4560, 4
        %v4563 = vshll.u32 %v4254, 16
        %v4565 = vrot.slane %v4563, 5
        %v4566 = vsel %vm1258, %v4561, %v4565
        %v4567 = vshrl.u32 %v4254, 16
        %v4569 = vrot.slane %v4567, 4
        %v4570 = vor.u32 %v4569, %v4565
        %v4571 = vrot.slane %v4570, 4
        %v4573 = vshll.u32 %v4255, 16
        %v4575 = vrot.slane %v4573, 5
        %v4576 = vsel %vm1258, %v4571, %v4575
        %v4578 = vshrl.u32 %v4256, 16
        %v4580 = vrot.slane %v4578, 4
        %v4581 = vshll.u32 %v4256, 16
        %v4583 = vrot.slane %v4581, 5
        %v4584 = vor.u32 %v4580, %v4583
        %v4585 = vrot.slane %v4584, 4
        %v4587 = vshll.u32 %v4257, 16
        %v4589 = vrot.slane %v4587, 5
        %v4590 = vsel %vm1258, %v4585, %v4589
        %v4591 = vshrl.u32 %v4257, 16
        %v4593 = vrot.slane %v4591, 4
        %v4594 = vor.u32 %v4593, %v4589
        %v4595 = vrot.slane %v4594, 4
        %v4597 = vshll.u32 %v4258, 16
        %v4599 = vrot.slane %v4597, 5
        %v4600 = vsel %vm1258, %v4595, %v4599
        %v4602 = vshrl.u32 %v4259, 16
        %v4604 = vrot.slane %v4602, 4
        %v4605 = vshll.u32 %v4259, 16
        %v4607 = vrot.slane %v4605, 5
        %v4608 = vor.u32 %v4604, %v4607
        %v4609 = vrot.slane %v4608, 4
        %v4611 = vshll.u32 %v4260, 16
        %v4613 = vrot.slane %v4611, 5
        %v4614 = vsel %vm1258, %v4609, %v4613
        %v4615 = vshrl.u32 %v4260, 16
        %v4617 = vrot.slane %v4615, 4
        %v4618 = vor.u32 %v4617, %v4613
        %v4619 = vrot.slane %v4618, 4
        %v4621 = vshll.u32 %v4261, 16
        %v4623 = vrot.slane %v4621, 5
        %v4624 = vsel %vm1258, %v4619, %v4623
        %v4626 = vshrl.u32 %v4262, 16
        %v4628 = vrot.slane %v4626, 4
        %v4629 = vshll.u32 %v4262, 16
        %v4631 = vrot.slane %v4629, 5
        %v4632 = vor.u32 %v4628, %v4631
        %v4633 = vrot.slane %v4632, 4
        %v4635 = vshll.u32 %v4263, 16
        %v4637 = vrot.slane %v4635, 5
        %v4638 = vsel %vm1258, %v4633, %v4637
        %v4639 = vshrl.u32 %v4263, 16
        %v4641 = vrot.slane %v4639, 4
        %v4642 = vor.u32 %v4641, %v4637
        %v4643 = vrot.slane %v4642, 4
        %v4645 = vshll.u32 %v4264, 16
        %v4647 = vrot.slane %v4645, 5
        %v4648 = vsel %vm1258, %v4643, %v4647
        %v4649 = vld [vmem:[#allocation2] sm:$0xff]
        %v4650 = vld [vmem:[#allocation2 + $0x8] sm:$0xff]
        %v4651 = vld [vmem:[#allocation2 + $0x10] sm:$0xff]
        %v4652 = vld [vmem:[#allocation2 + $0x18] sm:$0xff]
        %v4653 = vld [vmem:[#allocation2 + $0x20] sm:$0xff]
        %v4654 = vld [vmem:[#allocation2 + $0x28] sm:$0xff]
        %v4655 = vld [vmem:[#allocation2 + $0x30] sm:$0xff]
        %v4656 = vld [vmem:[#allocation2 + $0x38] sm:$0xff]
        %v4657 = vld [vmem:[#allocation2 + $0x40] sm:$0xff]
        %v4658 = vld [vmem:[#allocation2 + $0x48] sm:$0xff]
        %v4659 = vld [vmem:[#allocation2 + $0x50] sm:$0xff]
        %v4660 = vld [vmem:[#allocation2 + $0x58] sm:$0xff]
        %v4661 = vld [vmem:[#allocation2 + $0x60] sm:$0xff]
        %v4662 = vld [vmem:[#allocation2 + $0x68] sm:$0xff]
        %v4663 = vld [vmem:[#allocation2 + $0x70] sm:$0xff]
        %v4664 = vld [vmem:[#allocation2 + $0x78] sm:$0xff]
        %v4665 = vld [vmem:[#allocation2 + $0x80] sm:$0xff]
        %v4666 = vld [vmem:[#allocation2 + $0x88] sm:$0xff]
        %v4667 = vld [vmem:[#allocation2 + $0x90] sm:$0xff]
        %v4668 = vld [vmem:[#allocation2 + $0x98] sm:$0xff]
        %v4669 = vld [vmem:[#allocation2 + $0xa0] sm:$0xff]
        %v4670 = vld [vmem:[#allocation2 + $0xa8] sm:$0xff]
        %v4671 = vld [vmem:[#allocation2 + $0xb0] sm:$0xff]
        %v4672 = vld [vmem:[#allocation2 + $0xb8] sm:$0xff]
        %v4673 = vld [vmem:[#allocation2 + $0xc0] sm:$0xff]
        %v4674 = vld [vmem:[#allocation2 + $0xc8] sm:$0xff]
        %v4675 = vld [vmem:[#allocation2 + $0xd0] sm:$0xff]
        %v4676 = vld [vmem:[#allocation2 + $0xd8] sm:$0xff]
        %v4677 = vld [vmem:[#allocation2 + $0xe0] sm:$0xff]
        %v4678 = vld [vmem:[#allocation2 + $0xe8] sm:$0xff]
        %v4679 = vld [vmem:[#allocation2 + $0xf0] sm:$0xff]
        %v4680 = vld [vmem:[#allocation2 + $0xf8] sm:$0xff]
        %v4681 = vld [vmem:[#allocation2 + $0x100] sm:$0xff]
        %v4682 = vld [vmem:[#allocation2 + $0x108] sm:$0xff]
        %v4683 = vld [vmem:[#allocation2 + $0x110] sm:$0xff]
        %v4684 = vld [vmem:[#allocation2 + $0x118] sm:$0xff]
        %v4685 = vld [vmem:[#allocation2 + $0x120] sm:$0xff]
        %v4686 = vld [vmem:[#allocation2 + $0x128] sm:$0xff]
        %v4687 = vld [vmem:[#allocation2 + $0x130] sm:$0xff]
        %v4688 = vld [vmem:[#allocation2 + $0x138] sm:$0xff]
        %v4689 = vld [vmem:[#allocation2 + $0x140] sm:$0xff]
        %v4690 = vld [vmem:[#allocation2 + $0x148] sm:$0xff]
        %v4691 = vld [vmem:[#allocation2 + $0x150] sm:$0xff]
        %v4692 = vld [vmem:[#allocation2 + $0x158] sm:$0xff]
        %v4693 = vld [vmem:[#allocation2 + $0x160] sm:$0xff]
        %v4694 = vld [vmem:[#allocation2 + $0x168] sm:$0xff]
        %v4695 = vld [vmem:[#allocation2 + $0x170] sm:$0xff]
        %v4696 = vld [vmem:[#allocation2 + $0x178] sm:$0xff]
        %v4697 = vld [vmem:[#allocation2 + $0x180] sm:$0xff]
        %v4698 = vld [vmem:[#allocation2 + $0x188] sm:$0xff]
        %v4699 = vld [vmem:[#allocation2 + $0x190] sm:$0xff]
        %v4700 = vld [vmem:[#allocation2 + $0x198] sm:$0xff]
        %v4701 = vld [vmem:[#allocation2 + $0x1a0] sm:$0xff]
        %v4702 = vld [vmem:[#allocation2 + $0x1a8] sm:$0xff]
        %v4703 = vld [vmem:[#allocation2 + $0x1b0] sm:$0xff]
        %v4704 = vld [vmem:[#allocation2 + $0x1b8] sm:$0xff]
        %v4705 = vld [vmem:[#allocation2 + $0x1c0] sm:$0xff]
        %v4706 = vld [vmem:[#allocation2 + $0x1c8] sm:$0xff]
        %v4707 = vld [vmem:[#allocation2 + $0x1d0] sm:$0xff]
        %v4708 = vld [vmem:[#allocation2 + $0x1d8] sm:$0xff]
        %v4709 = vld [vmem:[#allocation2 + $0x1e0] sm:$0xff]
        %v4710 = vld [vmem:[#allocation2 + $0x1e8] sm:$0xff]
        %v4711 = vld [vmem:[#allocation2 + $0x1f0] sm:$0xff]
        %v4712 = vld [vmem:[#allocation2 + $0x1f8] sm:$0xff]
        %v4713 = vld [vmem:[#allocation2 + $0x200] sm:$0xff]
        %v4714 = vld [vmem:[#allocation2 + $0x208] sm:$0xff]
        %v4715 = vld [vmem:[#allocation2 + $0x210] sm:$0xff]
        %v4716 = vld [vmem:[#allocation2 + $0x218] sm:$0xff]
        %v4717 = vld [vmem:[#allocation2 + $0x220] sm:$0xff]
        %v4718 = vld [vmem:[#allocation2 + $0x228] sm:$0xff]
        %v4719 = vld [vmem:[#allocation2 + $0x230] sm:$0xff]
        %v4720 = vld [vmem:[#allocation2 + $0x238] sm:$0xff]
        %v4721 = vld [vmem:[#allocation2 + $0x240] sm:$0xff]
        %v4722 = vld [vmem:[#allocation2 + $0x248] sm:$0xff]
        %v4723 = vld [vmem:[#allocation2 + $0x250] sm:$0xff]
        %v4724 = vld [vmem:[#allocation2 + $0x258] sm:$0xff]
        %v4725 = vld [vmem:[#allocation2 + $0x260] sm:$0xff]
        %v4726 = vld [vmem:[#allocation2 + $0x268] sm:$0xff]
        %v4727 = vld [vmem:[#allocation2 + $0x270] sm:$0xff]
        %v4728 = vld [vmem:[#allocation2 + $0x278] sm:$0xff]
        %v4729 = vld [vmem:[#allocation2 + $0x280] sm:$0xff]
        %v4730 = vld [vmem:[#allocation2 + $0x288] sm:$0xff]
        %v4731 = vld [vmem:[#allocation2 + $0x290] sm:$0xff]
        %v4732 = vld [vmem:[#allocation2 + $0x298] sm:$0xff]
        %v4733 = vld [vmem:[#allocation2 + $0x2a0] sm:$0xff]
        %v4734 = vld [vmem:[#allocation2 + $0x2a8] sm:$0xff]
        %v4735 = vld [vmem:[#allocation2 + $0x2b0] sm:$0xff]
        %v4736 = vld [vmem:[#allocation2 + $0x2b8] sm:$0xff]
        %v4737 = vld [vmem:[#allocation2 + $0x2c0] sm:$0xff]
        %v4738 = vld [vmem:[#allocation2 + $0x2c8] sm:$0xff]
        %v4739 = vld [vmem:[#allocation2 + $0x2d0] sm:$0xff]
        %v4740 = vld [vmem:[#allocation2 + $0x2d8] sm:$0xff]
        %v4741 = vld [vmem:[#allocation2 + $0x2e0] sm:$0xff]
        %v4742 = vld [vmem:[#allocation2 + $0x2e8] sm:$0xff]
        %v4743 = vld [vmem:[#allocation2 + $0x2f0] sm:$0xff]
        %v4744 = vld [vmem:[#allocation2 + $0x2f8] sm:$0xff]
        %s4745 = scalar_lea.vmem %s249, 24
        %v4746 = vld [vmem:[%s4745] sm:$0x3f]
        %v4747 = vunpack.c.l.b16 %v4278
        %v4748 = vunpack.c.l.b16 %v4288
        %v4749 = vunpack.c.l.b16 %v4302
        %v4750 = vunpack.c.l.b16 %v4312
        %v4751 = vunpack.c.l.b16 %v4326
        %v4752 = vunpack.c.l.b16 %v4336
        %v4753 = vunpack.c.l.b16 %v4350
        %v4754 = vunpack.c.l.b16 %v4360
        %v4755 = vunpack.c.l.b16 %v4374
        %v4756 = vunpack.c.l.b16 %v4384
        %v4757 = vunpack.c.l.b16 %v4398
        %v4758 = vunpack.c.l.b16 %v4408
        %v4759 = vunpack.c.l.b16 %v4422
        %v4760 = vunpack.c.l.b16 %v4432
        %v4761 = vunpack.c.l.b16 %v4446
        %v4762 = vunpack.c.l.b16 %v4456
        %v4763 = vunpack.c.l.b16 %v4470
        %v4764 = vunpack.c.l.b16 %v4480
        %v4765 = vunpack.c.l.b16 %v4494
        %v4766 = vunpack.c.l.b16 %v4504
        %v4767 = vunpack.c.l.b16 %v4518
        %v4768 = vunpack.c.l.b16 %v4528
        %v4769 = vunpack.c.l.b16 %v4542
        %v4770 = vunpack.c.l.b16 %v4552
        %v4771 = vunpack.c.l.b16 %v4566
        %v4772 = vunpack.c.l.b16 %v4576
        %v4773 = vunpack.c.l.b16 %v4590
        %v4774 = vunpack.c.l.b16 %v4600
        %v4775 = vunpack.c.l.b16 %v4614
        %v4776 = vunpack.c.l.b16 %v4624
        %v4777 = vunpack.c.l.b16 %v4638
        %v4778 = vunpack.c.l.b16 %v4648
        %v4779 = vpack.c.b16 %v4748, %v4747
        %v4780 = vpack.c.b16 %v4750, %v4749
        %v4781 = vpack.c.b16 %v4752, %v4751
        %v4782 = vpack.c.b16 %v4754, %v4753
        %v4783 = vpack.c.b16 %v4756, %v4755
        %v4784 = vpack.c.b16 %v4758, %v4757
        %v4785 = vpack.c.b16 %v4760, %v4759
        %v4786 = vpack.c.b16 %v4762, %v4761
        %v4787 = vpack.c.b16 %v4764, %v4763
        %v4788 = vpack.c.b16 %v4766, %v4765
        %v4789 = vpack.c.b16 %v4768, %v4767
        %v4790 = vpack.c.b16 %v4770, %v4769
        %v4791 = vpack.c.b16 %v4772, %v4771
        %v4792 = vpack.c.b16 %v4774, %v4773
        %v4793 = vpack.c.b16 %v4776, %v4775
        %v4794 = vpack.c.b16 %v4778, %v4777
        %v4796 = vcombine.high %v4746, %v4746
        %v4798 = vunpack.c.l.s4 1983009808
        %v4799 = vunpack.c.0.s8 %v4798
        %v4800 = vlaneseq
        %v4801 = vshrl.u32 %v4800, 7
        %v4802 = vsub.s32 %v4799, %v4801
        %v4803 = vrot.slane %v4746, %v4802
        %v4805 = vunpack.c.l.s4 1983009808
        %v4806 = vunpack.c.0.s8 %v4805
        %v4807 = vlaneseq
        %v4808 = vshrl.u32 %v4807, 7
        %v4809 = vsub.s32 %v4806, %v4808
        %v4810 = vrot.slane %v4796, %v4809
        %v4811 = vcombine.high %v4803, %v4803
        %v4813 = vsel %vm602, %v4779, 0
        %v4816 = vsel %vm602, %v4780, 0
        %v4819 = vsel %vm602, %v4781, 0
        %v4822 = vsel %vm602, %v4782, 0
        %v4825 = vsel %vm602, %v4783, 0
        %v4828 = vsel %vm602, %v4784, 0
        %v4831 = vsel %vm602, %v4785, 0
        %v4834 = vsel %vm602, %v4786, 0
        %v4837 = vsel %vm602, %v4787, 0
        %v4840 = vsel %vm602, %v4788, 0
        %v4843 = vsel %vm602, %v4789, 0
        %v4846 = vsel %vm602, %v4790, 0
        %v4849 = vsel %vm602, %v4791, 0
        %v4852 = vsel %vm602, %v4792, 0
        %v4855 = vsel %vm602, %v4793, 0
        %v4858 = vsel %vm602, %v4794, 0
        %v4861 = vsel %vm651, %v4803, 0
        %v4864 = vsel %vm651, %v4811, 0
        %v4867 = vsel %vm651, %v4810, 0
        %4869 = vmatprep.subr.bf16.mxu0 %v4864
        %4870 = vmatpush1.bf16.msra.mxu0 %v4861
        %4871 = vmatprep.subr.bf16.mxu0 0
        %4872 = vmatpush1.bf16.msra.mxu0 0
        %4873 = vmatprep.subr.bf16.mxu0 0
        %4874 = vmatpush1.bf16.msra.mxu0 0
        %4875 = vmatprep.subr.bf16.mxu0 0
        %4876 = vmatpush1.bf16.msra.mxu0 0
        %4877 = vmatprep.subr.bf16.mxu0 0
        %4878 = vmatpush1.bf16.msra.mxu0 0
        %4879 = vmatprep.subr.bf16.mxu0 0
        %4880 = vmatpush1.bf16.msra.mxu0 0
        %4881 = vmatprep.subr.bf16.mxu0 0
        %4882 = vmatpush1.bf16.msra.mxu0 0
        %4883 = vmatprep.subr.bf16.mxu0 0
        %4884 = vmatpush1.bf16.msra.mxu0 0
        %4885 = vmatprep.subr.bf16.mxu0 0
        %4886 = vmatpush1.bf16.msra.mxu0 0
        %4887 = vmatprep.subr.bf16.mxu0 0
        %4888 = vmatpush1.bf16.msra.mxu0 0
        %4889 = vmatprep.subr.bf16.mxu0 0
        %4890 = vmatpush1.bf16.msra.mxu0 0
        %4891 = vmatprep.subr.bf16.mxu0 0
        %4892 = vmatpush1.bf16.msra.mxu0 0
        %4893 = vmatprep.subr.bf16.mxu0 0
        %4894 = vmatpush1.bf16.msra.mxu0 0
        %4895 = vmatprep.subr.bf16.mxu0 0
        %4896 = vmatpush1.bf16.msra.mxu0 0
        %4897 = vmatprep.subr.bf16.mxu0 0
        %4898 = vmatpush1.bf16.msra.mxu0 0
        %4899 = vmatprep.subr.bf16.mxu0 0
        %4900 = vmatpush1.bf16.msra.mxu0 0
        %4901 = vmatprep.mubr.bf16.mxu0 0
        %4902 = vmatmul.mubr.bf16.gmra.mrb[0].mxu0 %v4813
        %v4903 = vpop.f32.mrb[0].mxu0
        %v4904 = vadd.f32 0.0, %v4903
        %v4905 = vpop.f32.mrb[0].mxu0
        %v4906 = vadd.f32 0.0, %v4905
        %v4907 = vpop.f32.mrb[0].mxu0
        %v4908 = vadd.f32 0.0, %v4907
        %v4909 = vpop.f32.mrb[0].mxu0
        %v4910 = vadd.f32 0.0, %v4909
        %4911 = vmatprep.mubr.bf16.mxu0 0
        %4912 = vmatmul.mubr.bf16.gmra.mrb[0].mxu0 %v4816
        %v4913 = vpop.f32.mrb[0].mxu0
        %v4914 = vadd.f32 0.0, %v4913
        %v4915 = vpop.f32.mrb[0].mxu0
        %v4916 = vadd.f32 0.0, %v4915
        %v4917 = vpop.f32.mrb[0].mxu0
        %v4918 = vadd.f32 0.0, %v4917
        %v4919 = vpop.f32.mrb[0].mxu0
        %v4920 = vadd.f32 0.0, %v4919
        %4921 = vmatprep.mubr.bf16.mxu0 0
        %4922 = vmatmul.mubr.bf16.gmra.mrb[0].mxu0 %v4819
        %v4923 = vpop.f32.mrb[0].mxu0
        %v4924 = vadd.f32 0.0, %v4923
        %v4925 = vpop.f32.mrb[0].mxu0
        %v4926 = vadd.f32 0.0, %v4925
        %v4927 = vpop.f32.mrb[0].mxu0
        %v4928 = vadd.f32 0.0, %v4927
        %v4929 = vpop.f32.mrb[0].mxu0
        %v4930 = vadd.f32 0.0, %v4929
        %4931 = vmatprep.mubr.bf16.mxu0 0
        %4932 = vmatmul.mubr.bf16.gmra.mrb[0].mxu0 %v4822
        %v4933 = vpop.f32.mrb[0].mxu0
        %v4934 = vadd.f32 0.0, %v4933
        %v4935 = vpop.f32.mrb[0].mxu0
        %v4936 = vadd.f32 0.0, %v4935
        %v4937 = vpop.f32.mrb[0].mxu0
        %v4938 = vadd.f32 0.0, %v4937
        %v4939 = vpop.f32.mrb[0].mxu0
        %v4940 = vadd.f32 0.0, %v4939
        %4941 = vmatprep.mubr.bf16.mxu0 0
        %4942 = vmatmul.mubr.bf16.gmra.mrb[0].mxu0 %v4825
        %v4943 = vpop.f32.mrb[0].mxu0
        %v4944 = vadd.f32 0.0, %v4943
        %v4945 = vpop.f32.mrb[0].mxu0
        %v4946 = vadd.f32 0.0, %v4945
        %v4947 = vpop.f32.mrb[0].mxu0
        %v4948 = vadd.f32 0.0, %v4947
        %v4949 = vpop.f32.mrb[0].mxu0
        %v4950 = vadd.f32 0.0, %v4949
        %4951 = vmatprep.mubr.bf16.mxu0 0
        %4952 = vmatmul.mubr.bf16.gmra.mrb[0].mxu0 %v4828
        %v4953 = vpop.f32.mrb[0].mxu0
        %v4954 = vadd.f32 0.0, %v4953
        %v4955 = vpop.f32.mrb[0].mxu0
        %v4956 = vadd.f32 0.0, %v4955
        %v4957 = vpop.f32.mrb[0].mxu0
        %v4958 = vadd.f32 0.0, %v4957
        %v4959 = vpop.f32.mrb[0].mxu0
        %v4960 = vadd.f32 0.0, %v4959
        %4961 = vmatprep.mubr.bf16.mxu0 0
        %4962 = vmatmul.mubr.bf16.gmra.mrb[0].mxu0 %v4831
        %v4963 = vpop.f32.mrb[0].mxu0
        %v4964 = vadd.f32 0.0, %v4963
        %v4965 = vpop.f32.mrb[0].mxu0
        %v4966 = vadd.f32 0.0, %v4965
        %v4967 = vpop.f32.mrb[0].mxu0
        %v4968 = vadd.f32 0.0, %v4967
        %v4969 = vpop.f32.mrb[0].mxu0
        %v4970 = vadd.f32 0.0, %v4969
        %4971 = vmatprep.mubr.bf16.mxu0 0
        %4972 = vmatmul.mubr.bf16.gmra.mrb[0].mxu0 %v4834
        %v4973 = vpop.f32.mrb[0].mxu0
        %v4974 = vadd.f32 0.0, %v4973
        %v4975 = vpop.f32.mrb[0].mxu0
        %v4976 = vadd.f32 0.0, %v4975
        %v4977 = vpop.f32.mrb[0].mxu0
        %v4978 = vadd.f32 0.0, %v4977
        %v4979 = vpop.f32.mrb[0].mxu0
        %v4980 = vadd.f32 0.0, %v4979
        %4981 = vmatprep.mubr.bf16.mxu0 0
        %4982 = vmatmul.mubr.bf16.gmra.mrb[0].mxu0 %v4837
        %v4983 = vpop.f32.mrb[0].mxu0
        %v4984 = vadd.f32 0.0, %v4983
        %v4985 = vpop.f32.mrb[0].mxu0
        %v4986 = vadd.f32 0.0, %v4985
        %v4987 = vpop.f32.mrb[0].mxu0
        %v4988 = vadd.f32 0.0, %v4987
        %v4989 = vpop.f32.mrb[0].mxu0
        %v4990 = vadd.f32 0.0, %v4989
        %4991 = vmatprep.mubr.bf16.mxu0 0
        %4992 = vmatmul.mubr.bf16.gmra.mrb[0].mxu0 %v4840
        %v4993 = vpop.f32.mrb[0].mxu0
        %v4994 = vadd.f32 0.0, %v4993
        %v4995 = vpop.f32.mrb[0].mxu0
        %v4996 = vadd.f32 0.0, %v4995
        %v4997 = vpop.f32.mrb[0].mxu0
        %v4998 = vadd.f32 0.0, %v4997
        %v4999 = vpop.f32.mrb[0].mxu0
        %v5000 = vadd.f32 0.0, %v4999
        %5001 = vmatprep.mubr.bf16.mxu0 0
        %5002 = vmatmul.mubr.bf16.gmra.mrb[0].mxu0 %v4843
        %v5003 = vpop.f32.mrb[0].mxu0
        %v5004 = vadd.f32 0.0, %v5003
        %v5005 = vpop.f32.mrb[0].mxu0
        %v5006 = vadd.f32 0.0, %v5005
        %v5007 = vpop.f32.mrb[0].mxu0
        %v5008 = vadd.f32 0.0, %v5007
        %v5009 = vpop.f32.mrb[0].mxu0
        %v5010 = vadd.f32 0.0, %v5009
        %5011 = vmatprep.mubr.bf16.mxu0 0
        %5012 = vmatmul.mubr.bf16.gmra.mrb[0].mxu0 %v4846
        %v5013 = vpop.f32.mrb[0].mxu0
        %v5014 = vadd.f32 0.0, %v5013
        %v5015 = vpop.f32.mrb[0].mxu0
        %v5016 = vadd.f32 0.0, %v5015
        %v5017 = vpop.f32.mrb[0].mxu0
        %v5018 = vadd.f32 0.0, %v5017
        %v5019 = vpop.f32.mrb[0].mxu0
        %v5020 = vadd.f32 0.0, %v5019
        %5021 = vmatprep.mubr.bf16.mxu0 0
        %5022 = vmatmul.mubr.bf16.gmra.mrb[0].mxu0 %v4849
        %v5023 = vpop.f32.mrb[0].mxu0
        %v5024 = vadd.f32 0.0, %v5023
        %v5025 = vpop.f32.mrb[0].mxu0
        %v5026 = vadd.f32 0.0, %v5025
        %v5027 = vpop.f32.mrb[0].mxu0
        %v5028 = vadd.f32 0.0, %v5027
        %v5029 = vpop.f32.mrb[0].mxu0
        %v5030 = vadd.f32 0.0, %v5029
        %5031 = vmatprep.mubr.bf16.mxu0 0
        %5032 = vmatmul.mubr.bf16.gmra.mrb[0].mxu0 %v4852
        %v5033 = vpop.f32.mrb[0].mxu0
        %v5034 = vadd.f32 0.0, %v5033
        %v5035 = vpop.f32.mrb[0].mxu0
        %v5036 = vadd.f32 0.0, %v5035
        %v5037 = vpop.f32.mrb[0].mxu0
        %v5038 = vadd.f32 0.0, %v5037
        %v5039 = vpop.f32.mrb[0].mxu0
        %v5040 = vadd.f32 0.0, %v5039
        %5041 = vmatprep.mubr.bf16.mxu0 0
        %5042 = vmatmul.mubr.bf16.gmra.mrb[0].mxu0 %v4855
        %v5043 = vpop.f32.mrb[0].mxu0
        %v5044 = vadd.f32 0.0, %v5043
        %v5045 = vpop.f32.mrb[0].mxu0
        %v5046 = vadd.f32 0.0, %v5045
        %v5047 = vpop.f32.mrb[0].mxu0
        %v5048 = vadd.f32 0.0, %v5047
        %v5049 = vpop.f32.mrb[0].mxu0
        %v5050 = vadd.f32 0.0, %v5049
        %5051 = vmatprep.mubr.bf16.mxu0 0
        %5052 = vmatmul.mubr.bf16.gmra.mrb[0].mxu0 %v4858
        %v5053 = vpop.f32.mrb[0].mxu0
        %v5054 = vadd.f32 0.0, %v5053
        %v5055 = vpop.f32.mrb[0].mxu0
        %v5056 = vadd.f32 0.0, %v5055
        %v5057 = vpop.f32.mrb[0].mxu0
        %v5058 = vadd.f32 0.0, %v5057
        %v5059 = vpop.f32.mrb[0].mxu0
        %v5060 = vadd.f32 0.0, %v5059
        %5061 = vdwg.mxu0
        %5062 = vmatprep.subr.bf16.mxu0 0
        %5063 = vmatpush1.bf16.msra.mxu0 %v4867
        %5064 = vmatprep.subr.bf16.mxu0 0
        %5065 = vmatpush1.bf16.msra.mxu0 0
        %5066 = vmatprep.subr.bf16.mxu0 0
        %5067 = vmatpush1.bf16.msra.mxu0 0
        %5068 = vmatprep.subr.bf16.mxu0 0
        %5069 = vmatpush1.bf16.msra.mxu0 0
        %5070 = vmatprep.subr.bf16.mxu0 0
        %5071 = vmatpush1.bf16.msra.mxu0 0
        %5072 = vmatprep.subr.bf16.mxu0 0
        %5073 = vmatpush1.bf16.msra.mxu0 0
        %5074 = vmatprep.subr.bf16.mxu0 0
        %5075 = vmatpush1.bf16.msra.mxu0 0
        %5076 = vmatprep.subr.bf16.mxu0 0
        %5077 = vmatpush1.bf16.msra.mxu0 0
        %5078 = vmatprep.subr.bf16.mxu0 0
        %5079 = vmatpush1.bf16.msra.mxu0 0
        %5080 = vmatprep.subr.bf16.mxu0 0
        %5081 = vmatpush1.bf16.msra.mxu0 0
        %5082 = vmatprep.subr.bf16.mxu0 0
        %5083 = vmatpush1.bf16.msra.mxu0 0
        %5084 = vmatprep.subr.bf16.mxu0 0
        %5085 = vmatpush1.bf16.msra.mxu0 0
        %5086 = vmatprep.subr.bf16.mxu0 0
        %5087 = vmatpush1.bf16.msra.mxu0 0
        %5088 = vmatprep.subr.bf16.mxu0 0
        %5089 = vmatpush1.bf16.msra.mxu0 0
        %5090 = vmatprep.subr.bf16.mxu0 0
        %5091 = vmatpush1.bf16.msra.mxu0 0
        %5092 = vmatprep.subr.bf16.mxu0 0
        %5093 = vmatpush1.bf16.msra.mxu0 0
        %5094 = vmatprep.mubr.bf16.mxu0 0
        %5095 = vmatmul.mubr.bf16.gmra.mrb[0].mxu0 %v4813
        %v5096 = vpop.f32.mrb[0].mxu0
        %v5097 = vadd.f32 0.0, %v5096
        %v5098 = vpop.f32.mrb[0].mxu0
        %v5099 = vpop.f32.mrb[0].mxu0
        %v5100 = vadd.f32 0.0, %v5099
        %v5101 = vpop.f32.mrb[0].mxu0
        %5102 = vmatprep.mubr.bf16.mxu0 0
        %5103 = vmatmul.mubr.bf16.gmra.mrb[0].mxu0 %v4816
        %v5104 = vpop.f32.mrb[0].mxu0
        %v5105 = vadd.f32 0.0, %v5104
        %v5106 = vpop.f32.mrb[0].mxu0
        %v5107 = vpop.f32.mrb[0].mxu0
        %v5108 = vadd.f32 0.0, %v5107
        %v5109 = vpop.f32.mrb[0].mxu0
        %5110 = vmatprep.mubr.bf16.mxu0 0
        %5111 = vmatmul.mubr.bf16.gmra.mrb[0].mxu0 %v4819
        %v5112 = vpop.f32.mrb[0].mxu0
        %v5113 = vadd.f32 0.0, %v5112
        %v5114 = vpop.f32.mrb[0].mxu0
        %v5115 = vpop.f32.mrb[0].mxu0
        %v5116 = vadd.f32 0.0, %v5115
        %v5117 = vpop.f32.mrb[0].mxu0
        %5118 = vmatprep.mubr.bf16.mxu0 0
        %5119 = vmatmul.mubr.bf16.gmra.mrb[0].mxu0 %v4822
        %v5120 = vpop.f32.mrb[0].mxu0
        %v5121 = vadd.f32 0.0, %v5120
        %v5122 = vpop.f32.mrb[0].mxu0
        %v5123 = vpop.f32.mrb[0].mxu0
        %v5124 = vadd.f32 0.0, %v5123
        %v5125 = vpop.f32.mrb[0].mxu0
        %5126 = vmatprep.mubr.bf16.mxu0 0
        %5127 = vmatmul.mubr.bf16.gmra.mrb[0].mxu0 %v4825
        %v5128 = vpop.f32.mrb[0].mxu0
        %v5129 = vadd.f32 0.0, %v5128
        %v5130 = vpop.f32.mrb[0].mxu0
        %v5131 = vpop.f32.mrb[0].mxu0
        %v5132 = vadd.f32 0.0, %v5131
        %v5133 = vpop.f32.mrb[0].mxu0
        %5134 = vmatprep.mubr.bf16.mxu0 0
        %5135 = vmatmul.mubr.bf16.gmra.mrb[0].mxu0 %v4828
        %v5136 = vpop.f32.mrb[0].mxu0
        %v5137 = vadd.f32 0.0, %v5136
        %v5138 = vpop.f32.mrb[0].mxu0
        %v5139 = vpop.f32.mrb[0].mxu0
        %v5140 = vadd.f32 0.0, %v5139
        %v5141 = vpop.f32.mrb[0].mxu0
        %5142 = vmatprep.mubr.bf16.mxu0 0
        %5143 = vmatmul.mubr.bf16.gmra.mrb[0].mxu0 %v4831
        %v5144 = vpop.f32.mrb[0].mxu0
        %v5145 = vadd.f32 0.0, %v5144
        %v5146 = vpop.f32.mrb[0].mxu0
        %v5147 = vpop.f32.mrb[0].mxu0
        %v5148 = vadd.f32 0.0, %v5147
        %v5149 = vpop.f32.mrb[0].mxu0
        %5150 = vmatprep.mubr.bf16.mxu0 0
        %5151 = vmatmul.mubr.bf16.gmra.mrb[0].mxu0 %v4834
        %v5152 = vpop.f32.mrb[0].mxu0
        %v5153 = vadd.f32 0.0, %v5152
        %v5154 = vpop.f32.mrb[0].mxu0
        %v5155 = vpop.f32.mrb[0].mxu0
        %v5156 = vadd.f32 0.0, %v5155
        %v5157 = vpop.f32.mrb[0].mxu0
        %5158 = vmatprep.mubr.bf16.mxu0 0
        %5159 = vmatmul.mubr.bf16.gmra.mrb[0].mxu0 %v4837
        %v5160 = vpop.f32.mrb[0].mxu0
        %v5161 = vadd.f32 0.0, %v5160
        %v5162 = vpop.f32.mrb[0].mxu0
        %v5163 = vpop.f32.mrb[0].mxu0
        %v5164 = vadd.f32 0.0, %v5163
        %v5165 = vpop.f32.mrb[0].mxu0
        %5166 = vmatprep.mubr.bf16.mxu0 0
        %5167 = vmatmul.mubr.bf16.gmra.mrb[0].mxu0 %v4840
        %v5168 = vpop.f32.mrb[0].mxu0
        %v5169 = vadd.f32 0.0, %v5168
        %v5170 = vpop.f32.mrb[0].mxu0
        %v5171 = vpop.f32.mrb[0].mxu0
        %v5172 = vadd.f32 0.0, %v5171
        %v5173 = vpop.f32.mrb[0].mxu0
        %5174 = vmatprep.mubr.bf16.mxu0 0
        %5175 = vmatmul.mubr.bf16.gmra.mrb[0].mxu0 %v4843
        %v5176 = vpop.f32.mrb[0].mxu0
        %v5177 = vadd.f32 0.0, %v5176
        %v5178 = vpop.f32.mrb[0].mxu0
        %v5179 = vpop.f32.mrb[0].mxu0
        %v5180 = vadd.f32 0.0, %v5179
        %v5181 = vpop.f32.mrb[0].mxu0
        %5182 = vmatprep.mubr.bf16.mxu0 0
        %5183 = vmatmul.mubr.bf16.gmra.mrb[0].mxu0 %v4846
        %v5184 = vpop.f32.mrb[0].mxu0
        %v5185 = vadd.f32 0.0, %v5184
        %v5186 = vpop.f32.mrb[0].mxu0
        %v5187 = vpop.f32.mrb[0].mxu0
        %v5188 = vadd.f32 0.0, %v5187
        %v5189 = vpop.f32.mrb[0].mxu0
        %5190 = vmatprep.mubr.bf16.mxu0 0
        %5191 = vmatmul.mubr.bf16.gmra.mrb[0].mxu0 %v4849
        %v5192 = vpop.f32.mrb[0].mxu0
        %v5193 = vadd.f32 0.0, %v5192
        %v5194 = vpop.f32.mrb[0].mxu0
        %v5195 = vpop.f32.mrb[0].mxu0
        %v5196 = vadd.f32 0.0, %v5195
        %v5197 = vpop.f32.mrb[0].mxu0
        %5198 = vmatprep.mubr.bf16.mxu0 0
        %5199 = vmatmul.mubr.bf16.gmra.mrb[0].mxu0 %v4852
        %v5200 = vpop.f32.mrb[0].mxu0
        %v5201 = vadd.f32 0.0, %v5200
        %v5202 = vpop.f32.mrb[0].mxu0
        %v5203 = vpop.f32.mrb[0].mxu0
        %v5204 = vadd.f32 0.0, %v5203
        %v5205 = vpop.f32.mrb[0].mxu0
        %5206 = vmatprep.mubr.bf16.mxu0 0
        %5207 = vmatmul.mubr.bf16.gmra.mrb[0].mxu0 %v4855
        %v5208 = vpop.f32.mrb[0].mxu0
        %v5209 = vadd.f32 0.0, %v5208
        %v5210 = vpop.f32.mrb[0].mxu0
        %v5211 = vpop.f32.mrb[0].mxu0
        %v5212 = vadd.f32 0.0, %v5211
        %v5213 = vpop.f32.mrb[0].mxu0
        %5214 = vmatprep.mubr.bf16.mxu0 0
        %5215 = vmatmul.mubr.bf16.gmra.mrb[0].mxu0 %v4858
        %v5216 = vpop.f32.mrb[0].mxu0
        %v5217 = vadd.f32 0.0, %v5216
        %v5218 = vpop.f32.mrb[0].mxu0
        %v5219 = vpop.f32.mrb[0].mxu0
        %v5220 = vadd.f32 0.0, %v5219
        %v5221 = vpop.f32.mrb[0].mxu0
        %5222 = vdwg.mxu0
        %v5223 = vadd.f32 %v4649, %v4904
        %v5224 = vadd.f32 %v4650, %v4906
        %v5225 = vadd.f32 %v4651, %v5097
        %v5226 = vadd.f32 %v4652, %v4908
        %v5227 = vadd.f32 %v4653, %v4910
        %v5228 = vadd.f32 %v4654, %v5100
        %v5229 = vadd.f32 %v4655, %v4914
        %v5230 = vadd.f32 %v4656, %v4916
        %v5231 = vadd.f32 %v4657, %v5105
        %v5232 = vadd.f32 %v4658, %v4918
        %v5233 = vadd.f32 %v4659, %v4920
        %v5234 = vadd.f32 %v4660, %v5108
        %v5235 = vadd.f32 %v4661, %v4924
        %v5236 = vadd.f32 %v4662, %v4926
        %v5237 = vadd.f32 %v4663, %v5113
        %v5238 = vadd.f32 %v4664, %v4928
        %v5239 = vadd.f32 %v4665, %v4930
        %v5240 = vadd.f32 %v4666, %v5116
        %v5241 = vadd.f32 %v4667, %v4934
        %v5242 = vadd.f32 %v4668, %v4936
        %v5243 = vadd.f32 %v4669, %v5121
        %v5244 = vadd.f32 %v4670, %v4938
        %v5245 = vadd.f32 %v4671, %v4940
        %v5246 = vadd.f32 %v4672, %v5124
        %v5247 = vadd.f32 %v4673, %v4944
        %v5248 = vadd.f32 %v4674, %v4946
        %v5249 = vadd.f32 %v4675, %v5129
        %v5250 = vadd.f32 %v4676, %v4948
        %v5251 = vadd.f32 %v4677, %v4950
        %v5252 = vadd.f32 %v4678, %v5132
        %v5253 = vadd.f32 %v4679, %v4954
        %v5254 = vadd.f32 %v4680, %v4956
        %v5255 = vadd.f32 %v4681, %v5137
        %v5256 = vadd.f32 %v4682, %v4958
        %v5257 = vadd.f32 %v4683, %v4960
        %v5258 = vadd.f32 %v4684, %v5140
        %v5259 = vadd.f32 %v4685, %v4964
        %v5260 = vadd.f32 %v4686, %v4966
        %v5261 = vadd.f32 %v4687, %v5145
        %v5262 = vadd.f32 %v4688, %v4968
        %v5263 = vadd.f32 %v4689, %v4970
        %v5264 = vadd.f32 %v4690, %v5148
        %v5265 = vadd.f32 %v4691, %v4974
        %v5266 = vadd.f32 %v4692, %v4976
        %v5267 = vadd.f32 %v4693, %v5153
        %v5268 = vadd.f32 %v4694, %v4978
        %v5269 = vadd.f32 %v4695, %v4980
        %v5270 = vadd.f32 %v4696, %v5156
        %v5271 = vadd.f32 %v4697, %v4984
        %v5272 = vadd.f32 %v4698, %v4986
        %v5273 = vadd.f32 %v4699, %v5161
        %v5274 = vadd.f32 %v4700, %v4988
        %v5275 = vadd.f32 %v4701, %v4990
        %v5276 = vadd.f32 %v4702, %v5164
        %v5277 = vadd.f32 %v4703, %v4994
        %v5278 = vadd.f32 %v4704, %v4996
        %v5279 = vadd.f32 %v4705, %v5169
        %v5280 = vadd.f32 %v4706, %v4998
        %v5281 = vadd.f32 %v4707, %v5000
        %v5282 = vadd.f32 %v4708, %v5172
        %v5283 = vadd.f32 %v4709, %v5004
        %v5284 = vadd.f32 %v4710, %v5006
        %v5285 = vadd.f32 %v4711, %v5177
        %v5286 = vadd.f32 %v4712, %v5008
        %v5287 = vadd.f32 %v4713, %v5010
        %v5288 = vadd.f32 %v4714, %v5180
        %v5289 = vadd.f32 %v4715, %v5014
        %v5290 = vadd.f32 %v4716, %v5016
        %v5291 = vadd.f32 %v4717, %v5185
        %v5292 = vadd.f32 %v4718, %v5018
        %v5293 = vadd.f32 %v4719, %v5020
        %v5294 = vadd.f32 %v4720, %v5188
        %v5295 = vadd.f32 %v4721, %v5024
        %v5296 = vadd.f32 %v4722, %v5026
        %v5297 = vadd.f32 %v4723, %v5193
        %v5298 = vadd.f32 %v4724, %v5028
        %v5299 = vadd.f32 %v4725, %v5030
        %v5300 = vadd.f32 %v4726, %v5196
        %v5301 = vadd.f32 %v4727, %v5034
        %v5302 = vadd.f32 %v4728, %v5036
        %v5303 = vadd.f32 %v4729, %v5201
        %v5304 = vadd.f32 %v4730, %v5038
        %v5305 = vadd.f32 %v4731, %v5040
        %v5306 = vadd.f32 %v4732, %v5204
        %v5307 = vadd.f32 %v4733, %v5044
        %v5308 = vadd.f32 %v4734, %v5046
        %v5309 = vadd.f32 %v4735, %v5209
        %v5310 = vadd.f32 %v4736, %v5048
        %v5311 = vadd.f32 %v4737, %v5050
        %v5312 = vadd.f32 %v4738, %v5212
        %v5313 = vadd.f32 %v4739, %v5054
        %v5314 = vadd.f32 %v4740, %v5056
        %v5315 = vadd.f32 %v4741, %v5217
        %v5316 = vadd.f32 %v4742, %v5058
        %v5317 = vadd.f32 %v4743, %v5060
        %v5318 = vadd.f32 %v4744, %v5220
        %5319 = vst [vmem:[#allocation2] sm:$0xff] %v5223
        %5320 = vst [vmem:[#allocation2 + $0x8] sm:$0xff] %v5224
        %5321 = vst.msk [vmem:[#allocation2 + $0x10] sm:$0xff] %vm1113, %v5225
        %5322 = vst [vmem:[#allocation2 + $0x18] sm:$0xff] %v5226
        %5323 = vst [vmem:[#allocation2 + $0x20] sm:$0xff] %v5227
        %5324 = vst.msk [vmem:[#allocation2 + $0x28] sm:$0xff] %vm1113, %v5228
        %5325 = vst [vmem:[#allocation2 + $0x30] sm:$0xff] %v5229
        %5326 = vst [vmem:[#allocation2 + $0x38] sm:$0xff] %v5230
        %5327 = vst.msk [vmem:[#allocation2 + $0x40] sm:$0xff] %vm1113, %v5231
        %5328 = vst [vmem:[#allocation2 + $0x48] sm:$0xff] %v5232
        %5329 = vst [vmem:[#allocation2 + $0x50] sm:$0xff] %v5233
        %5330 = vst.msk [vmem:[#allocation2 + $0x58] sm:$0xff] %vm1113, %v5234
        %5331 = vst [vmem:[#allocation2 + $0x60] sm:$0xff] %v5235
        %5332 = vst [vmem:[#allocation2 + $0x68] sm:$0xff] %v5236
        %5333 = vst.msk [vmem:[#allocation2 + $0x70] sm:$0xff] %vm1113, %v5237
        %5334 = vst [vmem:[#allocation2 + $0x78] sm:$0xff] %v5238
        %5335 = vst [vmem:[#allocation2 + $0x80] sm:$0xff] %v5239
        %5336 = vst.msk [vmem:[#allocation2 + $0x88] sm:$0xff] %vm1113, %v5240
        %5337 = vst [vmem:[#allocation2 + $0x90] sm:$0xff] %v5241
        %5338 = vst [vmem:[#allocation2 + $0x98] sm:$0xff] %v5242
        %5339 = vst.msk [vmem:[#allocation2 + $0xa0] sm:$0xff] %vm1113, %v5243
        %5340 = vst [vmem:[#allocation2 + $0xa8] sm:$0xff] %v5244
        %5341 = vst [vmem:[#allocation2 + $0xb0] sm:$0xff] %v5245
        %5342 = vst.msk [vmem:[#allocation2 + $0xb8] sm:$0xff] %vm1113, %v5246
        %5343 = vst [vmem:[#allocation2 + $0xc0] sm:$0xff] %v5247
        %5344 = vst [vmem:[#allocation2 + $0xc8] sm:$0xff] %v5248
        %5345 = vst.msk [vmem:[#allocation2 + $0xd0] sm:$0xff] %vm1113, %v5249
        %5346 = vst [vmem:[#allocation2 + $0xd8] sm:$0xff] %v5250
        %5347 = vst [vmem:[#allocation2 + $0xe0] sm:$0xff] %v5251
        %5348 = vst.msk [vmem:[#allocation2 + $0xe8] sm:$0xff] %vm1113, %v5252
        %5349 = vst [vmem:[#allocation2 + $0xf0] sm:$0xff] %v5253
        %5350 = vst [vmem:[#allocation2 + $0xf8] sm:$0xff] %v5254
        %5351 = vst.msk [vmem:[#allocation2 + $0x100] sm:$0xff] %vm1113, %v5255
        %5352 = vst [vmem:[#allocation2 + $0x108] sm:$0xff] %v5256
        %5353 = vst [vmem:[#allocation2 + $0x110] sm:$0xff] %v5257
        %5354 = vst.msk [vmem:[#allocation2 + $0x118] sm:$0xff] %vm1113, %v5258
        %5355 = vst [vmem:[#allocation2 + $0x120] sm:$0xff] %v5259
        %5356 = vst [vmem:[#allocation2 + $0x128] sm:$0xff] %v5260
        %5357 = vst.msk [vmem:[#allocation2 + $0x130] sm:$0xff] %vm1113, %v5261
        %5358 = vst [vmem:[#allocation2 + $0x138] sm:$0xff] %v5262
        %5359 = vst [vmem:[#allocation2 + $0x140] sm:$0xff] %v5263
        %5360 = vst.msk [vmem:[#allocation2 + $0x148] sm:$0xff] %vm1113, %v5264
        %5361 = vst [vmem:[#allocation2 + $0x150] sm:$0xff] %v5265
        %5362 = vst [vmem:[#allocation2 + $0x158] sm:$0xff] %v5266
        %5363 = vst.msk [vmem:[#allocation2 + $0x160] sm:$0xff] %vm1113, %v5267
        %5364 = vst [vmem:[#allocation2 + $0x168] sm:$0xff] %v5268
        %5365 = vst [vmem:[#allocation2 + $0x170] sm:$0xff] %v5269
        %5366 = vst.msk [vmem:[#allocation2 + $0x178] sm:$0xff] %vm1113, %v5270
        %5367 = vst [vmem:[#allocation2 + $0x180] sm:$0xff] %v5271
        %5368 = vst [vmem:[#allocation2 + $0x188] sm:$0xff] %v5272
        %5369 = vst.msk [vmem:[#allocation2 + $0x190] sm:$0xff] %vm1113, %v5273
        %5370 = vst [vmem:[#allocation2 + $0x198] sm:$0xff] %v5274
        %5371 = vst [vmem:[#allocation2 + $0x1a0] sm:$0xff] %v5275
        %5372 = vst.msk [vmem:[#allocation2 + $0x1a8] sm:$0xff] %vm1113, %v5276
        %5373 = vst [vmem:[#allocation2 + $0x1b0] sm:$0xff] %v5277
        %5374 = vst [vmem:[#allocation2 + $0x1b8] sm:$0xff] %v5278
        %5375 = vst.msk [vmem:[#allocation2 + $0x1c0] sm:$0xff] %vm1113, %v5279
        %5376 = vst [vmem:[#allocation2 + $0x1c8] sm:$0xff] %v5280
        %5377 = vst [vmem:[#allocation2 + $0x1d0] sm:$0xff] %v5281
        %5378 = vst.msk [vmem:[#allocation2 + $0x1d8] sm:$0xff] %vm1113, %v5282
        %5379 = vst [vmem:[#allocation2 + $0x1e0] sm:$0xff] %v5283
        %5380 = vst [vmem:[#allocation2 + $0x1e8] sm:$0xff] %v5284
        %5381 = vst.msk [vmem:[#allocation2 + $0x1f0] sm:$0xff] %vm1113, %v5285
        %5382 = vst [vmem:[#allocation2 + $0x1f8] sm:$0xff] %v5286
        %5383 = vst [vmem:[#allocation2 + $0x200] sm:$0xff] %v5287
        %5384 = vst.msk [vmem:[#allocation2 + $0x208] sm:$0xff] %vm1113, %v5288
        %5385 = vst [vmem:[#allocation2 + $0x210] sm:$0xff] %v5289
        %5386 = vst [vmem:[#allocation2 + $0x218] sm:$0xff] %v5290
        %5387 = vst.msk [vmem:[#allocation2 + $0x220] sm:$0xff] %vm1113, %v5291
        %5388 = vst [vmem:[#allocation2 + $0x228] sm:$0xff] %v5292
        %5389 = vst [vmem:[#allocation2 + $0x230] sm:$0xff] %v5293
        %5390 = vst.msk [vmem:[#allocation2 + $0x238] sm:$0xff] %vm1113, %v5294
        %5391 = vst [vmem:[#allocation2 + $0x240] sm:$0xff] %v5295
        %5392 = vst [vmem:[#allocation2 + $0x248] sm:$0xff] %v5296
        %5393 = vst.msk [vmem:[#allocation2 + $0x250] sm:$0xff] %vm1113, %v5297
        %5394 = vst [vmem:[#allocation2 + $0x258] sm:$0xff] %v5298
        %5395 = vst [vmem:[#allocation2 + $0x260] sm:$0xff] %v5299
        %5396 = vst.msk [vmem:[#allocation2 + $0x268] sm:$0xff] %vm1113, %v5300
        %5397 = vst [vmem:[#allocation2 + $0x270] sm:$0xff] %v5301
        %5398 = vst [vmem:[#allocation2 + $0x278] sm:$0xff] %v5302
        %5399 = vst.msk [vmem:[#allocation2 + $0x280] sm:$0xff] %vm1113, %v5303
        %5400 = vst [vmem:[#allocation2 + $0x288] sm:$0xff] %v5304
        %5401 = vst [vmem:[#allocation2 + $0x290] sm:$0xff] %v5305
        %5402 = vst.msk [vmem:[#allocation2 + $0x298] sm:$0xff] %vm1113, %v5306
        %5403 = vst [vmem:[#allocation2 + $0x2a0] sm:$0xff] %v5307
        %5404 = vst [vmem:[#allocation2 + $0x2a8] sm:$0xff] %v5308
        %5405 = vst.msk [vmem:[#allocation2 + $0x2b0] sm:$0xff] %vm1113, %v5309
        %5406 = vst [vmem:[#allocation2 + $0x2b8] sm:$0xff] %v5310
        %5407 = vst [vmem:[#allocation2 + $0x2c0] sm:$0xff] %v5311
        %5408 = vst.msk [vmem:[#allocation2 + $0x2c8] sm:$0xff] %vm1113, %v5312
        %5409 = vst [vmem:[#allocation2 + $0x2d0] sm:$0xff] %v5313
        %5410 = vst [vmem:[#allocation2 + $0x2d8] sm:$0xff] %v5314
        %5411 = vst.msk [vmem:[#allocation2 + $0x2e0] sm:$0xff] %vm1113, %v5315
        %5412 = vst [vmem:[#allocation2 + $0x2e8] sm:$0xff] %v5316
        %5413 = vst [vmem:[#allocation2 + $0x2f0] sm:$0xff] %v5317
        %5414 = vst.msk [vmem:[#allocation2 + $0x2f8] sm:$0xff] %vm1113, %v5318
        %v5415 = vld [vmem:[%s3386] sm:$0xe]
        %v5416 = vld [vmem:[%s3386 + $0x4] sm:$0xf]
        %v5417 = vld [vmem:[%s3386 + $0x8] sm:$0x1]
        %v5418 = vld [vmem:[%s3386 + $0xc] sm:$0xe]
        %v5419 = vld [vmem:[%s3386 + $0x10] sm:$0xf]
        %v5420 = vld [vmem:[%s3386 + $0x14] sm:$0x1]
        %v5421 = vld [vmem:[%s3386 + $0x18] sm:$0xe]
        %v5422 = vld [vmem:[%s3386 + $0x1c] sm:$0xf]
        %v5423 = vld [vmem:[%s3386 + $0x20] sm:$0x1]
        %v5424 = vld [vmem:[%s3386 + $0x24] sm:$0xe]
        %v5425 = vld [vmem:[%s3386 + $0x28] sm:$0xf]
        %v5426 = vld [vmem:[%s3386 + $0x2c] sm:$0x1]
        %v5427 = vld [vmem:[%s3386 + $0x30] sm:$0xe]
        %v5428 = vld [vmem:[%s3386 + $0x34] sm:$0xf]
        %v5429 = vld [vmem:[%s3386 + $0x38] sm:$0x1]
        %v5430 = vld [vmem:[%s3386 + $0x3c] sm:$0xe]
        %v5431 = vld [vmem:[%s3386 + $0x40] sm:$0xf]
        %v5432 = vld [vmem:[%s3386 + $0x44] sm:$0x1]
        %v5433 = vld [vmem:[%s3386 + $0x48] sm:$0xe]
        %v5434 = vld [vmem:[%s3386 + $0x4c] sm:$0xf]
        %v5435 = vld [vmem:[%s3386 + $0x50] sm:$0x1]
        %v5436 = vld [vmem:[%s3386 + $0x54] sm:$0xe]
        %v5437 = vld [vmem:[%s3386 + $0x58] sm:$0xf]
        %v5438 = vld [vmem:[%s3386 + $0x5c] sm:$0x1]
        %v5439 = vld [vmem:[%s3386 + $0x60] sm:$0xe]
        %v5440 = vld [vmem:[%s3386 + $0x64] sm:$0xf]
        %v5441 = vld [vmem:[%s3386 + $0x68] sm:$0x1]
        %v5442 = vld [vmem:[%s3386 + $0x6c] sm:$0xe]
        %v5443 = vld [vmem:[%s3386 + $0x70] sm:$0xf]
        %v5444 = vld [vmem:[%s3386 + $0x74] sm:$0x1]
        %v5445 = vld [vmem:[%s3386 + $0x78] sm:$0xe]
        %v5446 = vld [vmem:[%s3386 + $0x7c] sm:$0xf]
        %v5447 = vld [vmem:[%s3386 + $0x80] sm:$0x1]
        %v5448 = vld [vmem:[%s3386 + $0x84] sm:$0xe]
        %v5449 = vld [vmem:[%s3386 + $0x88] sm:$0xf]
        %v5450 = vld [vmem:[%s3386 + $0x8c] sm:$0x1]
        %v5451 = vld [vmem:[%s3386 + $0x90] sm:$0xe]
        %v5452 = vld [vmem:[%s3386 + $0x94] sm:$0xf]
        %v5453 = vld [vmem:[%s3386 + $0x98] sm:$0x1]
        %v5454 = vld [vmem:[%s3386 + $0x9c] sm:$0xe]
        %v5455 = vld [vmem:[%s3386 + $0xa0] sm:$0xf]
        %v5456 = vld [vmem:[%s3386 + $0xa4] sm:$0x1]
        %v5457 = vld [vmem:[%s3386 + $0xa8] sm:$0xe]
        %v5458 = vld [vmem:[%s3386 + $0xac] sm:$0xf]
        %v5459 = vld [vmem:[%s3386 + $0xb0] sm:$0x1]
        %v5460 = vld [vmem:[%s3386 + $0xb4] sm:$0xe]
        %v5461 = vld [vmem:[%s3386 + $0xb8] sm:$0xf]
        %v5462 = vld [vmem:[%s3386 + $0xbc] sm:$0x1]
        %v5511 = vrot.slane %v5415, 5
        %v5512 = vrot.slane %v5511, 4
        %v5513 = vrot.slane %v5416, 5
        %v5514 = vsel %vm2507, %v5512, %v5513
        %v5515 = vrot.slane %v5513, 4
        %v5516 = vrot.slane %v5417, 5
        %v5517 = vsel %vm2507, %v5515, %v5516
        %v5518 = vrot.slane %v5418, 5
        %v5519 = vrot.slane %v5518, 4
        %v5520 = vrot.slane %v5419, 5
        %v5521 = vsel %vm2507, %v5519, %v5520
        %v5522 = vrot.slane %v5520, 4
        %v5523 = vrot.slane %v5420, 5
        %v5524 = vsel %vm2507, %v5522, %v5523
        %v5525 = vrot.slane %v5421, 5
        %v5526 = vrot.slane %v5525, 4
        %v5527 = vrot.slane %v5422, 5
        %v5528 = vsel %vm2507, %v5526, %v5527
        %v5529 = vrot.slane %v5527, 4
        %v5530 = vrot.slane %v5423, 5
        %v5531 = vsel %vm2507, %v5529, %v5530
        %v5532 = vrot.slane %v5424, 5
        %v5533 = vrot.slane %v5532, 4
        %v5534 = vrot.slane %v5425, 5
        %v5535 = vsel %vm2507, %v5533, %v5534
        %v5536 = vrot.slane %v5534, 4
        %v5537 = vrot.slane %v5426, 5
        %v5538 = vsel %vm2507, %v5536, %v5537
        %v5539 = vrot.slane %v5427, 5
        %v5540 = vrot.slane %v5539, 4
        %v5541 = vrot.slane %v5428, 5
        %v5542 = vsel %vm2507, %v5540, %v5541
        %v5543 = vrot.slane %v5541, 4
        %v5544 = vrot.slane %v5429, 5
        %v5545 = vsel %vm2507, %v5543, %v5544
        %v5546 = vrot.slane %v5430, 5
        %v5547 = vrot.slane %v5546, 4
        %v5548 = vrot.slane %v5431, 5
        %v5549 = vsel %vm2507, %v5547, %v5548
        %v5550 = vrot.slane %v5548, 4
        %v5551 = vrot.slane %v5432, 5
        %v5552 = vsel %vm2507, %v5550, %v5551
        %v5553 = vrot.slane %v5433, 5
        %v5554 = vrot.slane %v5553, 4
        %v5555 = vrot.slane %v5434, 5
        %v5556 = vsel %vm2507, %v5554, %v5555
        %v5557 = vrot.slane %v5555, 4
        %v5558 = vrot.slane %v5435, 5
        %v5559 = vsel %vm2507, %v5557, %v5558
        %v5560 = vrot.slane %v5436, 5
        %v5561 = vrot.slane %v5560, 4
        %v5562 = vrot.slane %v5437, 5
        %v5563 = vsel %vm2507, %v5561, %v5562
        %v5564 = vrot.slane %v5562, 4
        %v5565 = vrot.slane %v5438, 5
        %v5566 = vsel %vm2507, %v5564, %v5565
        %v5567 = vrot.slane %v5439, 5
        %v5568 = vrot.slane %v5567, 4
        %v5569 = vrot.slane %v5440, 5
        %v5570 = vsel %vm2507, %v5568, %v5569
        %v5571 = vrot.slane %v5569, 4
        %v5572 = vrot.slane %v5441, 5
        %v5573 = vsel %vm2507, %v5571, %v5572
        %v5574 = vrot.slane %v5442, 5
        %v5575 = vrot.slane %v5574, 4
        %v5576 = vrot.slane %v5443, 5
        %v5577 = vsel %vm2507, %v5575, %v5576
        %v5578 = vrot.slane %v5576, 4
        %v5579 = vrot.slane %v5444, 5
        %v5580 = vsel %vm2507, %v5578, %v5579
        %v5581 = vrot.slane %v5445, 5
        %v5582 = vrot.slane %v5581, 4
        %v5583 = vrot.slane %v5446, 5
        %v5584 = vsel %vm2507, %v5582, %v5583
        %v5585 = vrot.slane %v5583, 4
        %v5586 = vrot.slane %v5447, 5
        %v5587 = vsel %vm2507, %v5585, %v5586
        %v5588 = vrot.slane %v5448, 5
        %v5589 = vrot.slane %v5588, 4
        %v5590 = vrot.slane %v5449, 5
        %v5591 = vsel %vm2507, %v5589, %v5590
        %v5592 = vrot.slane %v5590, 4
        %v5593 = vrot.slane %v5450, 5
        %v5594 = vsel %vm2507, %v5592, %v5593
        %v5595 = vrot.slane %v5451, 5
        %v5596 = vrot.slane %v5595, 4
        %v5597 = vrot.slane %v5452, 5
        %v5598 = vsel %vm2507, %v5596, %v5597
        %v5599 = vrot.slane %v5597, 4
        %v5600 = vrot.slane %v5453, 5
        %v5601 = vsel %vm2507, %v5599, %v5600
        %v5602 = vrot.slane %v5454, 5
        %v5603 = vrot.slane %v5602, 4
        %v5604 = vrot.slane %v5455, 5
        %v5605 = vsel %vm2507, %v5603, %v5604
        %v5606 = vrot.slane %v5604, 4
        %v5607 = vrot.slane %v5456, 5
        %v5608 = vsel %vm2507, %v5606, %v5607
        %v5609 = vrot.slane %v5457, 5
        %v5610 = vrot.slane %v5609, 4
        %v5611 = vrot.slane %v5458, 5
        %v5612 = vsel %vm2507, %v5610, %v5611
        %v5613 = vrot.slane %v5611, 4
        %v5614 = vrot.slane %v5459, 5
        %v5615 = vsel %vm2507, %v5613, %v5614
        %v5616 = vrot.slane %v5460, 5
        %v5617 = vrot.slane %v5616, 4
        %v5618 = vrot.slane %v5461, 5
        %v5619 = vsel %vm2507, %v5617, %v5618
        %v5620 = vrot.slane %v5618, 4
        %v5621 = vrot.slane %v5462, 5
        %v5622 = vsel %vm2507, %v5620, %v5621
        %v5623 = vld [vmem:[#allocation2] sm:$0xff]
        %v5624 = vld [vmem:[#allocation2 + $0x8] sm:$0xff]
        %v5625 = vld [vmem:[#allocation2 + $0x10] sm:$0xff]
        %v5626 = vld [vmem:[#allocation2 + $0x18] sm:$0xff]
        %v5627 = vld [vmem:[#allocation2 + $0x20] sm:$0xff]
        %v5628 = vld [vmem:[#allocation2 + $0x28] sm:$0xff]
        %v5629 = vld [vmem:[#allocation2 + $0x30] sm:$0xff]
        %v5630 = vld [vmem:[#allocation2 + $0x38] sm:$0xff]
        %v5631 = vld [vmem:[#allocation2 + $0x40] sm:$0xff]
        %v5632 = vld [vmem:[#allocation2 + $0x48] sm:$0xff]
        %v5633 = vld [vmem:[#allocation2 + $0x50] sm:$0xff]
        %v5634 = vld [vmem:[#allocation2 + $0x58] sm:$0xff]
        %v5635 = vld [vmem:[#allocation2 + $0x60] sm:$0xff]
        %v5636 = vld [vmem:[#allocation2 + $0x68] sm:$0xff]
        %v5637 = vld [vmem:[#allocation2 + $0x70] sm:$0xff]
        %v5638 = vld [vmem:[#allocation2 + $0x78] sm:$0xff]
        %v5639 = vld [vmem:[#allocation2 + $0x80] sm:$0xff]
        %v5640 = vld [vmem:[#allocation2 + $0x88] sm:$0xff]
        %v5641 = vld [vmem:[#allocation2 + $0x90] sm:$0xff]
        %v5642 = vld [vmem:[#allocation2 + $0x98] sm:$0xff]
        %v5643 = vld [vmem:[#allocation2 + $0xa0] sm:$0xff]
        %v5644 = vld [vmem:[#allocation2 + $0xa8] sm:$0xff]
        %v5645 = vld [vmem:[#allocation2 + $0xb0] sm:$0xff]
        %v5646 = vld [vmem:[#allocation2 + $0xb8] sm:$0xff]
        %v5647 = vld [vmem:[#allocation2 + $0xc0] sm:$0xff]
        %v5648 = vld [vmem:[#allocation2 + $0xc8] sm:$0xff]
        %v5649 = vld [vmem:[#allocation2 + $0xd0] sm:$0xff]
        %v5650 = vld [vmem:[#allocation2 + $0xd8] sm:$0xff]
        %v5651 = vld [vmem:[#allocation2 + $0xe0] sm:$0xff]
        %v5652 = vld [vmem:[#allocation2 + $0xe8] sm:$0xff]
        %v5653 = vld [vmem:[#allocation2 + $0xf0] sm:$0xff]
        %v5654 = vld [vmem:[#allocation2 + $0xf8] sm:$0xff]
        %v5655 = vld [vmem:[#allocation2 + $0x100] sm:$0xff]
        %v5656 = vld [vmem:[#allocation2 + $0x108] sm:$0xff]
        %v5657 = vld [vmem:[#allocation2 + $0x110] sm:$0xff]
        %v5658 = vld [vmem:[#allocation2 + $0x118] sm:$0xff]
        %v5659 = vld [vmem:[#allocation2 + $0x120] sm:$0xff]
        %v5660 = vld [vmem:[#allocation2 + $0x128] sm:$0xff]
        %v5661 = vld [vmem:[#allocation2 + $0x130] sm:$0xff]
        %v5662 = vld [vmem:[#allocation2 + $0x138] sm:$0xff]
        %v5663 = vld [vmem:[#allocation2 + $0x140] sm:$0xff]
        %v5664 = vld [vmem:[#allocation2 + $0x148] sm:$0xff]
        %v5665 = vld [vmem:[#allocation2 + $0x150] sm:$0xff]
        %v5666 = vld [vmem:[#allocation2 + $0x158] sm:$0xff]
        %v5667 = vld [vmem:[#allocation2 + $0x160] sm:$0xff]
        %v5668 = vld [vmem:[#allocation2 + $0x168] sm:$0xff]
        %v5669 = vld [vmem:[#allocation2 + $0x170] sm:$0xff]
        %v5670 = vld [vmem:[#allocation2 + $0x178] sm:$0xff]
        %v5671 = vld [vmem:[#allocation2 + $0x180] sm:$0xff]
        %v5672 = vld [vmem:[#allocation2 + $0x188] sm:$0xff]
        %v5673 = vld [vmem:[#allocation2 + $0x190] sm:$0xff]
        %v5674 = vld [vmem:[#allocation2 + $0x198] sm:$0xff]
        %v5675 = vld [vmem:[#allocation2 + $0x1a0] sm:$0xff]
        %v5676 = vld [vmem:[#allocation2 + $0x1a8] sm:$0xff]
        %v5677 = vld [vmem:[#allocation2 + $0x1b0] sm:$0xff]
        %v5678 = vld [vmem:[#allocation2 + $0x1b8] sm:$0xff]
        %v5679 = vld [vmem:[#allocation2 + $0x1c0] sm:$0xff]
        %v5680 = vld [vmem:[#allocation2 + $0x1c8] sm:$0xff]
        %v5681 = vld [vmem:[#allocation2 + $0x1d0] sm:$0xff]
        %v5682 = vld [vmem:[#allocation2 + $0x1d8] sm:$0xff]
        %v5683 = vld [vmem:[#allocation2 + $0x1e0] sm:$0xff]
        %v5684 = vld [vmem:[#allocation2 + $0x1e8] sm:$0xff]
        %v5685 = vld [vmem:[#allocation2 + $0x1f0] sm:$0xff]
        %v5686 = vld [vmem:[#allocation2 + $0x1f8] sm:$0xff]
        %v5687 = vld [vmem:[#allocation2 + $0x200] sm:$0xff]
        %v5688 = vld [vmem:[#allocation2 + $0x208] sm:$0xff]
        %v5689 = vld [vmem:[#allocation2 + $0x210] sm:$0xff]
        %v5690 = vld [vmem:[#allocation2 + $0x218] sm:$0xff]
        %v5691 = vld [vmem:[#allocation2 + $0x220] sm:$0xff]
        %v5692 = vld [vmem:[#allocation2 + $0x228] sm:$0xff]
        %v5693 = vld [vmem:[#allocation2 + $0x230] sm:$0xff]
        %v5694 = vld [vmem:[#allocation2 + $0x238] sm:$0xff]
        %v5695 = vld [vmem:[#allocation2 + $0x240] sm:$0xff]
        %v5696 = vld [vmem:[#allocation2 + $0x248] sm:$0xff]
        %v5697 = vld [vmem:[#allocation2 + $0x250] sm:$0xff]
        %v5698 = vld [vmem:[#allocation2 + $0x258] sm:$0xff]
        %v5699 = vld [vmem:[#allocation2 + $0x260] sm:$0xff]
        %v5700 = vld [vmem:[#allocation2 + $0x268] sm:$0xff]
        %v5701 = vld [vmem:[#allocation2 + $0x270] sm:$0xff]
        %v5702 = vld [vmem:[#allocation2 + $0x278] sm:$0xff]
        %v5703 = vld [vmem:[#allocation2 + $0x280] sm:$0xff]
        %v5704 = vld [vmem:[#allocation2 + $0x288] sm:$0xff]
        %v5705 = vld [vmem:[#allocation2 + $0x290] sm:$0xff]
        %v5706 = vld [vmem:[#allocation2 + $0x298] sm:$0xff]
        %v5707 = vld [vmem:[#allocation2 + $0x2a0] sm:$0xff]
        %v5708 = vld [vmem:[#allocation2 + $0x2a8] sm:$0xff]
        %v5709 = vld [vmem:[#allocation2 + $0x2b0] sm:$0xff]
        %v5710 = vld [vmem:[#allocation2 + $0x2b8] sm:$0xff]
        %v5711 = vld [vmem:[#allocation2 + $0x2c0] sm:$0xff]
        %v5712 = vld [vmem:[#allocation2 + $0x2c8] sm:$0xff]
        %v5713 = vld [vmem:[#allocation2 + $0x2d0] sm:$0xff]
        %v5714 = vld [vmem:[#allocation2 + $0x2d8] sm:$0xff]
        %v5715 = vld [vmem:[#allocation2 + $0x2e0] sm:$0xff]
        %v5716 = vld [vmem:[#allocation2 + $0x2e8] sm:$0xff]
        %v5717 = vld [vmem:[#allocation2 + $0x2f0] sm:$0xff]
        %v5718 = vld [vmem:[#allocation2 + $0x2f8] sm:$0xff]
        %s5719 = scalar_lea.vmem %s249, 30
        %v5720 = vld [vmem:[%s5719] sm:$0x3f]
        %v5721 = vunpack.c.l.b16 %v5514
        %v5722 = vunpack.c.l.b16 %v5517
        %v5723 = vunpack.c.l.b16 %v5521
        %v5724 = vunpack.c.l.b16 %v5524
        %v5725 = vunpack.c.l.b16 %v5528
        %v5726 = vunpack.c.l.b16 %v5531
        %v5727 = vunpack.c.l.b16 %v5535
        %v5728 = vunpack.c.l.b16 %v5538
        %v5729 = vunpack.c.l.b16 %v5542
        %v5730 = vunpack.c.l.b16 %v5545
        %v5731 = vunpack.c.l.b16 %v5549
        %v5732 = vunpack.c.l.b16 %v5552
        %v5733 = vunpack.c.l.b16 %v5556
        %v5734 = vunpack.c.l.b16 %v5559
        %v5735 = vunpack.c.l.b16 %v5563
        %v5736 = vunpack.c.l.b16 %v5566
        %v5737 = vunpack.c.l.b16 %v5570
        %v5738 = vunpack.c.l.b16 %v5573
        %v5739 = vunpack.c.l.b16 %v5577
        %v5740 = vunpack.c.l.b16 %v5580
        %v5741 = vunpack.c.l.b16 %v5584
        %v5742 = vunpack.c.l.b16 %v5587
        %v5743 = vunpack.c.l.b16 %v5591
        %v5744 = vunpack.c.l.b16 %v5594
        %v5745 = vunpack.c.l.b16 %v5598
        %v5746 = vunpack.c.l.b16 %v5601
        %v5747 = vunpack.c.l.b16 %v5605
        %v5748 = vunpack.c.l.b16 %v5608
        %v5749 = vunpack.c.l.b16 %v5612
        %v5750 = vunpack.c.l.b16 %v5615
        %v5751 = vunpack.c.l.b16 %v5619
        %v5752 = vunpack.c.l.b16 %v5622
        %v5753 = vpack.c.b16 %v5722, %v5721
        %v5754 = vpack.c.b16 %v5724, %v5723
        %v5755 = vpack.c.b16 %v5726, %v5725
        %v5756 = vpack.c.b16 %v5728, %v5727
        %v5757 = vpack.c.b16 %v5730, %v5729
        %v5758 = vpack.c.b16 %v5732, %v5731
        %v5759 = vpack.c.b16 %v5734, %v5733
        %v5760 = vpack.c.b16 %v5736, %v5735
        %v5761 = vpack.c.b16 %v5738, %v5737
        %v5762 = vpack.c.b16 %v5740, %v5739
        %v5763 = vpack.c.b16 %v5742, %v5741
        %v5764 = vpack.c.b16 %v5744, %v5743
        %v5765 = vpack.c.b16 %v5746, %v5745
        %v5766 = vpack.c.b16 %v5748, %v5747
        %v5767 = vpack.c.b16 %v5750, %v5749
        %v5768 = vpack.c.b16 %v5752, %v5751
        %v5770 = vcombine.high %v5720, %v5720
        %v5772 = vunpack.c.l.s4 1983009808
        %v5773 = vunpack.c.0.s8 %v5772
        %v5774 = vlaneseq
        %v5775 = vshrl.u32 %v5774, 7
        %v5776 = vsub.s32 %v5773, %v5775
        %v5777 = vrot.slane %v5720, %v5776
        %v5779 = vunpack.c.l.s4 1983009808
        %v5780 = vunpack.c.0.s8 %v5779
        %v5781 = vlaneseq
        %v5782 = vshrl.u32 %v5781, 7
        %v5783 = vsub.s32 %v5780, %v5782
        %v5784 = vrot.slane %v5770, %v5783
        %v5785 = vcombine.high %v5777, %v5777
        %v5787 = vsel %vm602, %v5753, 0
        %v5790 = vsel %vm602, %v5754, 0
        %v5793 = vsel %vm602, %v5755, 0
        %v5796 = vsel %vm602, %v5756, 0
        %v5799 = vsel %vm602, %v5757, 0
        %v5802 = vsel %vm602, %v5758, 0
        %v5805 = vsel %vm602, %v5759, 0
        %v5808 = vsel %vm602, %v5760, 0
        %v5811 = vsel %vm602, %v5761, 0
        %v5814 = vsel %vm602, %v5762, 0
        %v5817 = vsel %vm602, %v5763, 0
        %v5820 = vsel %vm602, %v5764, 0
        %v5823 = vsel %vm602, %v5765, 0
        %v5826 = vsel %vm602, %v5766, 0
        %v5829 = vsel %vm602, %v5767, 0
        %v5832 = vsel %vm602, %v5768, 0
        %v5835 = vsel %vm651, %v5777, 0
        %v5838 = vsel %vm651, %v5785, 0
        %v5841 = vsel %vm651, %v5784, 0
        %5843 = vmatprep.subr.bf16.mxu0 %v5838
        %5844 = vmatpush1.bf16.msra.mxu0 %v5835
        %5845 = vmatprep.subr.bf16.mxu0 0
        %5846 = vmatpush1.bf16.msra.mxu0 0
        %5847 = vmatprep.subr.bf16.mxu0 0
        %5848 = vmatpush1.bf16.msra.mxu0 0
        %5849 = vmatprep.subr.bf16.mxu0 0
        %5850 = vmatpush1.bf16.msra.mxu0 0
        %5851 = vmatprep.subr.bf16.mxu0 0
        %5852 = vmatpush1.bf16.msra.mxu0 0
        %5853 = vmatprep.subr.bf16.mxu0 0
        %5854 = vmatpush1.bf16.msra.mxu0 0
        %5855 = vmatprep.subr.bf16.mxu0 0
        %5856 = vmatpush1.bf16.msra.mxu0 0
        %5857 = vmatprep.subr.bf16.mxu0 0
        %5858 = vmatpush1.bf16.msra.mxu0 0
        %5859 = vmatprep.subr.bf16.mxu0 0
        %5860 = vmatpush1.bf16.msra.mxu0 0
        %5861 = vmatprep.subr.bf16.mxu0 0
        %5862 = vmatpush1.bf16.msra.mxu0 0
        %5863 = vmatprep.subr.bf16.mxu0 0
        %5864 = vmatpush1.bf16.msra.mxu0 0
        %5865 = vmatprep.subr.bf16.mxu0 0
        %5866 = vmatpush1.bf16.msra.mxu0 0
        %5867 = vmatprep.subr.bf16.mxu0 0
        %5868 = vmatpush1.bf16.msra.mxu0 0
        %5869 = vmatprep.subr.bf16.mxu0 0
        %5870 = vmatpush1.bf16.msra.mxu0 0
        %5871 = vmatprep.subr.bf16.mxu0 0
        %5872 = vmatpush1.bf16.msra.mxu0 0
        %5873 = vmatprep.subr.bf16.mxu0 0
        %5874 = vmatpush1.bf16.msra.mxu0 0
        %5875 = vmatprep.mubr.bf16.mxu0 0
        %5876 = vmatmul.mubr.bf16.gmra.mrb[0].mxu0 %v5787
        %v5877 = vpop.f32.mrb[0].mxu0
        %v5878 = vadd.f32 0.0, %v5877
        %v5879 = vpop.f32.mrb[0].mxu0
        %v5880 = vadd.f32 0.0, %v5879
        %v5881 = vpop.f32.mrb[0].mxu0
        %v5882 = vadd.f32 0.0, %v5881
        %v5883 = vpop.f32.mrb[0].mxu0
        %v5884 = vadd.f32 0.0, %v5883
        %5885 = vmatprep.mubr.bf16.mxu0 0
        %5886 = vmatmul.mubr.bf16.gmra.mrb[0].mxu0 %v5790
        %v5887 = vpop.f32.mrb[0].mxu0
        %v5888 = vadd.f32 0.0, %v5887
        %v5889 = vpop.f32.mrb[0].mxu0
        %v5890 = vadd.f32 0.0, %v5889
        %v5891 = vpop.f32.mrb[0].mxu0
        %v5892 = vadd.f32 0.0, %v5891
        %v5893 = vpop.f32.mrb[0].mxu0
        %v5894 = vadd.f32 0.0, %v5893
        %5895 = vmatprep.mubr.bf16.mxu0 0
        %5896 = vmatmul.mubr.bf16.gmra.mrb[0].mxu0 %v5793
        %v5897 = vpop.f32.mrb[0].mxu0
        %v5898 = vadd.f32 0.0, %v5897
        %v5899 = vpop.f32.mrb[0].mxu0
        %v5900 = vadd.f32 0.0, %v5899
        %v5901 = vpop.f32.mrb[0].mxu0
        %v5902 = vadd.f32 0.0, %v5901
        %v5903 = vpop.f32.mrb[0].mxu0
        %v5904 = vadd.f32 0.0, %v5903
        %5905 = vmatprep.mubr.bf16.mxu0 0
        %5906 = vmatmul.mubr.bf16.gmra.mrb[0].mxu0 %v5796
        %v5907 = vpop.f32.mrb[0].mxu0
        %v5908 = vadd.f32 0.0, %v5907
        %v5909 = vpop.f32.mrb[0].mxu0
        %v5910 = vadd.f32 0.0, %v5909
        %v5911 = vpop.f32.mrb[0].mxu0
        %v5912 = vadd.f32 0.0, %v5911
        %v5913 = vpop.f32.mrb[0].mxu0
        %v5914 = vadd.f32 0.0, %v5913
        %5915 = vmatprep.mubr.bf16.mxu0 0
        %5916 = vmatmul.mubr.bf16.gmra.mrb[0].mxu0 %v5799
        %v5917 = vpop.f32.mrb[0].mxu0
        %v5918 = vadd.f32 0.0, %v5917
        %v5919 = vpop.f32.mrb[0].mxu0
        %v5920 = vadd.f32 0.0, %v5919
        %v5921 = vpop.f32.mrb[0].mxu0
        %v5922 = vadd.f32 0.0, %v5921
        %v5923 = vpop.f32.mrb[0].mxu0
        %v5924 = vadd.f32 0.0, %v5923
        %5925 = vmatprep.mubr.bf16.mxu0 0
        %5926 = vmatmul.mubr.bf16.gmra.mrb[0].mxu0 %v5802
        %v5927 = vpop.f32.mrb[0].mxu0
        %v5928 = vadd.f32 0.0, %v5927
        %v5929 = vpop.f32.mrb[0].mxu0
        %v5930 = vadd.f32 0.0, %v5929
        %v5931 = vpop.f32.mrb[0].mxu0
        %v5932 = vadd.f32 0.0, %v5931
        %v5933 = vpop.f32.mrb[0].mxu0
        %v5934 = vadd.f32 0.0, %v5933
        %5935 = vmatprep.mubr.bf16.mxu0 0
        %5936 = vmatmul.mubr.bf16.gmra.mrb[0].mxu0 %v5805
        %v5937 = vpop.f32.mrb[0].mxu0
        %v5938 = vadd.f32 0.0, %v5937
        %v5939 = vpop.f32.mrb[0].mxu0
        %v5940 = vadd.f32 0.0, %v5939
        %v5941 = vpop.f32.mrb[0].mxu0
        %v5942 = vadd.f32 0.0, %v5941
        %v5943 = vpop.f32.mrb[0].mxu0
        %v5944 = vadd.f32 0.0, %v5943
        %5945 = vmatprep.mubr.bf16.mxu0 0
        %5946 = vmatmul.mubr.bf16.gmra.mrb[0].mxu0 %v5808
        %v5947 = vpop.f32.mrb[0].mxu0
        %v5948 = vadd.f32 0.0, %v5947
        %v5949 = vpop.f32.mrb[0].mxu0
        %v5950 = vadd.f32 0.0, %v5949
        %v5951 = vpop.f32.mrb[0].mxu0
        %v5952 = vadd.f32 0.0, %v5951
        %v5953 = vpop.f32.mrb[0].mxu0
        %v5954 = vadd.f32 0.0, %v5953
        %5955 = vmatprep.mubr.bf16.mxu0 0
        %5956 = vmatmul.mubr.bf16.gmra.mrb[0].mxu0 %v5811
        %v5957 = vpop.f32.mrb[0].mxu0
        %v5958 = vadd.f32 0.0, %v5957
        %v5959 = vpop.f32.mrb[0].mxu0
        %v5960 = vadd.f32 0.0, %v5959
        %v5961 = vpop.f32.mrb[0].mxu0
        %v5962 = vadd.f32 0.0, %v5961
        %v5963 = vpop.f32.mrb[0].mxu0
        %v5964 = vadd.f32 0.0, %v5963
        %5965 = vmatprep.mubr.bf16.mxu0 0
        %5966 = vmatmul.mubr.bf16.gmra.mrb[0].mxu0 %v5814
        %v5967 = vpop.f32.mrb[0].mxu0
        %v5968 = vadd.f32 0.0, %v5967
        %v5969 = vpop.f32.mrb[0].mxu0
        %v5970 = vadd.f32 0.0, %v5969
        %v5971 = vpop.f32.mrb[0].mxu0
        %v5972 = vadd.f32 0.0, %v5971
        %v5973 = vpop.f32.mrb[0].mxu0
        %v5974 = vadd.f32 0.0, %v5973
        %5975 = vmatprep.mubr.bf16.mxu0 0
        %5976 = vmatmul.mubr.bf16.gmra.mrb[0].mxu0 %v5817
        %v5977 = vpop.f32.mrb[0].mxu0
        %v5978 = vadd.f32 0.0, %v5977
        %v5979 = vpop.f32.mrb[0].mxu0
        %v5980 = vadd.f32 0.0, %v5979
        %v5981 = vpop.f32.mrb[0].mxu0
        %v5982 = vadd.f32 0.0, %v5981
        %v5983 = vpop.f32.mrb[0].mxu0
        %v5984 = vadd.f32 0.0, %v5983
        %5985 = vmatprep.mubr.bf16.mxu0 0
        %5986 = vmatmul.mubr.bf16.gmra.mrb[0].mxu0 %v5820
        %v5987 = vpop.f32.mrb[0].mxu0
        %v5988 = vadd.f32 0.0, %v5987
        %v5989 = vpop.f32.mrb[0].mxu0
        %v5990 = vadd.f32 0.0, %v5989
        %v5991 = vpop.f32.mrb[0].mxu0
        %v5992 = vadd.f32 0.0, %v5991
        %v5993 = vpop.f32.mrb[0].mxu0
        %v5994 = vadd.f32 0.0, %v5993
        %5995 = vmatprep.mubr.bf16.mxu0 0
        %5996 = vmatmul.mubr.bf16.gmra.mrb[0].mxu0 %v5823
        %v5997 = vpop.f32.mrb[0].mxu0
        %v5998 = vadd.f32 0.0, %v5997
        %v5999 = vpop.f32.mrb[0].mxu0
        %v6000 = vadd.f32 0.0, %v5999
        %v6001 = vpop.f32.mrb[0].mxu0
        %v6002 = vadd.f32 0.0, %v6001
        %v6003 = vpop.f32.mrb[0].mxu0
        %v6004 = vadd.f32 0.0, %v6003
        %6005 = vmatprep.mubr.bf16.mxu0 0
        %6006 = vmatmul.mubr.bf16.gmra.mrb[0].mxu0 %v5826
        %v6007 = vpop.f32.mrb[0].mxu0
        %v6008 = vadd.f32 0.0, %v6007
        %v6009 = vpop.f32.mrb[0].mxu0
        %v6010 = vadd.f32 0.0, %v6009
        %v6011 = vpop.f32.mrb[0].mxu0
        %v6012 = vadd.f32 0.0, %v6011
        %v6013 = vpop.f32.mrb[0].mxu0
        %v6014 = vadd.f32 0.0, %v6013
        %6015 = vmatprep.mubr.bf16.mxu0 0
        %6016 = vmatmul.mubr.bf16.gmra.mrb[0].mxu0 %v5829
        %v6017 = vpop.f32.mrb[0].mxu0
        %v6018 = vadd.f32 0.0, %v6017
        %v6019 = vpop.f32.mrb[0].mxu0
        %v6020 = vadd.f32 0.0, %v6019
        %v6021 = vpop.f32.mrb[0].mxu0
        %v6022 = vadd.f32 0.0, %v6021
        %v6023 = vpop.f32.mrb[0].mxu0
        %v6024 = vadd.f32 0.0, %v6023
        %6025 = vmatprep.mubr.bf16.mxu0 0
        %6026 = vmatmul.mubr.bf16.gmra.mrb[0].mxu0 %v5832
        %v6027 = vpop.f32.mrb[0].mxu0
        %v6028 = vadd.f32 0.0, %v6027
        %v6029 = vpop.f32.mrb[0].mxu0
        %v6030 = vadd.f32 0.0, %v6029
        %v6031 = vpop.f32.mrb[0].mxu0
        %v6032 = vadd.f32 0.0, %v6031
        %v6033 = vpop.f32.mrb[0].mxu0
        %v6034 = vadd.f32 0.0, %v6033
        %6035 = vdwg.mxu0
        %6036 = vmatprep.subr.bf16.mxu0 0
        %6037 = vmatpush1.bf16.msra.mxu0 %v5841
        %6038 = vmatprep.subr.bf16.mxu0 0
        %6039 = vmatpush1.bf16.msra.mxu0 0
        %6040 = vmatprep.subr.bf16.mxu0 0
        %6041 = vmatpush1.bf16.msra.mxu0 0
        %6042 = vmatprep.subr.bf16.mxu0 0
        %6043 = vmatpush1.bf16.msra.mxu0 0
        %6044 = vmatprep.subr.bf16.mxu0 0
        %6045 = vmatpush1.bf16.msra.mxu0 0
        %6046 = vmatprep.subr.bf16.mxu0 0
        %6047 = vmatpush1.bf16.msra.mxu0 0
        %6048 = vmatprep.subr.bf16.mxu0 0
        %6049 = vmatpush1.bf16.msra.mxu0 0
        %6050 = vmatprep.subr.bf16.mxu0 0
        %6051 = vmatpush1.bf16.msra.mxu0 0
        %6052 = vmatprep.subr.bf16.mxu0 0
        %6053 = vmatpush1.bf16.msra.mxu0 0
        %6054 = vmatprep.subr.bf16.mxu0 0
        %6055 = vmatpush1.bf16.msra.mxu0 0
        %6056 = vmatprep.subr.bf16.mxu0 0
        %6057 = vmatpush1.bf16.msra.mxu0 0
        %6058 = vmatprep.subr.bf16.mxu0 0
        %6059 = vmatpush1.bf16.msra.mxu0 0
        %6060 = vmatprep.subr.bf16.mxu0 0
        %6061 = vmatpush1.bf16.msra.mxu0 0
        %6062 = vmatprep.subr.bf16.mxu0 0
        %6063 = vmatpush1.bf16.msra.mxu0 0
        %6064 = vmatprep.subr.bf16.mxu0 0
        %6065 = vmatpush1.bf16.msra.mxu0 0
        %6066 = vmatprep.subr.bf16.mxu0 0
        %6067 = vmatpush1.bf16.msra.mxu0 0
        %6068 = vmatprep.mubr.bf16.mxu0 0
        %6069 = vmatmul.mubr.bf16.gmra.mrb[0].mxu0 %v5787
        %v6070 = vpop.f32.mrb[0].mxu0
        %v6071 = vadd.f32 0.0, %v6070
        %v6072 = vpop.f32.mrb[0].mxu0
        %v6073 = vpop.f32.mrb[0].mxu0
        %v6074 = vadd.f32 0.0, %v6073
        %v6075 = vpop.f32.mrb[0].mxu0
        %6076 = vmatprep.mubr.bf16.mxu0 0
        %6077 = vmatmul.mubr.bf16.gmra.mrb[0].mxu0 %v5790
        %v6078 = vpop.f32.mrb[0].mxu0
        %v6079 = vadd.f32 0.0, %v6078
        %v6080 = vpop.f32.mrb[0].mxu0
        %v6081 = vpop.f32.mrb[0].mxu0
        %v6082 = vadd.f32 0.0, %v6081
        %v6083 = vpop.f32.mrb[0].mxu0
        %6084 = vmatprep.mubr.bf16.mxu0 0
        %6085 = vmatmul.mubr.bf16.gmra.mrb[0].mxu0 %v5793
        %v6086 = vpop.f32.mrb[0].mxu0
        %v6087 = vadd.f32 0.0, %v6086
        %v6088 = vpop.f32.mrb[0].mxu0
        %v6089 = vpop.f32.mrb[0].mxu0
        %v6090 = vadd.f32 0.0, %v6089
        %v6091 = vpop.f32.mrb[0].mxu0
        %6092 = vmatprep.mubr.bf16.mxu0 0
        %6093 = vmatmul.mubr.bf16.gmra.mrb[0].mxu0 %v5796
        %v6094 = vpop.f32.mrb[0].mxu0
        %v6095 = vadd.f32 0.0, %v6094
        %v6096 = vpop.f32.mrb[0].mxu0
        %v6097 = vpop.f32.mrb[0].mxu0
        %v6098 = vadd.f32 0.0, %v6097
        %v6099 = vpop.f32.mrb[0].mxu0
        %6100 = vmatprep.mubr.bf16.mxu0 0
        %6101 = vmatmul.mubr.bf16.gmra.mrb[0].mxu0 %v5799
        %v6102 = vpop.f32.mrb[0].mxu0
        %v6103 = vadd.f32 0.0, %v6102
        %v6104 = vpop.f32.mrb[0].mxu0
        %v6105 = vpop.f32.mrb[0].mxu0
        %v6106 = vadd.f32 0.0, %v6105
        %v6107 = vpop.f32.mrb[0].mxu0
        %6108 = vmatprep.mubr.bf16.mxu0 0
        %6109 = vmatmul.mubr.bf16.gmra.mrb[0].mxu0 %v5802
        %v6110 = vpop.f32.mrb[0].mxu0
        %v6111 = vadd.f32 0.0, %v6110
        %v6112 = vpop.f32.mrb[0].mxu0
        %v6113 = vpop.f32.mrb[0].mxu0
        %v6114 = vadd.f32 0.0, %v6113
        %v6115 = vpop.f32.mrb[0].mxu0
        %6116 = vmatprep.mubr.bf16.mxu0 0
        %6117 = vmatmul.mubr.bf16.gmra.mrb[0].mxu0 %v5805
        %v6118 = vpop.f32.mrb[0].mxu0
        %v6119 = vadd.f32 0.0, %v6118
        %v6120 = vpop.f32.mrb[0].mxu0
        %v6121 = vpop.f32.mrb[0].mxu0
        %v6122 = vadd.f32 0.0, %v6121
        %v6123 = vpop.f32.mrb[0].mxu0
        %6124 = vmatprep.mubr.bf16.mxu0 0
        %6125 = vmatmul.mubr.bf16.gmra.mrb[0].mxu0 %v5808
        %v6126 = vpop.f32.mrb[0].mxu0
        %v6127 = vadd.f32 0.0, %v6126
        %v6128 = vpop.f32.mrb[0].mxu0
        %v6129 = vpop.f32.mrb[0].mxu0
        %v6130 = vadd.f32 0.0, %v6129
        %v6131 = vpop.f32.mrb[0].mxu0
        %6132 = vmatprep.mubr.bf16.mxu0 0
        %6133 = vmatmul.mubr.bf16.gmra.mrb[0].mxu0 %v5811
        %v6134 = vpop.f32.mrb[0].mxu0
        %v6135 = vadd.f32 0.0, %v6134
        %v6136 = vpop.f32.mrb[0].mxu0
        %v6137 = vpop.f32.mrb[0].mxu0
        %v6138 = vadd.f32 0.0, %v6137
        %v6139 = vpop.f32.mrb[0].mxu0
        %6140 = vmatprep.mubr.bf16.mxu0 0
        %6141 = vmatmul.mubr.bf16.gmra.mrb[0].mxu0 %v5814
        %v6142 = vpop.f32.mrb[0].mxu0
        %v6143 = vadd.f32 0.0, %v6142
        %v6144 = vpop.f32.mrb[0].mxu0
        %v6145 = vpop.f32.mrb[0].mxu0
        %v6146 = vadd.f32 0.0, %v6145
        %v6147 = vpop.f32.mrb[0].mxu0
        %6148 = vmatprep.mubr.bf16.mxu0 0
        %6149 = vmatmul.mubr.bf16.gmra.mrb[0].mxu0 %v5817
        %v6150 = vpop.f32.mrb[0].mxu0
        %v6151 = vadd.f32 0.0, %v6150
        %v6152 = vpop.f32.mrb[0].mxu0
        %v6153 = vpop.f32.mrb[0].mxu0
        %v6154 = vadd.f32 0.0, %v6153
        %v6155 = vpop.f32.mrb[0].mxu0
        %6156 = vmatprep.mubr.bf16.mxu0 0
        %6157 = vmatmul.mubr.bf16.gmra.mrb[0].mxu0 %v5820
        %v6158 = vpop.f32.mrb[0].mxu0
        %v6159 = vadd.f32 0.0, %v6158
        %v6160 = vpop.f32.mrb[0].mxu0
        %v6161 = vpop.f32.mrb[0].mxu0
        %v6162 = vadd.f32 0.0, %v6161
        %v6163 = vpop.f32.mrb[0].mxu0
        %6164 = vmatprep.mubr.bf16.mxu0 0
        %6165 = vmatmul.mubr.bf16.gmra.mrb[0].mxu0 %v5823
        %v6166 = vpop.f32.mrb[0].mxu0
        %v6167 = vadd.f32 0.0, %v6166
        %v6168 = vpop.f32.mrb[0].mxu0
        %v6169 = vpop.f32.mrb[0].mxu0
        %v6170 = vadd.f32 0.0, %v6169
        %v6171 = vpop.f32.mrb[0].mxu0
        %6172 = vmatprep.mubr.bf16.mxu0 0
        %6173 = vmatmul.mubr.bf16.gmra.mrb[0].mxu0 %v5826
        %v6174 = vpop.f32.mrb[0].mxu0
        %v6175 = vadd.f32 0.0, %v6174
        %v6176 = vpop.f32.mrb[0].mxu0
        %v6177 = vpop.f32.mrb[0].mxu0
        %v6178 = vadd.f32 0.0, %v6177
        %v6179 = vpop.f32.mrb[0].mxu0
        %6180 = vmatprep.mubr.bf16.mxu0 0
        %6181 = vmatmul.mubr.bf16.gmra.mrb[0].mxu0 %v5829
        %v6182 = vpop.f32.mrb[0].mxu0
        %v6183 = vadd.f32 0.0, %v6182
        %v6184 = vpop.f32.mrb[0].mxu0
        %v6185 = vpop.f32.mrb[0].mxu0
        %v6186 = vadd.f32 0.0, %v6185
        %v6187 = vpop.f32.mrb[0].mxu0
        %6188 = vmatprep.mubr.bf16.mxu0 0
        %6189 = vmatmul.mubr.bf16.gmra.mrb[0].mxu0 %v5832
        %v6190 = vpop.f32.mrb[0].mxu0
        %v6191 = vadd.f32 0.0, %v6190
        %v6192 = vpop.f32.mrb[0].mxu0
        %v6193 = vpop.f32.mrb[0].mxu0
        %v6194 = vadd.f32 0.0, %v6193
        %v6195 = vpop.f32.mrb[0].mxu0
        %6196 = vdwg.mxu0
        %v6197 = vadd.f32 %v5623, %v5878
        %v6198 = vadd.f32 %v5624, %v5880
        %v6199 = vadd.f32 %v5625, %v6071
        %v6200 = vadd.f32 %v5626, %v5882
        %v6201 = vadd.f32 %v5627, %v5884
        %v6202 = vadd.f32 %v5628, %v6074
        %v6203 = vadd.f32 %v5629, %v5888
        %v6204 = vadd.f32 %v5630, %v5890
        %v6205 = vadd.f32 %v5631, %v6079
        %v6206 = vadd.f32 %v5632, %v5892
        %v6207 = vadd.f32 %v5633, %v5894
        %v6208 = vadd.f32 %v5634, %v6082
        %v6209 = vadd.f32 %v5635, %v5898
        %v6210 = vadd.f32 %v5636, %v5900
        %v6211 = vadd.f32 %v5637, %v6087
        %v6212 = vadd.f32 %v5638, %v5902
        %v6213 = vadd.f32 %v5639, %v5904
        %v6214 = vadd.f32 %v5640, %v6090
        %v6215 = vadd.f32 %v5641, %v5908
        %v6216 = vadd.f32 %v5642, %v5910
        %v6217 = vadd.f32 %v5643, %v6095
        %v6218 = vadd.f32 %v5644, %v5912
        %v6219 = vadd.f32 %v5645, %v5914
        %v6220 = vadd.f32 %v5646, %v6098
        %v6221 = vadd.f32 %v5647, %v5918
        %v6222 = vadd.f32 %v5648, %v5920
        %v6223 = vadd.f32 %v5649, %v6103
        %v6224 = vadd.f32 %v5650, %v5922
        %v6225 = vadd.f32 %v5651, %v5924
        %v6226 = vadd.f32 %v5652, %v6106
        %v6227 = vadd.f32 %v5653, %v5928
        %v6228 = vadd.f32 %v5654, %v5930
        %v6229 = vadd.f32 %v5655, %v6111
        %v6230 = vadd.f32 %v5656, %v5932
        %v6231 = vadd.f32 %v5657, %v5934
        %v6232 = vadd.f32 %v5658, %v6114
        %v6233 = vadd.f32 %v5659, %v5938
        %v6234 = vadd.f32 %v5660, %v5940
        %v6235 = vadd.f32 %v5661, %v6119
        %v6236 = vadd.f32 %v5662, %v5942
        %v6237 = vadd.f32 %v5663, %v5944
        %v6238 = vadd.f32 %v5664, %v6122
        %v6239 = vadd.f32 %v5665, %v5948
        %v6240 = vadd.f32 %v5666, %v5950
        %v6241 = vadd.f32 %v5667, %v6127
        %v6242 = vadd.f32 %v5668, %v5952
        %v6243 = vadd.f32 %v5669, %v5954
        %v6244 = vadd.f32 %v5670, %v6130
        %v6245 = vadd.f32 %v5671, %v5958
        %v6246 = vadd.f32 %v5672, %v5960
        %v6247 = vadd.f32 %v5673, %v6135
        %v6248 = vadd.f32 %v5674, %v5962
        %v6249 = vadd.f32 %v5675, %v5964
        %v6250 = vadd.f32 %v5676, %v6138
        %v6251 = vadd.f32 %v5677, %v5968
        %v6252 = vadd.f32 %v5678, %v5970
        %v6253 = vadd.f32 %v5679, %v6143
        %v6254 = vadd.f32 %v5680, %v5972
        %v6255 = vadd.f32 %v5681, %v5974
        %v6256 = vadd.f32 %v5682, %v6146
        %v6257 = vadd.f32 %v5683, %v5978
        %v6258 = vadd.f32 %v5684, %v5980
        %v6259 = vadd.f32 %v5685, %v6151
        %v6260 = vadd.f32 %v5686, %v5982
        %v6261 = vadd.f32 %v5687, %v5984
        %v6262 = vadd.f32 %v5688, %v6154
        %v6263 = vadd.f32 %v5689, %v5988
        %v6264 = vadd.f32 %v5690, %v5990
        %v6265 = vadd.f32 %v5691, %v6159
        %v6266 = vadd.f32 %v5692, %v5992
        %v6267 = vadd.f32 %v5693, %v5994
        %v6268 = vadd.f32 %v5694, %v6162
        %v6269 = vadd.f32 %v5695, %v5998
        %v6270 = vadd.f32 %v5696, %v6000
        %v6271 = vadd.f32 %v5697, %v6167
        %v6272 = vadd.f32 %v5698, %v6002
        %v6273 = vadd.f32 %v5699, %v6004
        %v6274 = vadd.f32 %v5700, %v6170
        %v6275 = vadd.f32 %v5701, %v6008
        %v6276 = vadd.f32 %v5702, %v6010
        %v6277 = vadd.f32 %v5703, %v6175
        %v6278 = vadd.f32 %v5704, %v6012
        %v6279 = vadd.f32 %v5705, %v6014
        %v6280 = vadd.f32 %v5706, %v6178
        %v6281 = vadd.f32 %v5707, %v6018
        %v6282 = vadd.f32 %v5708, %v6020
        %v6283 = vadd.f32 %v5709, %v6183
        %v6284 = vadd.f32 %v5710, %v6022
        %v6285 = vadd.f32 %v5711, %v6024
        %v6286 = vadd.f32 %v5712, %v6186
        %v6287 = vadd.f32 %v5713, %v6028
        %v6288 = vadd.f32 %v5714, %v6030
        %v6289 = vadd.f32 %v5715, %v6191
        %v6290 = vadd.f32 %v5716, %v6032
        %v6291 = vadd.f32 %v5717, %v6034
        %v6292 = vadd.f32 %v5718, %v6194
        %6293 = vst [vmem:[#allocation2] sm:$0xff] %v6197
        %6294 = vst [vmem:[#allocation2 + $0x8] sm:$0xff] %v6198
        %6295 = vst.msk [vmem:[#allocation2 + $0x10] sm:$0xff] %vm1113, %v6199
        %6296 = vst [vmem:[#allocation2 + $0x18] sm:$0xff] %v6200
        %6297 = vst [vmem:[#allocation2 + $0x20] sm:$0xff] %v6201
        %6298 = vst.msk [vmem:[#allocation2 + $0x28] sm:$0xff] %vm1113, %v6202
        %6299 = vst [vmem:[#allocation2 + $0x30] sm:$0xff] %v6203
        %6300 = vst [vmem:[#allocation2 + $0x38] sm:$0xff] %v6204
        %6301 = vst.msk [vmem:[#allocation2 + $0x40] sm:$0xff] %vm1113, %v6205
        %6302 = vst [vmem:[#allocation2 + $0x48] sm:$0xff] %v6206
        %6303 = vst [vmem:[#allocation2 + $0x50] sm:$0xff] %v6207
        %6304 = vst.msk [vmem:[#allocation2 + $0x58] sm:$0xff] %vm1113, %v6208
        %6305 = vst [vmem:[#allocation2 + $0x60] sm:$0xff] %v6209
        %6306 = vst [vmem:[#allocation2 + $0x68] sm:$0xff] %v6210
        %6307 = vst.msk [vmem:[#allocation2 + $0x70] sm:$0xff] %vm1113, %v6211
        %6308 = vst [vmem:[#allocation2 + $0x78] sm:$0xff] %v6212
        %6309 = vst [vmem:[#allocation2 + $0x80] sm:$0xff] %v6213
        %6310 = vst.msk [vmem:[#allocation2 + $0x88] sm:$0xff] %vm1113, %v6214
        %6311 = vst [vmem:[#allocation2 + $0x90] sm:$0xff] %v6215
        %6312 = vst [vmem:[#allocation2 + $0x98] sm:$0xff] %v6216
        %6313 = vst.msk [vmem:[#allocation2 + $0xa0] sm:$0xff] %vm1113, %v6217
        %6314 = vst [vmem:[#allocation2 + $0xa8] sm:$0xff] %v6218
        %6315 = vst [vmem:[#allocation2 + $0xb0] sm:$0xff] %v6219
        %6316 = vst.msk [vmem:[#allocation2 + $0xb8] sm:$0xff] %vm1113, %v6220
        %6317 = vst [vmem:[#allocation2 + $0xc0] sm:$0xff] %v6221
        %6318 = vst [vmem:[#allocation2 + $0xc8] sm:$0xff] %v6222
        %6319 = vst.msk [vmem:[#allocation2 + $0xd0] sm:$0xff] %vm1113, %v6223
        %6320 = vst [vmem:[#allocation2 + $0xd8] sm:$0xff] %v6224
        %6321 = vst [vmem:[#allocation2 + $0xe0] sm:$0xff] %v6225
        %6322 = vst.msk [vmem:[#allocation2 + $0xe8] sm:$0xff] %vm1113, %v6226
        %6323 = vst [vmem:[#allocation2 + $0xf0] sm:$0xff] %v6227
        %6324 = vst [vmem:[#allocation2 + $0xf8] sm:$0xff] %v6228
        %6325 = vst.msk [vmem:[#allocation2 + $0x100] sm:$0xff] %vm1113, %v6229
        %6326 = vst [vmem:[#allocation2 + $0x108] sm:$0xff] %v6230
        %6327 = vst [vmem:[#allocation2 + $0x110] sm:$0xff] %v6231
        %6328 = vst.msk [vmem:[#allocation2 + $0x118] sm:$0xff] %vm1113, %v6232
        %6329 = vst [vmem:[#allocation2 + $0x120] sm:$0xff] %v6233
        %6330 = vst [vmem:[#allocation2 + $0x128] sm:$0xff] %v6234
        %6331 = vst.msk [vmem:[#allocation2 + $0x130] sm:$0xff] %vm1113, %v6235
        %6332 = vst [vmem:[#allocation2 + $0x138] sm:$0xff] %v6236
        %6333 = vst [vmem:[#allocation2 + $0x140] sm:$0xff] %v6237
        %6334 = vst.msk [vmem:[#allocation2 + $0x148] sm:$0xff] %vm1113, %v6238
        %6335 = vst [vmem:[#allocation2 + $0x150] sm:$0xff] %v6239
        %6336 = vst [vmem:[#allocation2 + $0x158] sm:$0xff] %v6240
        %6337 = vst.msk [vmem:[#allocation2 + $0x160] sm:$0xff] %vm1113, %v6241
        %6338 = vst [vmem:[#allocation2 + $0x168] sm:$0xff] %v6242
        %6339 = vst [vmem:[#allocation2 + $0x170] sm:$0xff] %v6243
        %6340 = vst.msk [vmem:[#allocation2 + $0x178] sm:$0xff] %vm1113, %v6244
        %6341 = vst [vmem:[#allocation2 + $0x180] sm:$0xff] %v6245
        %6342 = vst [vmem:[#allocation2 + $0x188] sm:$0xff] %v6246
        %6343 = vst.msk [vmem:[#allocation2 + $0x190] sm:$0xff] %vm1113, %v6247
        %6344 = vst [vmem:[#allocation2 + $0x198] sm:$0xff] %v6248
        %6345 = vst [vmem:[#allocation2 + $0x1a0] sm:$0xff] %v6249
        %6346 = vst.msk [vmem:[#allocation2 + $0x1a8] sm:$0xff] %vm1113, %v6250
        %6347 = vst [vmem:[#allocation2 + $0x1b0] sm:$0xff] %v6251
        %6348 = vst [vmem:[#allocation2 + $0x1b8] sm:$0xff] %v6252
        %6349 = vst.msk [vmem:[#allocation2 + $0x1c0] sm:$0xff] %vm1113, %v6253
        %6350 = vst [vmem:[#allocation2 + $0x1c8] sm:$0xff] %v6254
        %6351 = vst [vmem:[#allocation2 + $0x1d0] sm:$0xff] %v6255
        %6352 = vst.msk [vmem:[#allocation2 + $0x1d8] sm:$0xff] %vm1113, %v6256
        %6353 = vst [vmem:[#allocation2 + $0x1e0] sm:$0xff] %v6257
        %6354 = vst [vmem:[#allocation2 + $0x1e8] sm:$0xff] %v6258
        %6355 = vst.msk [vmem:[#allocation2 + $0x1f0] sm:$0xff] %vm1113, %v6259
        %6356 = vst [vmem:[#allocation2 + $0x1f8] sm:$0xff] %v6260
        %6357 = vst [vmem:[#allocation2 + $0x200] sm:$0xff] %v6261
        %6358 = vst.msk [vmem:[#allocation2 + $0x208] sm:$0xff] %vm1113, %v6262
        %6359 = vst [vmem:[#allocation2 + $0x210] sm:$0xff] %v6263
        %6360 = vst [vmem:[#allocation2 + $0x218] sm:$0xff] %v6264
        %6361 = vst.msk [vmem:[#allocation2 + $0x220] sm:$0xff] %vm1113, %v6265
        %6362 = vst [vmem:[#allocation2 + $0x228] sm:$0xff] %v6266
        %6363 = vst [vmem:[#allocation2 + $0x230] sm:$0xff] %v6267
        %6364 = vst.msk [vmem:[#allocation2 + $0x238] sm:$0xff] %vm1113, %v6268
        %6365 = vst [vmem:[#allocation2 + $0x240] sm:$0xff] %v6269
        %6366 = vst [vmem:[#allocation2 + $0x248] sm:$0xff] %v6270
        %6367 = vst.msk [vmem:[#allocation2 + $0x250] sm:$0xff] %vm1113, %v6271
        %6368 = vst [vmem:[#allocation2 + $0x258] sm:$0xff] %v6272
        %6369 = vst [vmem:[#allocation2 + $0x260] sm:$0xff] %v6273
        %6370 = vst.msk [vmem:[#allocation2 + $0x268] sm:$0xff] %vm1113, %v6274
        %6371 = vst [vmem:[#allocation2 + $0x270] sm:$0xff] %v6275
        %6372 = vst [vmem:[#allocation2 + $0x278] sm:$0xff] %v6276
        %6373 = vst.msk [vmem:[#allocation2 + $0x280] sm:$0xff] %vm1113, %v6277
        %6374 = vst [vmem:[#allocation2 + $0x288] sm:$0xff] %v6278
        %6375 = vst [vmem:[#allocation2 + $0x290] sm:$0xff] %v6279
        %6376 = vst.msk [vmem:[#allocation2 + $0x298] sm:$0xff] %vm1113, %v6280
        %6377 = vst [vmem:[#allocation2 + $0x2a0] sm:$0xff] %v6281
        %6378 = vst [vmem:[#allocation2 + $0x2a8] sm:$0xff] %v6282
        %6379 = vst.msk [vmem:[#allocation2 + $0x2b0] sm:$0xff] %vm1113, %v6283
        %6380 = vst [vmem:[#allocation2 + $0x2b8] sm:$0xff] %v6284
        %6381 = vst [vmem:[#allocation2 + $0x2c0] sm:$0xff] %v6285
        %6382 = vst.msk [vmem:[#allocation2 + $0x2c8] sm:$0xff] %vm1113, %v6286
        %6383 = vst [vmem:[#allocation2 + $0x2d0] sm:$0xff] %v6287
        %6384 = vst [vmem:[#allocation2 + $0x2d8] sm:$0xff] %v6288
        %6385 = vst.msk [vmem:[#allocation2 + $0x2e0] sm:$0xff] %vm1113, %v6289
        %6386 = vst [vmem:[#allocation2 + $0x2e8] sm:$0xff] %v6290
        %6387 = vst [vmem:[#allocation2 + $0x2f0] sm:$0xff] %v6291
        %6388 = vst.msk [vmem:[#allocation2 + $0x2f8] sm:$0xff] %vm1113, %v6292
        %s6389 = scalar_lea.vmem %s240, 24
        %v6390 = vld [vmem:[%s6389] sm:$0xf]
        %v6391 = vld [vmem:[%s6389 + $0x4] sm:$0xf]
        %v6392 = vld [vmem:[%s6389 + $0xc] sm:$0xf]
        %v6393 = vld [vmem:[%s6389 + $0x10] sm:$0xf]
        %v6394 = vld [vmem:[%s6389 + $0x18] sm:$0xf]
        %v6395 = vld [vmem:[%s6389 + $0x1c] sm:$0xf]
        %v6396 = vld [vmem:[%s6389 + $0x24] sm:$0xf]
        %v6397 = vld [vmem:[%s6389 + $0x28] sm:$0xf]
        %v6398 = vld [vmem:[%s6389 + $0x30] sm:$0xf]
        %v6399 = vld [vmem:[%s6389 + $0x34] sm:$0xf]
        %v6400 = vld [vmem:[%s6389 + $0x3c] sm:$0xf]
        %v6401 = vld [vmem:[%s6389 + $0x40] sm:$0xf]
        %v6402 = vld [vmem:[%s6389 + $0x48] sm:$0xf]
        %v6403 = vld [vmem:[%s6389 + $0x4c] sm:$0xf]
        %v6404 = vld [vmem:[%s6389 + $0x54] sm:$0xf]
        %v6405 = vld [vmem:[%s6389 + $0x58] sm:$0xf]
        %v6406 = vld [vmem:[%s6389 + $0x60] sm:$0xf]
        %v6407 = vld [vmem:[%s6389 + $0x64] sm:$0xf]
        %v6408 = vld [vmem:[%s6389 + $0x6c] sm:$0xf]
        %v6409 = vld [vmem:[%s6389 + $0x70] sm:$0xf]
        %v6410 = vld [vmem:[%s6389 + $0x78] sm:$0xf]
        %v6411 = vld [vmem:[%s6389 + $0x7c] sm:$0xf]
        %v6412 = vld [vmem:[%s6389 + $0x84] sm:$0xf]
        %v6413 = vld [vmem:[%s6389 + $0x88] sm:$0xf]
        %v6414 = vld [vmem:[%s6389 + $0x90] sm:$0xf]
        %v6415 = vld [vmem:[%s6389 + $0x94] sm:$0xf]
        %v6416 = vld [vmem:[%s6389 + $0x9c] sm:$0xf]
        %v6417 = vld [vmem:[%s6389 + $0xa0] sm:$0xf]
        %v6418 = vld [vmem:[%s6389 + $0xa8] sm:$0xf]
        %v6419 = vld [vmem:[%s6389 + $0xac] sm:$0xf]
        %v6420 = vld [vmem:[%s6389 + $0xb4] sm:$0xf]
        %v6421 = vld [vmem:[%s6389 + $0xb8] sm:$0xf]
        %v6422 = vld [vmem:[#allocation2] sm:$0xff]
        %v6423 = vld [vmem:[#allocation2 + $0x8] sm:$0xff]
        %v6424 = vld [vmem:[#allocation2 + $0x10] sm:$0xff]
        %v6425 = vld [vmem:[#allocation2 + $0x18] sm:$0xff]
        %v6426 = vld [vmem:[#allocation2 + $0x20] sm:$0xff]
        %v6427 = vld [vmem:[#allocation2 + $0x28] sm:$0xff]
        %v6428 = vld [vmem:[#allocation2 + $0x30] sm:$0xff]
        %v6429 = vld [vmem:[#allocation2 + $0x38] sm:$0xff]
        %v6430 = vld [vmem:[#allocation2 + $0x40] sm:$0xff]
        %v6431 = vld [vmem:[#allocation2 + $0x48] sm:$0xff]
        %v6432 = vld [vmem:[#allocation2 + $0x50] sm:$0xff]
        %v6433 = vld [vmem:[#allocation2 + $0x58] sm:$0xff]
        %v6434 = vld [vmem:[#allocation2 + $0x60] sm:$0xff]
        %v6435 = vld [vmem:[#allocation2 + $0x68] sm:$0xff]
        %v6436 = vld [vmem:[#allocation2 + $0x70] sm:$0xff]
        %v6437 = vld [vmem:[#allocation2 + $0x78] sm:$0xff]
        %v6438 = vld [vmem:[#allocation2 + $0x80] sm:$0xff]
        %v6439 = vld [vmem:[#allocation2 + $0x88] sm:$0xff]
        %v6440 = vld [vmem:[#allocation2 + $0x90] sm:$0xff]
        %v6441 = vld [vmem:[#allocation2 + $0x98] sm:$0xff]
        %v6442 = vld [vmem:[#allocation2 + $0xa0] sm:$0xff]
        %v6443 = vld [vmem:[#allocation2 + $0xa8] sm:$0xff]
        %v6444 = vld [vmem:[#allocation2 + $0xb0] sm:$0xff]
        %v6445 = vld [vmem:[#allocation2 + $0xb8] sm:$0xff]
        %v6446 = vld [vmem:[#allocation2 + $0xc0] sm:$0xff]
        %v6447 = vld [vmem:[#allocation2 + $0xc8] sm:$0xff]
        %v6448 = vld [vmem:[#allocation2 + $0xd0] sm:$0xff]
        %v6449 = vld [vmem:[#allocation2 + $0xd8] sm:$0xff]
        %v6450 = vld [vmem:[#allocation2 + $0xe0] sm:$0xff]
        %v6451 = vld [vmem:[#allocation2 + $0xe8] sm:$0xff]
        %v6452 = vld [vmem:[#allocation2 + $0xf0] sm:$0xff]
        %v6453 = vld [vmem:[#allocation2 + $0xf8] sm:$0xff]
        %v6454 = vld [vmem:[#allocation2 + $0x100] sm:$0xff]
        %v6455 = vld [vmem:[#allocation2 + $0x108] sm:$0xff]
        %v6456 = vld [vmem:[#allocation2 + $0x110] sm:$0xff]
        %v6457 = vld [vmem:[#allocation2 + $0x118] sm:$0xff]
        %v6458 = vld [vmem:[#allocation2 + $0x120] sm:$0xff]
        %v6459 = vld [vmem:[#allocation2 + $0x128] sm:$0xff]
        %v6460 = vld [vmem:[#allocation2 + $0x130] sm:$0xff]
        %v6461 = vld [vmem:[#allocation2 + $0x138] sm:$0xff]
        %v6462 = vld [vmem:[#allocation2 + $0x140] sm:$0xff]
        %v6463 = vld [vmem:[#allocation2 + $0x148] sm:$0xff]
        %v6464 = vld [vmem:[#allocation2 + $0x150] sm:$0xff]
        %v6465 = vld [vmem:[#allocation2 + $0x158] sm:$0xff]
        %v6466 = vld [vmem:[#allocation2 + $0x160] sm:$0xff]
        %v6467 = vld [vmem:[#allocation2 + $0x168] sm:$0xff]
        %v6468 = vld [vmem:[#allocation2 + $0x170] sm:$0xff]
        %v6469 = vld [vmem:[#allocation2 + $0x178] sm:$0xff]
        %v6470 = vld [vmem:[#allocation2 + $0x180] sm:$0xff]
        %v6471 = vld [vmem:[#allocation2 + $0x188] sm:$0xff]
        %v6472 = vld [vmem:[#allocation2 + $0x190] sm:$0xff]
        %v6473 = vld [vmem:[#allocation2 + $0x198] sm:$0xff]
        %v6474 = vld [vmem:[#allocation2 + $0x1a0] sm:$0xff]
        %v6475 = vld [vmem:[#allocation2 + $0x1a8] sm:$0xff]
        %v6476 = vld [vmem:[#allocation2 + $0x1b0] sm:$0xff]
        %v6477 = vld [vmem:[#allocation2 + $0x1b8] sm:$0xff]
        %v6478 = vld [vmem:[#allocation2 + $0x1c0] sm:$0xff]
        %v6479 = vld [vmem:[#allocation2 + $0x1c8] sm:$0xff]
        %v6480 = vld [vmem:[#allocation2 + $0x1d0] sm:$0xff]
        %v6481 = vld [vmem:[#allocation2 + $0x1d8] sm:$0xff]
        %v6482 = vld [vmem:[#allocation2 + $0x1e0] sm:$0xff]
        %v6483 = vld [vmem:[#allocation2 + $0x1e8] sm:$0xff]
        %v6484 = vld [vmem:[#allocation2 + $0x1f0] sm:$0xff]
        %v6485 = vld [vmem:[#allocation2 + $0x1f8] sm:$0xff]
        %v6486 = vld [vmem:[#allocation2 + $0x200] sm:$0xff]
        %v6487 = vld [vmem:[#allocation2 + $0x208] sm:$0xff]
        %v6488 = vld [vmem:[#allocation2 + $0x210] sm:$0xff]
        %v6489 = vld [vmem:[#allocation2 + $0x218] sm:$0xff]
        %v6490 = vld [vmem:[#allocation2 + $0x220] sm:$0xff]
        %v6491 = vld [vmem:[#allocation2 + $0x228] sm:$0xff]
        %v6492 = vld [vmem:[#allocation2 + $0x230] sm:$0xff]
        %v6493 = vld [vmem:[#allocation2 + $0x238] sm:$0xff]
        %v6494 = vld [vmem:[#allocation2 + $0x240] sm:$0xff]
        %v6495 = vld [vmem:[#allocation2 + $0x248] sm:$0xff]
        %v6496 = vld [vmem:[#allocation2 + $0x250] sm:$0xff]
        %v6497 = vld [vmem:[#allocation2 + $0x258] sm:$0xff]
        %v6498 = vld [vmem:[#allocation2 + $0x260] sm:$0xff]
        %v6499 = vld [vmem:[#allocation2 + $0x268] sm:$0xff]
        %v6500 = vld [vmem:[#allocation2 + $0x270] sm:$0xff]
        %v6501 = vld [vmem:[#allocation2 + $0x278] sm:$0xff]
        %v6502 = vld [vmem:[#allocation2 + $0x280] sm:$0xff]
        %v6503 = vld [vmem:[#allocation2 + $0x288] sm:$0xff]
        %v6504 = vld [vmem:[#allocation2 + $0x290] sm:$0xff]
        %v6505 = vld [vmem:[#allocation2 + $0x298] sm:$0xff]
        %v6506 = vld [vmem:[#allocation2 + $0x2a0] sm:$0xff]
        %v6507 = vld [vmem:[#allocation2 + $0x2a8] sm:$0xff]
        %v6508 = vld [vmem:[#allocation2 + $0x2b0] sm:$0xff]
        %v6509 = vld [vmem:[#allocation2 + $0x2b8] sm:$0xff]
        %v6510 = vld [vmem:[#allocation2 + $0x2c0] sm:$0xff]
        %v6511 = vld [vmem:[#allocation2 + $0x2c8] sm:$0xff]
        %v6512 = vld [vmem:[#allocation2 + $0x2d0] sm:$0xff]
        %v6513 = vld [vmem:[#allocation2 + $0x2d8] sm:$0xff]
        %v6514 = vld [vmem:[#allocation2 + $0x2e0] sm:$0xff]
        %v6515 = vld [vmem:[#allocation2 + $0x2e8] sm:$0xff]
        %v6516 = vld [vmem:[#allocation2 + $0x2f0] sm:$0xff]
        %v6517 = vld [vmem:[#allocation2 + $0x2f8] sm:$0xff]
        %s6518 = scalar_lea.vmem %s249, 36
        %v6519 = vld [vmem:[%s6518] sm:$0x3f]
        %v6552 = vunpack.c.l.b16 %v6390
        %v6553 = vunpack.c.l.b16 %v6391
        %v6554 = vunpack.c.l.b16 %v6392
        %v6555 = vunpack.c.l.b16 %v6393
        %v6556 = vunpack.c.l.b16 %v6394
        %v6557 = vunpack.c.l.b16 %v6395
        %v6558 = vunpack.c.l.b16 %v6396
        %v6559 = vunpack.c.l.b16 %v6397
        %v6560 = vunpack.c.l.b16 %v6398
        %v6561 = vunpack.c.l.b16 %v6399
        %v6562 = vunpack.c.l.b16 %v6400
        %v6563 = vunpack.c.l.b16 %v6401
        %v6564 = vunpack.c.l.b16 %v6402
        %v6565 = vunpack.c.l.b16 %v6403
        %v6566 = vunpack.c.l.b16 %v6404
        %v6567 = vunpack.c.l.b16 %v6405
        %v6568 = vunpack.c.l.b16 %v6406
        %v6569 = vunpack.c.l.b16 %v6407
        %v6570 = vunpack.c.l.b16 %v6408
        %v6571 = vunpack.c.l.b16 %v6409
        %v6572 = vunpack.c.l.b16 %v6410
        %v6573 = vunpack.c.l.b16 %v6411
        %v6574 = vunpack.c.l.b16 %v6412
        %v6575 = vunpack.c.l.b16 %v6413
        %v6576 = vunpack.c.l.b16 %v6414
        %v6577 = vunpack.c.l.b16 %v6415
        %v6578 = vunpack.c.l.b16 %v6416
        %v6579 = vunpack.c.l.b16 %v6417
        %v6580 = vunpack.c.l.b16 %v6418
        %v6581 = vunpack.c.l.b16 %v6419
        %v6582 = vunpack.c.l.b16 %v6420
        %v6583 = vunpack.c.l.b16 %v6421
        %v6584 = vpack.c.b16 %v6553, %v6552
        %v6585 = vpack.c.b16 %v6555, %v6554
        %v6586 = vpack.c.b16 %v6557, %v6556
        %v6587 = vpack.c.b16 %v6559, %v6558
        %v6588 = vpack.c.b16 %v6561, %v6560
        %v6589 = vpack.c.b16 %v6563, %v6562
        %v6590 = vpack.c.b16 %v6565, %v6564
        %v6591 = vpack.c.b16 %v6567, %v6566
        %v6592 = vpack.c.b16 %v6569, %v6568
        %v6593 = vpack.c.b16 %v6571, %v6570
        %v6594 = vpack.c.b16 %v6573, %v6572
        %v6595 = vpack.c.b16 %v6575, %v6574
        %v6596 = vpack.c.b16 %v6577, %v6576
        %v6597 = vpack.c.b16 %v6579, %v6578
        %v6598 = vpack.c.b16 %v6581, %v6580
        %v6599 = vpack.c.b16 %v6583, %v6582
        %v6601 = vcombine.high %v6519, %v6519
        %v6603 = vunpack.c.l.s4 1983009808
        %v6604 = vunpack.c.0.s8 %v6603
        %v6605 = vlaneseq
        %v6606 = vshrl.u32 %v6605, 7
        %v6607 = vsub.s32 %v6604, %v6606
        %v6608 = vrot.slane %v6519, %v6607
        %v6610 = vunpack.c.l.s4 1983009808
        %v6611 = vunpack.c.0.s8 %v6610
        %v6612 = vlaneseq
        %v6613 = vshrl.u32 %v6612, 7
        %v6614 = vsub.s32 %v6611, %v6613
        %v6615 = vrot.slane %v6601, %v6614
        %v6616 = vcombine.high %v6608, %v6608
        %v6618 = vsel %vm602, %v6584, 0
        %v6621 = vsel %vm602, %v6585, 0
        %v6624 = vsel %vm602, %v6586, 0
        %v6627 = vsel %vm602, %v6587, 0
        %v6630 = vsel %vm602, %v6588, 0
        %v6633 = vsel %vm602, %v6589, 0
        %v6636 = vsel %vm602, %v6590, 0
        %v6639 = vsel %vm602, %v6591, 0
        %v6642 = vsel %vm602, %v6592, 0
        %v6645 = vsel %vm602, %v6593, 0
        %v6648 = vsel %vm602, %v6594, 0
        %v6651 = vsel %vm602, %v6595, 0
        %v6654 = vsel %vm602, %v6596, 0
        %v6657 = vsel %vm602, %v6597, 0
        %v6660 = vsel %vm602, %v6598, 0
        %v6663 = vsel %vm602, %v6599, 0
        %v6666 = vsel %vm651, %v6608, 0
        %v6669 = vsel %vm651, %v6616, 0
        %v6672 = vsel %vm651, %v6615, 0
        %6674 = vmatprep.subr.bf16.mxu0 %v6669
        %6675 = vmatpush1.bf16.msra.mxu0 %v6666
        %6676 = vmatprep.subr.bf16.mxu0 0
        %6677 = vmatpush1.bf16.msra.mxu0 0
        %6678 = vmatprep.subr.bf16.mxu0 0
        %6679 = vmatpush1.bf16.msra.mxu0 0
        %6680 = vmatprep.subr.bf16.mxu0 0
        %6681 = vmatpush1.bf16.msra.mxu0 0
        %6682 = vmatprep.subr.bf16.mxu0 0
        %6683 = vmatpush1.bf16.msra.mxu0 0
        %6684 = vmatprep.subr.bf16.mxu0 0
        %6685 = vmatpush1.bf16.msra.mxu0 0
        %6686 = vmatprep.subr.bf16.mxu0 0
        %6687 = vmatpush1.bf16.msra.mxu0 0
        %6688 = vmatprep.subr.bf16.mxu0 0
        %6689 = vmatpush1.bf16.msra.mxu0 0
        %6690 = vmatprep.subr.bf16.mxu0 0
        %6691 = vmatpush1.bf16.msra.mxu0 0
        %6692 = vmatprep.subr.bf16.mxu0 0
        %6693 = vmatpush1.bf16.msra.mxu0 0
        %6694 = vmatprep.subr.bf16.mxu0 0
        %6695 = vmatpush1.bf16.msra.mxu0 0
        %6696 = vmatprep.subr.bf16.mxu0 0
        %6697 = vmatpush1.bf16.msra.mxu0 0
        %6698 = vmatprep.subr.bf16.mxu0 0
        %6699 = vmatpush1.bf16.msra.mxu0 0
        %6700 = vmatprep.subr.bf16.mxu0 0
        %6701 = vmatpush1.bf16.msra.mxu0 0
        %6702 = vmatprep.subr.bf16.mxu0 0
        %6703 = vmatpush1.bf16.msra.mxu0 0
        %6704 = vmatprep.subr.bf16.mxu0 0
        %6705 = vmatpush1.bf16.msra.mxu0 0
        %6706 = vmatprep.mubr.bf16.mxu0 0
        %6707 = vmatmul.mubr.bf16.gmra.mrb[0].mxu0 %v6618
        %v6708 = vpop.f32.mrb[0].mxu0
        %v6709 = vadd.f32 0.0, %v6708
        %v6710 = vpop.f32.mrb[0].mxu0
        %v6711 = vadd.f32 0.0, %v6710
        %v6712 = vpop.f32.mrb[0].mxu0
        %v6713 = vadd.f32 0.0, %v6712
        %v6714 = vpop.f32.mrb[0].mxu0
        %v6715 = vadd.f32 0.0, %v6714
        %6716 = vmatprep.mubr.bf16.mxu0 0
        %6717 = vmatmul.mubr.bf16.gmra.mrb[0].mxu0 %v6621
        %v6718 = vpop.f32.mrb[0].mxu0
        %v6719 = vadd.f32 0.0, %v6718
        %v6720 = vpop.f32.mrb[0].mxu0
        %v6721 = vadd.f32 0.0, %v6720
        %v6722 = vpop.f32.mrb[0].mxu0
        %v6723 = vadd.f32 0.0, %v6722
        %v6724 = vpop.f32.mrb[0].mxu0
        %v6725 = vadd.f32 0.0, %v6724
        %6726 = vmatprep.mubr.bf16.mxu0 0
        %6727 = vmatmul.mubr.bf16.gmra.mrb[0].mxu0 %v6624
        %v6728 = vpop.f32.mrb[0].mxu0
        %v6729 = vadd.f32 0.0, %v6728
        %v6730 = vpop.f32.mrb[0].mxu0
        %v6731 = vadd.f32 0.0, %v6730
        %v6732 = vpop.f32.mrb[0].mxu0
        %v6733 = vadd.f32 0.0, %v6732
        %v6734 = vpop.f32.mrb[0].mxu0
        %v6735 = vadd.f32 0.0, %v6734
        %6736 = vmatprep.mubr.bf16.mxu0 0
        %6737 = vmatmul.mubr.bf16.gmra.mrb[0].mxu0 %v6627
        %v6738 = vpop.f32.mrb[0].mxu0
        %v6739 = vadd.f32 0.0, %v6738
        %v6740 = vpop.f32.mrb[0].mxu0
        %v6741 = vadd.f32 0.0, %v6740
        %v6742 = vpop.f32.mrb[0].mxu0
        %v6743 = vadd.f32 0.0, %v6742
        %v6744 = vpop.f32.mrb[0].mxu0
        %v6745 = vadd.f32 0.0, %v6744
        %6746 = vmatprep.mubr.bf16.mxu0 0
        %6747 = vmatmul.mubr.bf16.gmra.mrb[0].mxu0 %v6630
        %v6748 = vpop.f32.mrb[0].mxu0
        %v6749 = vadd.f32 0.0, %v6748
        %v6750 = vpop.f32.mrb[0].mxu0
        %v6751 = vadd.f32 0.0, %v6750
        %v6752 = vpop.f32.mrb[0].mxu0
        %v6753 = vadd.f32 0.0, %v6752
        %v6754 = vpop.f32.mrb[0].mxu0
        %v6755 = vadd.f32 0.0, %v6754
        %6756 = vmatprep.mubr.bf16.mxu0 0
        %6757 = vmatmul.mubr.bf16.gmra.mrb[0].mxu0 %v6633
        %v6758 = vpop.f32.mrb[0].mxu0
        %v6759 = vadd.f32 0.0, %v6758
        %v6760 = vpop.f32.mrb[0].mxu0
        %v6761 = vadd.f32 0.0, %v6760
        %v6762 = vpop.f32.mrb[0].mxu0
        %v6763 = vadd.f32 0.0, %v6762
        %v6764 = vpop.f32.mrb[0].mxu0
        %v6765 = vadd.f32 0.0, %v6764
        %6766 = vmatprep.mubr.bf16.mxu0 0
        %6767 = vmatmul.mubr.bf16.gmra.mrb[0].mxu0 %v6636
        %v6768 = vpop.f32.mrb[0].mxu0
        %v6769 = vadd.f32 0.0, %v6768
        %v6770 = vpop.f32.mrb[0].mxu0
        %v6771 = vadd.f32 0.0, %v6770
        %v6772 = vpop.f32.mrb[0].mxu0
        %v6773 = vadd.f32 0.0, %v6772
        %v6774 = vpop.f32.mrb[0].mxu0
        %v6775 = vadd.f32 0.0, %v6774
        %6776 = vmatprep.mubr.bf16.mxu0 0
        %6777 = vmatmul.mubr.bf16.gmra.mrb[0].mxu0 %v6639
        %v6778 = vpop.f32.mrb[0].mxu0
        %v6779 = vadd.f32 0.0, %v6778
        %v6780 = vpop.f32.mrb[0].mxu0
        %v6781 = vadd.f32 0.0, %v6780
        %v6782 = vpop.f32.mrb[0].mxu0
        %v6783 = vadd.f32 0.0, %v6782
        %v6784 = vpop.f32.mrb[0].mxu0
        %v6785 = vadd.f32 0.0, %v6784
        %6786 = vmatprep.mubr.bf16.mxu0 0
        %6787 = vmatmul.mubr.bf16.gmra.mrb[0].mxu0 %v6642
        %v6788 = vpop.f32.mrb[0].mxu0
        %v6789 = vadd.f32 0.0, %v6788
        %v6790 = vpop.f32.mrb[0].mxu0
        %v6791 = vadd.f32 0.0, %v6790
        %v6792 = vpop.f32.mrb[0].mxu0
        %v6793 = vadd.f32 0.0, %v6792
        %v6794 = vpop.f32.mrb[0].mxu0
        %v6795 = vadd.f32 0.0, %v6794
        %6796 = vmatprep.mubr.bf16.mxu0 0
        %6797 = vmatmul.mubr.bf16.gmra.mrb[0].mxu0 %v6645
        %v6798 = vpop.f32.mrb[0].mxu0
        %v6799 = vadd.f32 0.0, %v6798
        %v6800 = vpop.f32.mrb[0].mxu0
        %v6801 = vadd.f32 0.0, %v6800
        %v6802 = vpop.f32.mrb[0].mxu0
        %v6803 = vadd.f32 0.0, %v6802
        %v6804 = vpop.f32.mrb[0].mxu0
        %v6805 = vadd.f32 0.0, %v6804
        %6806 = vmatprep.mubr.bf16.mxu0 0
        %6807 = vmatmul.mubr.bf16.gmra.mrb[0].mxu0 %v6648
        %v6808 = vpop.f32.mrb[0].mxu0
        %v6809 = vadd.f32 0.0, %v6808
        %v6810 = vpop.f32.mrb[0].mxu0
        %v6811 = vadd.f32 0.0, %v6810
        %v6812 = vpop.f32.mrb[0].mxu0
        %v6813 = vadd.f32 0.0, %v6812
        %v6814 = vpop.f32.mrb[0].mxu0
        %v6815 = vadd.f32 0.0, %v6814
        %6816 = vmatprep.mubr.bf16.mxu0 0
        %6817 = vmatmul.mubr.bf16.gmra.mrb[0].mxu0 %v6651
        %v6818 = vpop.f32.mrb[0].mxu0
        %v6819 = vadd.f32 0.0, %v6818
        %v6820 = vpop.f32.mrb[0].mxu0
        %v6821 = vadd.f32 0.0, %v6820
        %v6822 = vpop.f32.mrb[0].mxu0
        %v6823 = vadd.f32 0.0, %v6822
        %v6824 = vpop.f32.mrb[0].mxu0
        %v6825 = vadd.f32 0.0, %v6824
        %6826 = vmatprep.mubr.bf16.mxu0 0
        %6827 = vmatmul.mubr.bf16.gmra.mrb[0].mxu0 %v6654
        %v6828 = vpop.f32.mrb[0].mxu0
        %v6829 = vadd.f32 0.0, %v6828
        %v6830 = vpop.f32.mrb[0].mxu0
        %v6831 = vadd.f32 0.0, %v6830
        %v6832 = vpop.f32.mrb[0].mxu0
        %v6833 = vadd.f32 0.0, %v6832
        %v6834 = vpop.f32.mrb[0].mxu0
        %v6835 = vadd.f32 0.0, %v6834
        %6836 = vmatprep.mubr.bf16.mxu0 0
        %6837 = vmatmul.mubr.bf16.gmra.mrb[0].mxu0 %v6657
        %v6838 = vpop.f32.mrb[0].mxu0
        %v6839 = vadd.f32 0.0, %v6838
        %v6840 = vpop.f32.mrb[0].mxu0
        %v6841 = vadd.f32 0.0, %v6840
        %v6842 = vpop.f32.mrb[0].mxu0
        %v6843 = vadd.f32 0.0, %v6842
        %v6844 = vpop.f32.mrb[0].mxu0
        %v6845 = vadd.f32 0.0, %v6844
        %6846 = vmatprep.mubr.bf16.mxu0 0
        %6847 = vmatmul.mubr.bf16.gmra.mrb[0].mxu0 %v6660
        %v6848 = vpop.f32.mrb[0].mxu0
        %v6849 = vadd.f32 0.0, %v6848
        %v6850 = vpop.f32.mrb[0].mxu0
        %v6851 = vadd.f32 0.0, %v6850
        %v6852 = vpop.f32.mrb[0].mxu0
        %v6853 = vadd.f32 0.0, %v6852
        %v6854 = vpop.f32.mrb[0].mxu0
        %v6855 = vadd.f32 0.0, %v6854
        %6856 = vmatprep.mubr.bf16.mxu0 0
        %6857 = vmatmul.mubr.bf16.gmra.mrb[0].mxu0 %v6663
        %v6858 = vpop.f32.mrb[0].mxu0
        %v6859 = vadd.f32 0.0, %v6858
        %v6860 = vpop.f32.mrb[0].mxu0
        %v6861 = vadd.f32 0.0, %v6860
        %v6862 = vpop.f32.mrb[0].mxu0
        %v6863 = vadd.f32 0.0, %v6862
        %v6864 = vpop.f32.mrb[0].mxu0
        %v6865 = vadd.f32 0.0, %v6864
        %6866 = vdwg.mxu0
        %6867 = vmatprep.subr.bf16.mxu0 0
        %6868 = vmatpush1.bf16.msra.mxu0 %v6672
        %6869 = vmatprep.subr.bf16.mxu0 0
        %6870 = vmatpush1.bf16.msra.mxu0 0
        %6871 = vmatprep.subr.bf16.mxu0 0
        %6872 = vmatpush1.bf16.msra.mxu0 0
        %6873 = vmatprep.subr.bf16.mxu0 0
        %6874 = vmatpush1.bf16.msra.mxu0 0
        %6875 = vmatprep.subr.bf16.mxu0 0
        %6876 = vmatpush1.bf16.msra.mxu0 0
        %6877 = vmatprep.subr.bf16.mxu0 0
        %6878 = vmatpush1.bf16.msra.mxu0 0
        %6879 = vmatprep.subr.bf16.mxu0 0
        %6880 = vmatpush1.bf16.msra.mxu0 0
        %6881 = vmatprep.subr.bf16.mxu0 0
        %6882 = vmatpush1.bf16.msra.mxu0 0
        %6883 = vmatprep.subr.bf16.mxu0 0
        %6884 = vmatpush1.bf16.msra.mxu0 0
        %6885 = vmatprep.subr.bf16.mxu0 0
        %6886 = vmatpush1.bf16.msra.mxu0 0
        %6887 = vmatprep.subr.bf16.mxu0 0
        %6888 = vmatpush1.bf16.msra.mxu0 0
        %6889 = vmatprep.subr.bf16.mxu0 0
        %6890 = vmatpush1.bf16.msra.mxu0 0
        %6891 = vmatprep.subr.bf16.mxu0 0
        %6892 = vmatpush1.bf16.msra.mxu0 0
        %6893 = vmatprep.subr.bf16.mxu0 0
        %6894 = vmatpush1.bf16.msra.mxu0 0
        %6895 = vmatprep.subr.bf16.mxu0 0
        %6896 = vmatpush1.bf16.msra.mxu0 0
        %6897 = vmatprep.subr.bf16.mxu0 0
        %6898 = vmatpush1.bf16.msra.mxu0 0
        %6899 = vmatprep.mubr.bf16.mxu0 0
        %6900 = vmatmul.mubr.bf16.gmra.mrb[0].mxu0 %v6618
        %v6901 = vpop.f32.mrb[0].mxu0
        %v6902 = vadd.f32 0.0, %v6901
        %v6903 = vpop.f32.mrb[0].mxu0
        %v6904 = vpop.f32.mrb[0].mxu0
        %v6905 = vadd.f32 0.0, %v6904
        %v6906 = vpop.f32.mrb[0].mxu0
        %6907 = vmatprep.mubr.bf16.mxu0 0
        %6908 = vmatmul.mubr.bf16.gmra.mrb[0].mxu0 %v6621
        %v6909 = vpop.f32.mrb[0].mxu0
        %v6910 = vadd.f32 0.0, %v6909
        %v6911 = vpop.f32.mrb[0].mxu0
        %v6912 = vpop.f32.mrb[0].mxu0
        %v6913 = vadd.f32 0.0, %v6912
        %v6914 = vpop.f32.mrb[0].mxu0
        %6915 = vmatprep.mubr.bf16.mxu0 0
        %6916 = vmatmul.mubr.bf16.gmra.mrb[0].mxu0 %v6624
        %v6917 = vpop.f32.mrb[0].mxu0
        %v6918 = vadd.f32 0.0, %v6917
        %v6919 = vpop.f32.mrb[0].mxu0
        %v6920 = vpop.f32.mrb[0].mxu0
        %v6921 = vadd.f32 0.0, %v6920
        %v6922 = vpop.f32.mrb[0].mxu0
        %6923 = vmatprep.mubr.bf16.mxu0 0
        %6924 = vmatmul.mubr.bf16.gmra.mrb[0].mxu0 %v6627
        %v6925 = vpop.f32.mrb[0].mxu0
        %v6926 = vadd.f32 0.0, %v6925
        %v6927 = vpop.f32.mrb[0].mxu0
        %v6928 = vpop.f32.mrb[0].mxu0
        %v6929 = vadd.f32 0.0, %v6928
        %v6930 = vpop.f32.mrb[0].mxu0
        %6931 = vmatprep.mubr.bf16.mxu0 0
        %6932 = vmatmul.mubr.bf16.gmra.mrb[0].mxu0 %v6630
        %v6933 = vpop.f32.mrb[0].mxu0
        %v6934 = vadd.f32 0.0, %v6933
        %v6935 = vpop.f32.mrb[0].mxu0
        %v6936 = vpop.f32.mrb[0].mxu0
        %v6937 = vadd.f32 0.0, %v6936
        %v6938 = vpop.f32.mrb[0].mxu0
        %6939 = vmatprep.mubr.bf16.mxu0 0
        %6940 = vmatmul.mubr.bf16.gmra.mrb[0].mxu0 %v6633
        %v6941 = vpop.f32.mrb[0].mxu0
        %v6942 = vadd.f32 0.0, %v6941
        %v6943 = vpop.f32.mrb[0].mxu0
        %v6944 = vpop.f32.mrb[0].mxu0
        %v6945 = vadd.f32 0.0, %v6944
        %v6946 = vpop.f32.mrb[0].mxu0
        %6947 = vmatprep.mubr.bf16.mxu0 0
        %6948 = vmatmul.mubr.bf16.gmra.mrb[0].mxu0 %v6636
        %v6949 = vpop.f32.mrb[0].mxu0
        %v6950 = vadd.f32 0.0, %v6949
        %v6951 = vpop.f32.mrb[0].mxu0
        %v6952 = vpop.f32.mrb[0].mxu0
        %v6953 = vadd.f32 0.0, %v6952
        %v6954 = vpop.f32.mrb[0].mxu0
        %6955 = vmatprep.mubr.bf16.mxu0 0
        %6956 = vmatmul.mubr.bf16.gmra.mrb[0].mxu0 %v6639
        %v6957 = vpop.f32.mrb[0].mxu0
        %v6958 = vadd.f32 0.0, %v6957
        %v6959 = vpop.f32.mrb[0].mxu0
        %v6960 = vpop.f32.mrb[0].mxu0
        %v6961 = vadd.f32 0.0, %v6960
        %v6962 = vpop.f32.mrb[0].mxu0
        %6963 = vmatprep.mubr.bf16.mxu0 0
        %6964 = vmatmul.mubr.bf16.gmra.mrb[0].mxu0 %v6642
        %v6965 = vpop.f32.mrb[0].mxu0
        %v6966 = vadd.f32 0.0, %v6965
        %v6967 = vpop.f32.mrb[0].mxu0
        %v6968 = vpop.f32.mrb[0].mxu0
        %v6969 = vadd.f32 0.0, %v6968
        %v6970 = vpop.f32.mrb[0].mxu0
        %6971 = vmatprep.mubr.bf16.mxu0 0
        %6972 = vmatmul.mubr.bf16.gmra.mrb[0].mxu0 %v6645
        %v6973 = vpop.f32.mrb[0].mxu0
        %v6974 = vadd.f32 0.0, %v6973
        %v6975 = vpop.f32.mrb[0].mxu0
        %v6976 = vpop.f32.mrb[0].mxu0
        %v6977 = vadd.f32 0.0, %v6976
        %v6978 = vpop.f32.mrb[0].mxu0
        %6979 = vmatprep.mubr.bf16.mxu0 0
        %6980 = vmatmul.mubr.bf16.gmra.mrb[0].mxu0 %v6648
        %v6981 = vpop.f32.mrb[0].mxu0
        %v6982 = vadd.f32 0.0, %v6981
        %v6983 = vpop.f32.mrb[0].mxu0
        %v6984 = vpop.f32.mrb[0].mxu0
        %v6985 = vadd.f32 0.0, %v6984
        %v6986 = vpop.f32.mrb[0].mxu0
        %6987 = vmatprep.mubr.bf16.mxu0 0
        %6988 = vmatmul.mubr.bf16.gmra.mrb[0].mxu0 %v6651
        %v6989 = vpop.f32.mrb[0].mxu0
        %v6990 = vadd.f32 0.0, %v6989
        %v6991 = vpop.f32.mrb[0].mxu0
        %v6992 = vpop.f32.mrb[0].mxu0
        %v6993 = vadd.f32 0.0, %v6992
        %v6994 = vpop.f32.mrb[0].mxu0
        %6995 = vmatprep.mubr.bf16.mxu0 0
        %6996 = vmatmul.mubr.bf16.gmra.mrb[0].mxu0 %v6654
        %v6997 = vpop.f32.mrb[0].mxu0
        %v6998 = vadd.f32 0.0, %v6997
        %v6999 = vpop.f32.mrb[0].mxu0
        %v7000 = vpop.f32.mrb[0].mxu0
        %v7001 = vadd.f32 0.0, %v7000
        %v7002 = vpop.f32.mrb[0].mxu0
        %7003 = vmatprep.mubr.bf16.mxu0 0
        %7004 = vmatmul.mubr.bf16.gmra.mrb[0].mxu0 %v6657
        %v7005 = vpop.f32.mrb[0].mxu0
        %v7006 = vadd.f32 0.0, %v7005
        %v7007 = vpop.f32.mrb[0].mxu0
        %v7008 = vpop.f32.mrb[0].mxu0
        %v7009 = vadd.f32 0.0, %v7008
        %v7010 = vpop.f32.mrb[0].mxu0
        %7011 = vmatprep.mubr.bf16.mxu0 0
        %7012 = vmatmul.mubr.bf16.gmra.mrb[0].mxu0 %v6660
        %v7013 = vpop.f32.mrb[0].mxu0
        %v7014 = vadd.f32 0.0, %v7013
        %v7015 = vpop.f32.mrb[0].mxu0
        %v7016 = vpop.f32.mrb[0].mxu0
        %v7017 = vadd.f32 0.0, %v7016
        %v7018 = vpop.f32.mrb[0].mxu0
        %7019 = vmatprep.mubr.bf16.mxu0 0
        %7020 = vmatmul.mubr.bf16.gmra.mrb[0].mxu0 %v6663
        %v7021 = vpop.f32.mrb[0].mxu0
        %v7022 = vadd.f32 0.0, %v7021
        %v7023 = vpop.f32.mrb[0].mxu0
        %v7024 = vpop.f32.mrb[0].mxu0
        %v7025 = vadd.f32 0.0, %v7024
        %v7026 = vpop.f32.mrb[0].mxu0
        %7027 = vdwg.mxu0
        %v7028 = vadd.f32 %v6422, %v6709
        %v7029 = vadd.f32 %v6423, %v6711
        %v7030 = vadd.f32 %v6424, %v6902
        %v7031 = vadd.f32 %v6425, %v6713
        %v7032 = vadd.f32 %v6426, %v6715
        %v7033 = vadd.f32 %v6427, %v6905
        %v7034 = vadd.f32 %v6428, %v6719
        %v7035 = vadd.f32 %v6429, %v6721
        %v7036 = vadd.f32 %v6430, %v6910
        %v7037 = vadd.f32 %v6431, %v6723
        %v7038 = vadd.f32 %v6432, %v6725
        %v7039 = vadd.f32 %v6433, %v6913
        %v7040 = vadd.f32 %v6434, %v6729
        %v7041 = vadd.f32 %v6435, %v6731
        %v7042 = vadd.f32 %v6436, %v6918
        %v7043 = vadd.f32 %v6437, %v6733
        %v7044 = vadd.f32 %v6438, %v6735
        %v7045 = vadd.f32 %v6439, %v6921
        %v7046 = vadd.f32 %v6440, %v6739
        %v7047 = vadd.f32 %v6441, %v6741
        %v7048 = vadd.f32 %v6442, %v6926
        %v7049 = vadd.f32 %v6443, %v6743
        %v7050 = vadd.f32 %v6444, %v6745
        %v7051 = vadd.f32 %v6445, %v6929
        %v7052 = vadd.f32 %v6446, %v6749
        %v7053 = vadd.f32 %v6447, %v6751
        %v7054 = vadd.f32 %v6448, %v6934
        %v7055 = vadd.f32 %v6449, %v6753
        %v7056 = vadd.f32 %v6450, %v6755
        %v7057 = vadd.f32 %v6451, %v6937
        %v7058 = vadd.f32 %v6452, %v6759
        %v7059 = vadd.f32 %v6453, %v6761
        %v7060 = vadd.f32 %v6454, %v6942
        %v7061 = vadd.f32 %v6455, %v6763
        %v7062 = vadd.f32 %v6456, %v6765
        %v7063 = vadd.f32 %v6457, %v6945
        %v7064 = vadd.f32 %v6458, %v6769
        %v7065 = vadd.f32 %v6459, %v6771
        %v7066 = vadd.f32 %v6460, %v6950
        %v7067 = vadd.f32 %v6461, %v6773
        %v7068 = vadd.f32 %v6462, %v6775
        %v7069 = vadd.f32 %v6463, %v6953
        %v7070 = vadd.f32 %v6464, %v6779
        %v7071 = vadd.f32 %v6465, %v6781
        %v7072 = vadd.f32 %v6466, %v6958
        %v7073 = vadd.f32 %v6467, %v6783
        %v7074 = vadd.f32 %v6468, %v6785
        %v7075 = vadd.f32 %v6469, %v6961
        %v7076 = vadd.f32 %v6470, %v6789
        %v7077 = vadd.f32 %v6471, %v6791
        %v7078 = vadd.f32 %v6472, %v6966
        %v7079 = vadd.f32 %v6473, %v6793
        %v7080 = vadd.f32 %v6474, %v6795
        %v7081 = vadd.f32 %v6475, %v6969
        %v7082 = vadd.f32 %v6476, %v6799
        %v7083 = vadd.f32 %v6477, %v6801
        %v7084 = vadd.f32 %v6478, %v6974
        %v7085 = vadd.f32 %v6479, %v6803
        %v7086 = vadd.f32 %v6480, %v6805
        %v7087 = vadd.f32 %v6481, %v6977
        %v7088 = vadd.f32 %v6482, %v6809
        %v7089 = vadd.f32 %v6483, %v6811
        %v7090 = vadd.f32 %v6484, %v6982
        %v7091 = vadd.f32 %v6485, %v6813
        %v7092 = vadd.f32 %v6486, %v6815
        %v7093 = vadd.f32 %v6487, %v6985
        %v7094 = vadd.f32 %v6488, %v6819
        %v7095 = vadd.f32 %v6489, %v6821
        %v7096 = vadd.f32 %v6490, %v6990
        %v7097 = vadd.f32 %v6491, %v6823
        %v7098 = vadd.f32 %v6492, %v6825
        %v7099 = vadd.f32 %v6493, %v6993
        %v7100 = vadd.f32 %v6494, %v6829
        %v7101 = vadd.f32 %v6495, %v6831
        %v7102 = vadd.f32 %v6496, %v6998
        %v7103 = vadd.f32 %v6497, %v6833
        %v7104 = vadd.f32 %v6498, %v6835
        %v7105 = vadd.f32 %v6499, %v7001
        %v7106 = vadd.f32 %v6500, %v6839
        %v7107 = vadd.f32 %v6501, %v6841
        %v7108 = vadd.f32 %v6502, %v7006
        %v7109 = vadd.f32 %v6503, %v6843
        %v7110 = vadd.f32 %v6504, %v6845
        %v7111 = vadd.f32 %v6505, %v7009
        %v7112 = vadd.f32 %v6506, %v6849
        %v7113 = vadd.f32 %v6507, %v6851
        %v7114 = vadd.f32 %v6508, %v7014
        %v7115 = vadd.f32 %v6509, %v6853
        %v7116 = vadd.f32 %v6510, %v6855
        %v7117 = vadd.f32 %v6511, %v7017
        %v7118 = vadd.f32 %v6512, %v6859
        %v7119 = vadd.f32 %v6513, %v6861
        %v7120 = vadd.f32 %v6514, %v7022
        %v7121 = vadd.f32 %v6515, %v6863
        %v7122 = vadd.f32 %v6516, %v6865
        %v7123 = vadd.f32 %v6517, %v7025
        %7124 = vst [vmem:[#allocation2] sm:$0xff] %v7028
        %7125 = vst [vmem:[#allocation2 + $0x8] sm:$0xff] %v7029
        %7126 = vst.msk [vmem:[#allocation2 + $0x10] sm:$0xff] %vm1113, %v7030
        %7127 = vst [vmem:[#allocation2 + $0x18] sm:$0xff] %v7031
        %7128 = vst [vmem:[#allocation2 + $0x20] sm:$0xff] %v7032
        %7129 = vst.msk [vmem:[#allocation2 + $0x28] sm:$0xff] %vm1113, %v7033
        %7130 = vst [vmem:[#allocation2 + $0x30] sm:$0xff] %v7034
        %7131 = vst [vmem:[#allocation2 + $0x38] sm:$0xff] %v7035
        %7132 = vst.msk [vmem:[#allocation2 + $0x40] sm:$0xff] %vm1113, %v7036
        %7133 = vst [vmem:[#allocation2 + $0x48] sm:$0xff] %v7037
        %7134 = vst [vmem:[#allocation2 + $0x50] sm:$0xff] %v7038
        %7135 = vst.msk [vmem:[#allocation2 + $0x58] sm:$0xff] %vm1113, %v7039
        %7136 = vst [vmem:[#allocation2 + $0x60] sm:$0xff] %v7040
        %7137 = vst [vmem:[#allocation2 + $0x68] sm:$0xff] %v7041
        %7138 = vst.msk [vmem:[#allocation2 + $0x70] sm:$0xff] %vm1113, %v7042
        %7139 = vst [vmem:[#allocation2 + $0x78] sm:$0xff] %v7043
        %7140 = vst [vmem:[#allocation2 + $0x80] sm:$0xff] %v7044
        %7141 = vst.msk [vmem:[#allocation2 + $0x88] sm:$0xff] %vm1113, %v7045
        %7142 = vst [vmem:[#allocation2 + $0x90] sm:$0xff] %v7046
        %7143 = vst [vmem:[#allocation2 + $0x98] sm:$0xff] %v7047
        %7144 = vst.msk [vmem:[#allocation2 + $0xa0] sm:$0xff] %vm1113, %v7048
        %7145 = vst [vmem:[#allocation2 + $0xa8] sm:$0xff] %v7049
        %7146 = vst [vmem:[#allocation2 + $0xb0] sm:$0xff] %v7050
        %7147 = vst.msk [vmem:[#allocation2 + $0xb8] sm:$0xff] %vm1113, %v7051
        %7148 = vst [vmem:[#allocation2 + $0xc0] sm:$0xff] %v7052
        %7149 = vst [vmem:[#allocation2 + $0xc8] sm:$0xff] %v7053
        %7150 = vst.msk [vmem:[#allocation2 + $0xd0] sm:$0xff] %vm1113, %v7054
        %7151 = vst [vmem:[#allocation2 + $0xd8] sm:$0xff] %v7055
        %7152 = vst [vmem:[#allocation2 + $0xe0] sm:$0xff] %v7056
        %7153 = vst.msk [vmem:[#allocation2 + $0xe8] sm:$0xff] %vm1113, %v7057
        %7154 = vst [vmem:[#allocation2 + $0xf0] sm:$0xff] %v7058
        %7155 = vst [vmem:[#allocation2 + $0xf8] sm:$0xff] %v7059
        %7156 = vst.msk [vmem:[#allocation2 + $0x100] sm:$0xff] %vm1113, %v7060
        %7157 = vst [vmem:[#allocation2 + $0x108] sm:$0xff] %v7061
        %7158 = vst [vmem:[#allocation2 + $0x110] sm:$0xff] %v7062
        %7159 = vst.msk [vmem:[#allocation2 + $0x118] sm:$0xff] %vm1113, %v7063
        %7160 = vst [vmem:[#allocation2 + $0x120] sm:$0xff] %v7064
        %7161 = vst [vmem:[#allocation2 + $0x128] sm:$0xff] %v7065
        %7162 = vst.msk [vmem:[#allocation2 + $0x130] sm:$0xff] %vm1113, %v7066
        %7163 = vst [vmem:[#allocation2 + $0x138] sm:$0xff] %v7067
        %7164 = vst [vmem:[#allocation2 + $0x140] sm:$0xff] %v7068
        %7165 = vst.msk [vmem:[#allocation2 + $0x148] sm:$0xff] %vm1113, %v7069
        %7166 = vst [vmem:[#allocation2 + $0x150] sm:$0xff] %v7070
        %7167 = vst [vmem:[#allocation2 + $0x158] sm:$0xff] %v7071
        %7168 = vst.msk [vmem:[#allocation2 + $0x160] sm:$0xff] %vm1113, %v7072
        %7169 = vst [vmem:[#allocation2 + $0x168] sm:$0xff] %v7073
        %7170 = vst [vmem:[#allocation2 + $0x170] sm:$0xff] %v7074
        %7171 = vst.msk [vmem:[#allocation2 + $0x178] sm:$0xff] %vm1113, %v7075
        %7172 = vst [vmem:[#allocation2 + $0x180] sm:$0xff] %v7076
        %7173 = vst [vmem:[#allocation2 + $0x188] sm:$0xff] %v7077
        %7174 = vst.msk [vmem:[#allocation2 + $0x190] sm:$0xff] %vm1113, %v7078
        %7175 = vst [vmem:[#allocation2 + $0x198] sm:$0xff] %v7079
        %7176 = vst [vmem:[#allocation2 + $0x1a0] sm:$0xff] %v7080
        %7177 = vst.msk [vmem:[#allocation2 + $0x1a8] sm:$0xff] %vm1113, %v7081
        %7178 = vst [vmem:[#allocation2 + $0x1b0] sm:$0xff] %v7082
        %7179 = vst [vmem:[#allocation2 + $0x1b8] sm:$0xff] %v7083
        %7180 = vst.msk [vmem:[#allocation2 + $0x1c0] sm:$0xff] %vm1113, %v7084
        %7181 = vst [vmem:[#allocation2 + $0x1c8] sm:$0xff] %v7085
        %7182 = vst [vmem:[#allocation2 + $0x1d0] sm:$0xff] %v7086
        %7183 = vst.msk [vmem:[#allocation2 + $0x1d8] sm:$0xff] %vm1113, %v7087
        %7184 = vst [vmem:[#allocation2 + $0x1e0] sm:$0xff] %v7088
        %7185 = vst [vmem:[#allocation2 + $0x1e8] sm:$0xff] %v7089
        %7186 = vst.msk [vmem:[#allocation2 + $0x1f0] sm:$0xff] %vm1113, %v7090
        %7187 = vst [vmem:[#allocation2 + $0x1f8] sm:$0xff] %v7091
        %7188 = vst [vmem:[#allocation2 + $0x200] sm:$0xff] %v7092
        %7189 = vst.msk [vmem:[#allocation2 + $0x208] sm:$0xff] %vm1113, %v7093
        %7190 = vst [vmem:[#allocation2 + $0x210] sm:$0xff] %v7094
        %7191 = vst [vmem:[#allocation2 + $0x218] sm:$0xff] %v7095
        %7192 = vst.msk [vmem:[#allocation2 + $0x220] sm:$0xff] %vm1113, %v7096
        %7193 = vst [vmem:[#allocation2 + $0x228] sm:$0xff] %v7097
        %7194 = vst [vmem:[#allocation2 + $0x230] sm:$0xff] %v7098
        %7195 = vst.msk [vmem:[#allocation2 + $0x238] sm:$0xff] %vm1113, %v7099
        %7196 = vst [vmem:[#allocation2 + $0x240] sm:$0xff] %v7100
        %7197 = vst [vmem:[#allocation2 + $0x248] sm:$0xff] %v7101
        %7198 = vst.msk [vmem:[#allocation2 + $0x250] sm:$0xff] %vm1113, %v7102
        %7199 = vst [vmem:[#allocation2 + $0x258] sm:$0xff] %v7103
        %7200 = vst [vmem:[#allocation2 + $0x260] sm:$0xff] %v7104
        %7201 = vst.msk [vmem:[#allocation2 + $0x268] sm:$0xff] %vm1113, %v7105
        %7202 = vst [vmem:[#allocation2 + $0x270] sm:$0xff] %v7106
        %7203 = vst [vmem:[#allocation2 + $0x278] sm:$0xff] %v7107
        %7204 = vst.msk [vmem:[#allocation2 + $0x280] sm:$0xff] %vm1113, %v7108
        %7205 = vst [vmem:[#allocation2 + $0x288] sm:$0xff] %v7109
        %7206 = vst [vmem:[#allocation2 + $0x290] sm:$0xff] %v7110
        %7207 = vst.msk [vmem:[#allocation2 + $0x298] sm:$0xff] %vm1113, %v7111
        %7208 = vst [vmem:[#allocation2 + $0x2a0] sm:$0xff] %v7112
        %7209 = vst [vmem:[#allocation2 + $0x2a8] sm:$0xff] %v7113
        %7210 = vst.msk [vmem:[#allocation2 + $0x2b0] sm:$0xff] %vm1113, %v7114
        %7211 = vst [vmem:[#allocation2 + $0x2b8] sm:$0xff] %v7115
        %7212 = vst [vmem:[#allocation2 + $0x2c0] sm:$0xff] %v7116
        %7213 = vst.msk [vmem:[#allocation2 + $0x2c8] sm:$0xff] %vm1113, %v7117
        %7214 = vst [vmem:[#allocation2 + $0x2d0] sm:$0xff] %v7118
        %7215 = vst [vmem:[#allocation2 + $0x2d8] sm:$0xff] %v7119
        %7216 = vst.msk [vmem:[#allocation2 + $0x2e0] sm:$0xff] %vm1113, %v7120
        %7217 = vst [vmem:[#allocation2 + $0x2e8] sm:$0xff] %v7121
        %7218 = vst [vmem:[#allocation2 + $0x2f0] sm:$0xff] %v7122
        %7219 = vst.msk [vmem:[#allocation2 + $0x2f8] sm:$0xff] %vm1113, %v7123
        %v7220 = vld [vmem:[%s6389] sm:$0xf]
        %v7221 = vld [vmem:[%s6389 + $0x4] sm:$0xf]
        %v7222 = vld [vmem:[%s6389 + $0x8] sm:$0x1]
        %v7223 = vld [vmem:[%s6389 + $0xc] sm:$0xf]
        %v7224 = vld [vmem:[%s6389 + $0x10] sm:$0xf]
        %v7225 = vld [vmem:[%s6389 + $0x14] sm:$0x1]
        %v7226 = vld [vmem:[%s6389 + $0x18] sm:$0xf]
        %v7227 = vld [vmem:[%s6389 + $0x1c] sm:$0xf]
        %v7228 = vld [vmem:[%s6389 + $0x20] sm:$0x1]
        %v7229 = vld [vmem:[%s6389 + $0x24] sm:$0xf]
        %v7230 = vld [vmem:[%s6389 + $0x28] sm:$0xf]
        %v7231 = vld [vmem:[%s6389 + $0x2c] sm:$0x1]
        %v7232 = vld [vmem:[%s6389 + $0x30] sm:$0xf]
        %v7233 = vld [vmem:[%s6389 + $0x34] sm:$0xf]
        %v7234 = vld [vmem:[%s6389 + $0x38] sm:$0x1]
        %v7235 = vld [vmem:[%s6389 + $0x3c] sm:$0xf]
        %v7236 = vld [vmem:[%s6389 + $0x40] sm:$0xf]
        %v7237 = vld [vmem:[%s6389 + $0x44] sm:$0x1]
        %v7238 = vld [vmem:[%s6389 + $0x48] sm:$0xf]
        %v7239 = vld [vmem:[%s6389 + $0x4c] sm:$0xf]
        %v7240 = vld [vmem:[%s6389 + $0x50] sm:$0x1]
        %v7241 = vld [vmem:[%s6389 + $0x54] sm:$0xf]
        %v7242 = vld [vmem:[%s6389 + $0x58] sm:$0xf]
        %v7243 = vld [vmem:[%s6389 + $0x5c] sm:$0x1]
        %v7244 = vld [vmem:[%s6389 + $0x60] sm:$0xf]
        %v7245 = vld [vmem:[%s6389 + $0x64] sm:$0xf]
        %v7246 = vld [vmem:[%s6389 + $0x68] sm:$0x1]
        %v7247 = vld [vmem:[%s6389 + $0x6c] sm:$0xf]
        %v7248 = vld [vmem:[%s6389 + $0x70] sm:$0xf]
        %v7249 = vld [vmem:[%s6389 + $0x74] sm:$0x1]
        %v7250 = vld [vmem:[%s6389 + $0x78] sm:$0xf]
        %v7251 = vld [vmem:[%s6389 + $0x7c] sm:$0xf]
        %v7252 = vld [vmem:[%s6389 + $0x80] sm:$0x1]
        %v7253 = vld [vmem:[%s6389 + $0x84] sm:$0xf]
        %v7254 = vld [vmem:[%s6389 + $0x88] sm:$0xf]
        %v7255 = vld [vmem:[%s6389 + $0x8c] sm:$0x1]
        %v7256 = vld [vmem:[%s6389 + $0x90] sm:$0xf]
        %v7257 = vld [vmem:[%s6389 + $0x94] sm:$0xf]
        %v7258 = vld [vmem:[%s6389 + $0x98] sm:$0x1]
        %v7259 = vld [vmem:[%s6389 + $0x9c] sm:$0xf]
        %v7260 = vld [vmem:[%s6389 + $0xa0] sm:$0xf]
        %v7261 = vld [vmem:[%s6389 + $0xa4] sm:$0x1]
        %v7262 = vld [vmem:[%s6389 + $0xa8] sm:$0xf]
        %v7263 = vld [vmem:[%s6389 + $0xac] sm:$0xf]
        %v7264 = vld [vmem:[%s6389 + $0xb0] sm:$0x1]
        %v7265 = vld [vmem:[%s6389 + $0xb4] sm:$0xf]
        %v7266 = vld [vmem:[%s6389 + $0xb8] sm:$0xf]
        %v7267 = vld [vmem:[%s6389 + $0xbc] sm:$0x1]
        %v7269 = vshrl.u32 %v7220, 16
        %v7271 = vrot.slane %v7269, 4
        %v7272 = vshll.u32 %v7220, 16
        %v7274 = vrot.slane %v7272, 5
        %v7275 = vor.u32 %v7271, %v7274
        %v7276 = vrot.slane %v7275, 4
        %v7278 = vshll.u32 %v7221, 16
        %v7280 = vrot.slane %v7278, 5
        %v7281 = vsel %vm1258, %v7276, %v7280
        %v7282 = vshrl.u32 %v7221, 16
        %v7284 = vrot.slane %v7282, 4
        %v7285 = vor.u32 %v7284, %v7280
        %v7286 = vrot.slane %v7285, 4
        %v7288 = vshll.u32 %v7222, 16
        %v7290 = vrot.slane %v7288, 5
        %v7291 = vsel %vm1258, %v7286, %v7290
        %v7293 = vshrl.u32 %v7223, 16
        %v7295 = vrot.slane %v7293, 4
        %v7296 = vshll.u32 %v7223, 16
        %v7298 = vrot.slane %v7296, 5
        %v7299 = vor.u32 %v7295, %v7298
        %v7300 = vrot.slane %v7299, 4
        %v7302 = vshll.u32 %v7224, 16
        %v7304 = vrot.slane %v7302, 5
        %v7305 = vsel %vm1258, %v7300, %v7304
        %v7306 = vshrl.u32 %v7224, 16
        %v7308 = vrot.slane %v7306, 4
        %v7309 = vor.u32 %v7308, %v7304
        %v7310 = vrot.slane %v7309, 4
        %v7312 = vshll.u32 %v7225, 16
        %v7314 = vrot.slane %v7312, 5
        %v7315 = vsel %vm1258, %v7310, %v7314
        %v7317 = vshrl.u32 %v7226, 16
        %v7319 = vrot.slane %v7317, 4
        %v7320 = vshll.u32 %v7226, 16
        %v7322 = vrot.slane %v7320, 5
        %v7323 = vor.u32 %v7319, %v7322
        %v7324 = vrot.slane %v7323, 4
        %v7326 = vshll.u32 %v7227, 16
        %v7328 = vrot.slane %v7326, 5
        %v7329 = vsel %vm1258, %v7324, %v7328
        %v7330 = vshrl.u32 %v7227, 16
        %v7332 = vrot.slane %v7330, 4
        %v7333 = vor.u32 %v7332, %v7328
        %v7334 = vrot.slane %v7333, 4
        %v7336 = vshll.u32 %v7228, 16
        %v7338 = vrot.slane %v7336, 5
        %v7339 = vsel %vm1258, %v7334, %v7338
        %v7341 = vshrl.u32 %v7229, 16
        %v7343 = vrot.slane %v7341, 4
        %v7344 = vshll.u32 %v7229, 16
        %v7346 = vrot.slane %v7344, 5
        %v7347 = vor.u32 %v7343, %v7346
        %v7348 = vrot.slane %v7347, 4
        %v7350 = vshll.u32 %v7230, 16
        %v7352 = vrot.slane %v7350, 5
        %v7353 = vsel %vm1258, %v7348, %v7352
        %v7354 = vshrl.u32 %v7230, 16
        %v7356 = vrot.slane %v7354, 4
        %v7357 = vor.u32 %v7356, %v7352
        %v7358 = vrot.slane %v7357, 4
        %v7360 = vshll.u32 %v7231, 16
        %v7362 = vrot.slane %v7360, 5
        %v7363 = vsel %vm1258, %v7358, %v7362
        %v7365 = vshrl.u32 %v7232, 16
        %v7367 = vrot.slane %v7365, 4
        %v7368 = vshll.u32 %v7232, 16
        %v7370 = vrot.slane %v7368, 5
        %v7371 = vor.u32 %v7367, %v7370
        %v7372 = vrot.slane %v7371, 4
        %v7374 = vshll.u32 %v7233, 16
        %v7376 = vrot.slane %v7374, 5
        %v7377 = vsel %vm1258, %v7372, %v7376
        %v7378 = vshrl.u32 %v7233, 16
        %v7380 = vrot.slane %v7378, 4
        %v7381 = vor.u32 %v7380, %v7376
        %v7382 = vrot.slane %v7381, 4
        %v7384 = vshll.u32 %v7234, 16
        %v7386 = vrot.slane %v7384, 5
        %v7387 = vsel %vm1258, %v7382, %v7386
        %v7389 = vshrl.u32 %v7235, 16
        %v7391 = vrot.slane %v7389, 4
        %v7392 = vshll.u32 %v7235, 16
        %v7394 = vrot.slane %v7392, 5
        %v7395 = vor.u32 %v7391, %v7394
        %v7396 = vrot.slane %v7395, 4
        %v7398 = vshll.u32 %v7236, 16
        %v7400 = vrot.slane %v7398, 5
        %v7401 = vsel %vm1258, %v7396, %v7400
        %v7402 = vshrl.u32 %v7236, 16
        %v7404 = vrot.slane %v7402, 4
        %v7405 = vor.u32 %v7404, %v7400
        %v7406 = vrot.slane %v7405, 4
        %v7408 = vshll.u32 %v7237, 16
        %v7410 = vrot.slane %v7408, 5
        %v7411 = vsel %vm1258, %v7406, %v7410
        %v7413 = vshrl.u32 %v7238, 16
        %v7415 = vrot.slane %v7413, 4
        %v7416 = vshll.u32 %v7238, 16
        %v7418 = vrot.slane %v7416, 5
        %v7419 = vor.u32 %v7415, %v7418
        %v7420 = vrot.slane %v7419, 4
        %v7422 = vshll.u32 %v7239, 16
        %v7424 = vrot.slane %v7422, 5
        %v7425 = vsel %vm1258, %v7420, %v7424
        %v7426 = vshrl.u32 %v7239, 16
        %v7428 = vrot.slane %v7426, 4
        %v7429 = vor.u32 %v7428, %v7424
        %v7430 = vrot.slane %v7429, 4
        %v7432 = vshll.u32 %v7240, 16
        %v7434 = vrot.slane %v7432, 5
        %v7435 = vsel %vm1258, %v7430, %v7434
        %v7437 = vshrl.u32 %v7241, 16
        %v7439 = vrot.slane %v7437, 4
        %v7440 = vshll.u32 %v7241, 16
        %v7442 = vrot.slane %v7440, 5
        %v7443 = vor.u32 %v7439, %v7442
        %v7444 = vrot.slane %v7443, 4
        %v7446 = vshll.u32 %v7242, 16
        %v7448 = vrot.slane %v7446, 5
        %v7449 = vsel %vm1258, %v7444, %v7448
        %v7450 = vshrl.u32 %v7242, 16
        %v7452 = vrot.slane %v7450, 4
        %v7453 = vor.u32 %v7452, %v7448
        %v7454 = vrot.slane %v7453, 4
        %v7456 = vshll.u32 %v7243, 16
        %v7458 = vrot.slane %v7456, 5
        %v7459 = vsel %vm1258, %v7454, %v7458
        %v7461 = vshrl.u32 %v7244, 16
        %v7463 = vrot.slane %v7461, 4
        %v7464 = vshll.u32 %v7244, 16
        %v7466 = vrot.slane %v7464, 5
        %v7467 = vor.u32 %v7463, %v7466
        %v7468 = vrot.slane %v7467, 4
        %v7470 = vshll.u32 %v7245, 16
        %v7472 = vrot.slane %v7470, 5
        %v7473 = vsel %vm1258, %v7468, %v7472
        %v7474 = vshrl.u32 %v7245, 16
        %v7476 = vrot.slane %v7474, 4
        %v7477 = vor.u32 %v7476, %v7472
        %v7478 = vrot.slane %v7477, 4
        %v7480 = vshll.u32 %v7246, 16
        %v7482 = vrot.slane %v7480, 5
        %v7483 = vsel %vm1258, %v7478, %v7482
        %v7485 = vshrl.u32 %v7247, 16
        %v7487 = vrot.slane %v7485, 4
        %v7488 = vshll.u32 %v7247, 16
        %v7490 = vrot.slane %v7488, 5
        %v7491 = vor.u32 %v7487, %v7490
        %v7492 = vrot.slane %v7491, 4
        %v7494 = vshll.u32 %v7248, 16
        %v7496 = vrot.slane %v7494, 5
        %v7497 = vsel %vm1258, %v7492, %v7496
        %v7498 = vshrl.u32 %v7248, 16
        %v7500 = vrot.slane %v7498, 4
        %v7501 = vor.u32 %v7500, %v7496
        %v7502 = vrot.slane %v7501, 4
        %v7504 = vshll.u32 %v7249, 16
        %v7506 = vrot.slane %v7504, 5
        %v7507 = vsel %vm1258, %v7502, %v7506
        %v7509 = vshrl.u32 %v7250, 16
        %v7511 = vrot.slane %v7509, 4
        %v7512 = vshll.u32 %v7250, 16
        %v7514 = vrot.slane %v7512, 5
        %v7515 = vor.u32 %v7511, %v7514
        %v7516 = vrot.slane %v7515, 4
        %v7518 = vshll.u32 %v7251, 16
        %v7520 = vrot.slane %v7518, 5
        %v7521 = vsel %vm1258, %v7516, %v7520
        %v7522 = vshrl.u32 %v7251, 16
        %v7524 = vrot.slane %v7522, 4
        %v7525 = vor.u32 %v7524, %v7520
        %v7526 = vrot.slane %v7525, 4
        %v7528 = vshll.u32 %v7252, 16
        %v7530 = vrot.slane %v7528, 5
        %v7531 = vsel %vm1258, %v7526, %v7530
        %v7533 = vshrl.u32 %v7253, 16
        %v7535 = vrot.slane %v7533, 4
        %v7536 = vshll.u32 %v7253, 16
        %v7538 = vrot.slane %v7536, 5
        %v7539 = vor.u32 %v7535, %v7538
        %v7540 = vrot.slane %v7539, 4
        %v7542 = vshll.u32 %v7254, 16
        %v7544 = vrot.slane %v7542, 5
        %v7545 = vsel %vm1258, %v7540, %v7544
        %v7546 = vshrl.u32 %v7254, 16
        %v7548 = vrot.slane %v7546, 4
        %v7549 = vor.u32 %v7548, %v7544
        %v7550 = vrot.slane %v7549, 4
        %v7552 = vshll.u32 %v7255, 16
        %v7554 = vrot.slane %v7552, 5
        %v7555 = vsel %vm1258, %v7550, %v7554
        %v7557 = vshrl.u32 %v7256, 16
        %v7559 = vrot.slane %v7557, 4
        %v7560 = vshll.u32 %v7256, 16
        %v7562 = vrot.slane %v7560, 5
        %v7563 = vor.u32 %v7559, %v7562
        %v7564 = vrot.slane %v7563, 4
        %v7566 = vshll.u32 %v7257, 16
        %v7568 = vrot.slane %v7566, 5
        %v7569 = vsel %vm1258, %v7564, %v7568
        %v7570 = vshrl.u32 %v7257, 16
        %v7572 = vrot.slane %v7570, 4
        %v7573 = vor.u32 %v7572, %v7568
        %v7574 = vrot.slane %v7573, 4
        %v7576 = vshll.u32 %v7258, 16
        %v7578 = vrot.slane %v7576, 5
        %v7579 = vsel %vm1258, %v7574, %v7578
        %v7581 = vshrl.u32 %v7259, 16
        %v7583 = vrot.slane %v7581, 4
        %v7584 = vshll.u32 %v7259, 16
        %v7586 = vrot.slane %v7584, 5
        %v7587 = vor.u32 %v7583, %v7586
        %v7588 = vrot.slane %v7587, 4
        %v7590 = vshll.u32 %v7260, 16
        %v7592 = vrot.slane %v7590, 5
        %v7593 = vsel %vm1258, %v7588, %v7592
        %v7594 = vshrl.u32 %v7260, 16
        %v7596 = vrot.slane %v7594, 4
        %v7597 = vor.u32 %v7596, %v7592
        %v7598 = vrot.slane %v7597, 4
        %v7600 = vshll.u32 %v7261, 16
        %v7602 = vrot.slane %v7600, 5
        %v7603 = vsel %vm1258, %v7598, %v7602
        %v7605 = vshrl.u32 %v7262, 16
        %v7607 = vrot.slane %v7605, 4
        %v7608 = vshll.u32 %v7262, 16
        %v7610 = vrot.slane %v7608, 5
        %v7611 = vor.u32 %v7607, %v7610
        %v7612 = vrot.slane %v7611, 4
        %v7614 = vshll.u32 %v7263, 16
        %v7616 = vrot.slane %v7614, 5
        %v7617 = vsel %vm1258, %v7612, %v7616
        %v7618 = vshrl.u32 %v7263, 16
        %v7620 = vrot.slane %v7618, 4
        %v7621 = vor.u32 %v7620, %v7616
        %v7622 = vrot.slane %v7621, 4
        %v7624 = vshll.u32 %v7264, 16
        %v7626 = vrot.slane %v7624, 5
        %v7627 = vsel %vm1258, %v7622, %v7626
        %v7629 = vshrl.u32 %v7265, 16
        %v7631 = vrot.slane %v7629, 4
        %v7632 = vshll.u32 %v7265, 16
        %v7634 = vrot.slane %v7632, 5
        %v7635 = vor.u32 %v7631, %v7634
        %v7636 = vrot.slane %v7635, 4
        %v7638 = vshll.u32 %v7266, 16
        %v7640 = vrot.slane %v7638, 5
        %v7641 = vsel %vm1258, %v7636, %v7640
        %v7642 = vshrl.u32 %v7266, 16
        %v7644 = vrot.slane %v7642, 4
        %v7645 = vor.u32 %v7644, %v7640
        %v7646 = vrot.slane %v7645, 4
        %v7648 = vshll.u32 %v7267, 16
        %v7650 = vrot.slane %v7648, 5
        %v7651 = vsel %vm1258, %v7646, %v7650
        %v7652 = vld [vmem:[#allocation2] sm:$0xff]
        %v7653 = vld [vmem:[#allocation2 + $0x8] sm:$0xff]
        %v7654 = vld [vmem:[#allocation2 + $0x10] sm:$0xff]
        %v7655 = vld [vmem:[#allocation2 + $0x18] sm:$0xff]
        %v7656 = vld [vmem:[#allocation2 + $0x20] sm:$0xff]
        %v7657 = vld [vmem:[#allocation2 + $0x28] sm:$0xff]
        %v7658 = vld [vmem:[#allocation2 + $0x30] sm:$0xff]
        %v7659 = vld [vmem:[#allocation2 + $0x38] sm:$0xff]
        %v7660 = vld [vmem:[#allocation2 + $0x40] sm:$0xff]
        %v7661 = vld [vmem:[#allocation2 + $0x48] sm:$0xff]
        %v7662 = vld [vmem:[#allocation2 + $0x50] sm:$0xff]
        %v7663 = vld [vmem:[#allocation2 + $0x58] sm:$0xff]
        %v7664 = vld [vmem:[#allocation2 + $0x60] sm:$0xff]
        %v7665 = vld [vmem:[#allocation2 + $0x68] sm:$0xff]
        %v7666 = vld [vmem:[#allocation2 + $0x70] sm:$0xff]
        %v7667 = vld [vmem:[#allocation2 + $0x78] sm:$0xff]
        %v7668 = vld [vmem:[#allocation2 + $0x80] sm:$0xff]
        %v7669 = vld [vmem:[#allocation2 + $0x88] sm:$0xff]
        %v7670 = vld [vmem:[#allocation2 + $0x90] sm:$0xff]
        %v7671 = vld [vmem:[#allocation2 + $0x98] sm:$0xff]
        %v7672 = vld [vmem:[#allocation2 + $0xa0] sm:$0xff]
        %v7673 = vld [vmem:[#allocation2 + $0xa8] sm:$0xff]
        %v7674 = vld [vmem:[#allocation2 + $0xb0] sm:$0xff]
        %v7675 = vld [vmem:[#allocation2 + $0xb8] sm:$0xff]
        %v7676 = vld [vmem:[#allocation2 + $0xc0] sm:$0xff]
        %v7677 = vld [vmem:[#allocation2 + $0xc8] sm:$0xff]
        %v7678 = vld [vmem:[#allocation2 + $0xd0] sm:$0xff]
        %v7679 = vld [vmem:[#allocation2 + $0xd8] sm:$0xff]
        %v7680 = vld [vmem:[#allocation2 + $0xe0] sm:$0xff]
        %v7681 = vld [vmem:[#allocation2 + $0xe8] sm:$0xff]
        %v7682 = vld [vmem:[#allocation2 + $0xf0] sm:$0xff]
        %v7683 = vld [vmem:[#allocation2 + $0xf8] sm:$0xff]
        %v7684 = vld [vmem:[#allocation2 + $0x100] sm:$0xff]
        %v7685 = vld [vmem:[#allocation2 + $0x108] sm:$0xff]
        %v7686 = vld [vmem:[#allocation2 + $0x110] sm:$0xff]
        %v7687 = vld [vmem:[#allocation2 + $0x118] sm:$0xff]
        %v7688 = vld [vmem:[#allocation2 + $0x120] sm:$0xff]
        %v7689 = vld [vmem:[#allocation2 + $0x128] sm:$0xff]
        %v7690 = vld [vmem:[#allocation2 + $0x130] sm:$0xff]
        %v7691 = vld [vmem:[#allocation2 + $0x138] sm:$0xff]
        %v7692 = vld [vmem:[#allocation2 + $0x140] sm:$0xff]
        %v7693 = vld [vmem:[#allocation2 + $0x148] sm:$0xff]
        %v7694 = vld [vmem:[#allocation2 + $0x150] sm:$0xff]
        %v7695 = vld [vmem:[#allocation2 + $0x158] sm:$0xff]
        %v7696 = vld [vmem:[#allocation2 + $0x160] sm:$0xff]
        %v7697 = vld [vmem:[#allocation2 + $0x168] sm:$0xff]
        %v7698 = vld [vmem:[#allocation2 + $0x170] sm:$0xff]
        %v7699 = vld [vmem:[#allocation2 + $0x178] sm:$0xff]
        %v7700 = vld [vmem:[#allocation2 + $0x180] sm:$0xff]
        %v7701 = vld [vmem:[#allocation2 + $0x188] sm:$0xff]
        %v7702 = vld [vmem:[#allocation2 + $0x190] sm:$0xff]
        %v7703 = vld [vmem:[#allocation2 + $0x198] sm:$0xff]
        %v7704 = vld [vmem:[#allocation2 + $0x1a0] sm:$0xff]
        %v7705 = vld [vmem:[#allocation2 + $0x1a8] sm:$0xff]
        %v7706 = vld [vmem:[#allocation2 + $0x1b0] sm:$0xff]
        %v7707 = vld [vmem:[#allocation2 + $0x1b8] sm:$0xff]
        %v7708 = vld [vmem:[#allocation2 + $0x1c0] sm:$0xff]
        %v7709 = vld [vmem:[#allocation2 + $0x1c8] sm:$0xff]
        %v7710 = vld [vmem:[#allocation2 + $0x1d0] sm:$0xff]
        %v7711 = vld [vmem:[#allocation2 + $0x1d8] sm:$0xff]
        %v7712 = vld [vmem:[#allocation2 + $0x1e0] sm:$0xff]
        %v7713 = vld [vmem:[#allocation2 + $0x1e8] sm:$0xff]
        %v7714 = vld [vmem:[#allocation2 + $0x1f0] sm:$0xff]
        %v7715 = vld [vmem:[#allocation2 + $0x1f8] sm:$0xff]
        %v7716 = vld [vmem:[#allocation2 + $0x200] sm:$0xff]
        %v7717 = vld [vmem:[#allocation2 + $0x208] sm:$0xff]
        %v7718 = vld [vmem:[#allocation2 + $0x210] sm:$0xff]
        %v7719 = vld [vmem:[#allocation2 + $0x218] sm:$0xff]
        %v7720 = vld [vmem:[#allocation2 + $0x220] sm:$0xff]
        %v7721 = vld [vmem:[#allocation2 + $0x228] sm:$0xff]
        %v7722 = vld [vmem:[#allocation2 + $0x230] sm:$0xff]
        %v7723 = vld [vmem:[#allocation2 + $0x238] sm:$0xff]
        %v7724 = vld [vmem:[#allocation2 + $0x240] sm:$0xff]
        %v7725 = vld [vmem:[#allocation2 + $0x248] sm:$0xff]
        %v7726 = vld [vmem:[#allocation2 + $0x250] sm:$0xff]
        %v7727 = vld [vmem:[#allocation2 + $0x258] sm:$0xff]
        %v7728 = vld [vmem:[#allocation2 + $0x260] sm:$0xff]
        %v7729 = vld [vmem:[#allocation2 + $0x268] sm:$0xff]
        %v7730 = vld [vmem:[#allocation2 + $0x270] sm:$0xff]
        %v7731 = vld [vmem:[#allocation2 + $0x278] sm:$0xff]
        %v7732 = vld [vmem:[#allocation2 + $0x280] sm:$0xff]
        %v7733 = vld [vmem:[#allocation2 + $0x288] sm:$0xff]
        %v7734 = vld [vmem:[#allocation2 + $0x290] sm:$0xff]
        %v7735 = vld [vmem:[#allocation2 + $0x298] sm:$0xff]
        %v7736 = vld [vmem:[#allocation2 + $0x2a0] sm:$0xff]
        %v7737 = vld [vmem:[#allocation2 + $0x2a8] sm:$0xff]
        %v7738 = vld [vmem:[#allocation2 + $0x2b0] sm:$0xff]
        %v7739 = vld [vmem:[#allocation2 + $0x2b8] sm:$0xff]
        %v7740 = vld [vmem:[#allocation2 + $0x2c0] sm:$0xff]
        %v7741 = vld [vmem:[#allocation2 + $0x2c8] sm:$0xff]
        %v7742 = vld [vmem:[#allocation2 + $0x2d0] sm:$0xff]
        %v7743 = vld [vmem:[#allocation2 + $0x2d8] sm:$0xff]
        %v7744 = vld [vmem:[#allocation2 + $0x2e0] sm:$0xff]
        %v7745 = vld [vmem:[#allocation2 + $0x2e8] sm:$0xff]
        %v7746 = vld [vmem:[#allocation2 + $0x2f0] sm:$0xff]
        %v7747 = vld [vmem:[#allocation2 + $0x2f8] sm:$0xff]
        %s7748 = scalar_lea.vmem %s249, 42
        %v7749 = vld [vmem:[%s7748] sm:$0x3f]
        %v7750 = vunpack.c.l.b16 %v7281
        %v7751 = vunpack.c.l.b16 %v7291
        %v7752 = vunpack.c.l.b16 %v7305
        %v7753 = vunpack.c.l.b16 %v7315
        %v7754 = vunpack.c.l.b16 %v7329
        %v7755 = vunpack.c.l.b16 %v7339
        %v7756 = vunpack.c.l.b16 %v7353
        %v7757 = vunpack.c.l.b16 %v7363
        %v7758 = vunpack.c.l.b16 %v7377
        %v7759 = vunpack.c.l.b16 %v7387
        %v7760 = vunpack.c.l.b16 %v7401
        %v7761 = vunpack.c.l.b16 %v7411
        %v7762 = vunpack.c.l.b16 %v7425
        %v7763 = vunpack.c.l.b16 %v7435
        %v7764 = vunpack.c.l.b16 %v7449
        %v7765 = vunpack.c.l.b16 %v7459
        %v7766 = vunpack.c.l.b16 %v7473
        %v7767 = vunpack.c.l.b16 %v7483
        %v7768 = vunpack.c.l.b16 %v7497
        %v7769 = vunpack.c.l.b16 %v7507
        %v7770 = vunpack.c.l.b16 %v7521
        %v7771 = vunpack.c.l.b16 %v7531
        %v7772 = vunpack.c.l.b16 %v7545
        %v7773 = vunpack.c.l.b16 %v7555
        %v7774 = vunpack.c.l.b16 %v7569
        %v7775 = vunpack.c.l.b16 %v7579
        %v7776 = vunpack.c.l.b16 %v7593
        %v7777 = vunpack.c.l.b16 %v7603
        %v7778 = vunpack.c.l.b16 %v7617
        %v7779 = vunpack.c.l.b16 %v7627
        %v7780 = vunpack.c.l.b16 %v7641
        %v7781 = vunpack.c.l.b16 %v7651
        %v7782 = vpack.c.b16 %v7751, %v7750
        %v7783 = vpack.c.b16 %v7753, %v7752
        %v7784 = vpack.c.b16 %v7755, %v7754
        %v7785 = vpack.c.b16 %v7757, %v7756
        %v7786 = vpack.c.b16 %v7759, %v7758
        %v7787 = vpack.c.b16 %v7761, %v7760
        %v7788 = vpack.c.b16 %v7763, %v7762
        %v7789 = vpack.c.b16 %v7765, %v7764
        %v7790 = vpack.c.b16 %v7767, %v7766
        %v7791 = vpack.c.b16 %v7769, %v7768
        %v7792 = vpack.c.b16 %v7771, %v7770
        %v7793 = vpack.c.b16 %v7773, %v7772
        %v7794 = vpack.c.b16 %v7775, %v7774
        %v7795 = vpack.c.b16 %v7777, %v7776
        %v7796 = vpack.c.b16 %v7779, %v7778
        %v7797 = vpack.c.b16 %v7781, %v7780
        %v7799 = vcombine.high %v7749, %v7749
        %v7801 = vunpack.c.l.s4 1983009808
        %v7802 = vunpack.c.0.s8 %v7801
        %v7803 = vlaneseq
        %v7804 = vshrl.u32 %v7803, 7
        %v7805 = vsub.s32 %v7802, %v7804
        %v7806 = vrot.slane %v7749, %v7805
        %v7808 = vunpack.c.l.s4 1983009808
        %v7809 = vunpack.c.0.s8 %v7808
        %v7810 = vlaneseq
        %v7811 = vshrl.u32 %v7810, 7
        %v7812 = vsub.s32 %v7809, %v7811
        %v7813 = vrot.slane %v7799, %v7812
        %v7814 = vcombine.high %v7806, %v7806
        %v7816 = vsel %vm602, %v7782, 0
        %v7819 = vsel %vm602, %v7783, 0
        %v7822 = vsel %vm602, %v7784, 0
        %v7825 = vsel %vm602, %v7785, 0
        %v7828 = vsel %vm602, %v7786, 0
        %v7831 = vsel %vm602, %v7787, 0
        %v7834 = vsel %vm602, %v7788, 0
        %v7837 = vsel %vm602, %v7789, 0
        %v7840 = vsel %vm602, %v7790, 0
        %v7843 = vsel %vm602, %v7791, 0
        %v7846 = vsel %vm602, %v7792, 0
        %v7849 = vsel %vm602, %v7793, 0
        %v7852 = vsel %vm602, %v7794, 0
        %v7855 = vsel %vm602, %v7795, 0
        %v7858 = vsel %vm602, %v7796, 0
        %v7861 = vsel %vm602, %v7797, 0
        %v7864 = vsel %vm651, %v7806, 0
        %v7867 = vsel %vm651, %v7814, 0
        %v7870 = vsel %vm651, %v7813, 0
        %7872 = vmatprep.subr.bf16.mxu0 %v7867
        %7873 = vmatpush1.bf16.msra.mxu0 %v7864
        %7874 = vmatprep.subr.bf16.mxu0 0
        %7875 = vmatpush1.bf16.msra.mxu0 0
        %7876 = vmatprep.subr.bf16.mxu0 0
        %7877 = vmatpush1.bf16.msra.mxu0 0
        %7878 = vmatprep.subr.bf16.mxu0 0
        %7879 = vmatpush1.bf16.msra.mxu0 0
        %7880 = vmatprep.subr.bf16.mxu0 0
        %7881 = vmatpush1.bf16.msra.mxu0 0
        %7882 = vmatprep.subr.bf16.mxu0 0
        %7883 = vmatpush1.bf16.msra.mxu0 0
        %7884 = vmatprep.subr.bf16.mxu0 0
        %7885 = vmatpush1.bf16.msra.mxu0 0
        %7886 = vmatprep.subr.bf16.mxu0 0
        %7887 = vmatpush1.bf16.msra.mxu0 0
        %7888 = vmatprep.subr.bf16.mxu0 0
        %7889 = vmatpush1.bf16.msra.mxu0 0
        %7890 = vmatprep.subr.bf16.mxu0 0
        %7891 = vmatpush1.bf16.msra.mxu0 0
        %7892 = vmatprep.subr.bf16.mxu0 0
        %7893 = vmatpush1.bf16.msra.mxu0 0
        %7894 = vmatprep.subr.bf16.mxu0 0
        %7895 = vmatpush1.bf16.msra.mxu0 0
        %7896 = vmatprep.subr.bf16.mxu0 0
        %7897 = vmatpush1.bf16.msra.mxu0 0
        %7898 = vmatprep.subr.bf16.mxu0 0
        %7899 = vmatpush1.bf16.msra.mxu0 0
        %7900 = vmatprep.subr.bf16.mxu0 0
        %7901 = vmatpush1.bf16.msra.mxu0 0
        %7902 = vmatprep.subr.bf16.mxu0 0
        %7903 = vmatpush1.bf16.msra.mxu0 0
        %7904 = vmatprep.mubr.bf16.mxu0 0
        %7905 = vmatmul.mubr.bf16.gmra.mrb[0].mxu0 %v7816
        %v7906 = vpop.f32.mrb[0].mxu0
        %v7907 = vadd.f32 0.0, %v7906
        %v7908 = vpop.f32.mrb[0].mxu0
        %v7909 = vadd.f32 0.0, %v7908
        %v7910 = vpop.f32.mrb[0].mxu0
        %v7911 = vadd.f32 0.0, %v7910
        %v7912 = vpop.f32.mrb[0].mxu0
        %v7913 = vadd.f32 0.0, %v7912
        %7914 = vmatprep.mubr.bf16.mxu0 0
        %7915 = vmatmul.mubr.bf16.gmra.mrb[0].mxu0 %v7819
        %v7916 = vpop.f32.mrb[0].mxu0
        %v7917 = vadd.f32 0.0, %v7916
        %v7918 = vpop.f32.mrb[0].mxu0
        %v7919 = vadd.f32 0.0, %v7918
        %v7920 = vpop.f32.mrb[0].mxu0
        %v7921 = vadd.f32 0.0, %v7920
        %v7922 = vpop.f32.mrb[0].mxu0
        %v7923 = vadd.f32 0.0, %v7922
        %7924 = vmatprep.mubr.bf16.mxu0 0
        %7925 = vmatmul.mubr.bf16.gmra.mrb[0].mxu0 %v7822
        %v7926 = vpop.f32.mrb[0].mxu0
        %v7927 = vadd.f32 0.0, %v7926
        %v7928 = vpop.f32.mrb[0].mxu0
        %v7929 = vadd.f32 0.0, %v7928
        %v7930 = vpop.f32.mrb[0].mxu0
        %v7931 = vadd.f32 0.0, %v7930
        %v7932 = vpop.f32.mrb[0].mxu0
        %v7933 = vadd.f32 0.0, %v7932
        %7934 = vmatprep.mubr.bf16.mxu0 0
        %7935 = vmatmul.mubr.bf16.gmra.mrb[0].mxu0 %v7825
        %v7936 = vpop.f32.mrb[0].mxu0
        %v7937 = vadd.f32 0.0, %v7936
        %v7938 = vpop.f32.mrb[0].mxu0
        %v7939 = vadd.f32 0.0, %v7938
        %v7940 = vpop.f32.mrb[0].mxu0
        %v7941 = vadd.f32 0.0, %v7940
        %v7942 = vpop.f32.mrb[0].mxu0
        %v7943 = vadd.f32 0.0, %v7942
        %7944 = vmatprep.mubr.bf16.mxu0 0
        %7945 = vmatmul.mubr.bf16.gmra.mrb[0].mxu0 %v7828
        %v7946 = vpop.f32.mrb[0].mxu0
        %v7947 = vadd.f32 0.0, %v7946
        %v7948 = vpop.f32.mrb[0].mxu0
        %v7949 = vadd.f32 0.0, %v7948
        %v7950 = vpop.f32.mrb[0].mxu0
        %v7951 = vadd.f32 0.0, %v7950
        %v7952 = vpop.f32.mrb[0].mxu0
        %v7953 = vadd.f32 0.0, %v7952
        %7954 = vmatprep.mubr.bf16.mxu0 0
        %7955 = vmatmul.mubr.bf16.gmra.mrb[0].mxu0 %v7831
        %v7956 = vpop.f32.mrb[0].mxu0
        %v7957 = vadd.f32 0.0, %v7956
        %v7958 = vpop.f32.mrb[0].mxu0
        %v7959 = vadd.f32 0.0, %v7958
        %v7960 = vpop.f32.mrb[0].mxu0
        %v7961 = vadd.f32 0.0, %v7960
        %v7962 = vpop.f32.mrb[0].mxu0
        %v7963 = vadd.f32 0.0, %v7962
        %7964 = vmatprep.mubr.bf16.mxu0 0
        %7965 = vmatmul.mubr.bf16.gmra.mrb[0].mxu0 %v7834
        %v7966 = vpop.f32.mrb[0].mxu0
        %v7967 = vadd.f32 0.0, %v7966
        %v7968 = vpop.f32.mrb[0].mxu0
        %v7969 = vadd.f32 0.0, %v7968
        %v7970 = vpop.f32.mrb[0].mxu0
        %v7971 = vadd.f32 0.0, %v7970
        %v7972 = vpop.f32.mrb[0].mxu0
        %v7973 = vadd.f32 0.0, %v7972
        %7974 = vmatprep.mubr.bf16.mxu0 0
        %7975 = vmatmul.mubr.bf16.gmra.mrb[0].mxu0 %v7837
        %v7976 = vpop.f32.mrb[0].mxu0
        %v7977 = vadd.f32 0.0, %v7976
        %v7978 = vpop.f32.mrb[0].mxu0
        %v7979 = vadd.f32 0.0, %v7978
        %v7980 = vpop.f32.mrb[0].mxu0
        %v7981 = vadd.f32 0.0, %v7980
        %v7982 = vpop.f32.mrb[0].mxu0
        %v7983 = vadd.f32 0.0, %v7982
        %7984 = vmatprep.mubr.bf16.mxu0 0
        %7985 = vmatmul.mubr.bf16.gmra.mrb[0].mxu0 %v7840
        %v7986 = vpop.f32.mrb[0].mxu0
        %v7987 = vadd.f32 0.0, %v7986
        %v7988 = vpop.f32.mrb[0].mxu0
        %v7989 = vadd.f32 0.0, %v7988
        %v7990 = vpop.f32.mrb[0].mxu0
        %v7991 = vadd.f32 0.0, %v7990
        %v7992 = vpop.f32.mrb[0].mxu0
        %v7993 = vadd.f32 0.0, %v7992
        %7994 = vmatprep.mubr.bf16.mxu0 0
        %7995 = vmatmul.mubr.bf16.gmra.mrb[0].mxu0 %v7843
        %v7996 = vpop.f32.mrb[0].mxu0
        %v7997 = vadd.f32 0.0, %v7996
        %v7998 = vpop.f32.mrb[0].mxu0
        %v7999 = vadd.f32 0.0, %v7998
        %v8000 = vpop.f32.mrb[0].mxu0
        %v8001 = vadd.f32 0.0, %v8000
        %v8002 = vpop.f32.mrb[0].mxu0
        %v8003 = vadd.f32 0.0, %v8002
        %8004 = vmatprep.mubr.bf16.mxu0 0
        %8005 = vmatmul.mubr.bf16.gmra.mrb[0].mxu0 %v7846
        %v8006 = vpop.f32.mrb[0].mxu0
        %v8007 = vadd.f32 0.0, %v8006
        %v8008 = vpop.f32.mrb[0].mxu0
        %v8009 = vadd.f32 0.0, %v8008
        %v8010 = vpop.f32.mrb[0].mxu0
        %v8011 = vadd.f32 0.0, %v8010
        %v8012 = vpop.f32.mrb[0].mxu0
        %v8013 = vadd.f32 0.0, %v8012
        %8014 = vmatprep.mubr.bf16.mxu0 0
        %8015 = vmatmul.mubr.bf16.gmra.mrb[0].mxu0 %v7849
        %v8016 = vpop.f32.mrb[0].mxu0
        %v8017 = vadd.f32 0.0, %v8016
        %v8018 = vpop.f32.mrb[0].mxu0
        %v8019 = vadd.f32 0.0, %v8018
        %v8020 = vpop.f32.mrb[0].mxu0
        %v8021 = vadd.f32 0.0, %v8020
        %v8022 = vpop.f32.mrb[0].mxu0
        %v8023 = vadd.f32 0.0, %v8022
        %8024 = vmatprep.mubr.bf16.mxu0 0
        %8025 = vmatmul.mubr.bf16.gmra.mrb[0].mxu0 %v7852
        %v8026 = vpop.f32.mrb[0].mxu0
        %v8027 = vadd.f32 0.0, %v8026
        %v8028 = vpop.f32.mrb[0].mxu0
        %v8029 = vadd.f32 0.0, %v8028
        %v8030 = vpop.f32.mrb[0].mxu0
        %v8031 = vadd.f32 0.0, %v8030
        %v8032 = vpop.f32.mrb[0].mxu0
        %v8033 = vadd.f32 0.0, %v8032
        %8034 = vmatprep.mubr.bf16.mxu0 0
        %8035 = vmatmul.mubr.bf16.gmra.mrb[0].mxu0 %v7855
        %v8036 = vpop.f32.mrb[0].mxu0
        %v8037 = vadd.f32 0.0, %v8036
        %v8038 = vpop.f32.mrb[0].mxu0
        %v8039 = vadd.f32 0.0, %v8038
        %v8040 = vpop.f32.mrb[0].mxu0
        %v8041 = vadd.f32 0.0, %v8040
        %v8042 = vpop.f32.mrb[0].mxu0
        %v8043 = vadd.f32 0.0, %v8042
        %8044 = vmatprep.mubr.bf16.mxu0 0
        %8045 = vmatmul.mubr.bf16.gmra.mrb[0].mxu0 %v7858
        %v8046 = vpop.f32.mrb[0].mxu0
        %v8047 = vadd.f32 0.0, %v8046
        %v8048 = vpop.f32.mrb[0].mxu0
        %v8049 = vadd.f32 0.0, %v8048
        %v8050 = vpop.f32.mrb[0].mxu0
        %v8051 = vadd.f32 0.0, %v8050
        %v8052 = vpop.f32.mrb[0].mxu0
        %v8053 = vadd.f32 0.0, %v8052
        %8054 = vmatprep.mubr.bf16.mxu0 0
        %8055 = vmatmul.mubr.bf16.gmra.mrb[0].mxu0 %v7861
        %v8056 = vpop.f32.mrb[0].mxu0
        %v8057 = vadd.f32 0.0, %v8056
        %v8058 = vpop.f32.mrb[0].mxu0
        %v8059 = vadd.f32 0.0, %v8058
        %v8060 = vpop.f32.mrb[0].mxu0
        %v8061 = vadd.f32 0.0, %v8060
        %v8062 = vpop.f32.mrb[0].mxu0
        %v8063 = vadd.f32 0.0, %v8062
        %8064 = vdwg.mxu0
        %8065 = vmatprep.subr.bf16.mxu0 0
        %8066 = vmatpush1.bf16.msra.mxu0 %v7870
        %8067 = vmatprep.subr.bf16.mxu0 0
        %8068 = vmatpush1.bf16.msra.mxu0 0
        %8069 = vmatprep.subr.bf16.mxu0 0
        %8070 = vmatpush1.bf16.msra.mxu0 0
        %8071 = vmatprep.subr.bf16.mxu0 0
        %8072 = vmatpush1.bf16.msra.mxu0 0
        %8073 = vmatprep.subr.bf16.mxu0 0
        %8074 = vmatpush1.bf16.msra.mxu0 0
        %8075 = vmatprep.subr.bf16.mxu0 0
        %8076 = vmatpush1.bf16.msra.mxu0 0
        %8077 = vmatprep.subr.bf16.mxu0 0
        %8078 = vmatpush1.bf16.msra.mxu0 0
        %8079 = vmatprep.subr.bf16.mxu0 0
        %8080 = vmatpush1.bf16.msra.mxu0 0
        %8081 = vmatprep.subr.bf16.mxu0 0
        %8082 = vmatpush1.bf16.msra.mxu0 0
        %8083 = vmatprep.subr.bf16.mxu0 0
        %8084 = vmatpush1.bf16.msra.mxu0 0
        %8085 = vmatprep.subr.bf16.mxu0 0
        %8086 = vmatpush1.bf16.msra.mxu0 0
        %8087 = vmatprep.subr.bf16.mxu0 0
        %8088 = vmatpush1.bf16.msra.mxu0 0
        %8089 = vmatprep.subr.bf16.mxu0 0
        %8090 = vmatpush1.bf16.msra.mxu0 0
        %8091 = vmatprep.subr.bf16.mxu0 0
        %8092 = vmatpush1.bf16.msra.mxu0 0
        %8093 = vmatprep.subr.bf16.mxu0 0
        %8094 = vmatpush1.bf16.msra.mxu0 0
        %8095 = vmatprep.subr.bf16.mxu0 0
        %8096 = vmatpush1.bf16.msra.mxu0 0
        %8097 = vmatprep.mubr.bf16.mxu0 0
        %8098 = vmatmul.mubr.bf16.gmra.mrb[0].mxu0 %v7816
        %v8099 = vpop.f32.mrb[0].mxu0
        %v8100 = vadd.f32 0.0, %v8099
        %v8101 = vpop.f32.mrb[0].mxu0
        %v8102 = vpop.f32.mrb[0].mxu0
        %v8103 = vadd.f32 0.0, %v8102
        %v8104 = vpop.f32.mrb[0].mxu0
        %8105 = vmatprep.mubr.bf16.mxu0 0
        %8106 = vmatmul.mubr.bf16.gmra.mrb[0].mxu0 %v7819
        %v8107 = vpop.f32.mrb[0].mxu0
        %v8108 = vadd.f32 0.0, %v8107
        %v8109 = vpop.f32.mrb[0].mxu0
        %v8110 = vpop.f32.mrb[0].mxu0
        %v8111 = vadd.f32 0.0, %v8110
        %v8112 = vpop.f32.mrb[0].mxu0
        %8113 = vmatprep.mubr.bf16.mxu0 0
        %8114 = vmatmul.mubr.bf16.gmra.mrb[0].mxu0 %v7822
        %v8115 = vpop.f32.mrb[0].mxu0
        %v8116 = vadd.f32 0.0, %v8115
        %v8117 = vpop.f32.mrb[0].mxu0
        %v8118 = vpop.f32.mrb[0].mxu0
        %v8119 = vadd.f32 0.0, %v8118
        %v8120 = vpop.f32.mrb[0].mxu0
        %8121 = vmatprep.mubr.bf16.mxu0 0
        %8122 = vmatmul.mubr.bf16.gmra.mrb[0].mxu0 %v7825
        %v8123 = vpop.f32.mrb[0].mxu0
        %v8124 = vadd.f32 0.0, %v8123
        %v8125 = vpop.f32.mrb[0].mxu0
        %v8126 = vpop.f32.mrb[0].mxu0
        %v8127 = vadd.f32 0.0, %v8126
        %v8128 = vpop.f32.mrb[0].mxu0
        %8129 = vmatprep.mubr.bf16.mxu0 0
        %8130 = vmatmul.mubr.bf16.gmra.mrb[0].mxu0 %v7828
        %v8131 = vpop.f32.mrb[0].mxu0
        %v8132 = vadd.f32 0.0, %v8131
        %v8133 = vpop.f32.mrb[0].mxu0
        %v8134 = vpop.f32.mrb[0].mxu0
        %v8135 = vadd.f32 0.0, %v8134
        %v8136 = vpop.f32.mrb[0].mxu0
        %8137 = vmatprep.mubr.bf16.mxu0 0
        %8138 = vmatmul.mubr.bf16.gmra.mrb[0].mxu0 %v7831
        %v8139 = vpop.f32.mrb[0].mxu0
        %v8140 = vadd.f32 0.0, %v8139
        %v8141 = vpop.f32.mrb[0].mxu0
        %v8142 = vpop.f32.mrb[0].mxu0
        %v8143 = vadd.f32 0.0, %v8142
        %v8144 = vpop.f32.mrb[0].mxu0
        %8145 = vmatprep.mubr.bf16.mxu0 0
        %8146 = vmatmul.mubr.bf16.gmra.mrb[0].mxu0 %v7834
        %v8147 = vpop.f32.mrb[0].mxu0
        %v8148 = vadd.f32 0.0, %v8147
        %v8149 = vpop.f32.mrb[0].mxu0
        %v8150 = vpop.f32.mrb[0].mxu0
        %v8151 = vadd.f32 0.0, %v8150
        %v8152 = vpop.f32.mrb[0].mxu0
        %8153 = vmatprep.mubr.bf16.mxu0 0
        %8154 = vmatmul.mubr.bf16.gmra.mrb[0].mxu0 %v7837
        %v8155 = vpop.f32.mrb[0].mxu0
        %v8156 = vadd.f32 0.0, %v8155
        %v8157 = vpop.f32.mrb[0].mxu0
        %v8158 = vpop.f32.mrb[0].mxu0
        %v8159 = vadd.f32 0.0, %v8158
        %v8160 = vpop.f32.mrb[0].mxu0
        %8161 = vmatprep.mubr.bf16.mxu0 0
        %8162 = vmatmul.mubr.bf16.gmra.mrb[0].mxu0 %v7840
        %v8163 = vpop.f32.mrb[0].mxu0
        %v8164 = vadd.f32 0.0, %v8163
        %v8165 = vpop.f32.mrb[0].mxu0
        %v8166 = vpop.f32.mrb[0].mxu0
        %v8167 = vadd.f32 0.0, %v8166
        %v8168 = vpop.f32.mrb[0].mxu0
        %8169 = vmatprep.mubr.bf16.mxu0 0
        %8170 = vmatmul.mubr.bf16.gmra.mrb[0].mxu0 %v7843
        %v8171 = vpop.f32.mrb[0].mxu0
        %v8172 = vadd.f32 0.0, %v8171
        %v8173 = vpop.f32.mrb[0].mxu0
        %v8174 = vpop.f32.mrb[0].mxu0
        %v8175 = vadd.f32 0.0, %v8174
        %v8176 = vpop.f32.mrb[0].mxu0
        %8177 = vmatprep.mubr.bf16.mxu0 0
        %8178 = vmatmul.mubr.bf16.gmra.mrb[0].mxu0 %v7846
        %v8179 = vpop.f32.mrb[0].mxu0
        %v8180 = vadd.f32 0.0, %v8179
        %v8181 = vpop.f32.mrb[0].mxu0
        %v8182 = vpop.f32.mrb[0].mxu0
        %v8183 = vadd.f32 0.0, %v8182
        %v8184 = vpop.f32.mrb[0].mxu0
        %8185 = vmatprep.mubr.bf16.mxu0 0
        %8186 = vmatmul.mubr.bf16.gmra.mrb[0].mxu0 %v7849
        %v8187 = vpop.f32.mrb[0].mxu0
        %v8188 = vadd.f32 0.0, %v8187
        %v8189 = vpop.f32.mrb[0].mxu0
        %v8190 = vpop.f32.mrb[0].mxu0
        %v8191 = vadd.f32 0.0, %v8190
        %v8192 = vpop.f32.mrb[0].mxu0
        %8193 = vmatprep.mubr.bf16.mxu0 0
        %8194 = vmatmul.mubr.bf16.gmra.mrb[0].mxu0 %v7852
        %v8195 = vpop.f32.mrb[0].mxu0
        %v8196 = vadd.f32 0.0, %v8195
        %v8197 = vpop.f32.mrb[0].mxu0
        %v8198 = vpop.f32.mrb[0].mxu0
        %v8199 = vadd.f32 0.0, %v8198
        %v8200 = vpop.f32.mrb[0].mxu0
        %8201 = vmatprep.mubr.bf16.mxu0 0
        %8202 = vmatmul.mubr.bf16.gmra.mrb[0].mxu0 %v7855
        %v8203 = vpop.f32.mrb[0].mxu0
        %v8204 = vadd.f32 0.0, %v8203
        %v8205 = vpop.f32.mrb[0].mxu0
        %v8206 = vpop.f32.mrb[0].mxu0
        %v8207 = vadd.f32 0.0, %v8206
        %v8208 = vpop.f32.mrb[0].mxu0
        %8209 = vmatprep.mubr.bf16.mxu0 0
        %8210 = vmatmul.mubr.bf16.gmra.mrb[0].mxu0 %v7858
        %v8211 = vpop.f32.mrb[0].mxu0
        %v8212 = vadd.f32 0.0, %v8211
        %v8213 = vpop.f32.mrb[0].mxu0
        %v8214 = vpop.f32.mrb[0].mxu0
        %v8215 = vadd.f32 0.0, %v8214
        %v8216 = vpop.f32.mrb[0].mxu0
        %8217 = vmatprep.mubr.bf16.mxu0 0
        %8218 = vmatmul.mubr.bf16.gmra.mrb[0].mxu0 %v7861
        %v8219 = vpop.f32.mrb[0].mxu0
        %v8220 = vadd.f32 0.0, %v8219
        %v8221 = vpop.f32.mrb[0].mxu0
        %v8222 = vpop.f32.mrb[0].mxu0
        %v8223 = vadd.f32 0.0, %v8222
        %v8224 = vpop.f32.mrb[0].mxu0
        %8225 = vdwg.mxu0
        %v8226 = vadd.f32 %v7652, %v7907
        %v8227 = vadd.f32 %v7653, %v7909
        %v8228 = vadd.f32 %v7654, %v8100
        %v8229 = vadd.f32 %v7655, %v7911
        %v8230 = vadd.f32 %v7656, %v7913
        %v8231 = vadd.f32 %v7657, %v8103
        %v8232 = vadd.f32 %v7658, %v7917
        %v8233 = vadd.f32 %v7659, %v7919
        %v8234 = vadd.f32 %v7660, %v8108
        %v8235 = vadd.f32 %v7661, %v7921
        %v8236 = vadd.f32 %v7662, %v7923
        %v8237 = vadd.f32 %v7663, %v8111
        %v8238 = vadd.f32 %v7664, %v7927
        %v8239 = vadd.f32 %v7665, %v7929
        %v8240 = vadd.f32 %v7666, %v8116
        %v8241 = vadd.f32 %v7667, %v7931
        %v8242 = vadd.f32 %v7668, %v7933
        %v8243 = vadd.f32 %v7669, %v8119
        %v8244 = vadd.f32 %v7670, %v7937
        %v8245 = vadd.f32 %v7671, %v7939
        %v8246 = vadd.f32 %v7672, %v8124
        %v8247 = vadd.f32 %v7673, %v7941
        %v8248 = vadd.f32 %v7674, %v7943
        %v8249 = vadd.f32 %v7675, %v8127
        %v8250 = vadd.f32 %v7676, %v7947
        %v8251 = vadd.f32 %v7677, %v7949
        %v8252 = vadd.f32 %v7678, %v8132
        %v8253 = vadd.f32 %v7679, %v7951
        %v8254 = vadd.f32 %v7680, %v7953
        %v8255 = vadd.f32 %v7681, %v8135
        %v8256 = vadd.f32 %v7682, %v7957
        %v8257 = vadd.f32 %v7683, %v7959
        %v8258 = vadd.f32 %v7684, %v8140
        %v8259 = vadd.f32 %v7685, %v7961
        %v8260 = vadd.f32 %v7686, %v7963
        %v8261 = vadd.f32 %v7687, %v8143
        %v8262 = vadd.f32 %v7688, %v7967
        %v8263 = vadd.f32 %v7689, %v7969
        %v8264 = vadd.f32 %v7690, %v8148
        %v8265 = vadd.f32 %v7691, %v7971
        %v8266 = vadd.f32 %v7692, %v7973
        %v8267 = vadd.f32 %v7693, %v8151
        %v8268 = vadd.f32 %v7694, %v7977
        %v8269 = vadd.f32 %v7695, %v7979
        %v8270 = vadd.f32 %v7696, %v8156
        %v8271 = vadd.f32 %v7697, %v7981
        %v8272 = vadd.f32 %v7698, %v7983
        %v8273 = vadd.f32 %v7699, %v8159
        %v8274 = vadd.f32 %v7700, %v7987
        %v8275 = vadd.f32 %v7701, %v7989
        %v8276 = vadd.f32 %v7702, %v8164
        %v8277 = vadd.f32 %v7703, %v7991
        %v8278 = vadd.f32 %v7704, %v7993
        %v8279 = vadd.f32 %v7705, %v8167
        %v8280 = vadd.f32 %v7706, %v7997
        %v8281 = vadd.f32 %v7707, %v7999
        %v8282 = vadd.f32 %v7708, %v8172
        %v8283 = vadd.f32 %v7709, %v8001
        %v8284 = vadd.f32 %v7710, %v8003
        %v8285 = vadd.f32 %v7711, %v8175
        %v8286 = vadd.f32 %v7712, %v8007
        %v8287 = vadd.f32 %v7713, %v8009
        %v8288 = vadd.f32 %v7714, %v8180
        %v8289 = vadd.f32 %v7715, %v8011
        %v8290 = vadd.f32 %v7716, %v8013
        %v8291 = vadd.f32 %v7717, %v8183
        %v8292 = vadd.f32 %v7718, %v8017
        %v8293 = vadd.f32 %v7719, %v8019
        %v8294 = vadd.f32 %v7720, %v8188
        %v8295 = vadd.f32 %v7721, %v8021
        %v8296 = vadd.f32 %v7722, %v8023
        %v8297 = vadd.f32 %v7723, %v8191
        %v8298 = vadd.f32 %v7724, %v8027
        %v8299 = vadd.f32 %v7725, %v8029
        %v8300 = vadd.f32 %v7726, %v8196
        %v8301 = vadd.f32 %v7727, %v8031
        %v8302 = vadd.f32 %v7728, %v8033
        %v8303 = vadd.f32 %v7729, %v8199
        %v8304 = vadd.f32 %v7730, %v8037
        %v8305 = vadd.f32 %v7731, %v8039
        %v8306 = vadd.f32 %v7732, %v8204
        %v8307 = vadd.f32 %v7733, %v8041
        %v8308 = vadd.f32 %v7734, %v8043
        %v8309 = vadd.f32 %v7735, %v8207
        %v8310 = vadd.f32 %v7736, %v8047
        %v8311 = vadd.f32 %v7737, %v8049
        %v8312 = vadd.f32 %v7738, %v8212
        %v8313 = vadd.f32 %v7739, %v8051
        %v8314 = vadd.f32 %v7740, %v8053
        %v8315 = vadd.f32 %v7741, %v8215
        %v8316 = vadd.f32 %v7742, %v8057
        %v8317 = vadd.f32 %v7743, %v8059
        %v8318 = vadd.f32 %v7744, %v8220
        %v8319 = vadd.f32 %v7745, %v8061
        %v8320 = vadd.f32 %v7746, %v8063
        %v8321 = vadd.f32 %v7747, %v8223
        %8322 = vst [vmem:[#allocation2] sm:$0xff] %v8226
        %8323 = vst [vmem:[#allocation2 + $0x8] sm:$0xff] %v8227
        %8324 = vst.msk [vmem:[#allocation2 + $0x10] sm:$0xff] %vm1113, %v8228
        %8325 = vst [vmem:[#allocation2 + $0x18] sm:$0xff] %v8229
        %8326 = vst [vmem:[#allocation2 + $0x20] sm:$0xff] %v8230
        %8327 = vst.msk [vmem:[#allocation2 + $0x28] sm:$0xff] %vm1113, %v8231
        %8328 = vst [vmem:[#allocation2 + $0x30] sm:$0xff] %v8232
        %8329 = vst [vmem:[#allocation2 + $0x38] sm:$0xff] %v8233
        %8330 = vst.msk [vmem:[#allocation2 + $0x40] sm:$0xff] %vm1113, %v8234
        %8331 = vst [vmem:[#allocation2 + $0x48] sm:$0xff] %v8235
        %8332 = vst [vmem:[#allocation2 + $0x50] sm:$0xff] %v8236
        %8333 = vst.msk [vmem:[#allocation2 + $0x58] sm:$0xff] %vm1113, %v8237
        %8334 = vst [vmem:[#allocation2 + $0x60] sm:$0xff] %v8238
        %8335 = vst [vmem:[#allocation2 + $0x68] sm:$0xff] %v8239
        %8336 = vst.msk [vmem:[#allocation2 + $0x70] sm:$0xff] %vm1113, %v8240
        %8337 = vst [vmem:[#allocation2 + $0x78] sm:$0xff] %v8241
        %8338 = vst [vmem:[#allocation2 + $0x80] sm:$0xff] %v8242
        %8339 = vst.msk [vmem:[#allocation2 + $0x88] sm:$0xff] %vm1113, %v8243
        %8340 = vst [vmem:[#allocation2 + $0x90] sm:$0xff] %v8244
        %8341 = vst [vmem:[#allocation2 + $0x98] sm:$0xff] %v8245
        %8342 = vst.msk [vmem:[#allocation2 + $0xa0] sm:$0xff] %vm1113, %v8246
        %8343 = vst [vmem:[#allocation2 + $0xa8] sm:$0xff] %v8247
        %8344 = vst [vmem:[#allocation2 + $0xb0] sm:$0xff] %v8248
        %8345 = vst.msk [vmem:[#allocation2 + $0xb8] sm:$0xff] %vm1113, %v8249
        %8346 = vst [vmem:[#allocation2 + $0xc0] sm:$0xff] %v8250
        %8347 = vst [vmem:[#allocation2 + $0xc8] sm:$0xff] %v8251
        %8348 = vst.msk [vmem:[#allocation2 + $0xd0] sm:$0xff] %vm1113, %v8252
        %8349 = vst [vmem:[#allocation2 + $0xd8] sm:$0xff] %v8253
        %8350 = vst [vmem:[#allocation2 + $0xe0] sm:$0xff] %v8254
        %8351 = vst.msk [vmem:[#allocation2 + $0xe8] sm:$0xff] %vm1113, %v8255
        %8352 = vst [vmem:[#allocation2 + $0xf0] sm:$0xff] %v8256
        %8353 = vst [vmem:[#allocation2 + $0xf8] sm:$0xff] %v8257
        %8354 = vst.msk [vmem:[#allocation2 + $0x100] sm:$0xff] %vm1113, %v8258
        %8355 = vst [vmem:[#allocation2 + $0x108] sm:$0xff] %v8259
        %8356 = vst [vmem:[#allocation2 + $0x110] sm:$0xff] %v8260
        %8357 = vst.msk [vmem:[#allocation2 + $0x118] sm:$0xff] %vm1113, %v8261
        %8358 = vst [vmem:[#allocation2 + $0x120] sm:$0xff] %v8262
        %8359 = vst [vmem:[#allocation2 + $0x128] sm:$0xff] %v8263
        %8360 = vst.msk [vmem:[#allocation2 + $0x130] sm:$0xff] %vm1113, %v8264
        %8361 = vst [vmem:[#allocation2 + $0x138] sm:$0xff] %v8265
        %8362 = vst [vmem:[#allocation2 + $0x140] sm:$0xff] %v8266
        %8363 = vst.msk [vmem:[#allocation2 + $0x148] sm:$0xff] %vm1113, %v8267
        %8364 = vst [vmem:[#allocation2 + $0x150] sm:$0xff] %v8268
        %8365 = vst [vmem:[#allocation2 + $0x158] sm:$0xff] %v8269
        %8366 = vst.msk [vmem:[#allocation2 + $0x160] sm:$0xff] %vm1113, %v8270
        %8367 = vst [vmem:[#allocation2 + $0x168] sm:$0xff] %v8271
        %8368 = vst [vmem:[#allocation2 + $0x170] sm:$0xff] %v8272
        %8369 = vst.msk [vmem:[#allocation2 + $0x178] sm:$0xff] %vm1113, %v8273
        %8370 = vst [vmem:[#allocation2 + $0x180] sm:$0xff] %v8274
        %8371 = vst [vmem:[#allocation2 + $0x188] sm:$0xff] %v8275
        %8372 = vst.msk [vmem:[#allocation2 + $0x190] sm:$0xff] %vm1113, %v8276
        %8373 = vst [vmem:[#allocation2 + $0x198] sm:$0xff] %v8277
        %8374 = vst [vmem:[#allocation2 + $0x1a0] sm:$0xff] %v8278
        %8375 = vst.msk [vmem:[#allocation2 + $0x1a8] sm:$0xff] %vm1113, %v8279
        %8376 = vst [vmem:[#allocation2 + $0x1b0] sm:$0xff] %v8280
        %8377 = vst [vmem:[#allocation2 + $0x1b8] sm:$0xff] %v8281
        %8378 = vst.msk [vmem:[#allocation2 + $0x1c0] sm:$0xff] %vm1113, %v8282
        %8379 = vst [vmem:[#allocation2 + $0x1c8] sm:$0xff] %v8283
        %8380 = vst [vmem:[#allocation2 + $0x1d0] sm:$0xff] %v8284
        %8381 = vst.msk [vmem:[#allocation2 + $0x1d8] sm:$0xff] %vm1113, %v8285
        %8382 = vst [vmem:[#allocation2 + $0x1e0] sm:$0xff] %v8286
        %8383 = vst [vmem:[#allocation2 + $0x1e8] sm:$0xff] %v8287
        %8384 = vst.msk [vmem:[#allocation2 + $0x1f0] sm:$0xff] %vm1113, %v8288
        %8385 = vst [vmem:[#allocation2 + $0x1f8] sm:$0xff] %v8289
        %8386 = vst [vmem:[#allocation2 + $0x200] sm:$0xff] %v8290
        %8387 = vst.msk [vmem:[#allocation2 + $0x208] sm:$0xff] %vm1113, %v8291
        %8388 = vst [vmem:[#allocation2 + $0x210] sm:$0xff] %v8292
        %8389 = vst [vmem:[#allocation2 + $0x218] sm:$0xff] %v8293
        %8390 = vst.msk [vmem:[#allocation2 + $0x220] sm:$0xff] %vm1113, %v8294
        %8391 = vst [vmem:[#allocation2 + $0x228] sm:$0xff] %v8295
        %8392 = vst [vmem:[#allocation2 + $0x230] sm:$0xff] %v8296
        %8393 = vst.msk [vmem:[#allocation2 + $0x238] sm:$0xff] %vm1113, %v8297
        %8394 = vst [vmem:[#allocation2 + $0x240] sm:$0xff] %v8298
        %8395 = vst [vmem:[#allocation2 + $0x248] sm:$0xff] %v8299
        %8396 = vst.msk [vmem:[#allocation2 + $0x250] sm:$0xff] %vm1113, %v8300
        %8397 = vst [vmem:[#allocation2 + $0x258] sm:$0xff] %v8301
        %8398 = vst [vmem:[#allocation2 + $0x260] sm:$0xff] %v8302
        %8399 = vst.msk [vmem:[#allocation2 + $0x268] sm:$0xff] %vm1113, %v8303
        %8400 = vst [vmem:[#allocation2 + $0x270] sm:$0xff] %v8304
        %8401 = vst [vmem:[#allocation2 + $0x278] sm:$0xff] %v8305
        %8402 = vst.msk [vmem:[#allocation2 + $0x280] sm:$0xff] %vm1113, %v8306
        %8403 = vst [vmem:[#allocation2 + $0x288] sm:$0xff] %v8307
        %8404 = vst [vmem:[#allocation2 + $0x290] sm:$0xff] %v8308
        %8405 = vst.msk [vmem:[#allocation2 + $0x298] sm:$0xff] %vm1113, %v8309
        %8406 = vst [vmem:[#allocation2 + $0x2a0] sm:$0xff] %v8310
        %8407 = vst [vmem:[#allocation2 + $0x2a8] sm:$0xff] %v8311
        %8408 = vst.msk [vmem:[#allocation2 + $0x2b0] sm:$0xff] %vm1113, %v8312
        %8409 = vst [vmem:[#allocation2 + $0x2b8] sm:$0xff] %v8313
        %8410 = vst [vmem:[#allocation2 + $0x2c0] sm:$0xff] %v8314
        %8411 = vst.msk [vmem:[#allocation2 + $0x2c8] sm:$0xff] %vm1113, %v8315
        %8412 = vst [vmem:[#allocation2 + $0x2d0] sm:$0xff] %v8316
        %8413 = vst [vmem:[#allocation2 + $0x2d8] sm:$0xff] %v8317
        %8414 = vst.msk [vmem:[#allocation2 + $0x2e0] sm:$0xff] %vm1113, %v8318
        %8415 = vst [vmem:[#allocation2 + $0x2e8] sm:$0xff] %v8319
        %8416 = vst [vmem:[#allocation2 + $0x2f0] sm:$0xff] %v8320
        %8417 = vst.msk [vmem:[#allocation2 + $0x2f8] sm:$0xff] %vm1113, %v8321
        %v8418 = vld [vmem:[%s6389] sm:$0xe]
        %v8419 = vld [vmem:[%s6389 + $0x4] sm:$0xf]
        %v8420 = vld [vmem:[%s6389 + $0x8] sm:$0x1]
        %v8421 = vld [vmem:[%s6389 + $0xc] sm:$0xe]
        %v8422 = vld [vmem:[%s6389 + $0x10] sm:$0xf]
        %v8423 = vld [vmem:[%s6389 + $0x14] sm:$0x1]
        %v8424 = vld [vmem:[%s6389 + $0x18] sm:$0xe]
        %v8425 = vld [vmem:[%s6389 + $0x1c] sm:$0xf]
        %v8426 = vld [vmem:[%s6389 + $0x20] sm:$0x1]
        %v8427 = vld [vmem:[%s6389 + $0x24] sm:$0xe]
        %v8428 = vld [vmem:[%s6389 + $0x28] sm:$0xf]
        %v8429 = vld [vmem:[%s6389 + $0x2c] sm:$0x1]
        %v8430 = vld [vmem:[%s6389 + $0x30] sm:$0xe]
        %v8431 = vld [vmem:[%s6389 + $0x34] sm:$0xf]
        %v8432 = vld [vmem:[%s6389 + $0x38] sm:$0x1]
        %v8433 = vld [vmem:[%s6389 + $0x3c] sm:$0xe]
        %v8434 = vld [vmem:[%s6389 + $0x40] sm:$0xf]
        %v8435 = vld [vmem:[%s6389 + $0x44] sm:$0x1]
        %v8436 = vld [vmem:[%s6389 + $0x48] sm:$0xe]
        %v8437 = vld [vmem:[%s6389 + $0x4c] sm:$0xf]
        %v8438 = vld [vmem:[%s6389 + $0x50] sm:$0x1]
        %v8439 = vld [vmem:[%s6389 + $0x54] sm:$0xe]
        %v8440 = vld [vmem:[%s6389 + $0x58] sm:$0xf]
        %v8441 = vld [vmem:[%s6389 + $0x5c] sm:$0x1]
        %v8442 = vld [vmem:[%s6389 + $0x60] sm:$0xe]
        %v8443 = vld [vmem:[%s6389 + $0x64] sm:$0xf]
        %v8444 = vld [vmem:[%s6389 + $0x68] sm:$0x1]
        %v8445 = vld [vmem:[%s6389 + $0x6c] sm:$0xe]
        %v8446 = vld [vmem:[%s6389 + $0x70] sm:$0xf]
        %v8447 = vld [vmem:[%s6389 + $0x74] sm:$0x1]
        %v8448 = vld [vmem:[%s6389 + $0x78] sm:$0xe]
        %v8449 = vld [vmem:[%s6389 + $0x7c] sm:$0xf]
        %v8450 = vld [vmem:[%s6389 + $0x80] sm:$0x1]
        %v8451 = vld [vmem:[%s6389 + $0x84] sm:$0xe]
        %v8452 = vld [vmem:[%s6389 + $0x88] sm:$0xf]
        %v8453 = vld [vmem:[%s6389 + $0x8c] sm:$0x1]
        %v8454 = vld [vmem:[%s6389 + $0x90] sm:$0xe]
        %v8455 = vld [vmem:[%s6389 + $0x94] sm:$0xf]
        %v8456 = vld [vmem:[%s6389 + $0x98] sm:$0x1]
        %v8457 = vld [vmem:[%s6389 + $0x9c] sm:$0xe]
        %v8458 = vld [vmem:[%s6389 + $0xa0] sm:$0xf]
        %v8459 = vld [vmem:[%s6389 + $0xa4] sm:$0x1]
        %v8460 = vld [vmem:[%s6389 + $0xa8] sm:$0xe]
        %v8461 = vld [vmem:[%s6389 + $0xac] sm:$0xf]
        %v8462 = vld [vmem:[%s6389 + $0xb0] sm:$0x1]
        %v8463 = vld [vmem:[%s6389 + $0xb4] sm:$0xe]
        %v8464 = vld [vmem:[%s6389 + $0xb8] sm:$0xf]
        %v8465 = vld [vmem:[%s6389 + $0xbc] sm:$0x1]
        %v8514 = vrot.slane %v8418, 5
        %v8515 = vrot.slane %v8514, 4
        %v8516 = vrot.slane %v8419, 5
        %v8517 = vsel %vm2507, %v8515, %v8516
        %v8518 = vrot.slane %v8516, 4
        %v8519 = vrot.slane %v8420, 5
        %v8520 = vsel %vm2507, %v8518, %v8519
        %v8521 = vrot.slane %v8421, 5
        %v8522 = vrot.slane %v8521, 4
        %v8523 = vrot.slane %v8422, 5
        %v8524 = vsel %vm2507, %v8522, %v8523
        %v8525 = vrot.slane %v8523, 4
        %v8526 = vrot.slane %v8423, 5
        %v8527 = vsel %vm2507, %v8525, %v8526
        %v8528 = vrot.slane %v8424, 5
        %v8529 = vrot.slane %v8528, 4
        %v8530 = vrot.slane %v8425, 5
        %v8531 = vsel %vm2507, %v8529, %v8530
        %v8532 = vrot.slane %v8530, 4
        %v8533 = vrot.slane %v8426, 5
        %v8534 = vsel %vm2507, %v8532, %v8533
        %v8535 = vrot.slane %v8427, 5
        %v8536 = vrot.slane %v8535, 4
        %v8537 = vrot.slane %v8428, 5
        %v8538 = vsel %vm2507, %v8536, %v8537
        %v8539 = vrot.slane %v8537, 4
        %v8540 = vrot.slane %v8429, 5
        %v8541 = vsel %vm2507, %v8539, %v8540
        %v8542 = vrot.slane %v8430, 5
        %v8543 = vrot.slane %v8542, 4
        %v8544 = vrot.slane %v8431, 5
        %v8545 = vsel %vm2507, %v8543, %v8544
        %v8546 = vrot.slane %v8544, 4
        %v8547 = vrot.slane %v8432, 5
        %v8548 = vsel %vm2507, %v8546, %v8547
        %v8549 = vrot.slane %v8433, 5
        %v8550 = vrot.slane %v8549, 4
        %v8551 = vrot.slane %v8434, 5
        %v8552 = vsel %vm2507, %v8550, %v8551
        %v8553 = vrot.slane %v8551, 4
        %v8554 = vrot.slane %v8435, 5
        %v8555 = vsel %vm2507, %v8553, %v8554
        %v8556 = vrot.slane %v8436, 5
        %v8557 = vrot.slane %v8556, 4
        %v8558 = vrot.slane %v8437, 5
        %v8559 = vsel %vm2507, %v8557, %v8558
        %v8560 = vrot.slane %v8558, 4
        %v8561 = vrot.slane %v8438, 5
        %v8562 = vsel %vm2507, %v8560, %v8561
        %v8563 = vrot.slane %v8439, 5
        %v8564 = vrot.slane %v8563, 4
        %v8565 = vrot.slane %v8440, 5
        %v8566 = vsel %vm2507, %v8564, %v8565
        %v8567 = vrot.slane %v8565, 4
        %v8568 = vrot.slane %v8441, 5
        %v8569 = vsel %vm2507, %v8567, %v8568
        %v8570 = vrot.slane %v8442, 5
        %v8571 = vrot.slane %v8570, 4
        %v8572 = vrot.slane %v8443, 5
        %v8573 = vsel %vm2507, %v8571, %v8572
        %v8574 = vrot.slane %v8572, 4
        %v8575 = vrot.slane %v8444, 5
        %v8576 = vsel %vm2507, %v8574, %v8575
        %v8577 = vrot.slane %v8445, 5
        %v8578 = vrot.slane %v8577, 4
        %v8579 = vrot.slane %v8446, 5
        %v8580 = vsel %vm2507, %v8578, %v8579
        %v8581 = vrot.slane %v8579, 4
        %v8582 = vrot.slane %v8447, 5
        %v8583 = vsel %vm2507, %v8581, %v8582
        %v8584 = vrot.slane %v8448, 5
        %v8585 = vrot.slane %v8584, 4
        %v8586 = vrot.slane %v8449, 5
        %v8587 = vsel %vm2507, %v8585, %v8586
        %v8588 = vrot.slane %v8586, 4
        %v8589 = vrot.slane %v8450, 5
        %v8590 = vsel %vm2507, %v8588, %v8589
        %v8591 = vrot.slane %v8451, 5
        %v8592 = vrot.slane %v8591, 4
        %v8593 = vrot.slane %v8452, 5
        %v8594 = vsel %vm2507, %v8592, %v8593
        %v8595 = vrot.slane %v8593, 4
        %v8596 = vrot.slane %v8453, 5
        %v8597 = vsel %vm2507, %v8595, %v8596
        %v8598 = vrot.slane %v8454, 5
        %v8599 = vrot.slane %v8598, 4
        %v8600 = vrot.slane %v8455, 5
        %v8601 = vsel %vm2507, %v8599, %v8600
        %v8602 = vrot.slane %v8600, 4
        %v8603 = vrot.slane %v8456, 5
        %v8604 = vsel %vm2507, %v8602, %v8603
        %v8605 = vrot.slane %v8457, 5
        %v8606 = vrot.slane %v8605, 4
        %v8607 = vrot.slane %v8458, 5
        %v8608 = vsel %vm2507, %v8606, %v8607
        %v8609 = vrot.slane %v8607, 4
        %v8610 = vrot.slane %v8459, 5
        %v8611 = vsel %vm2507, %v8609, %v8610
        %v8612 = vrot.slane %v8460, 5
        %v8613 = vrot.slane %v8612, 4
        %v8614 = vrot.slane %v8461, 5
        %v8615 = vsel %vm2507, %v8613, %v8614
        %v8616 = vrot.slane %v8614, 4
        %v8617 = vrot.slane %v8462, 5
        %v8618 = vsel %vm2507, %v8616, %v8617
        %v8619 = vrot.slane %v8463, 5
        %v8620 = vrot.slane %v8619, 4
        %v8621 = vrot.slane %v8464, 5
        %v8622 = vsel %vm2507, %v8620, %v8621
        %v8623 = vrot.slane %v8621, 4
        %v8624 = vrot.slane %v8465, 5
        %v8625 = vsel %vm2507, %v8623, %v8624
        %v8626 = vld [vmem:[#allocation2] sm:$0xff]
        %v8627 = vld [vmem:[#allocation2 + $0x8] sm:$0xff]
        %v8628 = vld [vmem:[#allocation2 + $0x10] sm:$0xff]
        %v8629 = vld [vmem:[#allocation2 + $0x18] sm:$0xff]
        %v8630 = vld [vmem:[#allocation2 + $0x20] sm:$0xff]
        %v8631 = vld [vmem:[#allocation2 + $0x28] sm:$0xff]
        %v8632 = vld [vmem:[#allocation2 + $0x30] sm:$0xff]
        %v8633 = vld [vmem:[#allocation2 + $0x38] sm:$0xff]
        %v8634 = vld [vmem:[#allocation2 + $0x40] sm:$0xff]
        %v8635 = vld [vmem:[#allocation2 + $0x48] sm:$0xff]
        %v8636 = vld [vmem:[#allocation2 + $0x50] sm:$0xff]
        %v8637 = vld [vmem:[#allocation2 + $0x58] sm:$0xff]
        %v8638 = vld [vmem:[#allocation2 + $0x60] sm:$0xff]
        %v8639 = vld [vmem:[#allocation2 + $0x68] sm:$0xff]
        %v8640 = vld [vmem:[#allocation2 + $0x70] sm:$0xff]
        %v8641 = vld [vmem:[#allocation2 + $0x78] sm:$0xff]
        %v8642 = vld [vmem:[#allocation2 + $0x80] sm:$0xff]
        %v8643 = vld [vmem:[#allocation2 + $0x88] sm:$0xff]
        %v8644 = vld [vmem:[#allocation2 + $0x90] sm:$0xff]
        %v8645 = vld [vmem:[#allocation2 + $0x98] sm:$0xff]
        %v8646 = vld [vmem:[#allocation2 + $0xa0] sm:$0xff]
        %v8647 = vld [vmem:[#allocation2 + $0xa8] sm:$0xff]
        %v8648 = vld [vmem:[#allocation2 + $0xb0] sm:$0xff]
        %v8649 = vld [vmem:[#allocation2 + $0xb8] sm:$0xff]
        %v8650 = vld [vmem:[#allocation2 + $0xc0] sm:$0xff]
        %v8651 = vld [vmem:[#allocation2 + $0xc8] sm:$0xff]
        %v8652 = vld [vmem:[#allocation2 + $0xd0] sm:$0xff]
        %v8653 = vld [vmem:[#allocation2 + $0xd8] sm:$0xff]
        %v8654 = vld [vmem:[#allocation2 + $0xe0] sm:$0xff]
        %v8655 = vld [vmem:[#allocation2 + $0xe8] sm:$0xff]
        %v8656 = vld [vmem:[#allocation2 + $0xf0] sm:$0xff]
        %v8657 = vld [vmem:[#allocation2 + $0xf8] sm:$0xff]
        %v8658 = vld [vmem:[#allocation2 + $0x100] sm:$0xff]
        %v8659 = vld [vmem:[#allocation2 + $0x108] sm:$0xff]
        %v8660 = vld [vmem:[#allocation2 + $0x110] sm:$0xff]
        %v8661 = vld [vmem:[#allocation2 + $0x118] sm:$0xff]
        %v8662 = vld [vmem:[#allocation2 + $0x120] sm:$0xff]
        %v8663 = vld [vmem:[#allocation2 + $0x128] sm:$0xff]
        %v8664 = vld [vmem:[#allocation2 + $0x130] sm:$0xff]
        %v8665 = vld [vmem:[#allocation2 + $0x138] sm:$0xff]
        %v8666 = vld [vmem:[#allocation2 + $0x140] sm:$0xff]
        %v8667 = vld [vmem:[#allocation2 + $0x148] sm:$0xff]
        %v8668 = vld [vmem:[#allocation2 + $0x150] sm:$0xff]
        %v8669 = vld [vmem:[#allocation2 + $0x158] sm:$0xff]
        %v8670 = vld [vmem:[#allocation2 + $0x160] sm:$0xff]
        %v8671 = vld [vmem:[#allocation2 + $0x168] sm:$0xff]
        %v8672 = vld [vmem:[#allocation2 + $0x170] sm:$0xff]
        %v8673 = vld [vmem:[#allocation2 + $0x178] sm:$0xff]
        %v8674 = vld [vmem:[#allocation2 + $0x180] sm:$0xff]
        %v8675 = vld [vmem:[#allocation2 + $0x188] sm:$0xff]
        %v8676 = vld [vmem:[#allocation2 + $0x190] sm:$0xff]
        %v8677 = vld [vmem:[#allocation2 + $0x198] sm:$0xff]
        %v8678 = vld [vmem:[#allocation2 + $0x1a0] sm:$0xff]
        %v8679 = vld [vmem:[#allocation2 + $0x1a8] sm:$0xff]
        %v8680 = vld [vmem:[#allocation2 + $0x1b0] sm:$0xff]
        %v8681 = vld [vmem:[#allocation2 + $0x1b8] sm:$0xff]
        %v8682 = vld [vmem:[#allocation2 + $0x1c0] sm:$0xff]
        %v8683 = vld [vmem:[#allocation2 + $0x1c8] sm:$0xff]
        %v8684 = vld [vmem:[#allocation2 + $0x1d0] sm:$0xff]
        %v8685 = vld [vmem:[#allocation2 + $0x1d8] sm:$0xff]
        %v8686 = vld [vmem:[#allocation2 + $0x1e0] sm:$0xff]
        %v8687 = vld [vmem:[#allocation2 + $0x1e8] sm:$0xff]
        %v8688 = vld [vmem:[#allocation2 + $0x1f0] sm:$0xff]
        %v8689 = vld [vmem:[#allocation2 + $0x1f8] sm:$0xff]
        %v8690 = vld [vmem:[#allocation2 + $0x200] sm:$0xff]
        %v8691 = vld [vmem:[#allocation2 + $0x208] sm:$0xff]
        %v8692 = vld [vmem:[#allocation2 + $0x210] sm:$0xff]
        %v8693 = vld [vmem:[#allocation2 + $0x218] sm:$0xff]
        %v8694 = vld [vmem:[#allocation2 + $0x220] sm:$0xff]
        %v8695 = vld [vmem:[#allocation2 + $0x228] sm:$0xff]
        %v8696 = vld [vmem:[#allocation2 + $0x230] sm:$0xff]
        %v8697 = vld [vmem:[#allocation2 + $0x238] sm:$0xff]
        %v8698 = vld [vmem:[#allocation2 + $0x240] sm:$0xff]
        %v8699 = vld [vmem:[#allocation2 + $0x248] sm:$0xff]
        %v8700 = vld [vmem:[#allocation2 + $0x250] sm:$0xff]
        %v8701 = vld [vmem:[#allocation2 + $0x258] sm:$0xff]
        %v8702 = vld [vmem:[#allocation2 + $0x260] sm:$0xff]
        %v8703 = vld [vmem:[#allocation2 + $0x268] sm:$0xff]
        %v8704 = vld [vmem:[#allocation2 + $0x270] sm:$0xff]
        %v8705 = vld [vmem:[#allocation2 + $0x278] sm:$0xff]
        %v8706 = vld [vmem:[#allocation2 + $0x280] sm:$0xff]
        %v8707 = vld [vmem:[#allocation2 + $0x288] sm:$0xff]
        %v8708 = vld [vmem:[#allocation2 + $0x290] sm:$0xff]
        %v8709 = vld [vmem:[#allocation2 + $0x298] sm:$0xff]
        %v8710 = vld [vmem:[#allocation2 + $0x2a0] sm:$0xff]
        %v8711 = vld [vmem:[#allocation2 + $0x2a8] sm:$0xff]
        %v8712 = vld [vmem:[#allocation2 + $0x2b0] sm:$0xff]
        %v8713 = vld [vmem:[#allocation2 + $0x2b8] sm:$0xff]
        %v8714 = vld [vmem:[#allocation2 + $0x2c0] sm:$0xff]
        %v8715 = vld [vmem:[#allocation2 + $0x2c8] sm:$0xff]
        %v8716 = vld [vmem:[#allocation2 + $0x2d0] sm:$0xff]
        %v8717 = vld [vmem:[#allocation2 + $0x2d8] sm:$0xff]
        %v8718 = vld [vmem:[#allocation2 + $0x2e0] sm:$0xff]
        %v8719 = vld [vmem:[#allocation2 + $0x2e8] sm:$0xff]
        %v8720 = vld [vmem:[#allocation2 + $0x2f0] sm:$0xff]
        %v8721 = vld [vmem:[#allocation2 + $0x2f8] sm:$0xff]
        %s8722 = scalar_lea.vmem %s249, 48
        %v8723 = vld [vmem:[%s8722] sm:$0x3f]
        %v8724 = vunpack.c.l.b16 %v8517
        %v8725 = vunpack.c.l.b16 %v8520
        %v8726 = vunpack.c.l.b16 %v8524
        %v8727 = vunpack.c.l.b16 %v8527
        %v8728 = vunpack.c.l.b16 %v8531
        %v8729 = vunpack.c.l.b16 %v8534
        %v8730 = vunpack.c.l.b16 %v8538
        %v8731 = vunpack.c.l.b16 %v8541
        %v8732 = vunpack.c.l.b16 %v8545
        %v8733 = vunpack.c.l.b16 %v8548
        %v8734 = vunpack.c.l.b16 %v8552
        %v8735 = vunpack.c.l.b16 %v8555
        %v8736 = vunpack.c.l.b16 %v8559
        %v8737 = vunpack.c.l.b16 %v8562
        %v8738 = vunpack.c.l.b16 %v8566
        %v8739 = vunpack.c.l.b16 %v8569
        %v8740 = vunpack.c.l.b16 %v8573
        %v8741 = vunpack.c.l.b16 %v8576
        %v8742 = vunpack.c.l.b16 %v8580
        %v8743 = vunpack.c.l.b16 %v8583
        %v8744 = vunpack.c.l.b16 %v8587
        %v8745 = vunpack.c.l.b16 %v8590
        %v8746 = vunpack.c.l.b16 %v8594
        %v8747 = vunpack.c.l.b16 %v8597
        %v8748 = vunpack.c.l.b16 %v8601
        %v8749 = vunpack.c.l.b16 %v8604
        %v8750 = vunpack.c.l.b16 %v8608
        %v8751 = vunpack.c.l.b16 %v8611
        %v8752 = vunpack.c.l.b16 %v8615
        %v8753 = vunpack.c.l.b16 %v8618
        %v8754 = vunpack.c.l.b16 %v8622
        %v8755 = vunpack.c.l.b16 %v8625
        %v8756 = vpack.c.b16 %v8725, %v8724
        %v8757 = vpack.c.b16 %v8727, %v8726
        %v8758 = vpack.c.b16 %v8729, %v8728
        %v8759 = vpack.c.b16 %v8731, %v8730
        %v8760 = vpack.c.b16 %v8733, %v8732
        %v8761 = vpack.c.b16 %v8735, %v8734
        %v8762 = vpack.c.b16 %v8737, %v8736
        %v8763 = vpack.c.b16 %v8739, %v8738
        %v8764 = vpack.c.b16 %v8741, %v8740
        %v8765 = vpack.c.b16 %v8743, %v8742
        %v8766 = vpack.c.b16 %v8745, %v8744
        %v8767 = vpack.c.b16 %v8747, %v8746
        %v8768 = vpack.c.b16 %v8749, %v8748
        %v8769 = vpack.c.b16 %v8751, %v8750
        %v8770 = vpack.c.b16 %v8753, %v8752
        %v8771 = vpack.c.b16 %v8755, %v8754
        %v8773 = vcombine.high %v8723, %v8723
        %v8775 = vunpack.c.l.s4 1983009808
        %v8776 = vunpack.c.0.s8 %v8775
        %v8777 = vlaneseq
        %v8778 = vshrl.u32 %v8777, 7
        %v8779 = vsub.s32 %v8776, %v8778
        %v8780 = vrot.slane %v8723, %v8779
        %v8782 = vunpack.c.l.s4 1983009808
        %v8783 = vunpack.c.0.s8 %v8782
        %v8784 = vlaneseq
        %v8785 = vshrl.u32 %v8784, 7
        %v8786 = vsub.s32 %v8783, %v8785
        %v8787 = vrot.slane %v8773, %v8786
        %v8788 = vcombine.high %v8780, %v8780
        %v8790 = vsel %vm602, %v8756, 0
        %v8793 = vsel %vm602, %v8757, 0
        %v8796 = vsel %vm602, %v8758, 0
        %v8799 = vsel %vm602, %v8759, 0
        %v8802 = vsel %vm602, %v8760, 0
        %v8805 = vsel %vm602, %v8761, 0
        %v8808 = vsel %vm602, %v8762, 0
        %v8811 = vsel %vm602, %v8763, 0
        %v8814 = vsel %vm602, %v8764, 0
        %v8817 = vsel %vm602, %v8765, 0
        %v8820 = vsel %vm602, %v8766, 0
        %v8823 = vsel %vm602, %v8767, 0
        %v8826 = vsel %vm602, %v8768, 0
        %v8829 = vsel %vm602, %v8769, 0
        %v8832 = vsel %vm602, %v8770, 0
        %v8835 = vsel %vm602, %v8771, 0
        %v8838 = vsel %vm651, %v8780, 0
        %v8841 = vsel %vm651, %v8788, 0
        %v8844 = vsel %vm651, %v8787, 0
        %8846 = vmatprep.subr.bf16.mxu0 %v8841
        %8847 = vmatpush1.bf16.msra.mxu0 %v8838
        %8848 = vmatprep.subr.bf16.mxu0 0
        %8849 = vmatpush1.bf16.msra.mxu0 0
        %8850 = vmatprep.subr.bf16.mxu0 0
        %8851 = vmatpush1.bf16.msra.mxu0 0
        %8852 = vmatprep.subr.bf16.mxu0 0
        %8853 = vmatpush1.bf16.msra.mxu0 0
        %8854 = vmatprep.subr.bf16.mxu0 0
        %8855 = vmatpush1.bf16.msra.mxu0 0
        %8856 = vmatprep.subr.bf16.mxu0 0
        %8857 = vmatpush1.bf16.msra.mxu0 0
        %8858 = vmatprep.subr.bf16.mxu0 0
        %8859 = vmatpush1.bf16.msra.mxu0 0
        %8860 = vmatprep.subr.bf16.mxu0 0
        %8861 = vmatpush1.bf16.msra.mxu0 0
        %8862 = vmatprep.subr.bf16.mxu0 0
        %8863 = vmatpush1.bf16.msra.mxu0 0
        %8864 = vmatprep.subr.bf16.mxu0 0
        %8865 = vmatpush1.bf16.msra.mxu0 0
        %8866 = vmatprep.subr.bf16.mxu0 0
        %8867 = vmatpush1.bf16.msra.mxu0 0
        %8868 = vmatprep.subr.bf16.mxu0 0
        %8869 = vmatpush1.bf16.msra.mxu0 0
        %8870 = vmatprep.subr.bf16.mxu0 0
        %8871 = vmatpush1.bf16.msra.mxu0 0
        %8872 = vmatprep.subr.bf16.mxu0 0
        %8873 = vmatpush1.bf16.msra.mxu0 0
        %8874 = vmatprep.subr.bf16.mxu0 0
        %8875 = vmatpush1.bf16.msra.mxu0 0
        %8876 = vmatprep.subr.bf16.mxu0 0
        %8877 = vmatpush1.bf16.msra.mxu0 0
        %8878 = vmatprep.mubr.bf16.mxu0 0
        %8879 = vmatmul.mubr.bf16.gmra.mrb[0].mxu0 %v8790
        %v8880 = vpop.f32.mrb[0].mxu0
        %v8881 = vadd.f32 0.0, %v8880
        %v8882 = vpop.f32.mrb[0].mxu0
        %v8883 = vadd.f32 0.0, %v8882
        %v8884 = vpop.f32.mrb[0].mxu0
        %v8885 = vadd.f32 0.0, %v8884
        %v8886 = vpop.f32.mrb[0].mxu0
        %v8887 = vadd.f32 0.0, %v8886
        %8888 = vmatprep.mubr.bf16.mxu0 0
        %8889 = vmatmul.mubr.bf16.gmra.mrb[0].mxu0 %v8793
        %v8890 = vpop.f32.mrb[0].mxu0
        %v8891 = vadd.f32 0.0, %v8890
        %v8892 = vpop.f32.mrb[0].mxu0
        %v8893 = vadd.f32 0.0, %v8892
        %v8894 = vpop.f32.mrb[0].mxu0
        %v8895 = vadd.f32 0.0, %v8894
        %v8896 = vpop.f32.mrb[0].mxu0
        %v8897 = vadd.f32 0.0, %v8896
        %8898 = vmatprep.mubr.bf16.mxu0 0
        %8899 = vmatmul.mubr.bf16.gmra.mrb[0].mxu0 %v8796
        %v8900 = vpop.f32.mrb[0].mxu0
        %v8901 = vadd.f32 0.0, %v8900
        %v8902 = vpop.f32.mrb[0].mxu0
        %v8903 = vadd.f32 0.0, %v8902
        %v8904 = vpop.f32.mrb[0].mxu0
        %v8905 = vadd.f32 0.0, %v8904
        %v8906 = vpop.f32.mrb[0].mxu0
        %v8907 = vadd.f32 0.0, %v8906
        %8908 = vmatprep.mubr.bf16.mxu0 0
        %8909 = vmatmul.mubr.bf16.gmra.mrb[0].mxu0 %v8799
        %v8910 = vpop.f32.mrb[0].mxu0
        %v8911 = vadd.f32 0.0, %v8910
        %v8912 = vpop.f32.mrb[0].mxu0
        %v8913 = vadd.f32 0.0, %v8912
        %v8914 = vpop.f32.mrb[0].mxu0
        %v8915 = vadd.f32 0.0, %v8914
        %v8916 = vpop.f32.mrb[0].mxu0
        %v8917 = vadd.f32 0.0, %v8916
        %8918 = vmatprep.mubr.bf16.mxu0 0
        %8919 = vmatmul.mubr.bf16.gmra.mrb[0].mxu0 %v8802
        %v8920 = vpop.f32.mrb[0].mxu0
        %v8921 = vadd.f32 0.0, %v8920
        %v8922 = vpop.f32.mrb[0].mxu0
        %v8923 = vadd.f32 0.0, %v8922
        %v8924 = vpop.f32.mrb[0].mxu0
        %v8925 = vadd.f32 0.0, %v8924
        %v8926 = vpop.f32.mrb[0].mxu0
        %v8927 = vadd.f32 0.0, %v8926
        %8928 = vmatprep.mubr.bf16.mxu0 0
        %8929 = vmatmul.mubr.bf16.gmra.mrb[0].mxu0 %v8805
        %v8930 = vpop.f32.mrb[0].mxu0
        %v8931 = vadd.f32 0.0, %v8930
        %v8932 = vpop.f32.mrb[0].mxu0
        %v8933 = vadd.f32 0.0, %v8932
        %v8934 = vpop.f32.mrb[0].mxu0
        %v8935 = vadd.f32 0.0, %v8934
        %v8936 = vpop.f32.mrb[0].mxu0
        %v8937 = vadd.f32 0.0, %v8936
        %8938 = vmatprep.mubr.bf16.mxu0 0
        %8939 = vmatmul.mubr.bf16.gmra.mrb[0].mxu0 %v8808
        %v8940 = vpop.f32.mrb[0].mxu0
        %v8941 = vadd.f32 0.0, %v8940
        %v8942 = vpop.f32.mrb[0].mxu0
        %v8943 = vadd.f32 0.0, %v8942
        %v8944 = vpop.f32.mrb[0].mxu0
        %v8945 = vadd.f32 0.0, %v8944
        %v8946 = vpop.f32.mrb[0].mxu0
        %v8947 = vadd.f32 0.0, %v8946
        %8948 = vmatprep.mubr.bf16.mxu0 0
        %8949 = vmatmul.mubr.bf16.gmra.mrb[0].mxu0 %v8811
        %v8950 = vpop.f32.mrb[0].mxu0
        %v8951 = vadd.f32 0.0, %v8950
        %v8952 = vpop.f32.mrb[0].mxu0
        %v8953 = vadd.f32 0.0, %v8952
        %v8954 = vpop.f32.mrb[0].mxu0
        %v8955 = vadd.f32 0.0, %v8954
        %v8956 = vpop.f32.mrb[0].mxu0
        %v8957 = vadd.f32 0.0, %v8956
        %8958 = vmatprep.mubr.bf16.mxu0 0
        %8959 = vmatmul.mubr.bf16.gmra.mrb[0].mxu0 %v8814
        %v8960 = vpop.f32.mrb[0].mxu0
        %v8961 = vadd.f32 0.0, %v8960
        %v8962 = vpop.f32.mrb[0].mxu0
        %v8963 = vadd.f32 0.0, %v8962
        %v8964 = vpop.f32.mrb[0].mxu0
        %v8965 = vadd.f32 0.0, %v8964
        %v8966 = vpop.f32.mrb[0].mxu0
        %v8967 = vadd.f32 0.0, %v8966
        %8968 = vmatprep.mubr.bf16.mxu0 0
        %8969 = vmatmul.mubr.bf16.gmra.mrb[0].mxu0 %v8817
        %v8970 = vpop.f32.mrb[0].mxu0
        %v8971 = vadd.f32 0.0, %v8970
        %v8972 = vpop.f32.mrb[0].mxu0
        %v8973 = vadd.f32 0.0, %v8972
        %v8974 = vpop.f32.mrb[0].mxu0
        %v8975 = vadd.f32 0.0, %v8974
        %v8976 = vpop.f32.mrb[0].mxu0
        %v8977 = vadd.f32 0.0, %v8976
        %8978 = vmatprep.mubr.bf16.mxu0 0
        %8979 = vmatmul.mubr.bf16.gmra.mrb[0].mxu0 %v8820
        %v8980 = vpop.f32.mrb[0].mxu0
        %v8981 = vadd.f32 0.0, %v8980
        %v8982 = vpop.f32.mrb[0].mxu0
        %v8983 = vadd.f32 0.0, %v8982
        %v8984 = vpop.f32.mrb[0].mxu0
        %v8985 = vadd.f32 0.0, %v8984
        %v8986 = vpop.f32.mrb[0].mxu0
        %v8987 = vadd.f32 0.0, %v8986
        %8988 = vmatprep.mubr.bf16.mxu0 0
        %8989 = vmatmul.mubr.bf16.gmra.mrb[0].mxu0 %v8823
        %v8990 = vpop.f32.mrb[0].mxu0
        %v8991 = vadd.f32 0.0, %v8990
        %v8992 = vpop.f32.mrb[0].mxu0
        %v8993 = vadd.f32 0.0, %v8992
        %v8994 = vpop.f32.mrb[0].mxu0
        %v8995 = vadd.f32 0.0, %v8994
        %v8996 = vpop.f32.mrb[0].mxu0
        %v8997 = vadd.f32 0.0, %v8996
        %8998 = vmatprep.mubr.bf16.mxu0 0
        %8999 = vmatmul.mubr.bf16.gmra.mrb[0].mxu0 %v8826
        %v9000 = vpop.f32.mrb[0].mxu0
        %v9001 = vadd.f32 0.0, %v9000
        %v9002 = vpop.f32.mrb[0].mxu0
        %v9003 = vadd.f32 0.0, %v9002
        %v9004 = vpop.f32.mrb[0].mxu0
        %v9005 = vadd.f32 0.0, %v9004
        %v9006 = vpop.f32.mrb[0].mxu0
        %v9007 = vadd.f32 0.0, %v9006
        %9008 = vmatprep.mubr.bf16.mxu0 0
        %9009 = vmatmul.mubr.bf16.gmra.mrb[0].mxu0 %v8829
        %v9010 = vpop.f32.mrb[0].mxu0
        %v9011 = vadd.f32 0.0, %v9010
        %v9012 = vpop.f32.mrb[0].mxu0
        %v9013 = vadd.f32 0.0, %v9012
        %v9014 = vpop.f32.mrb[0].mxu0
        %v9015 = vadd.f32 0.0, %v9014
        %v9016 = vpop.f32.mrb[0].mxu0
        %v9017 = vadd.f32 0.0, %v9016
        %9018 = vmatprep.mubr.bf16.mxu0 0
        %9019 = vmatmul.mubr.bf16.gmra.mrb[0].mxu0 %v8832
        %v9020 = vpop.f32.mrb[0].mxu0
        %v9021 = vadd.f32 0.0, %v9020
        %v9022 = vpop.f32.mrb[0].mxu0
        %v9023 = vadd.f32 0.0, %v9022
        %v9024 = vpop.f32.mrb[0].mxu0
        %v9025 = vadd.f32 0.0, %v9024
        %v9026 = vpop.f32.mrb[0].mxu0
        %v9027 = vadd.f32 0.0, %v9026
        %9028 = vmatprep.mubr.bf16.mxu0 0
        %9029 = vmatmul.mubr.bf16.gmra.mrb[0].mxu0 %v8835
        %v9030 = vpop.f32.mrb[0].mxu0
        %v9031 = vadd.f32 0.0, %v9030
        %v9032 = vpop.f32.mrb[0].mxu0
        %v9033 = vadd.f32 0.0, %v9032
        %v9034 = vpop.f32.mrb[0].mxu0
        %v9035 = vadd.f32 0.0, %v9034
        %v9036 = vpop.f32.mrb[0].mxu0
        %v9037 = vadd.f32 0.0, %v9036
        %9038 = vdwg.mxu0
        %9039 = vmatprep.subr.bf16.mxu0 0
        %9040 = vmatpush1.bf16.msra.mxu0 %v8844
        %9041 = vmatprep.subr.bf16.mxu0 0
        %9042 = vmatpush1.bf16.msra.mxu0 0
        %9043 = vmatprep.subr.bf16.mxu0 0
        %9044 = vmatpush1.bf16.msra.mxu0 0
        %9045 = vmatprep.subr.bf16.mxu0 0
        %9046 = vmatpush1.bf16.msra.mxu0 0
        %9047 = vmatprep.subr.bf16.mxu0 0
        %9048 = vmatpush1.bf16.msra.mxu0 0
        %9049 = vmatprep.subr.bf16.mxu0 0
        %9050 = vmatpush1.bf16.msra.mxu0 0
        %9051 = vmatprep.subr.bf16.mxu0 0
        %9052 = vmatpush1.bf16.msra.mxu0 0
        %9053 = vmatprep.subr.bf16.mxu0 0
        %9054 = vmatpush1.bf16.msra.mxu0 0
        %9055 = vmatprep.subr.bf16.mxu0 0
        %9056 = vmatpush1.bf16.msra.mxu0 0
        %9057 = vmatprep.subr.bf16.mxu0 0
        %9058 = vmatpush1.bf16.msra.mxu0 0
        %9059 = vmatprep.subr.bf16.mxu0 0
        %9060 = vmatpush1.bf16.msra.mxu0 0
        %9061 = vmatprep.subr.bf16.mxu0 0
        %9062 = vmatpush1.bf16.msra.mxu0 0
        %9063 = vmatprep.subr.bf16.mxu0 0
        %9064 = vmatpush1.bf16.msra.mxu0 0
        %9065 = vmatprep.subr.bf16.mxu0 0
        %9066 = vmatpush1.bf16.msra.mxu0 0
        %9067 = vmatprep.subr.bf16.mxu0 0
        %9068 = vmatpush1.bf16.msra.mxu0 0
        %9069 = vmatprep.subr.bf16.mxu0 0
        %9070 = vmatpush1.bf16.msra.mxu0 0
        %9071 = vmatprep.mubr.bf16.mxu0 0
        %9072 = vmatmul.mubr.bf16.gmra.mrb[0].mxu0 %v8790
        %v9073 = vpop.f32.mrb[0].mxu0
        %v9074 = vadd.f32 0.0, %v9073
        %v9075 = vpop.f32.mrb[0].mxu0
        %v9076 = vpop.f32.mrb[0].mxu0
        %v9077 = vadd.f32 0.0, %v9076
        %v9078 = vpop.f32.mrb[0].mxu0
        %9079 = vmatprep.mubr.bf16.mxu0 0
        %9080 = vmatmul.mubr.bf16.gmra.mrb[0].mxu0 %v8793
        %v9081 = vpop.f32.mrb[0].mxu0
        %v9082 = vadd.f32 0.0, %v9081
        %v9083 = vpop.f32.mrb[0].mxu0
        %v9084 = vpop.f32.mrb[0].mxu0
        %v9085 = vadd.f32 0.0, %v9084
        %v9086 = vpop.f32.mrb[0].mxu0
        %9087 = vmatprep.mubr.bf16.mxu0 0
        %9088 = vmatmul.mubr.bf16.gmra.mrb[0].mxu0 %v8796
        %v9089 = vpop.f32.mrb[0].mxu0
        %v9090 = vadd.f32 0.0, %v9089
        %v9091 = vpop.f32.mrb[0].mxu0
        %v9092 = vpop.f32.mrb[0].mxu0
        %v9093 = vadd.f32 0.0, %v9092
        %v9094 = vpop.f32.mrb[0].mxu0
        %9095 = vmatprep.mubr.bf16.mxu0 0
        %9096 = vmatmul.mubr.bf16.gmra.mrb[0].mxu0 %v8799
        %v9097 = vpop.f32.mrb[0].mxu0
        %v9098 = vadd.f32 0.0, %v9097
        %v9099 = vpop.f32.mrb[0].mxu0
        %v9100 = vpop.f32.mrb[0].mxu0
        %v9101 = vadd.f32 0.0, %v9100
        %v9102 = vpop.f32.mrb[0].mxu0
        %9103 = vmatprep.mubr.bf16.mxu0 0
        %9104 = vmatmul.mubr.bf16.gmra.mrb[0].mxu0 %v8802
        %v9105 = vpop.f32.mrb[0].mxu0
        %v9106 = vadd.f32 0.0, %v9105
        %v9107 = vpop.f32.mrb[0].mxu0
        %v9108 = vpop.f32.mrb[0].mxu0
        %v9109 = vadd.f32 0.0, %v9108
        %v9110 = vpop.f32.mrb[0].mxu0
        %9111 = vmatprep.mubr.bf16.mxu0 0
        %9112 = vmatmul.mubr.bf16.gmra.mrb[0].mxu0 %v8805
        %v9113 = vpop.f32.mrb[0].mxu0
        %v9114 = vadd.f32 0.0, %v9113
        %v9115 = vpop.f32.mrb[0].mxu0
        %v9116 = vpop.f32.mrb[0].mxu0
        %v9117 = vadd.f32 0.0, %v9116
        %v9118 = vpop.f32.mrb[0].mxu0
        %9119 = vmatprep.mubr.bf16.mxu0 0
        %9120 = vmatmul.mubr.bf16.gmra.mrb[0].mxu0 %v8808
        %v9121 = vpop.f32.mrb[0].mxu0
        %v9122 = vadd.f32 0.0, %v9121
        %v9123 = vpop.f32.mrb[0].mxu0
        %v9124 = vpop.f32.mrb[0].mxu0
        %v9125 = vadd.f32 0.0, %v9124
        %v9126 = vpop.f32.mrb[0].mxu0
        %9127 = vmatprep.mubr.bf16.mxu0 0
        %9128 = vmatmul.mubr.bf16.gmra.mrb[0].mxu0 %v8811
        %v9129 = vpop.f32.mrb[0].mxu0
        %v9130 = vadd.f32 0.0, %v9129
        %v9131 = vpop.f32.mrb[0].mxu0
        %v9132 = vpop.f32.mrb[0].mxu0
        %v9133 = vadd.f32 0.0, %v9132
        %v9134 = vpop.f32.mrb[0].mxu0
        %9135 = vmatprep.mubr.bf16.mxu0 0
        %9136 = vmatmul.mubr.bf16.gmra.mrb[0].mxu0 %v8814
        %v9137 = vpop.f32.mrb[0].mxu0
        %v9138 = vadd.f32 0.0, %v9137
        %v9139 = vpop.f32.mrb[0].mxu0
        %v9140 = vpop.f32.mrb[0].mxu0
        %v9141 = vadd.f32 0.0, %v9140
        %v9142 = vpop.f32.mrb[0].mxu0
        %9143 = vmatprep.mubr.bf16.mxu0 0
        %9144 = vmatmul.mubr.bf16.gmra.mrb[0].mxu0 %v8817
        %v9145 = vpop.f32.mrb[0].mxu0
        %v9146 = vadd.f32 0.0, %v9145
        %v9147 = vpop.f32.mrb[0].mxu0
        %v9148 = vpop.f32.mrb[0].mxu0
        %v9149 = vadd.f32 0.0, %v9148
        %v9150 = vpop.f32.mrb[0].mxu0
        %9151 = vmatprep.mubr.bf16.mxu0 0
        %9152 = vmatmul.mubr.bf16.gmra.mrb[0].mxu0 %v8820
        %v9153 = vpop.f32.mrb[0].mxu0
        %v9154 = vadd.f32 0.0, %v9153
        %v9155 = vpop.f32.mrb[0].mxu0
        %v9156 = vpop.f32.mrb[0].mxu0
        %v9157 = vadd.f32 0.0, %v9156
        %v9158 = vpop.f32.mrb[0].mxu0
        %9159 = vmatprep.mubr.bf16.mxu0 0
        %9160 = vmatmul.mubr.bf16.gmra.mrb[0].mxu0 %v8823
        %v9161 = vpop.f32.mrb[0].mxu0
        %v9162 = vadd.f32 0.0, %v9161
        %v9163 = vpop.f32.mrb[0].mxu0
        %v9164 = vpop.f32.mrb[0].mxu0
        %v9165 = vadd.f32 0.0, %v9164
        %v9166 = vpop.f32.mrb[0].mxu0
        %9167 = vmatprep.mubr.bf16.mxu0 0
        %9168 = vmatmul.mubr.bf16.gmra.mrb[0].mxu0 %v8826
        %v9169 = vpop.f32.mrb[0].mxu0
        %v9170 = vadd.f32 0.0, %v9169
        %v9171 = vpop.f32.mrb[0].mxu0
        %v9172 = vpop.f32.mrb[0].mxu0
        %v9173 = vadd.f32 0.0, %v9172
        %v9174 = vpop.f32.mrb[0].mxu0
        %9175 = vmatprep.mubr.bf16.mxu0 0
        %9176 = vmatmul.mubr.bf16.gmra.mrb[0].mxu0 %v8829
        %v9177 = vpop.f32.mrb[0].mxu0
        %v9178 = vadd.f32 0.0, %v9177
        %v9179 = vpop.f32.mrb[0].mxu0
        %v9180 = vpop.f32.mrb[0].mxu0
        %v9181 = vadd.f32 0.0, %v9180
        %v9182 = vpop.f32.mrb[0].mxu0
        %9183 = vmatprep.mubr.bf16.mxu0 0
        %9184 = vmatmul.mubr.bf16.gmra.mrb[0].mxu0 %v8832
        %v9185 = vpop.f32.mrb[0].mxu0
        %v9186 = vadd.f32 0.0, %v9185
        %v9187 = vpop.f32.mrb[0].mxu0
        %v9188 = vpop.f32.mrb[0].mxu0
        %v9189 = vadd.f32 0.0, %v9188
        %v9190 = vpop.f32.mrb[0].mxu0
        %9191 = vmatprep.mubr.bf16.mxu0 0
        %9192 = vmatmul.mubr.bf16.gmra.mrb[0].mxu0 %v8835
        %v9193 = vpop.f32.mrb[0].mxu0
        %v9194 = vadd.f32 0.0, %v9193
        %v9195 = vpop.f32.mrb[0].mxu0
        %v9196 = vpop.f32.mrb[0].mxu0
        %v9197 = vadd.f32 0.0, %v9196
        %v9198 = vpop.f32.mrb[0].mxu0
        %9199 = vdwg.mxu0
        %v9200 = vadd.f32 %v8626, %v8881
        %v9201 = vadd.f32 %v8627, %v8883
        %v9202 = vadd.f32 %v8628, %v9074
        %v9203 = vadd.f32 %v8629, %v8885
        %v9204 = vadd.f32 %v8630, %v8887
        %v9205 = vadd.f32 %v8631, %v9077
        %v9206 = vadd.f32 %v8632, %v8891
        %v9207 = vadd.f32 %v8633, %v8893
        %v9208 = vadd.f32 %v8634, %v9082
        %v9209 = vadd.f32 %v8635, %v8895
        %v9210 = vadd.f32 %v8636, %v8897
        %v9211 = vadd.f32 %v8637, %v9085
        %v9212 = vadd.f32 %v8638, %v8901
        %v9213 = vadd.f32 %v8639, %v8903
        %v9214 = vadd.f32 %v8640, %v9090
        %v9215 = vadd.f32 %v8641, %v8905
        %v9216 = vadd.f32 %v8642, %v8907
        %v9217 = vadd.f32 %v8643, %v9093
        %v9218 = vadd.f32 %v8644, %v8911
        %v9219 = vadd.f32 %v8645, %v8913
        %v9220 = vadd.f32 %v8646, %v9098
        %v9221 = vadd.f32 %v8647, %v8915
        %v9222 = vadd.f32 %v8648, %v8917
        %v9223 = vadd.f32 %v8649, %v9101
        %v9224 = vadd.f32 %v8650, %v8921
        %v9225 = vadd.f32 %v8651, %v8923
        %v9226 = vadd.f32 %v8652, %v9106
        %v9227 = vadd.f32 %v8653, %v8925
        %v9228 = vadd.f32 %v8654, %v8927
        %v9229 = vadd.f32 %v8655, %v9109
        %v9230 = vadd.f32 %v8656, %v8931
        %v9231 = vadd.f32 %v8657, %v8933
        %v9232 = vadd.f32 %v8658, %v9114
        %v9233 = vadd.f32 %v8659, %v8935
        %v9234 = vadd.f32 %v8660, %v8937
        %v9235 = vadd.f32 %v8661, %v9117
        %v9236 = vadd.f32 %v8662, %v8941
        %v9237 = vadd.f32 %v8663, %v8943
        %v9238 = vadd.f32 %v8664, %v9122
        %v9239 = vadd.f32 %v8665, %v8945
        %v9240 = vadd.f32 %v8666, %v8947
        %v9241 = vadd.f32 %v8667, %v9125
        %v9242 = vadd.f32 %v8668, %v8951
        %v9243 = vadd.f32 %v8669, %v8953
        %v9244 = vadd.f32 %v8670, %v9130
        %v9245 = vadd.f32 %v8671, %v8955
        %v9246 = vadd.f32 %v8672, %v8957
        %v9247 = vadd.f32 %v8673, %v9133
        %v9248 = vadd.f32 %v8674, %v8961
        %v9249 = vadd.f32 %v8675, %v8963
        %v9250 = vadd.f32 %v8676, %v9138
        %v9251 = vadd.f32 %v8677, %v8965
        %v9252 = vadd.f32 %v8678, %v8967
        %v9253 = vadd.f32 %v8679, %v9141
        %v9254 = vadd.f32 %v8680, %v8971
        %v9255 = vadd.f32 %v8681, %v8973
        %v9256 = vadd.f32 %v8682, %v9146
        %v9257 = vadd.f32 %v8683, %v8975
        %v9258 = vadd.f32 %v8684, %v8977
        %v9259 = vadd.f32 %v8685, %v9149
        %v9260 = vadd.f32 %v8686, %v8981
        %v9261 = vadd.f32 %v8687, %v8983
        %v9262 = vadd.f32 %v8688, %v9154
        %v9263 = vadd.f32 %v8689, %v8985
        %v9264 = vadd.f32 %v8690, %v8987
        %v9265 = vadd.f32 %v8691, %v9157
        %v9266 = vadd.f32 %v8692, %v8991
        %v9267 = vadd.f32 %v8693, %v8993
        %v9268 = vadd.f32 %v8694, %v9162
        %v9269 = vadd.f32 %v8695, %v8995
        %v9270 = vadd.f32 %v8696, %v8997
        %v9271 = vadd.f32 %v8697, %v9165
        %v9272 = vadd.f32 %v8698, %v9001
        %v9273 = vadd.f32 %v8699, %v9003
        %v9274 = vadd.f32 %v8700, %v9170
        %v9275 = vadd.f32 %v8701, %v9005
        %v9276 = vadd.f32 %v8702, %v9007
        %v9277 = vadd.f32 %v8703, %v9173
        %v9278 = vadd.f32 %v8704, %v9011
        %v9279 = vadd.f32 %v8705, %v9013
        %v9280 = vadd.f32 %v8706, %v9178
        %v9281 = vadd.f32 %v8707, %v9015
        %v9282 = vadd.f32 %v8708, %v9017
        %v9283 = vadd.f32 %v8709, %v9181
        %v9284 = vadd.f32 %v8710, %v9021
        %v9285 = vadd.f32 %v8711, %v9023
        %v9286 = vadd.f32 %v8712, %v9186
        %v9287 = vadd.f32 %v8713, %v9025
        %v9288 = vadd.f32 %v8714, %v9027
        %v9289 = vadd.f32 %v8715, %v9189
        %v9290 = vadd.f32 %v8716, %v9031
        %v9291 = vadd.f32 %v8717, %v9033
        %v9292 = vadd.f32 %v8718, %v9194
        %v9293 = vadd.f32 %v8719, %v9035
        %v9294 = vadd.f32 %v8720, %v9037
        %v9295 = vadd.f32 %v8721, %v9197
        %9296 = vst [vmem:[#allocation2] sm:$0xff] %v9200
        %9297 = vst [vmem:[#allocation2 + $0x8] sm:$0xff] %v9201
        %9298 = vst.msk [vmem:[#allocation2 + $0x10] sm:$0xff] %vm1113, %v9202
        %9299 = vst [vmem:[#allocation2 + $0x18] sm:$0xff] %v9203
        %9300 = vst [vmem:[#allocation2 + $0x20] sm:$0xff] %v9204
        %9301 = vst.msk [vmem:[#allocation2 + $0x28] sm:$0xff] %vm1113, %v9205
        %9302 = vst [vmem:[#allocation2 + $0x30] sm:$0xff] %v9206
        %9303 = vst [vmem:[#allocation2 + $0x38] sm:$0xff] %v9207
        %9304 = vst.msk [vmem:[#allocation2 + $0x40] sm:$0xff] %vm1113, %v9208
        %9305 = vst [vmem:[#allocation2 + $0x48] sm:$0xff] %v9209
        %9306 = vst [vmem:[#allocation2 + $0x50] sm:$0xff] %v9210
        %9307 = vst.msk [vmem:[#allocation2 + $0x58] sm:$0xff] %vm1113, %v9211
        %9308 = vst [vmem:[#allocation2 + $0x60] sm:$0xff] %v9212
        %9309 = vst [vmem:[#allocation2 + $0x68] sm:$0xff] %v9213
        %9310 = vst.msk [vmem:[#allocation2 + $0x70] sm:$0xff] %vm1113, %v9214
        %9311 = vst [vmem:[#allocation2 + $0x78] sm:$0xff] %v9215
        %9312 = vst [vmem:[#allocation2 + $0x80] sm:$0xff] %v9216
        %9313 = vst.msk [vmem:[#allocation2 + $0x88] sm:$0xff] %vm1113, %v9217
        %9314 = vst [vmem:[#allocation2 + $0x90] sm:$0xff] %v9218
        %9315 = vst [vmem:[#allocation2 + $0x98] sm:$0xff] %v9219
        %9316 = vst.msk [vmem:[#allocation2 + $0xa0] sm:$0xff] %vm1113, %v9220
        %9317 = vst [vmem:[#allocation2 + $0xa8] sm:$0xff] %v9221
        %9318 = vst [vmem:[#allocation2 + $0xb0] sm:$0xff] %v9222
        %9319 = vst.msk [vmem:[#allocation2 + $0xb8] sm:$0xff] %vm1113, %v9223
        %9320 = vst [vmem:[#allocation2 + $0xc0] sm:$0xff] %v9224
        %9321 = vst [vmem:[#allocation2 + $0xc8] sm:$0xff] %v9225
        %9322 = vst.msk [vmem:[#allocation2 + $0xd0] sm:$0xff] %vm1113, %v9226
        %9323 = vst [vmem:[#allocation2 + $0xd8] sm:$0xff] %v9227
        %9324 = vst [vmem:[#allocation2 + $0xe0] sm:$0xff] %v9228
        %9325 = vst.msk [vmem:[#allocation2 + $0xe8] sm:$0xff] %vm1113, %v9229
        %9326 = vst [vmem:[#allocation2 + $0xf0] sm:$0xff] %v9230
        %9327 = vst [vmem:[#allocation2 + $0xf8] sm:$0xff] %v9231
        %9328 = vst.msk [vmem:[#allocation2 + $0x100] sm:$0xff] %vm1113, %v9232
        %9329 = vst [vmem:[#allocation2 + $0x108] sm:$0xff] %v9233
        %9330 = vst [vmem:[#allocation2 + $0x110] sm:$0xff] %v9234
        %9331 = vst.msk [vmem:[#allocation2 + $0x118] sm:$0xff] %vm1113, %v9235
        %9332 = vst [vmem:[#allocation2 + $0x120] sm:$0xff] %v9236
        %9333 = vst [vmem:[#allocation2 + $0x128] sm:$0xff] %v9237
        %9334 = vst.msk [vmem:[#allocation2 + $0x130] sm:$0xff] %vm1113, %v9238
        %9335 = vst [vmem:[#allocation2 + $0x138] sm:$0xff] %v9239
        %9336 = vst [vmem:[#allocation2 + $0x140] sm:$0xff] %v9240
        %9337 = vst.msk [vmem:[#allocation2 + $0x148] sm:$0xff] %vm1113, %v9241
        %9338 = vst [vmem:[#allocation2 + $0x150] sm:$0xff] %v9242
        %9339 = vst [vmem:[#allocation2 + $0x158] sm:$0xff] %v9243
        %9340 = vst.msk [vmem:[#allocation2 + $0x160] sm:$0xff] %vm1113, %v9244
        %9341 = vst [vmem:[#allocation2 + $0x168] sm:$0xff] %v9245
        %9342 = vst [vmem:[#allocation2 + $0x170] sm:$0xff] %v9246
        %9343 = vst.msk [vmem:[#allocation2 + $0x178] sm:$0xff] %vm1113, %v9247
        %9344 = vst [vmem:[#allocation2 + $0x180] sm:$0xff] %v9248
        %9345 = vst [vmem:[#allocation2 + $0x188] sm:$0xff] %v9249
        %9346 = vst.msk [vmem:[#allocation2 + $0x190] sm:$0xff] %vm1113, %v9250
        %9347 = vst [vmem:[#allocation2 + $0x198] sm:$0xff] %v9251
        %9348 = vst [vmem:[#allocation2 + $0x1a0] sm:$0xff] %v9252
        %9349 = vst.msk [vmem:[#allocation2 + $0x1a8] sm:$0xff] %vm1113, %v9253
        %9350 = vst [vmem:[#allocation2 + $0x1b0] sm:$0xff] %v9254
        %9351 = vst [vmem:[#allocation2 + $0x1b8] sm:$0xff] %v9255
        %9352 = vst.msk [vmem:[#allocation2 + $0x1c0] sm:$0xff] %vm1113, %v9256
        %9353 = vst [vmem:[#allocation2 + $0x1c8] sm:$0xff] %v9257
        %9354 = vst [vmem:[#allocation2 + $0x1d0] sm:$0xff] %v9258
        %9355 = vst.msk [vmem:[#allocation2 + $0x1d8] sm:$0xff] %vm1113, %v9259
        %9356 = vst [vmem:[#allocation2 + $0x1e0] sm:$0xff] %v9260
        %9357 = vst [vmem:[#allocation2 + $0x1e8] sm:$0xff] %v9261
        %9358 = vst.msk [vmem:[#allocation2 + $0x1f0] sm:$0xff] %vm1113, %v9262
        %9359 = vst [vmem:[#allocation2 + $0x1f8] sm:$0xff] %v9263
        %9360 = vst [vmem:[#allocation2 + $0x200] sm:$0xff] %v9264
        %9361 = vst.msk [vmem:[#allocation2 + $0x208] sm:$0xff] %vm1113, %v9265
        %9362 = vst [vmem:[#allocation2 + $0x210] sm:$0xff] %v9266
        %9363 = vst [vmem:[#allocation2 + $0x218] sm:$0xff] %v9267
        %9364 = vst.msk [vmem:[#allocation2 + $0x220] sm:$0xff] %vm1113, %v9268
        %9365 = vst [vmem:[#allocation2 + $0x228] sm:$0xff] %v9269
        %9366 = vst [vmem:[#allocation2 + $0x230] sm:$0xff] %v9270
        %9367 = vst.msk [vmem:[#allocation2 + $0x238] sm:$0xff] %vm1113, %v9271
        %9368 = vst [vmem:[#allocation2 + $0x240] sm:$0xff] %v9272
        %9369 = vst [vmem:[#allocation2 + $0x248] sm:$0xff] %v9273
        %9370 = vst.msk [vmem:[#allocation2 + $0x250] sm:$0xff] %vm1113, %v9274
        %9371 = vst [vmem:[#allocation2 + $0x258] sm:$0xff] %v9275
        %9372 = vst [vmem:[#allocation2 + $0x260] sm:$0xff] %v9276
        %9373 = vst.msk [vmem:[#allocation2 + $0x268] sm:$0xff] %vm1113, %v9277
        %9374 = vst [vmem:[#allocation2 + $0x270] sm:$0xff] %v9278
        %9375 = vst [vmem:[#allocation2 + $0x278] sm:$0xff] %v9279
        %9376 = vst.msk [vmem:[#allocation2 + $0x280] sm:$0xff] %vm1113, %v9280
        %9377 = vst [vmem:[#allocation2 + $0x288] sm:$0xff] %v9281
        %9378 = vst [vmem:[#allocation2 + $0x290] sm:$0xff] %v9282
        %9379 = vst.msk [vmem:[#allocation2 + $0x298] sm:$0xff] %vm1113, %v9283
        %9380 = vst [vmem:[#allocation2 + $0x2a0] sm:$0xff] %v9284
        %9381 = vst [vmem:[#allocation2 + $0x2a8] sm:$0xff] %v9285
        %9382 = vst.msk [vmem:[#allocation2 + $0x2b0] sm:$0xff] %vm1113, %v9286
        %9383 = vst [vmem:[#allocation2 + $0x2b8] sm:$0xff] %v9287
        %9384 = vst [vmem:[#allocation2 + $0x2c0] sm:$0xff] %v9288
        %9385 = vst.msk [vmem:[#allocation2 + $0x2c8] sm:$0xff] %vm1113, %v9289
        %9386 = vst [vmem:[#allocation2 + $0x2d0] sm:$0xff] %v9290
        %9387 = vst [vmem:[#allocation2 + $0x2d8] sm:$0xff] %v9291
        %9388 = vst.msk [vmem:[#allocation2 + $0x2e0] sm:$0xff] %vm1113, %v9292
        %9389 = vst [vmem:[#allocation2 + $0x2e8] sm:$0xff] %v9293
        %9390 = vst [vmem:[#allocation2 + $0x2f0] sm:$0xff] %v9294
        %9391 = vst.msk [vmem:[#allocation2 + $0x2f8] sm:$0xff] %vm1113, %v9295
        // Predicated region
        $region37: #{conv3x3.1} parent=31 // pred_check
          %p9392 = pneg %p258
        $region38: #{conv3x3.1} parent=31 // pred_check_branch
          %9394 = sbr.rel (%p9392) target = $region40
        $region39: #{conv3x3.1} parent=31 // pred_region
          %v9395 = vld [vmem:[#allocation2] sm:$0xff]
          %v9396 = vld [vmem:[#allocation2 + $0x8] sm:$0xff]
          %v9397 = vld [vmem:[#allocation2 + $0x10] sm:$0xff]
          %v9398 = vld [vmem:[#allocation2 + $0x18] sm:$0xff]
          %v9399 = vld [vmem:[#allocation2 + $0x20] sm:$0xff]
          %v9400 = vld [vmem:[#allocation2 + $0x28] sm:$0xff]
          %v9401 = vld [vmem:[#allocation2 + $0x30] sm:$0xff]
          %v9402 = vld [vmem:[#allocation2 + $0x38] sm:$0xff]
          %v9403 = vld [vmem:[#allocation2 + $0x40] sm:$0xff]
          %v9404 = vld [vmem:[#allocation2 + $0x48] sm:$0xff]
          %v9405 = vld [vmem:[#allocation2 + $0x50] sm:$0xff]
          %v9406 = vld [vmem:[#allocation2 + $0x58] sm:$0xff]
          %v9407 = vld [vmem:[#allocation2 + $0x60] sm:$0xff]
          %v9408 = vld [vmem:[#allocation2 + $0x68] sm:$0xff]
          %v9409 = vld [vmem:[#allocation2 + $0x70] sm:$0xff]
          %v9410 = vld [vmem:[#allocation2 + $0x78] sm:$0xff]
          %v9411 = vld [vmem:[#allocation2 + $0x80] sm:$0xff]
          %v9412 = vld [vmem:[#allocation2 + $0x88] sm:$0xff]
          %v9413 = vld [vmem:[#allocation2 + $0x90] sm:$0xff]
          %v9414 = vld [vmem:[#allocation2 + $0x98] sm:$0xff]
          %v9415 = vld [vmem:[#allocation2 + $0xa0] sm:$0xff]
          %v9416 = vld [vmem:[#allocation2 + $0xa8] sm:$0xff]
          %v9417 = vld [vmem:[#allocation2 + $0xb0] sm:$0xff]
          %v9418 = vld [vmem:[#allocation2 + $0xb8] sm:$0xff]
          %v9419 = vld [vmem:[#allocation2 + $0xc0] sm:$0xff]
          %v9420 = vld [vmem:[#allocation2 + $0xc8] sm:$0xff]
          %v9421 = vld [vmem:[#allocation2 + $0xd0] sm:$0xff]
          %v9422 = vld [vmem:[#allocation2 + $0xd8] sm:$0xff]
          %v9423 = vld [vmem:[#allocation2 + $0xe0] sm:$0xff]
          %v9424 = vld [vmem:[#allocation2 + $0xe8] sm:$0xff]
          %v9425 = vld [vmem:[#allocation2 + $0xf0] sm:$0xff]
          %v9426 = vld [vmem:[#allocation2 + $0xf8] sm:$0xff]
          %v9427 = vld [vmem:[#allocation2 + $0x100] sm:$0xff]
          %v9428 = vld [vmem:[#allocation2 + $0x108] sm:$0xff]
          %v9429 = vld [vmem:[#allocation2 + $0x110] sm:$0xff]
          %v9430 = vld [vmem:[#allocation2 + $0x118] sm:$0xff]
          %v9431 = vld [vmem:[#allocation2 + $0x120] sm:$0xff]
          %v9432 = vld [vmem:[#allocation2 + $0x128] sm:$0xff]
          %v9433 = vld [vmem:[#allocation2 + $0x130] sm:$0xff]
          %v9434 = vld [vmem:[#allocation2 + $0x138] sm:$0xff]
          %v9435 = vld [vmem:[#allocation2 + $0x140] sm:$0xff]
          %v9436 = vld [vmem:[#allocation2 + $0x148] sm:$0xff]
          %v9437 = vld [vmem:[#allocation2 + $0x150] sm:$0xff]
          %v9438 = vld [vmem:[#allocation2 + $0x158] sm:$0xff]
          %v9439 = vld [vmem:[#allocation2 + $0x160] sm:$0xff]
          %v9440 = vld [vmem:[#allocation2 + $0x168] sm:$0xff]
          %v9441 = vld [vmem:[#allocation2 + $0x170] sm:$0xff]
          %v9442 = vld [vmem:[#allocation2 + $0x178] sm:$0xff]
          %v9443 = vld [vmem:[#allocation2 + $0x180] sm:$0xff]
          %v9444 = vld [vmem:[#allocation2 + $0x188] sm:$0xff]
          %v9445 = vld [vmem:[#allocation2 + $0x190] sm:$0xff]
          %v9446 = vld [vmem:[#allocation2 + $0x198] sm:$0xff]
          %v9447 = vld [vmem:[#allocation2 + $0x1a0] sm:$0xff]
          %v9448 = vld [vmem:[#allocation2 + $0x1a8] sm:$0xff]
          %v9449 = vld [vmem:[#allocation2 + $0x1b0] sm:$0xff]
          %v9450 = vld [vmem:[#allocation2 + $0x1b8] sm:$0xff]
          %v9451 = vld [vmem:[#allocation2 + $0x1c0] sm:$0xff]
          %v9452 = vld [vmem:[#allocation2 + $0x1c8] sm:$0xff]
          %v9453 = vld [vmem:[#allocation2 + $0x1d0] sm:$0xff]
          %v9454 = vld [vmem:[#allocation2 + $0x1d8] sm:$0xff]
          %v9455 = vld [vmem:[#allocation2 + $0x1e0] sm:$0xff]
          %v9456 = vld [vmem:[#allocation2 + $0x1e8] sm:$0xff]
          %v9457 = vld [vmem:[#allocation2 + $0x1f0] sm:$0xff]
          %v9458 = vld [vmem:[#allocation2 + $0x1f8] sm:$0xff]
          %v9459 = vld [vmem:[#allocation2 + $0x200] sm:$0xff]
          %v9460 = vld [vmem:[#allocation2 + $0x208] sm:$0xff]
          %v9461 = vld [vmem:[#allocation2 + $0x210] sm:$0xff]
          %v9462 = vld [vmem:[#allocation2 + $0x218] sm:$0xff]
          %v9463 = vld [vmem:[#allocation2 + $0x220] sm:$0xff]
          %v9464 = vld [vmem:[#allocation2 + $0x228] sm:$0xff]
          %v9465 = vld [vmem:[#allocation2 + $0x230] sm:$0xff]
          %v9466 = vld [vmem:[#allocation2 + $0x238] sm:$0xff]
          %v9467 = vld [vmem:[#allocation2 + $0x240] sm:$0xff]
          %v9468 = vld [vmem:[#allocation2 + $0x248] sm:$0xff]
          %v9469 = vld [vmem:[#allocation2 + $0x250] sm:$0xff]
          %v9470 = vld [vmem:[#allocation2 + $0x258] sm:$0xff]
          %v9471 = vld [vmem:[#allocation2 + $0x260] sm:$0xff]
          %v9472 = vld [vmem:[#allocation2 + $0x268] sm:$0xff]
          %v9473 = vld [vmem:[#allocation2 + $0x270] sm:$0xff]
          %v9474 = vld [vmem:[#allocation2 + $0x278] sm:$0xff]
          %v9475 = vld [vmem:[#allocation2 + $0x280] sm:$0xff]
          %v9476 = vld [vmem:[#allocation2 + $0x288] sm:$0xff]
          %v9477 = vld [vmem:[#allocation2 + $0x290] sm:$0xff]
          %v9478 = vld [vmem:[#allocation2 + $0x298] sm:$0xff]
          %v9479 = vld [vmem:[#allocation2 + $0x2a0] sm:$0xff]
          %v9480 = vld [vmem:[#allocation2 + $0x2a8] sm:$0xff]
          %v9481 = vld [vmem:[#allocation2 + $0x2b0] sm:$0xff]
          %v9482 = vld [vmem:[#allocation2 + $0x2b8] sm:$0xff]
          %v9483 = vld [vmem:[#allocation2 + $0x2c0] sm:$0xff]
          %v9484 = vld [vmem:[#allocation2 + $0x2c8] sm:$0xff]
          %v9485 = vld [vmem:[#allocation2 + $0x2d0] sm:$0xff]
          %v9486 = vld [vmem:[#allocation2 + $0x2d8] sm:$0xff]
          %v9487 = vld [vmem:[#allocation2 + $0x2e0] sm:$0xff]
          %v9488 = vld [vmem:[#allocation2 + $0x2e8] sm:$0xff]
          %v9489 = vld [vmem:[#allocation2 + $0x2f0] sm:$0xff]
          %v9490 = vld [vmem:[#allocation2 + $0x2f8] sm:$0xff]
          %v9491 = vpack.c.bf16 %v9398, %v9395
          %v9492 = vpack.c.bf16 %v9399, %v9396
          %v9493 = vpack.c.bf16 %v9400, %v9397
          %v9494 = vpack.c.bf16 %v9404, %v9401
          %v9495 = vpack.c.bf16 %v9405, %v9402
          %v9496 = vpack.c.bf16 %v9406, %v9403
          %v9497 = vpack.c.bf16 %v9410, %v9407
          %v9498 = vpack.c.bf16 %v9411, %v9408
          %v9499 = vpack.c.bf16 %v9412, %v9409
          %v9500 = vpack.c.bf16 %v9416, %v9413
          %v9501 = vpack.c.bf16 %v9417, %v9414
          %v9502 = vpack.c.bf16 %v9418, %v9415
          %v9503 = vpack.c.bf16 %v9422, %v9419
          %v9504 = vpack.c.bf16 %v9423, %v9420
          %v9505 = vpack.c.bf16 %v9424, %v9421
          %v9506 = vpack.c.bf16 %v9428, %v9425
          %v9507 = vpack.c.bf16 %v9429, %v9426
          %v9508 = vpack.c.bf16 %v9430, %v9427
          %v9509 = vpack.c.bf16 %v9434, %v9431
          %v9510 = vpack.c.bf16 %v9435, %v9432
          %v9511 = vpack.c.bf16 %v9436, %v9433
          %v9512 = vpack.c.bf16 %v9440, %v9437
          %v9513 = vpack.c.bf16 %v9441, %v9438
          %v9514 = vpack.c.bf16 %v9442, %v9439
          %v9515 = vpack.c.bf16 %v9446, %v9443
          %v9516 = vpack.c.bf16 %v9447, %v9444
          %v9517 = vpack.c.bf16 %v9448, %v9445
          %v9518 = vpack.c.bf16 %v9452, %v9449
          %v9519 = vpack.c.bf16 %v9453, %v9450
          %v9520 = vpack.c.bf16 %v9454, %v9451
          %v9521 = vpack.c.bf16 %v9458, %v9455
          %v9522 = vpack.c.bf16 %v9459, %v9456
          %v9523 = vpack.c.bf16 %v9460, %v9457
          %v9524 = vpack.c.bf16 %v9464, %v9461
          %v9525 = vpack.c.bf16 %v9465, %v9462
          %v9526 = vpack.c.bf16 %v9466, %v9463
          %v9527 = vpack.c.bf16 %v9470, %v9467
          %v9528 = vpack.c.bf16 %v9471, %v9468
          %v9529 = vpack.c.bf16 %v9472, %v9469
          %v9530 = vpack.c.bf16 %v9476, %v9473
          %v9531 = vpack.c.bf16 %v9477, %v9474
          %v9532 = vpack.c.bf16 %v9478, %v9475
          %v9533 = vpack.c.bf16 %v9482, %v9479
          %v9534 = vpack.c.bf16 %v9483, %v9480
          %v9535 = vpack.c.bf16 %v9484, %v9481
          %v9536 = vpack.c.bf16 %v9488, %v9485
          %v9537 = vpack.c.bf16 %v9489, %v9486
          %v9538 = vpack.c.bf16 %v9490, %v9487
          %v9587 = vunpack.c.l.b16 %v9491
          %v9588 = vunpack.c.l.b16 %v9492
          %v9589 = vunpack.c.l.b16 %v9493
          %v9590 = vunpack.c.h.b16 %v9491
          %v9591 = vunpack.c.h.b16 %v9492
          %v9592 = vunpack.c.h.b16 %v9493
          %v9593 = vunpack.c.l.b16 %v9494
          %v9594 = vunpack.c.l.b16 %v9495
          %v9595 = vunpack.c.l.b16 %v9496
          %v9596 = vunpack.c.h.b16 %v9494
          %v9597 = vunpack.c.h.b16 %v9495
          %v9598 = vunpack.c.h.b16 %v9496
          %v9599 = vunpack.c.l.b16 %v9497
          %v9600 = vunpack.c.l.b16 %v9498
          %v9601 = vunpack.c.l.b16 %v9499
          %v9602 = vunpack.c.h.b16 %v9497
          %v9603 = vunpack.c.h.b16 %v9498
          %v9604 = vunpack.c.h.b16 %v9499
          %v9605 = vunpack.c.l.b16 %v9500
          %v9606 = vunpack.c.l.b16 %v9501
          %v9607 = vunpack.c.l.b16 %v9502
          %v9608 = vunpack.c.h.b16 %v9500
          %v9609 = vunpack.c.h.b16 %v9501
          %v9610 = vunpack.c.h.b16 %v9502
          %v9611 = vunpack.c.l.b16 %v9503
          %v9612 = vunpack.c.l.b16 %v9504
          %v9613 = vunpack.c.l.b16 %v9505
          %v9614 = vunpack.c.h.b16 %v9503
          %v9615 = vunpack.c.h.b16 %v9504
          %v9616 = vunpack.c.h.b16 %v9505
          %v9617 = vunpack.c.l.b16 %v9506
          %v9618 = vunpack.c.l.b16 %v9507
          %v9619 = vunpack.c.l.b16 %v9508
          %v9620 = vunpack.c.h.b16 %v9506
          %v9621 = vunpack.c.h.b16 %v9507
          %v9622 = vunpack.c.h.b16 %v9508
          %v9623 = vunpack.c.l.b16 %v9509
          %v9624 = vunpack.c.l.b16 %v9510
          %v9625 = vunpack.c.l.b16 %v9511
          %v9626 = vunpack.c.h.b16 %v9509
          %v9627 = vunpack.c.h.b16 %v9510
          %v9628 = vunpack.c.h.b16 %v9511
          %v9629 = vunpack.c.l.b16 %v9512
          %v9630 = vunpack.c.l.b16 %v9513
          %v9631 = vunpack.c.l.b16 %v9514
          %v9632 = vunpack.c.h.b16 %v9512
          %v9633 = vunpack.c.h.b16 %v9513
          %v9634 = vunpack.c.h.b16 %v9514
          %v9635 = vunpack.c.l.b16 %v9515
          %v9636 = vunpack.c.l.b16 %v9516
          %v9637 = vunpack.c.l.b16 %v9517
          %v9638 = vunpack.c.h.b16 %v9515
          %v9639 = vunpack.c.h.b16 %v9516
          %v9640 = vunpack.c.h.b16 %v9517
          %v9641 = vunpack.c.l.b16 %v9518
          %v9642 = vunpack.c.l.b16 %v9519
          %v9643 = vunpack.c.l.b16 %v9520
          %v9644 = vunpack.c.h.b16 %v9518
          %v9645 = vunpack.c.h.b16 %v9519
          %v9646 = vunpack.c.h.b16 %v9520
          %v9647 = vunpack.c.l.b16 %v9521
          %v9648 = vunpack.c.l.b16 %v9522
          %v9649 = vunpack.c.l.b16 %v9523
          %v9650 = vunpack.c.h.b16 %v9521
          %v9651 = vunpack.c.h.b16 %v9522
          %v9652 = vunpack.c.h.b16 %v9523
          %v9653 = vunpack.c.l.b16 %v9524
          %v9654 = vunpack.c.l.b16 %v9525
          %v9655 = vunpack.c.l.b16 %v9526
          %v9656 = vunpack.c.h.b16 %v9524
          %v9657 = vunpack.c.h.b16 %v9525
          %v9658 = vunpack.c.h.b16 %v9526
          %v9659 = vunpack.c.l.b16 %v9527
          %v9660 = vunpack.c.l.b16 %v9528
          %v9661 = vunpack.c.l.b16 %v9529
          %v9662 = vunpack.c.h.b16 %v9527
          %v9663 = vunpack.c.h.b16 %v9528
          %v9664 = vunpack.c.h.b16 %v9529
          %v9665 = vunpack.c.l.b16 %v9530
          %v9666 = vunpack.c.l.b16 %v9531
          %v9667 = vunpack.c.l.b16 %v9532
          %v9668 = vunpack.c.h.b16 %v9530
          %v9669 = vunpack.c.h.b16 %v9531
          %v9670 = vunpack.c.h.b16 %v9532
          %v9671 = vunpack.c.l.b16 %v9533
          %v9672 = vunpack.c.l.b16 %v9534
          %v9673 = vunpack.c.l.b16 %v9535
          %v9674 = vunpack.c.h.b16 %v9533
          %v9675 = vunpack.c.h.b16 %v9534
          %v9676 = vunpack.c.h.b16 %v9535
          %v9677 = vunpack.c.l.b16 %v9536
          %v9678 = vunpack.c.l.b16 %v9537
          %v9679 = vunpack.c.l.b16 %v9538
          %v9680 = vunpack.c.h.b16 %v9536
          %v9681 = vunpack.c.h.b16 %v9537
          %v9682 = vunpack.c.h.b16 %v9538
          %v9683 = vpack.c.b16 %v9588, %v9587
          %v9684 = vpack.c.b16 %v9589, %v9589
          %v9685 = vpack.c.b16 %v9591, %v9590
          %v9686 = vpack.c.b16 %v9592, %v9592
          %v9687 = vpack.c.b16 %v9594, %v9593
          %v9688 = vpack.c.b16 %v9595, %v9595
          %v9689 = vpack.c.b16 %v9597, %v9596
          %v9690 = vpack.c.b16 %v9598, %v9598
          %v9691 = vpack.c.b16 %v9600, %v9599
          %v9692 = vpack.c.b16 %v9601, %v9601
          %v9693 = vpack.c.b16 %v9603, %v9602
          %v9694 = vpack.c.b16 %v9604, %v9604
          %v9695 = vpack.c.b16 %v9606, %v9605
          %v9696 = vpack.c.b16 %v9607, %v9607
          %v9697 = vpack.c.b16 %v9609, %v9608
          %v9698 = vpack.c.b16 %v9610, %v9610
          %v9699 = vpack.c.b16 %v9612, %v9611
          %v9700 = vpack.c.b16 %v9613, %v9613
          %v9701 = vpack.c.b16 %v9615, %v9614
          %v9702 = vpack.c.b16 %v9616, %v9616
          %v9703 = vpack.c.b16 %v9618, %v9617
          %v9704 = vpack.c.b16 %v9619, %v9619
          %v9705 = vpack.c.b16 %v9621, %v9620
          %v9706 = vpack.c.b16 %v9622, %v9622
          %v9707 = vpack.c.b16 %v9624, %v9623
          %v9708 = vpack.c.b16 %v9625, %v9625
          %v9709 = vpack.c.b16 %v9627, %v9626
          %v9710 = vpack.c.b16 %v9628, %v9628
          %v9711 = vpack.c.b16 %v9630, %v9629
          %v9712 = vpack.c.b16 %v9631, %v9631
          %v9713 = vpack.c.b16 %v9633, %v9632
          %v9714 = vpack.c.b16 %v9634, %v9634
          %v9715 = vpack.c.b16 %v9636, %v9635
          %v9716 = vpack.c.b16 %v9637, %v9637
          %v9717 = vpack.c.b16 %v9639, %v9638
          %v9718 = vpack.c.b16 %v9640, %v9640
          %v9719 = vpack.c.b16 %v9642, %v9641
          %v9720 = vpack.c.b16 %v9643, %v9643
          %v9721 = vpack.c.b16 %v9645, %v9644
          %v9722 = vpack.c.b16 %v9646, %v9646
          %v9723 = vpack.c.b16 %v9648, %v9647
          %v9724 = vpack.c.b16 %v9649, %v9649
          %v9725 = vpack.c.b16 %v9651, %v9650
          %v9726 = vpack.c.b16 %v9652, %v9652
          %v9727 = vpack.c.b16 %v9654, %v9653
          %v9728 = vpack.c.b16 %v9655, %v9655
          %v9729 = vpack.c.b16 %v9657, %v9656
          %v9730 = vpack.c.b16 %v9658, %v9658
          %v9731 = vpack.c.b16 %v9660, %v9659
          %v9732 = vpack.c.b16 %v9661, %v9661
          %v9733 = vpack.c.b16 %v9663, %v9662
          %v9734 = vpack.c.b16 %v9664, %v9664
          %v9735 = vpack.c.b16 %v9666, %v9665
          %v9736 = vpack.c.b16 %v9667, %v9667
          %v9737 = vpack.c.b16 %v9669, %v9668
          %v9738 = vpack.c.b16 %v9670, %v9670
          %v9739 = vpack.c.b16 %v9672, %v9671
          %v9740 = vpack.c.b16 %v9673, %v9673
          %v9741 = vpack.c.b16 %v9675, %v9674
          %v9742 = vpack.c.b16 %v9676, %v9676
          %v9743 = vpack.c.b16 %v9678, %v9677
          %v9744 = vpack.c.b16 %v9679, %v9679
          %v9745 = vpack.c.b16 %v9681, %v9680
          %v9746 = vpack.c.b16 %v9682, %v9682
          %9811 = vst [vmem:[%s232] sm:$0xff] %v9683
          %vm9812 = vcmask 519168
          %9813 = vst.msk [vmem:[%s232 + $0x8] sm:$0xf] %vm9812, %v9684
          %9814 = vst [vmem:[%s232 + $0xc] sm:$0xff] %v9685
          %9815 = vst.msk [vmem:[%s232 + $0x14] sm:$0xf] %vm9812, %v9686
          %9816 = vst [vmem:[%s232 + $0x18] sm:$0xff] %v9687
          %9817 = vst.msk [vmem:[%s232 + $0x20] sm:$0xf] %vm9812, %v9688
          %9818 = vst [vmem:[%s232 + $0x24] sm:$0xff] %v9689
          %9819 = vst.msk [vmem:[%s232 + $0x2c] sm:$0xf] %vm9812, %v9690
          %9820 = vst [vmem:[%s232 + $0x30] sm:$0xff] %v9691
          %9821 = vst.msk [vmem:[%s232 + $0x38] sm:$0xf] %vm9812, %v9692
          %9822 = vst [vmem:[%s232 + $0x3c] sm:$0xff] %v9693
          %9823 = vst.msk [vmem:[%s232 + $0x44] sm:$0xf] %vm9812, %v9694
          %9824 = vst [vmem:[%s232 + $0x48] sm:$0xff] %v9695
          %9825 = vst.msk [vmem:[%s232 + $0x50] sm:$0xf] %vm9812, %v9696
          %9826 = vst [vmem:[%s232 + $0x54] sm:$0xff] %v9697
          %9827 = vst.msk [vmem:[%s232 + $0x5c] sm:$0xf] %vm9812, %v9698
          %9828 = vst [vmem:[%s232 + $0x60] sm:$0xff] %v9699
          %9829 = vst.msk [vmem:[%s232 + $0x68] sm:$0xf] %vm9812, %v9700
          %9830 = vst [vmem:[%s232 + $0x6c] sm:$0xff] %v9701
          %9831 = vst.msk [vmem:[%s232 + $0x74] sm:$0xf] %vm9812, %v9702
          %9832 = vst [vmem:[%s232 + $0x78] sm:$0xff] %v9703
          %9833 = vst.msk [vmem:[%s232 + $0x80] sm:$0xf] %vm9812, %v9704
          %9834 = vst [vmem:[%s232 + $0x84] sm:$0xff] %v9705
          %9835 = vst.msk [vmem:[%s232 + $0x8c] sm:$0xf] %vm9812, %v9706
          %9836 = vst [vmem:[%s232 + $0x90] sm:$0xff] %v9707
          %9837 = vst.msk [vmem:[%s232 + $0x98] sm:$0xf] %vm9812, %v9708
          %9838 = vst [vmem:[%s232 + $0x9c] sm:$0xff] %v9709
          %9839 = vst.msk [vmem:[%s232 + $0xa4] sm:$0xf] %vm9812, %v9710
          %9840 = vst [vmem:[%s232 + $0xa8] sm:$0xff] %v9711
          %9841 = vst.msk [vmem:[%s232 + $0xb0] sm:$0xf] %vm9812, %v9712
          %9842 = vst [vmem:[%s232 + $0xb4] sm:$0xff] %v9713
          %9843 = vst.msk [vmem:[%s232 + $0xbc] sm:$0xf] %vm9812, %v9714
          %9844 = vst [vmem:[%s232 + $0xc0] sm:$0xff] %v9715
          %9845 = vst.msk [vmem:[%s232 + $0xc8] sm:$0xf] %vm9812, %v9716
          %9846 = vst [vmem:[%s232 + $0xcc] sm:$0xff] %v9717
          %9847 = vst.msk [vmem:[%s232 + $0xd4] sm:$0xf] %vm9812, %v9718
          %9848 = vst [vmem:[%s232 + $0xd8] sm:$0xff] %v9719
          %9849 = vst.msk [vmem:[%s232 + $0xe0] sm:$0xf] %vm9812, %v9720
          %9850 = vst [vmem:[%s232 + $0xe4] sm:$0xff] %v9721
          %9851 = vst.msk [vmem:[%s232 + $0xec] sm:$0xf] %vm9812, %v9722
          %9852 = vst [vmem:[%s232 + $0xf0] sm:$0xff] %v9723
          %9853 = vst.msk [vmem:[%s232 + $0xf8] sm:$0xf] %vm9812, %v9724
          %9854 = vst [vmem:[%s232 + $0xfc] sm:$0xff] %v9725
          %9855 = vst.msk [vmem:[%s232 + $0x104] sm:$0xf] %vm9812, %v9726
          %9856 = vst [vmem:[%s232 + $0x108] sm:$0xff] %v9727
          %9857 = vst.msk [vmem:[%s232 + $0x110] sm:$0xf] %vm9812, %v9728
          %9858 = vst [vmem:[%s232 + $0x114] sm:$0xff] %v9729
          %9859 = vst.msk [vmem:[%s232 + $0x11c] sm:$0xf] %vm9812, %v9730
          %9860 = vst [vmem:[%s232 + $0x120] sm:$0xff] %v9731
          %9861 = vst.msk [vmem:[%s232 + $0x128] sm:$0xf] %vm9812, %v9732
          %9862 = vst [vmem:[%s232 + $0x12c] sm:$0xff] %v9733
          %9863 = vst.msk [vmem:[%s232 + $0x134] sm:$0xf] %vm9812, %v9734
          %9864 = vst [vmem:[%s232 + $0x138] sm:$0xff] %v9735
          %9865 = vst.msk [vmem:[%s232 + $0x140] sm:$0xf] %vm9812, %v9736
          %9866 = vst [vmem:[%s232 + $0x144] sm:$0xff] %v9737
          %9867 = vst.msk [vmem:[%s232 + $0x14c] sm:$0xf] %vm9812, %v9738
          %9868 = vst [vmem:[%s232 + $0x150] sm:$0xff] %v9739
          %9869 = vst.msk [vmem:[%s232 + $0x158] sm:$0xf] %vm9812, %v9740
          %9870 = vst [vmem:[%s232 + $0x15c] sm:$0xff] %v9741
          %9871 = vst.msk [vmem:[%s232 + $0x164] sm:$0xf] %vm9812, %v9742
          %9872 = vst [vmem:[%s232 + $0x168] sm:$0xff] %v9743
          %9873 = vst.msk [vmem:[%s232 + $0x170] sm:$0xf] %vm9812, %v9744
          %9874 = vst [vmem:[%s232 + $0x174] sm:$0xff] %v9745
          %9875 = vst.msk [vmem:[%s232 + $0x17c] sm:$0xf] %vm9812, %v9746
        $region40: #{conv3x3.1} parent=31 // pred_fallthru
          _
        %s9876 = sand.u32 %s128, 1
        %s9877 = scalar_lea.sflag [#allocation4], %s9876
        %s9878 = sand.u32 %s128, 1
        %s9879 = smul.addr %s9878, 384
        %s9880 = scalar_lea.vmem [#allocation3], %s9879
        // Predicated region
        $region41: #{conv3x3.1} parent=31 // pred_check
          %p9881 = pneg %p138
        $region42: #{conv3x3.1} parent=31 // pred_check_branch
          %9883 = sbr.rel (%p9881) target = $region44
        $region43: #{conv3x3.1} parent=31 // pred_region
          %s9884 = smul.u32 3, %s23
          %s9886 = ssub.s32 6144, 6144
          %9887 = vsyncadd %s9877, %s9886
          %s9888 = smul.addr %s22, 96
          %s9889 = sadd.s32 %s9884, %s9888
          %s9890 = smul.addr %s9889, 64
          %s9891 = scalar_lea.hbm %s3, %s9890
          %s9892 = sshll.u32 %s9880, 4
          %s9893 = int_to_ptr.vmem [resolvable:$true] %s9892
          %9898 = dma.vmem_to_hbm [thread:$0]  %s9893, 6144, %s9891, %s9877, 192, 192, 12
        $region44: #{conv3x3.1} parent=31 // pred_fallthru
          _
      $region32: #{conv3x3.1} parent=5 // pred_fallthru
        _
      %p9899 = scmp.le.s32.totalorder 2, %s12
      // Predicated region
      $region45: #{conv3x3.1} parent=5 // pred_check
        %p9900 = pneg %p9899
      $region46: #{conv3x3.1} parent=5 // pred_check_branch
        %9902 = sbr.rel (%p9900) target = $region48
      $region47: #{conv3x3.1} parent=5 // pred_region
        %s9903 = ssub.s32 %s12, 2
        // Predicated region
        $region49: #{conv3x3.1} parent=47 // pred_check
          %p9904 = pneg %p144
        $region50: #{conv3x3.1} parent=47 // pred_check_branch
          %9906 = sbr.rel (%p9904) target = $region52
        $region51: #{conv3x3.1} parent=47 // pred_region
          %s9907 = sand.u32 %s129, 1
          %s9908 = scalar_lea.sflag [#allocation4], %s9907
          %s9909 = sand.u32 %s129, 1
          %s9910 = smul.addr %s9909, 384
          %s9911 = scalar_lea.vmem [#allocation3], %s9910
          %9912 = dma.done %s9908, 6144
        $region52: #{conv3x3.1} parent=47 // pred_fallthru
          _
      $region48: #{conv3x3.1} parent=5 // pred_fallthru
        _
    $region6: #{conv3x3.1} parent=1 // loop_footer
      %s16 = sadd.s32 1, %s12
    $region7: #{conv3x3.1} parent=1 // loop_footer_branch
      %11 = sbr.rel target = $region3
    $region8: #{conv3x3.1} parent=1 // loop_exit
      _
    %9913 = vsyncpa [#allocation4], 1
    %s9914 = scalar_lea.sflag [#allocation4], 1
    %9915 = vsyncpa %s9914, 1

</llo_original>
